<compile_context>
chip_gen: v7x
topology: tpu7x:2x2x1
jax: 0.10.0
libtpu: 0.0.40
codegen_flags: <defaults>
</compile_context>

<pallas_src>
import functools

import jax
import jax.numpy as jnp
from jax.experimental import pallas as pl
from jax.experimental.pallas import tpu as pltpu

EPS = 1e-5


# ----------------------------------------------------------------------------
# Fused bottleneck kernel (B images per grid step)
# ----------------------------------------------------------------------------
def _bottleneck_kernel(x_ref, w1_ref, b1_ref, w2_ref, b2_ref, w3_ref, b3_ref,
                       o_ref, ypad_ref, patch_ref, *, B, H, W, Cp):
    Cin = x_ref.shape[-1]
    Cout = o_ref.shape[-1]
    M = B * H * W

    # SAME-padding halo handled in VMEM (no HBM jnp.pad).  Re-zeroed every
    # step (bf16, ~40 vreg stores) — see header: a program_id==0-only init is
    # unsafe under megacore "parallel" sharding because each core has private
    # scratch and only one of them ever sees step 0.
    ypad_ref[...] = jnp.zeros_like(ypad_ref)

    # ---- conv1: 1x1 (Cin -> Cp), +BN shift, ReLU (bf16 MXU, f32 epilogue) --
    x2d = x_ref[...].reshape(M, Cin)                           # bf16 (M, Cin)
    x_id = x2d.astype(jnp.float32)                             # hoisted residual cast
    y1 = jnp.dot(x2d, w1_ref[...], preferred_element_type=jnp.float32)
    y1 = jnp.maximum(y1 + b1_ref[...], 0.0)                    # f32 (M, Cp)

    # interior of the halo buffer: lane-dense (Cp = 128) bf16 store
    ypad_ref[:, 1:H + 1, 1:W + 1, :] = (
        y1.astype(jnp.bfloat16).reshape(B, H, W, Cp))

    # ---- conv2: 3x3 as im2col -> one K = 9*Cp matmul, +BN shift, ReLU ------
    for t in range(9):                                         # unrolled taps
        kh, kw = divmod(t, 3)
        patch_ref[:, t * Cp:(t + 1) * Cp] = (
            ypad_ref[:, kh:kh + H, kw:kw + W, :].reshape(M, Cp))
    y2 = jnp.dot(patch_ref[...], w2_ref[...],
                 preferred_element_type=jnp.float32)
    y2 = jnp.maximum(y2 + b2_ref[...], 0.0)                    # f32 (M, Cp)

    # ---- conv3: 1x1 (Cp -> Cout), +BN shift, +identity, ReLU ---------------
    y3 = jnp.dot(y2.astype(jnp.bfloat16), w3_ref[...],
                 preferred_element_type=jnp.float32)
    y3 = jnp.maximum(y3 + b3_ref[...] + x_id, 0.0)
    o_ref[...] = y3.reshape(B, H, W, Cout).astype(o_ref.dtype)


# ----------------------------------------------------------------------------
# Weight prep + wrapper
# ----------------------------------------------------------------------------
def _fold_bn(w, bn):
    """Fold eval-mode BN scale into the conv weight; return (w_bf16, shift_f32)."""
    gamma, beta, mean, var = bn
    scale = gamma / jnp.sqrt(var + EPS)
    shift = beta - mean * scale
    return (w * scale).astype(jnp.bfloat16), shift.reshape(1, -1).astype(jnp.float32)


def bottleneck_forward(x_nchw, w1, w2, w3, bn1, bn2, bn3, *, block_n=2):
    """ResNet-50 style bottleneck block (identity shortcut), NCHW in / NCHW bf16 out."""
    x = jnp.transpose(x_nchw, (0, 2, 3, 1)).astype(jnp.bfloat16)   # NCHW -> NHWC
    N, H, W, Cin = x.shape
    Cmid = w1.shape[1]
    Cout = w3.shape[1]
    Cp = max(128, ((Cmid + 127) // 128) * 128)    # lane-align the mid channels
    pad = Cp - Cmid

    w1f, b1 = _fold_bn(w1, bn1)                   # (Cin, Cmid)
    w2f, b2 = _fold_bn(w2, bn2)                   # (3,3,Cmid,Cmid) HWIO
    w3f, b3 = _fold_bn(w3, bn3)                   # (Cmid, Cout)

    # Zero-pad Cmid -> Cp everywhere (numerically exact: padded channels stay 0).
    w1p = jnp.pad(w1f, ((0, 0), (0, pad)))                        # (Cin, Cp)
    b1p = jnp.pad(b1, ((0, 0), (0, pad)))                         # (1, Cp)
    w2p = jnp.pad(w2f, ((0, 0), (0, 0), (0, pad), (0, pad)))      # (3,3,Cp,Cp)
    w2p = w2p.reshape(9 * Cp, Cp)                                 # im2col layout
    b2p = jnp.pad(b2, ((0, 0), (0, pad)))                         # (1, Cp)
    w3p = jnp.pad(w3f, ((0, pad), (0, 0)))                        # (Cp, Cout)

    B = block_n
    assert N % B == 0, (N, B)
    kernel = functools.partial(_bottleneck_kernel, B=B, H=H, W=W, Cp=Cp)
    out = pl.pallas_call(
        kernel,
        out_shape=jax.ShapeDtypeStruct((N, H, W, Cout), jnp.bfloat16),
        grid=(N // B,),
        in_specs=[
            pl.BlockSpec((B, H, W, Cin), lambda n: (n, 0, 0, 0)),
            # Constant index maps: weights/biases are DMA'd once and stay resident.
            pl.BlockSpec((Cin, Cp), lambda n: (0, 0)),
            pl.BlockSpec((1, Cp), lambda n: (0, 0)),
            pl.BlockSpec((9 * Cp, Cp), lambda n: (0, 0)),
            pl.BlockSpec((1, Cp), lambda n: (0, 0)),
            pl.BlockSpec((Cp, Cout), lambda n: (0, 0)),
            pl.BlockSpec((1, Cout), lambda n: (0, 0)),
        ],
        out_specs=pl.BlockSpec((B, H, W, Cout), lambda n: (n, 0, 0, 0)),
        scratch_shapes=[
            pltpu.VMEM((B, H + 2, W + 2, Cp), jnp.bfloat16),   # halo-padded conv1 out
            pltpu.VMEM((B * H * W, 9 * Cp), jnp.bfloat16),     # im2col patch matrix
        ],
        compiler_params=pltpu.CompilerParams(
            dimension_semantics=("parallel",)),
    )(x, w1p, b1p, w2p, b2p, w3p, b3)
    return jnp.transpose(out, (0, 3, 1, 2))                   # back to NCHW (bf16)


# ----------------------------------------------------------------------------
# Pure-JAX reference (same bf16/f32 numerics path, for correctness check)
# ----------------------------------------------------------------------------
def bottleneck_reference(x_nchw, w1, w2, w3, bn1, bn2, bn3):
    x = jnp.transpose(x_nchw, (0, 2, 3, 1)).astype(jnp.bfloat16)
    N, H, W, Cin = x.shape
    Cmid = w1.shape[1]

    w1f, b1 = _fold_bn(w1, bn1)
    w2f, b2 = _fold_bn(w2, bn2)
    w2f = w2f.reshape(9 * Cmid, Cmid)
    w3f, b3 = _fold_bn(w3, bn3)

    x2d = x.reshape(N * H * W, Cin)
    y1 = jnp.maximum(
        jnp.dot(x2d, w1f, preferred_element_type=jnp.float32) + b1, 0.0)
    y1 = y1.reshape(N, H, W, Cmid)
    yp = jnp.pad(y1, ((0, 0), (1, 1), (1, 1), (0, 0)))
    patches = jnp.concatenate(
        [yp[:, kh:kh + H, kw:kw + W, :] for kh in range(3) for kw in range(3)],
        axis=-1).reshape(N * H * W, 9 * Cmid)
    y2 = jnp.maximum(
        jnp.dot(patches.astype(jnp.bfloat16), w2f,
                preferred_element_type=jnp.float32) + b2, 0.0)
    y3 = jnp.dot(y2.astype(jnp.bfloat16), w3f,
                 preferred_element_type=jnp.float32)
    y3 = jnp.maximum(y3 + b3 + x2d.astype(jnp.float32), 0.0)
    out = y3.reshape(N, H, W, -1).astype(jnp.bfloat16)
    return jnp.transpose(out, (0, 3, 1, 2))


# ----------------------------------------------------------------------------
# Main
# ----------------------------------------------------------------------------
if __name__ == "__main__":
    key = jax.random.PRNGKey(0)
    # resnet50 conv2_x channel counts (256 -> 64 -> 256); small spatial / batch
    # keeps the test quick while giving 4 grid steps of 2 images each.
    N, Cin, H, W = 8, 256, 16, 16
    Cmid, Cout = 64, 256
    ks = jax.random.split(key, 8)

    x_nchw = jax.random.normal(ks[0], (N, Cin, H, W), jnp.float32)

    # Deterministic synthetic conv weights (IO / HWIO layouts for NHWC math).
    w1 = jax.random.normal(ks[1], (Cin, Cmid), jnp.float32) * 0.05
    w2 = jax.random.normal(ks[2], (3, 3, Cmid, Cmid), jnp.float32) * 0.05
    w3 = jax.random.normal(ks[3], (Cmid, Cout), jnp.float32) * 0.05

    def bn_params(k, c):
        k1, k2, k3, k4 = jax.random.split(k, 4)
        gamma = jax.random.uniform(k1, (c,), jnp.float32, 0.5, 1.5)
        beta = jax.random.normal(k2, (c,), jnp.float32) * 0.1
        mean = jax.random.normal(k3, (c,), jnp.float32) * 0.1
        var = jax.random.uniform(k4, (c,), jnp.float32, 0.5, 1.5)
        return gamma, beta, mean, var

    bn1 = bn_params(ks[4], Cmid)
    bn2 = bn_params(ks[5], Cmid)
    bn3 = bn_params(ks[6], Cout)

    out = bottleneck_forward(x_nchw, w1, w2, w3, bn1, bn2, bn3)
    out = jax.block_until_ready(out)

    ref = bottleneck_reference(x_nchw, w1, w2, w3, bn1, bn2, bn3)
    assert out.shape == (N, Cout, H, W), out.shape
    assert out.dtype == jnp.bfloat16, out.dtype
    max_err = float(jnp.max(jnp.abs(out.astype(jnp.float32) -
                                    ref.astype(jnp.float32))))
    assert max_err < 5e-2, f"mismatch vs JAX reference: max abs err {max_err}"

    print("KERNEL_OK")
</pallas_src>

<mosaic_0001>
module attributes {stable_mosaic.version = 11 : i64} {
  func.func @_bottleneck_kernel(%arg0: i32, %arg1: memref<2x16x16x256xbf16, #tpu.memory_space<vmem>>, %arg2: memref<256x128xbf16, #tpu.memory_space<vmem>>, %arg3: memref<1x128xf32, #tpu.memory_space<vmem>>, %arg4: memref<1152x128xbf16, #tpu.memory_space<vmem>>, %arg5: memref<1x128xf32, #tpu.memory_space<vmem>>, %arg6: memref<128x256xbf16, #tpu.memory_space<vmem>>, %arg7: memref<1x256xf32, #tpu.memory_space<vmem>>, %arg8: memref<2x16x16x256xbf16, #tpu.memory_space<vmem>>, %arg9: memref<2x18x18x128xbf16, #tpu.memory_space<vmem>>, %arg10: memref<512x1152xbf16, #tpu.memory_space<vmem>>) attributes {dimension_semantics = [#tpu.dimension_semantics<parallel>], iteration_bounds = array<i64: 4>, scalar_prefetch = 0 : i64, scratch_operands = 2 : i64, tpu.core_type = #tpu.core_type<tc>, window_params = [{transform_indices = @transform_0, window_bounds = array<i64: 2, 16, 16, 256>}, {pipeline_mode = #tpu.pipeline_mode<synchronous>, transform_indices = @transform_1, window_bounds = array<i64: 256, 128>}, {pipeline_mode = #tpu.pipeline_mode<synchronous>, transform_indices = @transform_2, window_bounds = array<i64: 1, 128>}, {pipeline_mode = #tpu.pipeline_mode<synchronous>, transform_indices = @transform_3, window_bounds = array<i64: 1152, 128>}, {pipeline_mode = #tpu.pipeline_mode<synchronous>, transform_indices = @transform_4, window_bounds = array<i64: 1, 128>}, {pipeline_mode = #tpu.pipeline_mode<synchronous>, transform_indices = @transform_5, window_bounds = array<i64: 128, 256>}, {pipeline_mode = #tpu.pipeline_mode<synchronous>, transform_indices = @transform_6, window_bounds = array<i64: 1, 256>}, {transform_indices = @transform_7, window_bounds = array<i64: 2, 16, 16, 256>}]} {
    %cst = arith.constant 0.000000e+00 : bf16
    %0 = vector.broadcast %cst : bf16 to vector<2x18x18x128xbf16>
    %c0 = arith.constant 0 : index
    %c0_0 = arith.constant 0 : index
    %c0_1 = arith.constant 0 : index
    %c0_2 = arith.constant 0 : index
    %1 = vector.load %arg9[%c0, %c0_0, %c0_1, %c0_2] : memref<2x18x18x128xbf16, #tpu.memory_space<vmem>>, vector<2x18x18x128xbf16>
    tpu.vector_store %arg9[%c0, %c0_0, %c0_1, %c0_2], %0 {strides = array<i32>} : memref<2x18x18x128xbf16, #tpu.memory_space<vmem>>, vector<2x18x18x128xbf16>,
    %c0_3 = arith.constant 0 : index
    %c0_4 = arith.constant 0 : index
    %c0_5 = arith.constant 0 : index
    %c0_6 = arith.constant 0 : index
    %2 = vector.load %arg1[%c0_3, %c0_4, %c0_5, %c0_6] : memref<2x16x16x256xbf16, #tpu.memory_space<vmem>>, vector<2x16x16x256xbf16>
    %3 = vector.shape_cast %2 : vector<2x16x16x256xbf16> to vector<512x256xbf16>
    %4 = arith.extf %3 : vector<512x256xbf16> to vector<512x256xf32>
    %c0_7 = arith.constant 0 : index
    %c0_8 = arith.constant 0 : index
    %5 = vector.load %arg2[%c0_7, %c0_8] : memref<256x128xbf16, #tpu.memory_space<vmem>>, vector<256x128xbf16>
    %cst_9 = arith.constant dense<0.000000e+00> : vector<512x128xf32>
    %6 = tpu.matmul %3, %5, %cst_9 {dimension_numbers = #tpu.dot_dimension_numbers<[1], [0], [0], [1], [0, 0, 1, 1], [], []>} : vector<512x256xbf16>, vector<256x128xbf16>, vector<512x128xf32> -> vector<512x128xf32>
    %c0_10 = arith.constant 0 : index
    %c0_11 = arith.constant 0 : index
    %7 = vector.load %arg3[%c0_10, %c0_11] : memref<1x128xf32, #tpu.memory_space<vmem>>, vector<1x128xf32>
    %8 = vector.broadcast %7 : vector<1x128xf32> to vector<512x128xf32>
    %9 = arith.addf %6, %8 : vector<512x128xf32>
    %cst_12 = arith.constant 0.000000e+00 : f32
    %10 = vector.broadcast %cst_12 : f32 to vector<512x128xf32>
    %11 = arith.maximumf %9, %10 : vector<512x128xf32>
    %12 = arith.truncf %11 : vector<512x128xf32> to vector<512x128xbf16>
    %13 = vector.shape_cast %12 : vector<512x128xbf16> to vector<2x16x16x128xbf16>
    %c0_13 = arith.constant 0 : index
    %c1 = arith.constant 1 : index
    %c1_14 = arith.constant 1 : index
    %c0_15 = arith.constant 0 : index
    %14 = vector.load %arg9[%c0_13, %c1, %c1_14, %c0_15] : memref<2x18x18x128xbf16, #tpu.memory_space<vmem>>, vector<2x16x16x128xbf16>
    tpu.vector_store %arg9[%c0_13, %c1, %c1_14, %c0_15], %13 {strides = array<i32>} : memref<2x18x18x128xbf16, #tpu.memory_space<vmem>>, vector<2x16x16x128xbf16>,
    %c0_16 = arith.constant 0 : index
    %c0_17 = arith.constant 0 : index
    %c0_18 = arith.constant 0 : index
    %c0_19 = arith.constant 0 : index
    %15 = vector.load %arg9[%c0_16, %c0_17, %c0_18, %c0_19] : memref<2x18x18x128xbf16, #tpu.memory_space<vmem>>, vector<2x16x16x128xbf16>
    %16 = vector.shape_cast %15 : vector<2x16x16x128xbf16> to vector<512x128xbf16>
    %c0_20 = arith.constant 0 : index
    %c0_21 = arith.constant 0 : index
    %17 = vector.load %arg10[%c0_20, %c0_21] : memref<512x1152xbf16, #tpu.memory_space<vmem>>, vector<512x128xbf16>
    tpu.vector_store %arg10[%c0_20, %c0_21], %16 {strides = array<i32>} : memref<512x1152xbf16, #tpu.memory_space<vmem>>, vector<512x128xbf16>,
    %c0_22 = arith.constant 0 : index
    %c0_23 = arith.constant 0 : index
    %c1_24 = arith.constant 1 : index
    %c0_25 = arith.constant 0 : index
    %18 = vector.load %arg9[%c0_22, %c0_23, %c1_24, %c0_25] : memref<2x18x18x128xbf16, #tpu.memory_space<vmem>>, vector<2x16x16x128xbf16>
    %19 = vector.shape_cast %18 : vector<2x16x16x128xbf16> to vector<512x128xbf16>
    %c0_26 = arith.constant 0 : index
    %c128 = arith.constant 128 : index
    %20 = vector.load %arg10[%c0_26, %c128] : memref<512x1152xbf16, #tpu.memory_space<vmem>>, vector<512x128xbf16>
    tpu.vector_store %arg10[%c0_26, %c128], %19 {strides = array<i32>} : memref<512x1152xbf16, #tpu.memory_space<vmem>>, vector<512x128xbf16>,
    %c0_27 = arith.constant 0 : index
    %c0_28 = arith.constant 0 : index
    %c2 = arith.constant 2 : index
    %c0_29 = arith.constant 0 : index
    %21 = vector.load %arg9[%c0_27, %c0_28, %c2, %c0_29] : memref<2x18x18x128xbf16, #tpu.memory_space<vmem>>, vector<2x16x16x128xbf16>
    %22 = vector.shape_cast %21 : vector<2x16x16x128xbf16> to vector<512x128xbf16>
    %c0_30 = arith.constant 0 : index
    %c256 = arith.constant 256 : index
    %23 = vector.load %arg10[%c0_30, %c256] : memref<512x1152xbf16, #tpu.memory_space<vmem>>, vector<512x128xbf16>
    tpu.vector_store %arg10[%c0_30, %c256], %22 {strides = array<i32>} : memref<512x1152xbf16, #tpu.memory_space<vmem>>, vector<512x128xbf16>,
    %c0_31 = arith.constant 0 : index
    %c1_32 = arith.constant 1 : index
    %c0_33 = arith.constant 0 : index
    %c0_34 = arith.constant 0 : index
    %24 = vector.load %arg9[%c0_31, %c1_32, %c0_33, %c0_34] : memref<2x18x18x128xbf16, #tpu.memory_space<vmem>>, vector<2x16x16x128xbf16>
    %25 = vector.shape_cast %24 : vector<2x16x16x128xbf16> to vector<512x128xbf16>
    %c0_35 = arith.constant 0 : index
    %c384 = arith.constant 384 : index
    %26 = vector.load %arg10[%c0_35, %c384] : memref<512x1152xbf16, #tpu.memory_space<vmem>>, vector<512x128xbf16>
    tpu.vector_store %arg10[%c0_35, %c384], %25 {strides = array<i32>} : memref<512x1152xbf16, #tpu.memory_space<vmem>>, vector<512x128xbf16>,
    %c0_36 = arith.constant 0 : index
    %c1_37 = arith.constant 1 : index
    %c1_38 = arith.constant 1 : index
    %c0_39 = arith.constant 0 : index
    %27 = vector.load %arg9[%c0_36, %c1_37, %c1_38, %c0_39] : memref<2x18x18x128xbf16, #tpu.memory_space<vmem>>, vector<2x16x16x128xbf16>
    %28 = vector.shape_cast %27 : vector<2x16x16x128xbf16> to vector<512x128xbf16>
    %c0_40 = arith.constant 0 : index
    %c512 = arith.constant 512 : index
    %29 = vector.load %arg10[%c0_40, %c512] : memref<512x1152xbf16, #tpu.memory_space<vmem>>, vector<512x128xbf16>
    tpu.vector_store %arg10[%c0_40, %c512], %28 {strides = array<i32>} : memref<512x1152xbf16, #tpu.memory_space<vmem>>, vector<512x128xbf16>,
    %c0_41 = arith.constant 0 : index
    %c1_42 = arith.constant 1 : index
    %c2_43 = arith.constant 2 : index
    %c0_44 = arith.constant 0 : index
    %30 = vector.load %arg9[%c0_41, %c1_42, %c2_43, %c0_44] : memref<2x18x18x128xbf16, #tpu.memory_space<vmem>>, vector<2x16x16x128xbf16>
    %31 = vector.shape_cast %30 : vector<2x16x16x128xbf16> to vector<512x128xbf16>
    %c0_45 = arith.constant 0 : index
    %c640 = arith.constant 640 : index
    %32 = vector.load %arg10[%c0_45, %c640] : memref<512x1152xbf16, #tpu.memory_space<vmem>>, vector<512x128xbf16>
    tpu.vector_store %arg10[%c0_45, %c640], %31 {strides = array<i32>} : memref<512x1152xbf16, #tpu.memory_space<vmem>>, vector<512x128xbf16>,
    %c0_46 = arith.constant 0 : index
    %c2_47 = arith.constant 2 : index
    %c0_48 = arith.constant 0 : index
    %c0_49 = arith.constant 0 : index
    %33 = vector.load %arg9[%c0_46, %c2_47, %c0_48, %c0_49] : memref<2x18x18x128xbf16, #tpu.memory_space<vmem>>, vector<2x16x16x128xbf16>
    %34 = vector.shape_cast %33 : vector<2x16x16x128xbf16> to vector<512x128xbf16>
    %c0_50 = arith.constant 0 : index
    %c768 = arith.constant 768 : index
    %35 = vector.load %arg10[%c0_50, %c768] : memref<512x1152xbf16, #tpu.memory_space<vmem>>, vector<512x128xbf16>
    tpu.vector_store %arg10[%c0_50, %c768], %34 {strides = array<i32>} : memref<512x1152xbf16, #tpu.memory_space<vmem>>, vector<512x128xbf16>,
    %c0_51 = arith.constant 0 : index
    %c2_52 = arith.constant 2 : index
    %c1_53 = arith.constant 1 : index
    %c0_54 = arith.constant 0 : index
    %36 = vector.load %arg9[%c0_51, %c2_52, %c1_53, %c0_54] : memref<2x18x18x128xbf16, #tpu.memory_space<vmem>>, vector<2x16x16x128xbf16>
    %37 = vector.shape_cast %36 : vector<2x16x16x128xbf16> to vector<512x128xbf16>
    %c0_55 = arith.constant 0 : index
    %c896 = arith.constant 896 : index
    %38 = vector.load %arg10[%c0_55, %c896] : memref<512x1152xbf16, #tpu.memory_space<vmem>>, vector<512x128xbf16>
    tpu.vector_store %arg10[%c0_55, %c896], %37 {strides = array<i32>} : memref<512x1152xbf16, #tpu.memory_space<vmem>>, vector<512x128xbf16>,
    %c0_56 = arith.constant 0 : index
    %c2_57 = arith.constant 2 : index
    %c2_58 = arith.constant 2 : index
    %c0_59 = arith.constant 0 : index
    %39 = vector.load %arg9[%c0_56, %c2_57, %c2_58, %c0_59] : memref<2x18x18x128xbf16, #tpu.memory_space<vmem>>, vector<2x16x16x128xbf16>
    %40 = vector.shape_cast %39 : vector<2x16x16x128xbf16> to vector<512x128xbf16>
    %c0_60 = arith.constant 0 : index
    %c1024 = arith.constant 1024 : index
    %41 = vector.load %arg10[%c0_60, %c1024] : memref<512x1152xbf16, #tpu.memory_space<vmem>>, vector<512x128xbf16>
    tpu.vector_store %arg10[%c0_60, %c1024], %40 {strides = array<i32>} : memref<512x1152xbf16, #tpu.memory_space<vmem>>, vector<512x128xbf16>,
    %c0_61 = arith.constant 0 : index
    %c0_62 = arith.constant 0 : index
    %42 = vector.load %arg10[%c0_61, %c0_62] : memref<512x1152xbf16, #tpu.memory_space<vmem>>, vector<512x1152xbf16>
    %c0_63 = arith.constant 0 : index
    %c0_64 = arith.constant 0 : index
    %43 = vector.load %arg4[%c0_63, %c0_64] : memref<1152x128xbf16, #tpu.memory_space<vmem>>, vector<1152x128xbf16>
    %cst_65 = arith.constant dense<0.000000e+00> : vector<512x128xf32>
    %44 = tpu.matmul %42, %43, %cst_65 {dimension_numbers = #tpu.dot_dimension_numbers<[1], [0], [0], [1], [0, 0, 1, 1], [], []>} : vector<512x1152xbf16>, vector<1152x128xbf16>, vector<512x128xf32> -> vector<512x128xf32>
    %c0_66 = arith.constant 0 : index
    %c0_67 = arith.constant 0 : index
    %45 = vector.load %arg5[%c0_66, %c0_67] : memref<1x128xf32, #tpu.memory_space<vmem>>, vector<1x128xf32>
    %46 = vector.broadcast %45 : vector<1x128xf32> to vector<512x128xf32>
    %47 = arith.addf %44, %46 : vector<512x128xf32>
    %cst_68 = arith.constant 0.000000e+00 : f32
    %48 = vector.broadcast %cst_68 : f32 to vector<512x128xf32>
    %49 = arith.maximumf %47, %48 : vector<512x128xf32>
    %50 = arith.truncf %49 : vector<512x128xf32> to vector<512x128xbf16>
    %c0_69 = arith.constant 0 : index
    %c0_70 = arith.constant 0 : index
    %51 = vector.load %arg6[%c0_69, %c0_70] : memref<128x256xbf16, #tpu.memory_space<vmem>>, vector<128x256xbf16>
    %cst_71 = arith.constant dense<0.000000e+00> : vector<512x256xf32>
    %52 = tpu.matmul %50, %51, %cst_71 {dimension_numbers = #tpu.dot_dimension_numbers<[1], [0], [0], [1], [0, 0, 1, 1], [], []>} : vector<512x128xbf16>, vector<128x256xbf16>, vector<512x256xf32> -> vector<512x256xf32>
    %c0_72 = arith.constant 0 : index
    %c0_73 = arith.constant 0 : index
    %53 = vector.load %arg7[%c0_72, %c0_73] : memref<1x256xf32, #tpu.memory_space<vmem>>, vector<1x256xf32>
    %54 = vector.broadcast %53 : vector<1x256xf32> to vector<512x256xf32>
    %55 = arith.addf %52, %54 : vector<512x256xf32>
    %56 = arith.addf %55, %4 : vector<512x256xf32>
    %cst_74 = arith.constant 0.000000e+00 : f32
    %57 = vector.broadcast %cst_74 : f32 to vector<512x256xf32>
    %58 = arith.maximumf %56, %57 : vector<512x256xf32>
    %59 = vector.shape_cast %58 : vector<512x256xf32> to vector<2x16x16x256xf32>
    %60 = arith.truncf %59 : vector<2x16x16x256xf32> to vector<2x16x16x256xbf16>
    %c0_75 = arith.constant 0 : index
    %c0_76 = arith.constant 0 : index
    %c0_77 = arith.constant 0 : index
    %c0_78 = arith.constant 0 : index
    %61 = vector.load %arg8[%c0_75, %c0_76, %c0_77, %c0_78] : memref<2x16x16x256xbf16, #tpu.memory_space<vmem>>, vector<2x16x16x256xbf16>
    tpu.vector_store %arg8[%c0_75, %c0_76, %c0_77, %c0_78], %60 {strides = array<i32>} : memref<2x16x16x256xbf16, #tpu.memory_space<vmem>>, vector<2x16x16x256xbf16>,
    return
  }
  func.func @transform_0(%arg0: i32) -> (i32, i32, i32, i32) {
    %c0_i32 = arith.constant 0 : i32
    %c0_i32_0 = arith.constant 0 : i32
    %c0_i32_1 = arith.constant 0 : i32
    %c0_i32_2 = arith.constant 0 : i32
    return %arg0, %c0_i32, %c0_i32_0, %c0_i32_1 : i32, i32, i32, i32
  }
  func.func @transform_1(%arg0: i32) -> (i32, i32) {
    %c0_i32 = arith.constant 0 : i32
    %c0_i32_0 = arith.constant 0 : i32
    %c0_i32_1 = arith.constant 0 : i32
    return %c0_i32, %c0_i32_0 : i32, i32
  }
  func.func @transform_2(%arg0: i32) -> (i32, i32) {
    %c0_i32 = arith.constant 0 : i32
    %c0_i32_0 = arith.constant 0 : i32
    %c0_i32_1 = arith.constant 0 : i32
    return %c0_i32, %c0_i32_0 : i32, i32
  }
  func.func @transform_3(%arg0: i32) -> (i32, i32) {
    %c0_i32 = arith.constant 0 : i32
    %c0_i32_0 = arith.constant 0 : i32
    %c0_i32_1 = arith.constant 0 : i32
    return %c0_i32, %c0_i32_0 : i32, i32
  }
  func.func @transform_4(%arg0: i32) -> (i32, i32) {
    %c0_i32 = arith.constant 0 : i32
    %c0_i32_0 = arith.constant 0 : i32
    %c0_i32_1 = arith.constant 0 : i32
    return %c0_i32, %c0_i32_0 : i32, i32
  }
  func.func @transform_5(%arg0: i32) -> (i32, i32) {
    %c0_i32 = arith.constant 0 : i32
    %c0_i32_0 = arith.constant 0 : i32
    %c0_i32_1 = arith.constant 0 : i32
    return %c0_i32, %c0_i32_0 : i32, i32
  }
  func.func @transform_6(%arg0: i32) -> (i32, i32) {
    %c0_i32 = arith.constant 0 : i32
    %c0_i32_0 = arith.constant 0 : i32
    %c0_i32_1 = arith.constant 0 : i32
    return %c0_i32, %c0_i32_0 : i32, i32
  }
  func.func @transform_7(%arg0: i32) -> (i32, i32, i32, i32) {
    %c0_i32 = arith.constant 0 : i32
    %c0_i32_0 = arith.constant 0 : i32
    %c0_i32_1 = arith.constant 0 : i32
    %c0_i32_2 = arith.constant 0 : i32
    return %arg0, %c0_i32, %c0_i32_0, %c0_i32_1 : i32, i32, i32, i32
  }
}

</mosaic_0001>

<llo_original>
// kernel: tpu_custom_call.1
$region0: #{tpu_custom_call.1}
  #allocation0 [shape = 'u32[]', space=smem, size = 0x4, offset = 0x4, fixed_abs, tag = 'smem constant byte address 0x4 - core index']
  #allocation1 [shape = 'u32[144,128]{1,0:T(1,128)}', space=vmem, size = 0x12000, scoped, tag = 'internal scratch']
  #allocation2 [shape = 'bf16[2,18,18,128]{3,2,1,0:T(8,128)(2,1)}', space=vmem, size = 0x36000, scoped, tag = 'scratch operand']
  #allocation3 [shape = 'bf16[512,1152]{1,0:T(16,128)(2,1)}', space=vmem, size = 0x120000, scoped, tag = 'scratch operand']
  %s0 = inlined_call_operand.hbm [shape: bf16[8,16,16,256], index: 0, kind: input, shape index: {}]
  %s1 = inlined_call_operand.hbm [shape: bf16[256,128], index: 1, kind: input, shape index: {}]
  %s2 = inlined_call_operand.vmem [shape: f32[1,128], index: 2, kind: input, shape index: {}]
  %s3 = inlined_call_operand.hbm [shape: bf16[1152,128], index: 3, kind: input, shape index: {}]
  %s4 = inlined_call_operand.vmem [shape: f32[1,128], index: 4, kind: input, shape index: {}]
  %s5 = inlined_call_operand.hbm [shape: bf16[128,256], index: 5, kind: input, shape index: {}]
  %s6 = inlined_call_operand.vmem [shape: f32[1,256], index: 6, kind: input, shape index: {}]
  %s7 = inlined_call_operand.hbm [shape: bf16[8,16,16,256], index: 7, kind: output, shape index: {}]
  %s8 = sld [smem:[#allocation0]]
  $region77: #{tpu_custom_call.1} parent=0
    _
  %s10 = ssub.s32 1, %s8
  %s11 = scalar_select 0, %s10, %s8
  $region1: #{tpu_custom_call.1} parent=0
    #allocation4 [shape = 'u8[524288]{0}', space=vmem, size = 0x80000, scoped, tag = 'input window, operand 0']
    #allocation5 [shape = 's32[2]{0}', space=sflag, size = 0x8, scoped, tag = 'scoped memory for tpu_custom_call.1']
    #allocation6 [shape = 's32[2]{0}', space=sflag, size = 0x8, scoped, tag = 'scoped memory for tpu_custom_call.1']
    #allocation7 [shape = 'u8[65536]{0}', space=vmem, size = 0x10000, scoped, tag = 'input window, operand 1, single buffered']
    #allocation8 [shape = 's32[1]{0}', space=sflag, size = 0x4, scoped, tag = 'scoped memory for tpu_custom_call.1']
    #allocation9 [shape = 'u8[294912]{0}', space=vmem, size = 0x48000, scoped, tag = 'input window, operand 3, single buffered']
    #allocation10 [shape = 'u8[65536]{0}', space=vmem, size = 0x10000, scoped, tag = 'input window, operand 5, single buffered']
    #allocation11 [shape = 's32[1]{0}', space=sflag, size = 0x4, scoped, tag = 'scoped memory for tpu_custom_call.1']
    #allocation12 [shape = 'u8[524288]{0}', space=vmem, size = 0x80000, scoped, tag = 'output window, operand 0']
    %12 = vsyncpa [#allocation5], 0
    %s13 = scalar_lea.sflag [#allocation5], 1
    %14 = vsyncpa %s13, 0
    %15 = vsyncpa [#allocation8], 0
    %16 = vsyncpa [#allocation11], 0
    %17 = vsyncpa [#allocation6], 0
    %s18 = scalar_lea.sflag [#allocation6], 1
    %19 = vsyncpa %s18, 0
    loop: start=0, step=1, limit=6
    $region2: #{tpu_custom_call.1} parent=1 // loop_pre_header
      _
    $region3: #{tpu_custom_call.1} parent=1 // loop_header
      %s21 = sphi 0, %s25
      %p22 = scmp.ge.s32.totalorder %s21, 6
      %s31 = sphi 0, %s33
      %s34 = sphi 0, %s31
      %s35 = sphi 0, %s34
      %s51 = sphi 0, %s35
      %s55 = sphi 0, %s55
      %s57 = sphi 0, %s55
      %s58 = sphi 0, %s57
      %s72 = sphi 0, %s58
      %s76 = sphi 0, %s76
      %s78 = sphi 0, %s76
      %s79 = sphi 0, %s78
      %s93 = sphi 0, %s79
      %s97 = sphi 0, %s97
      %s99 = sphi 0, %s97
      %s100 = sphi 0, %s99
      %s114 = sphi 0, %s100
      %s118 = sphi 0, %s118
      %s120 = sphi 0, %s118
      %s121 = sphi 0, %s120
      %s135 = sphi 0, %s121
      %s139 = sphi 0, %s139
      %s141 = sphi 0, %s139
      %s142 = sphi 0, %s141
      %s156 = sphi 0, %s142
      %s160 = sphi 0, %s160
      %s162 = sphi 0, %s160
      %s163 = sphi 0, %s162
      %s177 = sphi 0, %s163
      %s183 = sphi 0, %s185
      %s186 = sphi 0, %s183
      %s187 = sphi 0, %s186
      %s203 = sphi 0, %s187
    $region4: #{tpu_custom_call.1} parent=1 // loop_header_branch
      %24 = sbr.rel (%p22) target = $region8
    $region5: #{tpu_custom_call.1} parent=1 // loop_body
      %s26 = ssub.s32 %s21, 1
      %s27 = ssub.s32 %s21, 2
      %s28 = sadd.s32 %s21, 1
      %s29 = ssub.s32 %s21, %s28
      %p30 = scmp.eq.s32.totalorder %s29, 0
      %s32 = sadd.s32 %s31, 1
      %s33 = scalar_select %p30, %s31, %s32
      %p36 = pneg %p30
      %p37 = scmp.eq.s32.totalorder %s21, 3
      %p38 = por %p36, %p37
      %p39 = scmp.ne.s32.totalorder %s31, %s34
      %p40 = scmp.eq.s32.totalorder %s21, 0
      %p41 = por %p39, %p40
      %p42 = scmp.ne.s32.totalorder %s31, %s34
      %p43 = scmp.eq.s32.totalorder %s26, 3
      %p44 = por %p42, %p43
      %p45 = scmp.ne.s32.totalorder %s34, %s35
      %p46 = scmp.eq.s32.totalorder %s26, 0
      %p47 = por %p45, %p46
      %p48 = scmp.ne.s32.totalorder %s34, %s35
      %p49 = scmp.eq.s32.totalorder %s27, 3
      %p50 = por %p48, %p49
      %p52 = scmp.ne.s32.totalorder %s35, %s51
      %p53 = scmp.eq.s32.totalorder %s27, 0
      %p54 = por %p52, %p53
      %s56 = sadd.s32 %s55, 1
      %p59 = scmp.eq.s32.totalorder %s21, 3
      %p60 = scmp.ne.s32.totalorder %s55, %s57
      %p61 = scmp.eq.s32.totalorder %s21, 0
      %p62 = por %p60, %p61
      %p63 = scmp.ne.s32.totalorder %s55, %s57
      %p64 = scmp.eq.s32.totalorder %s26, 3
      %p65 = por %p63, %p64
      %p66 = scmp.ne.s32.totalorder %s57, %s58
      %p67 = scmp.eq.s32.totalorder %s26, 0
      %p68 = por %p66, %p67
      %p69 = scmp.ne.s32.totalorder %s57, %s58
      %p70 = scmp.eq.s32.totalorder %s27, 3
      %p71 = por %p69, %p70
      %p73 = scmp.ne.s32.totalorder %s58, %s72
      %p74 = scmp.eq.s32.totalorder %s27, 0
      %p75 = por %p73, %p74
      %s77 = sadd.s32 %s76, 1
      %p80 = scmp.eq.s32.totalorder %s21, 3
      %p81 = scmp.ne.s32.totalorder %s76, %s78
      %p82 = scmp.eq.s32.totalorder %s21, 0
      %p83 = por %p81, %p82
      %p84 = scmp.ne.s32.totalorder %s76, %s78
      %p85 = scmp.eq.s32.totalorder %s26, 3
      %p86 = por %p84, %p85
      %p87 = scmp.ne.s32.totalorder %s78, %s79
      %p88 = scmp.eq.s32.totalorder %s26, 0
      %p89 = por %p87, %p88
      %p90 = scmp.ne.s32.totalorder %s78, %s79
      %p91 = scmp.eq.s32.totalorder %s27, 3
      %p92 = por %p90, %p91
      %p94 = scmp.ne.s32.totalorder %s79, %s93
      %p95 = scmp.eq.s32.totalorder %s27, 0
      %p96 = por %p94, %p95
      %s98 = sadd.s32 %s97, 1
      %p101 = scmp.eq.s32.totalorder %s21, 3
      %p102 = scmp.ne.s32.totalorder %s97, %s99
      %p103 = scmp.eq.s32.totalorder %s21, 0
      %p104 = por %p102, %p103
      %p105 = scmp.ne.s32.totalorder %s97, %s99
      %p106 = scmp.eq.s32.totalorder %s26, 3
      %p107 = por %p105, %p106
      %p108 = scmp.ne.s32.totalorder %s99, %s100
      %p109 = scmp.eq.s32.totalorder %s26, 0
      %p110 = por %p108, %p109
      %p111 = scmp.ne.s32.totalorder %s99, %s100
      %p112 = scmp.eq.s32.totalorder %s27, 3
      %p113 = por %p111, %p112
      %p115 = scmp.ne.s32.totalorder %s100, %s114
      %p116 = scmp.eq.s32.totalorder %s27, 0
      %p117 = por %p115, %p116
      %s119 = sadd.s32 %s118, 1
      %p122 = scmp.eq.s32.totalorder %s21, 3
      %p123 = scmp.ne.s32.totalorder %s118, %s120
      %p124 = scmp.eq.s32.totalorder %s21, 0
      %p125 = por %p123, %p124
      %p126 = scmp.ne.s32.totalorder %s118, %s120
      %p127 = scmp.eq.s32.totalorder %s26, 3
      %p128 = por %p126, %p127
      %p129 = scmp.ne.s32.totalorder %s120, %s121
      %p130 = scmp.eq.s32.totalorder %s26, 0
      %p131 = por %p129, %p130
      %p132 = scmp.ne.s32.totalorder %s120, %s121
      %p133 = scmp.eq.s32.totalorder %s27, 3
      %p134 = por %p132, %p133
      %p136 = scmp.ne.s32.totalorder %s121, %s135
      %p137 = scmp.eq.s32.totalorder %s27, 0
      %p138 = por %p136, %p137
      %s140 = sadd.s32 %s139, 1
      %p143 = scmp.eq.s32.totalorder %s21, 3
      %p144 = scmp.ne.s32.totalorder %s139, %s141
      %p145 = scmp.eq.s32.totalorder %s21, 0
      %p146 = por %p144, %p145
      %p147 = scmp.ne.s32.totalorder %s139, %s141
      %p148 = scmp.eq.s32.totalorder %s26, 3
      %p149 = por %p147, %p148
      %p150 = scmp.ne.s32.totalorder %s141, %s142
      %p151 = scmp.eq.s32.totalorder %s26, 0
      %p152 = por %p150, %p151
      %p153 = scmp.ne.s32.totalorder %s141, %s142
      %p154 = scmp.eq.s32.totalorder %s27, 3
      %p155 = por %p153, %p154
      %p157 = scmp.ne.s32.totalorder %s142, %s156
      %p158 = scmp.eq.s32.totalorder %s27, 0
      %p159 = por %p157, %p158
      %s161 = sadd.s32 %s160, 1
      %p164 = scmp.eq.s32.totalorder %s21, 3
      %p165 = scmp.ne.s32.totalorder %s160, %s162
      %p166 = scmp.eq.s32.totalorder %s21, 0
      %p167 = por %p165, %p166
      %p168 = scmp.ne.s32.totalorder %s160, %s162
      %p169 = scmp.eq.s32.totalorder %s26, 3
      %p170 = por %p168, %p169
      %p171 = scmp.ne.s32.totalorder %s162, %s163
      %p172 = scmp.eq.s32.totalorder %s26, 0
      %p173 = por %p171, %p172
      %p174 = scmp.ne.s32.totalorder %s162, %s163
      %p175 = scmp.eq.s32.totalorder %s27, 3
      %p176 = por %p174, %p175
      %p178 = scmp.ne.s32.totalorder %s163, %s177
      %p179 = scmp.eq.s32.totalorder %s27, 0
      %p180 = por %p178, %p179
      %s181 = ssub.s32 %s21, %s28
      %p182 = scmp.eq.s32.totalorder %s181, 0
      %s184 = sadd.s32 %s183, 1
      %s185 = scalar_select %p182, %s183, %s184
      %p188 = pneg %p182
      %p189 = scmp.eq.s32.totalorder %s21, 3
      %p190 = por %p188, %p189
      %p191 = scmp.ne.s32.totalorder %s183, %s186
      %p192 = scmp.eq.s32.totalorder %s21, 0
      %p193 = por %p191, %p192
      %p194 = scmp.ne.s32.totalorder %s183, %s186
      %p195 = scmp.eq.s32.totalorder %s26, 3
      %p196 = por %p194, %p195
      %p197 = scmp.ne.s32.totalorder %s186, %s187
      %p198 = scmp.eq.s32.totalorder %s26, 0
      %p199 = por %p197, %p198
      %p200 = scmp.ne.s32.totalorder %s186, %s187
      %p201 = scmp.eq.s32.totalorder %s27, 3
      %p202 = por %p200, %p201
      %p204 = scmp.ne.s32.totalorder %s187, %s203
      %p205 = scmp.eq.s32.totalorder %s27, 0
      %p206 = por %p204, %p205
      %p207 = scmp.le.s32.totalorder 1, %s21
      %p208 = scmp.lt.s32.totalorder %s21, 5
      %p209 = pnand %p207, %p208
      %p210 = pneg %p209
      // Predicated region
      $region9: #{tpu_custom_call.1} parent=5 // pred_check
        _
      $region10: #{tpu_custom_call.1} parent=5 // pred_check_branch
        %212 = sbr.rel (%p209) target = $region12
      $region11: #{tpu_custom_call.1} parent=5 // pred_region
        %s213 = ssub.s32 %s21, 1
        // Predicated region
        $region13: #{tpu_custom_call.1} parent=11 // pred_check
          %p214 = pneg %p68
        $region14: #{tpu_custom_call.1} parent=11 // pred_check_branch
          %216 = sbr.rel (%p214) target = $region16
        $region15: #{tpu_custom_call.1} parent=11 // pred_region
          %s218 = ssub.s32 2048, 2048
          %219 = vsyncadd [#allocation8], %s218
          %s220 = sshll.u32 [#allocation7], 4
          %s221 = int_to_ptr.vmem [resolvable:$true] %s220
          %226 = dma.hbm_to_vmem [thread:$0]  %s1, 2048, %s221, [#allocation8], 64, 64, 4
        $region16: #{tpu_custom_call.1} parent=11 // pred_fallthru
          _
        // Predicated region
        $region17: #{tpu_custom_call.1} parent=11 // pred_check
          %p227 = pneg %p89
        $region18: #{tpu_custom_call.1} parent=11 // pred_check_branch
          %229 = sbr.rel (%p227) target = $region20
        $region19: #{tpu_custom_call.1} parent=11 // pred_region
          _
        $region20: #{tpu_custom_call.1} parent=11 // pred_fallthru
          _
        // Predicated region
        $region21: #{tpu_custom_call.1} parent=11 // pred_check
          %p230 = pneg %p110
        $region22: #{tpu_custom_call.1} parent=11 // pred_check_branch
          %232 = sbr.rel (%p230) target = $region24
        $region23: #{tpu_custom_call.1} parent=11 // pred_region
          %s234 = ssub.s32 9216, 9216
          %235 = vsyncadd [#allocation8], %s234
          %s236 = sshll.u32 [#allocation9], 4
          %s237 = int_to_ptr.vmem [resolvable:$true] %s236
          %242 = dma.hbm_to_vmem [thread:$0]  %s3, 9216, %s237, [#allocation8], 64, 64, 4
        $region24: #{tpu_custom_call.1} parent=11 // pred_fallthru
          _
        // Predicated region
        $region25: #{tpu_custom_call.1} parent=11 // pred_check
          %p243 = pneg %p131
        $region26: #{tpu_custom_call.1} parent=11 // pred_check_branch
          %245 = sbr.rel (%p243) target = $region28
        $region27: #{tpu_custom_call.1} parent=11 // pred_region
          _
        $region28: #{tpu_custom_call.1} parent=11 // pred_fallthru
          _
        // Predicated region
        $region29: #{tpu_custom_call.1} parent=11 // pred_check
          %p246 = pneg %p152
        $region30: #{tpu_custom_call.1} parent=11 // pred_check_branch
          %248 = sbr.rel (%p246) target = $region32
        $region31: #{tpu_custom_call.1} parent=11 // pred_region
          %s250 = ssub.s32 2048, 2048
          %251 = vsyncadd [#allocation11], %s250
          %s252 = sshll.u32 [#allocation10], 4
          %s253 = int_to_ptr.vmem [resolvable:$true] %s252
          %258 = dma.hbm_to_vmem [thread:$0]  %s5, 2048, %s253, [#allocation11], 128, 128, 8
        $region32: #{tpu_custom_call.1} parent=11 // pred_fallthru
          _
        // Predicated region
        $region33: #{tpu_custom_call.1} parent=11 // pred_check
          %p259 = pneg %p173
        $region34: #{tpu_custom_call.1} parent=11 // pred_check_branch
          %261 = sbr.rel (%p259) target = $region36
        $region35: #{tpu_custom_call.1} parent=11 // pred_region
          _
        $region36: #{tpu_custom_call.1} parent=11 // pred_fallthru
          _
      $region12: #{tpu_custom_call.1} parent=5 // pred_fallthru
        _
      %p262 = scmp.lt.s32.totalorder %s21, 4
      // Predicated region
      $region37: #{tpu_custom_call.1} parent=5 // pred_check
        %p263 = pneg %p262
      $region38: #{tpu_custom_call.1} parent=5 // pred_check_branch
        %265 = sbr.rel (%p263) target = $region40
      $region39: #{tpu_custom_call.1} parent=5 // pred_region
        // Predicated region
        $region41: #{tpu_custom_call.1} parent=39 // pred_check
          %p266 = pneg %p41
        $region42: #{tpu_custom_call.1} parent=39 // pred_check_branch
          %268 = sbr.rel (%p266) target = $region44
        $region43: #{tpu_custom_call.1} parent=39 // pred_region
          %s269 = sand.u32 %s31, 1
          %s270 = scalar_lea.sflag [#allocation5], %s269
          %s271 = sand.u32 %s31, 1
          %s272 = smul.addr %s271, 512
          %s273 = scalar_lea.vmem [#allocation4], %s272
          %s274 = smul.u32 2, %s21
          %s276 = ssub.s32 8192, 8192
          %277 = vsyncadd %s270, %s276
          %s278 = smul.addr %s274, 64
          %s279 = smul.addr %s278, 64
          %s280 = scalar_lea.hbm %s0, %s279
          %s281 = sshll.u32 %s273, 4
          %s282 = int_to_ptr.vmem [resolvable:$true] %s281
          %287 = dma.hbm_to_vmem [thread:$0]  %s280, 8192, %s282, %s270, 128, 128, 8
        $region44: #{tpu_custom_call.1} parent=39 // pred_fallthru
          _
      $region40: #{tpu_custom_call.1} parent=5 // pred_fallthru
        _
      %p288 = scmp.le.s32.totalorder 1, %s21
      %p289 = scmp.lt.s32.totalorder %s21, 5
      %p290 = pnand %p288, %p289
      %p291 = pneg %p290
      // Predicated region
      $region45: #{tpu_custom_call.1} parent=5 // pred_check
        _
      $region46: #{tpu_custom_call.1} parent=5 // pred_check_branch
        %293 = sbr.rel (%p290) target = $region48
      $region47: #{tpu_custom_call.1} parent=5 // pred_region
        %s294 = ssub.s32 %s21, 1
        %s295 = sand.u32 %s34, 1
        %s296 = scalar_lea.sflag [#allocation5], %s295
        %s297 = sand.u32 %s34, 1
        %s298 = smul.addr %s297, 512
        %s299 = scalar_lea.vmem [#allocation4], %s298
        // Predicated region
        $region49: #{tpu_custom_call.1} parent=47 // pred_check
          %p300 = pneg %p47
        $region50: #{tpu_custom_call.1} parent=47 // pred_check_branch
          %302 = sbr.rel (%p300) target = $region52
        $region51: #{tpu_custom_call.1} parent=47 // pred_region
          %303 = dma.done %s296, 8192
        $region52: #{tpu_custom_call.1} parent=47 // pred_fallthru
          _
        // Predicated region
        $region53: #{tpu_custom_call.1} parent=47 // pred_check
          %p304 = pneg %p68
        $region54: #{tpu_custom_call.1} parent=47 // pred_check_branch
          %306 = sbr.rel (%p304) target = $region56
        $region55: #{tpu_custom_call.1} parent=47 // pred_region
          %307 = dma.done [#allocation8], 2048
        $region56: #{tpu_custom_call.1} parent=47 // pred_fallthru
          _
        // Predicated region
        $region57: #{tpu_custom_call.1} parent=47 // pred_check
          %p308 = pneg %p110
        $region58: #{tpu_custom_call.1} parent=47 // pred_check_branch
          %310 = sbr.rel (%p308) target = $region60
        $region59: #{tpu_custom_call.1} parent=47 // pred_region
          %311 = dma.done [#allocation8], 9216
        $region60: #{tpu_custom_call.1} parent=47 // pred_fallthru
          _
        // Predicated region
        $region61: #{tpu_custom_call.1} parent=47 // pred_check
          %p312 = pneg %p152
        $region62: #{tpu_custom_call.1} parent=47 // pred_check_branch
          %314 = sbr.rel (%p312) target = $region64
        $region63: #{tpu_custom_call.1} parent=47 // pred_region
          %315 = dma.done [#allocation11], 2048
        $region64: #{tpu_custom_call.1} parent=47 // pred_fallthru
          _
        %s316 = sand.u32 %s34, 1
        %s317 = scalar_lea.sflag [#allocation5], %s316
        %s318 = sand.u32 %s34, 1
        %s319 = smul.addr %s318, 512
        %s320 = scalar_lea.vmem [#allocation4], %s319
        %p321 = pneg %p47
        %p322 = pneg %p44
        %p323 = pneg %p68
        %p324 = pneg %p65
        %p325 = pneg %p89
        %p326 = pneg %p86
        %p327 = pneg %p110
        %p328 = pneg %p107
        %p329 = pneg %p131
        %p330 = pneg %p128
        %p331 = pneg %p152
        %p332 = pneg %p149
        %p333 = pneg %p173
        %p334 = pneg %p170
        %p335 = pneg %p199
        %p336 = pneg %p196
        %s337 = sand.u32 %s186, 1
        %s338 = scalar_lea.sflag [#allocation6], %s337
        %s339 = sand.u32 %s186, 1
        %s340 = smul.addr %s339, 512
        %s341 = scalar_lea.vmem [#allocation12], %s340
        %s342 = smul.u32 2, %s26
        %s343 = smul.u32 2, %s26
        %345 = vst [vmem:[#allocation2] sm:$0xf] 0
        %346 = vst [vmem:[#allocation2 + $0x4] sm:$0xf] 0
        %347 = vst [vmem:[#allocation2 + $0x8] sm:$0x1] 0
        %348 = vst [vmem:[#allocation2 + $0xc] sm:$0xf] 0
        %349 = vst [vmem:[#allocation2 + $0x10] sm:$0xf] 0
        %350 = vst [vmem:[#allocation2 + $0x14] sm:$0x1] 0
        %351 = vst [vmem:[#allocation2 + $0x18] sm:$0xf] 0
        %352 = vst [vmem:[#allocation2 + $0x1c] sm:$0xf] 0
        %353 = vst [vmem:[#allocation2 + $0x20] sm:$0x1] 0
        %354 = vst [vmem:[#allocation2 + $0x24] sm:$0xf] 0
        %355 = vst [vmem:[#allocation2 + $0x28] sm:$0xf] 0
        %356 = vst [vmem:[#allocation2 + $0x2c] sm:$0x1] 0
        %357 = vst [vmem:[#allocation2 + $0x30] sm:$0xf] 0
        %358 = vst [vmem:[#allocation2 + $0x34] sm:$0xf] 0
        %359 = vst [vmem:[#allocation2 + $0x38] sm:$0x1] 0
        %360 = vst [vmem:[#allocation2 + $0x3c] sm:$0xf] 0
        %361 = vst [vmem:[#allocation2 + $0x40] sm:$0xf] 0
        %362 = vst [vmem:[#allocation2 + $0x44] sm:$0x1] 0
        %363 = vst [vmem:[#allocation2 + $0x48] sm:$0xf] 0
        %364 = vst [vmem:[#allocation2 + $0x4c] sm:$0xf] 0
        %365 = vst [vmem:[#allocation2 + $0x50] sm:$0x1] 0
        %366 = vst [vmem:[#allocation2 + $0x54] sm:$0xf] 0
        %367 = vst [vmem:[#allocation2 + $0x58] sm:$0xf] 0
        %368 = vst [vmem:[#allocation2 + $0x5c] sm:$0x1] 0
        %369 = vst [vmem:[#allocation2 + $0x60] sm:$0xf] 0
        %370 = vst [vmem:[#allocation2 + $0x64] sm:$0xf] 0
        %371 = vst [vmem:[#allocation2 + $0x68] sm:$0x1] 0
        %372 = vst [vmem:[#allocation2 + $0x6c] sm:$0xf] 0
        %373 = vst [vmem:[#allocation2 + $0x70] sm:$0xf] 0
        %374 = vst [vmem:[#allocation2 + $0x74] sm:$0x1] 0
        %375 = vst [vmem:[#allocation2 + $0x78] sm:$0xf] 0
        %376 = vst [vmem:[#allocation2 + $0x7c] sm:$0xf] 0
        %377 = vst [vmem:[#allocation2 + $0x80] sm:$0x1] 0
        %378 = vst [vmem:[#allocation2 + $0x84] sm:$0xf] 0
        %379 = vst [vmem:[#allocation2 + $0x88] sm:$0xf] 0
        %380 = vst [vmem:[#allocation2 + $0x8c] sm:$0x1] 0
        %381 = vst [vmem:[#allocation2 + $0x90] sm:$0xf] 0
        %382 = vst [vmem:[#allocation2 + $0x94] sm:$0xf] 0
        %383 = vst [vmem:[#allocation2 + $0x98] sm:$0x1] 0
        %384 = vst [vmem:[#allocation2 + $0x9c] sm:$0xf] 0
        %385 = vst [vmem:[#allocation2 + $0xa0] sm:$0xf] 0
        %386 = vst [vmem:[#allocation2 + $0xa4] sm:$0x1] 0
        %387 = vst [vmem:[#allocation2 + $0xa8] sm:$0xf] 0
        %388 = vst [vmem:[#allocation2 + $0xac] sm:$0xf] 0
        %389 = vst [vmem:[#allocation2 + $0xb0] sm:$0x1] 0
        %390 = vst [vmem:[#allocation2 + $0xb4] sm:$0xf] 0
        %391 = vst [vmem:[#allocation2 + $0xb8] sm:$0xf] 0
        %392 = vst [vmem:[#allocation2 + $0xbc] sm:$0x1] 0
        %393 = vst [vmem:[#allocation2 + $0xc0] sm:$0xf] 0
        %394 = vst [vmem:[#allocation2 + $0xc4] sm:$0xf] 0
        %395 = vst [vmem:[#allocation2 + $0xc8] sm:$0x1] 0
        %396 = vst [vmem:[#allocation2 + $0xcc] sm:$0xf] 0
        %397 = vst [vmem:[#allocation2 + $0xd0] sm:$0xf] 0
        %398 = vst [vmem:[#allocation2 + $0xd4] sm:$0x1] 0
        %399 = vst [vmem:[#allocation2 + $0xd8] sm:$0xf] 0
        %400 = vst [vmem:[#allocation2 + $0xdc] sm:$0xf] 0
        %401 = vst [vmem:[#allocation2 + $0xe0] sm:$0x1] 0
        %402 = vst [vmem:[#allocation2 + $0xe4] sm:$0xf] 0
        %403 = vst [vmem:[#allocation2 + $0xe8] sm:$0xf] 0
        %404 = vst [vmem:[#allocation2 + $0xec] sm:$0x1] 0
        %405 = vst [vmem:[#allocation2 + $0xf0] sm:$0xf] 0
        %406 = vst [vmem:[#allocation2 + $0xf4] sm:$0xf] 0
        %407 = vst [vmem:[#allocation2 + $0xf8] sm:$0x1] 0
        %408 = vst [vmem:[#allocation2 + $0xfc] sm:$0xf] 0
        %409 = vst [vmem:[#allocation2 + $0x100] sm:$0xf] 0
        %410 = vst [vmem:[#allocation2 + $0x104] sm:$0x1] 0
        %411 = vst [vmem:[#allocation2 + $0x108] sm:$0xf] 0
        %412 = vst [vmem:[#allocation2 + $0x10c] sm:$0xf] 0
        %413 = vst [vmem:[#allocation2 + $0x110] sm:$0x1] 0
        %414 = vst [vmem:[#allocation2 + $0x114] sm:$0xf] 0
        %415 = vst [vmem:[#allocation2 + $0x118] sm:$0xf] 0
        %416 = vst [vmem:[#allocation2 + $0x11c] sm:$0x1] 0
        %417 = vst [vmem:[#allocation2 + $0x120] sm:$0xf] 0
        %418 = vst [vmem:[#allocation2 + $0x124] sm:$0xf] 0
        %419 = vst [vmem:[#allocation2 + $0x128] sm:$0x1] 0
        %420 = vst [vmem:[#allocation2 + $0x12c] sm:$0xf] 0
        %421 = vst [vmem:[#allocation2 + $0x130] sm:$0xf] 0
        %422 = vst [vmem:[#allocation2 + $0x134] sm:$0x1] 0
        %423 = vst [vmem:[#allocation2 + $0x138] sm:$0xf] 0
        %424 = vst [vmem:[#allocation2 + $0x13c] sm:$0xf] 0
        %425 = vst [vmem:[#allocation2 + $0x140] sm:$0x1] 0
        %426 = vst [vmem:[#allocation2 + $0x144] sm:$0xf] 0
        %427 = vst [vmem:[#allocation2 + $0x148] sm:$0xf] 0
        %428 = vst [vmem:[#allocation2 + $0x14c] sm:$0x1] 0
        %429 = vst [vmem:[#allocation2 + $0x150] sm:$0xf] 0
        %430 = vst [vmem:[#allocation2 + $0x154] sm:$0xf] 0
        %431 = vst [vmem:[#allocation2 + $0x158] sm:$0x1] 0
        %432 = vst [vmem:[#allocation2 + $0x15c] sm:$0xf] 0
        %433 = vst [vmem:[#allocation2 + $0x160] sm:$0xf] 0
        %434 = vst [vmem:[#allocation2 + $0x164] sm:$0x1] 0
        %435 = vst [vmem:[#allocation2 + $0x168] sm:$0xf] 0
        %436 = vst [vmem:[#allocation2 + $0x16c] sm:$0xf] 0
        %437 = vst [vmem:[#allocation2 + $0x170] sm:$0x1] 0
        %438 = vst [vmem:[#allocation2 + $0x174] sm:$0xf] 0
        %439 = vst [vmem:[#allocation2 + $0x178] sm:$0xf] 0
        %440 = vst [vmem:[#allocation2 + $0x17c] sm:$0x1] 0
        %441 = vst [vmem:[#allocation2 + $0x180] sm:$0xf] 0
        %442 = vst [vmem:[#allocation2 + $0x184] sm:$0xf] 0
        %443 = vst [vmem:[#allocation2 + $0x188] sm:$0x1] 0
        %444 = vst [vmem:[#allocation2 + $0x18c] sm:$0xf] 0
        %445 = vst [vmem:[#allocation2 + $0x190] sm:$0xf] 0
        %446 = vst [vmem:[#allocation2 + $0x194] sm:$0x1] 0
        %447 = vst [vmem:[#allocation2 + $0x198] sm:$0xf] 0
        %448 = vst [vmem:[#allocation2 + $0x19c] sm:$0xf] 0
        %449 = vst [vmem:[#allocation2 + $0x1a0] sm:$0x1] 0
        %450 = vst [vmem:[#allocation2 + $0x1a4] sm:$0xf] 0
        %451 = vst [vmem:[#allocation2 + $0x1a8] sm:$0xf] 0
        %452 = vst [vmem:[#allocation2 + $0x1ac] sm:$0x1] 0
        %v453 = vld [vmem:[%s299] sm:$0xff]
        %v454 = vld [vmem:[%s299 + $0x8] sm:$0xff]
        %v455 = vld [vmem:[%s299 + $0x10] sm:$0xff]
        %v456 = vld [vmem:[%s299 + $0x18] sm:$0xff]
        %v457 = vld [vmem:[%s299 + $0x20] sm:$0xff]
        %v458 = vld [vmem:[%s299 + $0x28] sm:$0xff]
        %v459 = vld [vmem:[%s299 + $0x30] sm:$0xff]
        %v460 = vld [vmem:[%s299 + $0x38] sm:$0xff]
        %v461 = vld [vmem:[%s299 + $0x40] sm:$0xff]
        %v462 = vld [vmem:[%s299 + $0x48] sm:$0xff]
        %v463 = vld [vmem:[%s299 + $0x50] sm:$0xff]
        %v464 = vld [vmem:[%s299 + $0x58] sm:$0xff]
        %v465 = vld [vmem:[%s299 + $0x60] sm:$0xff]
        %v466 = vld [vmem:[%s299 + $0x68] sm:$0xff]
        %v467 = vld [vmem:[%s299 + $0x70] sm:$0xff]
        %v468 = vld [vmem:[%s299 + $0x78] sm:$0xff]
        %v469 = vld [vmem:[%s299 + $0x80] sm:$0xff]
        %v470 = vld [vmem:[%s299 + $0x88] sm:$0xff]
        %v471 = vld [vmem:[%s299 + $0x90] sm:$0xff]
        %v472 = vld [vmem:[%s299 + $0x98] sm:$0xff]
        %v473 = vld [vmem:[%s299 + $0xa0] sm:$0xff]
        %v474 = vld [vmem:[%s299 + $0xa8] sm:$0xff]
        %v475 = vld [vmem:[%s299 + $0xb0] sm:$0xff]
        %v476 = vld [vmem:[%s299 + $0xb8] sm:$0xff]
        %v477 = vld [vmem:[%s299 + $0xc0] sm:$0xff]
        %v478 = vld [vmem:[%s299 + $0xc8] sm:$0xff]
        %v479 = vld [vmem:[%s299 + $0xd0] sm:$0xff]
        %v480 = vld [vmem:[%s299 + $0xd8] sm:$0xff]
        %v481 = vld [vmem:[%s299 + $0xe0] sm:$0xff]
        %v482 = vld [vmem:[%s299 + $0xe8] sm:$0xff]
        %v483 = vld [vmem:[%s299 + $0xf0] sm:$0xff]
        %v484 = vld [vmem:[%s299 + $0xf8] sm:$0xff]
        %v485 = vld [vmem:[%s299 + $0x100] sm:$0xff]
        %v486 = vld [vmem:[%s299 + $0x108] sm:$0xff]
        %v487 = vld [vmem:[%s299 + $0x110] sm:$0xff]
        %v488 = vld [vmem:[%s299 + $0x118] sm:$0xff]
        %v489 = vld [vmem:[%s299 + $0x120] sm:$0xff]
        %v490 = vld [vmem:[%s299 + $0x128] sm:$0xff]
        %v491 = vld [vmem:[%s299 + $0x130] sm:$0xff]
        %v492 = vld [vmem:[%s299 + $0x138] sm:$0xff]
        %v493 = vld [vmem:[%s299 + $0x140] sm:$0xff]
        %v494 = vld [vmem:[%s299 + $0x148] sm:$0xff]
        %v495 = vld [vmem:[%s299 + $0x150] sm:$0xff]
        %v496 = vld [vmem:[%s299 + $0x158] sm:$0xff]
        %v497 = vld [vmem:[%s299 + $0x160] sm:$0xff]
        %v498 = vld [vmem:[%s299 + $0x168] sm:$0xff]
        %v499 = vld [vmem:[%s299 + $0x170] sm:$0xff]
        %v500 = vld [vmem:[%s299 + $0x178] sm:$0xff]
        %v501 = vld [vmem:[%s299 + $0x180] sm:$0xff]
        %v502 = vld [vmem:[%s299 + $0x188] sm:$0xff]
        %v503 = vld [vmem:[%s299 + $0x190] sm:$0xff]
        %v504 = vld [vmem:[%s299 + $0x198] sm:$0xff]
        %v505 = vld [vmem:[%s299 + $0x1a0] sm:$0xff]
        %v506 = vld [vmem:[%s299 + $0x1a8] sm:$0xff]
        %v507 = vld [vmem:[%s299 + $0x1b0] sm:$0xff]
        %v508 = vld [vmem:[%s299 + $0x1b8] sm:$0xff]
        %v509 = vld [vmem:[%s299 + $0x1c0] sm:$0xff]
        %v510 = vld [vmem:[%s299 + $0x1c8] sm:$0xff]
        %v511 = vld [vmem:[%s299 + $0x1d0] sm:$0xff]
        %v512 = vld [vmem:[%s299 + $0x1d8] sm:$0xff]
        %v513 = vld [vmem:[%s299 + $0x1e0] sm:$0xff]
        %v514 = vld [vmem:[%s299 + $0x1e8] sm:$0xff]
        %v515 = vld [vmem:[%s299 + $0x1f0] sm:$0xff]
        %v516 = vld [vmem:[%s299 + $0x1f8] sm:$0xff]
        %v517 = vunpack.c.l.bf16 %v453
        %v518 = vunpack.c.h.bf16 %v453
        %v519 = vunpack.c.l.bf16 %v454
        %v520 = vunpack.c.h.bf16 %v454
        %v521 = vunpack.c.l.bf16 %v455
        %v522 = vunpack.c.h.bf16 %v455
        %v523 = vunpack.c.l.bf16 %v456
        %v524 = vunpack.c.h.bf16 %v456
        %v525 = vunpack.c.l.bf16 %v457
        %v526 = vunpack.c.h.bf16 %v457
        %v527 = vunpack.c.l.bf16 %v458
        %v528 = vunpack.c.h.bf16 %v458
        %v529 = vunpack.c.l.bf16 %v459
        %v530 = vunpack.c.h.bf16 %v459
        %v531 = vunpack.c.l.bf16 %v460
        %v532 = vunpack.c.h.bf16 %v460
        %v533 = vunpack.c.l.bf16 %v461
        %v534 = vunpack.c.h.bf16 %v461
        %v535 = vunpack.c.l.bf16 %v462
        %v536 = vunpack.c.h.bf16 %v462
        %v537 = vunpack.c.l.bf16 %v463
        %v538 = vunpack.c.h.bf16 %v463
        %v539 = vunpack.c.l.bf16 %v464
        %v540 = vunpack.c.h.bf16 %v464
        %v541 = vunpack.c.l.bf16 %v465
        %v542 = vunpack.c.h.bf16 %v465
        %v543 = vunpack.c.l.bf16 %v466
        %v544 = vunpack.c.h.bf16 %v466
        %v545 = vunpack.c.l.bf16 %v467
        %v546 = vunpack.c.h.bf16 %v467
        %v547 = vunpack.c.l.bf16 %v468
        %v548 = vunpack.c.h.bf16 %v468
        %v549 = vunpack.c.l.bf16 %v469
        %v550 = vunpack.c.h.bf16 %v469
        %v551 = vunpack.c.l.bf16 %v470
        %v552 = vunpack.c.h.bf16 %v470
        %v553 = vunpack.c.l.bf16 %v471
        %v554 = vunpack.c.h.bf16 %v471
        %v555 = vunpack.c.l.bf16 %v472
        %v556 = vunpack.c.h.bf16 %v472
        %v557 = vunpack.c.l.bf16 %v473
        %v558 = vunpack.c.h.bf16 %v473
        %v559 = vunpack.c.l.bf16 %v474
        %v560 = vunpack.c.h.bf16 %v474
        %v561 = vunpack.c.l.bf16 %v475
        %v562 = vunpack.c.h.bf16 %v475
        %v563 = vunpack.c.l.bf16 %v476
        %v564 = vunpack.c.h.bf16 %v476
        %v565 = vunpack.c.l.bf16 %v477
        %v566 = vunpack.c.h.bf16 %v477
        %v567 = vunpack.c.l.bf16 %v478
        %v568 = vunpack.c.h.bf16 %v478
        %v569 = vunpack.c.l.bf16 %v479
        %v570 = vunpack.c.h.bf16 %v479
        %v571 = vunpack.c.l.bf16 %v480
        %v572 = vunpack.c.h.bf16 %v480
        %v573 = vunpack.c.l.bf16 %v481
        %v574 = vunpack.c.h.bf16 %v481
        %v575 = vunpack.c.l.bf16 %v482
        %v576 = vunpack.c.h.bf16 %v482
        %v577 = vunpack.c.l.bf16 %v483
        %v578 = vunpack.c.h.bf16 %v483
        %v579 = vunpack.c.l.bf16 %v484
        %v580 = vunpack.c.h.bf16 %v484
        %v581 = vunpack.c.l.bf16 %v485
        %v582 = vunpack.c.h.bf16 %v485
        %v583 = vunpack.c.l.bf16 %v486
        %v584 = vunpack.c.h.bf16 %v486
        %v585 = vunpack.c.l.bf16 %v487
        %v586 = vunpack.c.h.bf16 %v487
        %v587 = vunpack.c.l.bf16 %v488
        %v588 = vunpack.c.h.bf16 %v488
        %v589 = vunpack.c.l.bf16 %v489
        %v590 = vunpack.c.h.bf16 %v489
        %v591 = vunpack.c.l.bf16 %v490
        %v592 = vunpack.c.h.bf16 %v490
        %v593 = vunpack.c.l.bf16 %v491
        %v594 = vunpack.c.h.bf16 %v491
        %v595 = vunpack.c.l.bf16 %v492
        %v596 = vunpack.c.h.bf16 %v492
        %v597 = vunpack.c.l.bf16 %v493
        %v598 = vunpack.c.h.bf16 %v493
        %v599 = vunpack.c.l.bf16 %v494
        %v600 = vunpack.c.h.bf16 %v494
        %v601 = vunpack.c.l.bf16 %v495
        %v602 = vunpack.c.h.bf16 %v495
        %v603 = vunpack.c.l.bf16 %v496
        %v604 = vunpack.c.h.bf16 %v496
        %v605 = vunpack.c.l.bf16 %v497
        %v606 = vunpack.c.h.bf16 %v497
        %v607 = vunpack.c.l.bf16 %v498
        %v608 = vunpack.c.h.bf16 %v498
        %v609 = vunpack.c.l.bf16 %v499
        %v610 = vunpack.c.h.bf16 %v499
        %v611 = vunpack.c.l.bf16 %v500
        %v612 = vunpack.c.h.bf16 %v500
        %v613 = vunpack.c.l.bf16 %v501
        %v614 = vunpack.c.h.bf16 %v501
        %v615 = vunpack.c.l.bf16 %v502
        %v616 = vunpack.c.h.bf16 %v502
        %v617 = vunpack.c.l.bf16 %v503
        %v618 = vunpack.c.h.bf16 %v503
        %v619 = vunpack.c.l.bf16 %v504
        %v620 = vunpack.c.h.bf16 %v504
        %v621 = vunpack.c.l.bf16 %v505
        %v622 = vunpack.c.h.bf16 %v505
        %v623 = vunpack.c.l.bf16 %v506
        %v624 = vunpack.c.h.bf16 %v506
        %v625 = vunpack.c.l.bf16 %v507
        %v626 = vunpack.c.h.bf16 %v507
        %v627 = vunpack.c.l.bf16 %v508
        %v628 = vunpack.c.h.bf16 %v508
        %v629 = vunpack.c.l.bf16 %v509
        %v630 = vunpack.c.h.bf16 %v509
        %v631 = vunpack.c.l.bf16 %v510
        %v632 = vunpack.c.h.bf16 %v510
        %v633 = vunpack.c.l.bf16 %v511
        %v634 = vunpack.c.h.bf16 %v511
        %v635 = vunpack.c.l.bf16 %v512
        %v636 = vunpack.c.h.bf16 %v512
        %v637 = vunpack.c.l.bf16 %v513
        %v638 = vunpack.c.h.bf16 %v513
        %v639 = vunpack.c.l.bf16 %v514
        %v640 = vunpack.c.h.bf16 %v514
        %v641 = vunpack.c.l.bf16 %v515
        %v642 = vunpack.c.h.bf16 %v515
        %v643 = vunpack.c.l.bf16 %v516
        %v644 = vunpack.c.h.bf16 %v516
        %v645 = vld [vmem:[#allocation7] sm:$0xf]
        %v646 = vld [vmem:[#allocation7 + $0x4] sm:$0xf]
        %v647 = vld [vmem:[#allocation7 + $0x8] sm:$0xf]
        %v648 = vld [vmem:[#allocation7 + $0xc] sm:$0xf]
        %v649 = vld [vmem:[#allocation7 + $0x10] sm:$0xf]
        %v650 = vld [vmem:[#allocation7 + $0x14] sm:$0xf]
        %v651 = vld [vmem:[#allocation7 + $0x18] sm:$0xf]
        %v652 = vld [vmem:[#allocation7 + $0x1c] sm:$0xf]
        %v653 = vld [vmem:[#allocation7 + $0x20] sm:$0xf]
        %v654 = vld [vmem:[#allocation7 + $0x24] sm:$0xf]
        %v655 = vld [vmem:[#allocation7 + $0x28] sm:$0xf]
        %v656 = vld [vmem:[#allocation7 + $0x2c] sm:$0xf]
        %v657 = vld [vmem:[#allocation7 + $0x30] sm:$0xf]
        %v658 = vld [vmem:[#allocation7 + $0x34] sm:$0xf]
        %v659 = vld [vmem:[#allocation7 + $0x38] sm:$0xf]
        %v660 = vld [vmem:[#allocation7 + $0x3c] sm:$0xf]
        %v661 = vld [vmem:[#allocation7 + $0x40] sm:$0xf]
        %v662 = vld [vmem:[#allocation7 + $0x44] sm:$0xf]
        %v663 = vld [vmem:[#allocation7 + $0x48] sm:$0xf]
        %v664 = vld [vmem:[#allocation7 + $0x4c] sm:$0xf]
        %v665 = vld [vmem:[#allocation7 + $0x50] sm:$0xf]
        %v666 = vld [vmem:[#allocation7 + $0x54] sm:$0xf]
        %v667 = vld [vmem:[#allocation7 + $0x58] sm:$0xf]
        %v668 = vld [vmem:[#allocation7 + $0x5c] sm:$0xf]
        %v669 = vld [vmem:[#allocation7 + $0x60] sm:$0xf]
        %v670 = vld [vmem:[#allocation7 + $0x64] sm:$0xf]
        %v671 = vld [vmem:[#allocation7 + $0x68] sm:$0xf]
        %v672 = vld [vmem:[#allocation7 + $0x6c] sm:$0xf]
        %v673 = vld [vmem:[#allocation7 + $0x70] sm:$0xf]
        %v674 = vld [vmem:[#allocation7 + $0x74] sm:$0xf]
        %v675 = vld [vmem:[#allocation7 + $0x78] sm:$0xf]
        %v676 = vld [vmem:[#allocation7 + $0x7c] sm:$0xf]
        %v677 = vld [vmem:[%s2] sm:$0x1]
        %v679 = vlaneseq
        %v680 = vshrl.u32 %v679, 7
        %v681 = vsub.s32 0, %v680
        %v682 = vrot.slane %v677, %v681
        %v748 = vunpack.c.l.b16 %v453
        %v749 = vunpack.c.h.b16 %v453
        %v750 = vunpack.c.l.b16 %v454
        %v751 = vunpack.c.h.b16 %v454
        %v752 = vunpack.c.l.b16 %v455
        %v753 = vunpack.c.h.b16 %v455
        %v754 = vunpack.c.l.b16 %v456
        %v755 = vunpack.c.h.b16 %v456
        %v756 = vunpack.c.l.b16 %v457
        %v757 = vunpack.c.h.b16 %v457
        %v758 = vunpack.c.l.b16 %v458
        %v759 = vunpack.c.h.b16 %v458
        %v760 = vunpack.c.l.b16 %v459
        %v761 = vunpack.c.h.b16 %v459
        %v762 = vunpack.c.l.b16 %v460
        %v763 = vunpack.c.h.b16 %v460
        %v764 = vunpack.c.l.b16 %v461
        %v765 = vunpack.c.h.b16 %v461
        %v766 = vunpack.c.l.b16 %v462
        %v767 = vunpack.c.h.b16 %v462
        %v768 = vunpack.c.l.b16 %v463
        %v769 = vunpack.c.h.b16 %v463
        %v770 = vunpack.c.l.b16 %v464
        %v771 = vunpack.c.h.b16 %v464
        %v772 = vunpack.c.l.b16 %v465
        %v773 = vunpack.c.h.b16 %v465
        %v774 = vunpack.c.l.b16 %v466
        %v775 = vunpack.c.h.b16 %v466
        %v776 = vunpack.c.l.b16 %v467
        %v777 = vunpack.c.h.b16 %v467
        %v778 = vunpack.c.l.b16 %v468
        %v779 = vunpack.c.h.b16 %v468
        %v780 = vunpack.c.l.b16 %v469
        %v781 = vunpack.c.h.b16 %v469
        %v782 = vunpack.c.l.b16 %v470
        %v783 = vunpack.c.h.b16 %v470
        %v784 = vunpack.c.l.b16 %v471
        %v785 = vunpack.c.h.b16 %v471
        %v786 = vunpack.c.l.b16 %v472
        %v787 = vunpack.c.h.b16 %v472
        %v788 = vunpack.c.l.b16 %v473
        %v789 = vunpack.c.h.b16 %v473
        %v790 = vunpack.c.l.b16 %v474
        %v791 = vunpack.c.h.b16 %v474
        %v792 = vunpack.c.l.b16 %v475
        %v793 = vunpack.c.h.b16 %v475
        %v794 = vunpack.c.l.b16 %v476
        %v795 = vunpack.c.h.b16 %v476
        %v796 = vunpack.c.l.b16 %v477
        %v797 = vunpack.c.h.b16 %v477
        %v798 = vunpack.c.l.b16 %v478
        %v799 = vunpack.c.h.b16 %v478
        %v800 = vunpack.c.l.b16 %v479
        %v801 = vunpack.c.h.b16 %v479
        %v802 = vunpack.c.l.b16 %v480
        %v803 = vunpack.c.h.b16 %v480
        %v804 = vunpack.c.l.b16 %v481
        %v805 = vunpack.c.h.b16 %v481
        %v806 = vunpack.c.l.b16 %v482
        %v807 = vunpack.c.h.b16 %v482
        %v808 = vunpack.c.l.b16 %v483
        %v809 = vunpack.c.h.b16 %v483
        %v810 = vunpack.c.l.b16 %v484
        %v811 = vunpack.c.h.b16 %v484
        %v812 = vunpack.c.l.b16 %v485
        %v813 = vunpack.c.h.b16 %v485
        %v814 = vunpack.c.l.b16 %v486
        %v815 = vunpack.c.h.b16 %v486
        %v816 = vunpack.c.l.b16 %v487
        %v817 = vunpack.c.h.b16 %v487
        %v818 = vunpack.c.l.b16 %v488
        %v819 = vunpack.c.h.b16 %v488
        %v820 = vunpack.c.l.b16 %v489
        %v821 = vunpack.c.h.b16 %v489
        %v822 = vunpack.c.l.b16 %v490
        %v823 = vunpack.c.h.b16 %v490
        %v824 = vunpack.c.l.b16 %v491
        %v825 = vunpack.c.h.b16 %v491
        %v826 = vunpack.c.l.b16 %v492
        %v827 = vunpack.c.h.b16 %v492
        %v828 = vunpack.c.l.b16 %v493
        %v829 = vunpack.c.h.b16 %v493
        %v830 = vunpack.c.l.b16 %v494
        %v831 = vunpack.c.h.b16 %v494
        %v832 = vunpack.c.l.b16 %v495
        %v833 = vunpack.c.h.b16 %v495
        %v834 = vunpack.c.l.b16 %v496
        %v835 = vunpack.c.h.b16 %v496
        %v836 = vunpack.c.l.b16 %v497
        %v837 = vunpack.c.h.b16 %v497
        %v838 = vunpack.c.l.b16 %v498
        %v839 = vunpack.c.h.b16 %v498
        %v840 = vunpack.c.l.b16 %v499
        %v841 = vunpack.c.h.b16 %v499
        %v842 = vunpack.c.l.b16 %v500
        %v843 = vunpack.c.h.b16 %v500
        %v844 = vunpack.c.l.b16 %v501
        %v845 = vunpack.c.h.b16 %v501
        %v846 = vunpack.c.l.b16 %v502
        %v847 = vunpack.c.h.b16 %v502
        %v848 = vunpack.c.l.b16 %v503
        %v849 = vunpack.c.h.b16 %v503
        %v850 = vunpack.c.l.b16 %v504
        %v851 = vunpack.c.h.b16 %v504
        %v852 = vunpack.c.l.b16 %v505
        %v853 = vunpack.c.h.b16 %v505
        %v854 = vunpack.c.l.b16 %v506
        %v855 = vunpack.c.h.b16 %v506
        %v856 = vunpack.c.l.b16 %v507
        %v857 = vunpack.c.h.b16 %v507
        %v858 = vunpack.c.l.b16 %v508
        %v859 = vunpack.c.h.b16 %v508
        %v860 = vunpack.c.l.b16 %v509
        %v861 = vunpack.c.h.b16 %v509
        %v862 = vunpack.c.l.b16 %v510
        %v863 = vunpack.c.h.b16 %v510
        %v864 = vunpack.c.l.b16 %v511
        %v865 = vunpack.c.h.b16 %v511
        %v866 = vunpack.c.l.b16 %v512
        %v867 = vunpack.c.h.b16 %v512
        %v868 = vunpack.c.l.b16 %v513
        %v869 = vunpack.c.h.b16 %v513
        %v870 = vunpack.c.l.b16 %v514
        %v871 = vunpack.c.h.b16 %v514
        %v872 = vunpack.c.l.b16 %v515
        %v873 = vunpack.c.h.b16 %v515
        %v874 = vunpack.c.l.b16 %v516
        %v875 = vunpack.c.h.b16 %v516
        %v876 = vpack.c.b16 %v750, %v748
        %v877 = vpack.c.b16 %v751, %v749
        %v878 = vpack.c.b16 %v754, %v752
        %v879 = vpack.c.b16 %v755, %v753
        %v880 = vpack.c.b16 %v758, %v756
        %v881 = vpack.c.b16 %v759, %v757
        %v882 = vpack.c.b16 %v762, %v760
        %v883 = vpack.c.b16 %v763, %v761
        %v884 = vpack.c.b16 %v766, %v764
        %v885 = vpack.c.b16 %v767, %v765
        %v886 = vpack.c.b16 %v770, %v768
        %v887 = vpack.c.b16 %v771, %v769
        %v888 = vpack.c.b16 %v774, %v772
        %v889 = vpack.c.b16 %v775, %v773
        %v890 = vpack.c.b16 %v778, %v776
        %v891 = vpack.c.b16 %v779, %v777
        %v892 = vpack.c.b16 %v782, %v780
        %v893 = vpack.c.b16 %v783, %v781
        %v894 = vpack.c.b16 %v786, %v784
        %v895 = vpack.c.b16 %v787, %v785
        %v896 = vpack.c.b16 %v790, %v788
        %v897 = vpack.c.b16 %v791, %v789
        %v898 = vpack.c.b16 %v794, %v792
        %v899 = vpack.c.b16 %v795, %v793
        %v900 = vpack.c.b16 %v798, %v796
        %v901 = vpack.c.b16 %v799, %v797
        %v902 = vpack.c.b16 %v802, %v800
        %v903 = vpack.c.b16 %v803, %v801
        %v904 = vpack.c.b16 %v806, %v804
        %v905 = vpack.c.b16 %v807, %v805
        %v906 = vpack.c.b16 %v810, %v808
        %v907 = vpack.c.b16 %v811, %v809
        %v908 = vpack.c.b16 %v814, %v812
        %v909 = vpack.c.b16 %v815, %v813
        %v910 = vpack.c.b16 %v818, %v816
        %v911 = vpack.c.b16 %v819, %v817
        %v912 = vpack.c.b16 %v822, %v820
        %v913 = vpack.c.b16 %v823, %v821
        %v914 = vpack.c.b16 %v826, %v824
        %v915 = vpack.c.b16 %v827, %v825
        %v916 = vpack.c.b16 %v830, %v828
        %v917 = vpack.c.b16 %v831, %v829
        %v918 = vpack.c.b16 %v834, %v832
        %v919 = vpack.c.b16 %v835, %v833
        %v920 = vpack.c.b16 %v838, %v836
        %v921 = vpack.c.b16 %v839, %v837
        %v922 = vpack.c.b16 %v842, %v840
        %v923 = vpack.c.b16 %v843, %v841
        %v924 = vpack.c.b16 %v846, %v844
        %v925 = vpack.c.b16 %v847, %v845
        %v926 = vpack.c.b16 %v850, %v848
        %v927 = vpack.c.b16 %v851, %v849
        %v928 = vpack.c.b16 %v854, %v852
        %v929 = vpack.c.b16 %v855, %v853
        %v930 = vpack.c.b16 %v858, %v856
        %v931 = vpack.c.b16 %v859, %v857
        %v932 = vpack.c.b16 %v862, %v860
        %v933 = vpack.c.b16 %v863, %v861
        %v934 = vpack.c.b16 %v866, %v864
        %v935 = vpack.c.b16 %v867, %v865
        %v936 = vpack.c.b16 %v870, %v868
        %v937 = vpack.c.b16 %v871, %v869
        %v938 = vpack.c.b16 %v874, %v872
        %v939 = vpack.c.b16 %v875, %v873
        %v1036 = vunpack.c.l.b16 %v645
        %v1037 = vunpack.c.l.b16 %v646
        %v1038 = vunpack.c.l.b16 %v647
        %v1039 = vunpack.c.l.b16 %v648
        %v1040 = vunpack.c.l.b16 %v649
        %v1041 = vunpack.c.l.b16 %v650
        %v1042 = vunpack.c.l.b16 %v651
        %v1043 = vunpack.c.l.b16 %v652
        %v1044 = vunpack.c.l.b16 %v653
        %v1045 = vunpack.c.l.b16 %v654
        %v1046 = vunpack.c.l.b16 %v655
        %v1047 = vunpack.c.l.b16 %v656
        %v1048 = vunpack.c.l.b16 %v657
        %v1049 = vunpack.c.l.b16 %v658
        %v1050 = vunpack.c.l.b16 %v659
        %v1051 = vunpack.c.l.b16 %v660
        %v1052 = vunpack.c.l.b16 %v661
        %v1053 = vunpack.c.l.b16 %v662
        %v1054 = vunpack.c.l.b16 %v663
        %v1055 = vunpack.c.l.b16 %v664
        %v1056 = vunpack.c.l.b16 %v665
        %v1057 = vunpack.c.l.b16 %v666
        %v1058 = vunpack.c.l.b16 %v667
        %v1059 = vunpack.c.l.b16 %v668
        %v1060 = vunpack.c.l.b16 %v669
        %v1061 = vunpack.c.l.b16 %v670
        %v1062 = vunpack.c.l.b16 %v671
        %v1063 = vunpack.c.l.b16 %v672
        %v1064 = vunpack.c.l.b16 %v673
        %v1065 = vunpack.c.l.b16 %v674
        %v1066 = vunpack.c.l.b16 %v675
        %v1067 = vunpack.c.l.b16 %v676
        %v1068 = vpack.c.b16 %v1037, %v1036
        %v1069 = vpack.c.b16 %v1039, %v1038
        %v1070 = vpack.c.b16 %v1041, %v1040
        %v1071 = vpack.c.b16 %v1043, %v1042
        %v1072 = vpack.c.b16 %v1045, %v1044
        %v1073 = vpack.c.b16 %v1047, %v1046
        %v1074 = vpack.c.b16 %v1049, %v1048
        %v1075 = vpack.c.b16 %v1051, %v1050
        %v1076 = vpack.c.b16 %v1053, %v1052
        %v1077 = vpack.c.b16 %v1055, %v1054
        %v1078 = vpack.c.b16 %v1057, %v1056
        %v1079 = vpack.c.b16 %v1059, %v1058
        %v1080 = vpack.c.b16 %v1061, %v1060
        %v1081 = vpack.c.b16 %v1063, %v1062
        %v1082 = vpack.c.b16 %v1065, %v1064
        %v1083 = vpack.c.b16 %v1067, %v1066
        %1100 = vmatprep.subr.bf16.mxu0 0
        %1101 = vmatpush1.bf16.msra.mxu0 %v1068
        %1102 = vmatprep.subr.bf16.mxu0 0
        %1103 = vmatpush1.bf16.msra.mxu0 %v1069
        %1104 = vmatprep.subr.bf16.mxu0 0
        %1105 = vmatpush1.bf16.msra.mxu0 %v1070
        %1106 = vmatprep.subr.bf16.mxu0 0
        %1107 = vmatpush1.bf16.msra.mxu0 %v1071
        %1108 = vmatprep.subr.bf16.mxu0 0
        %1109 = vmatpush1.bf16.msra.mxu0 %v1072
        %1110 = vmatprep.subr.bf16.mxu0 0
        %1111 = vmatpush1.bf16.msra.mxu0 %v1073
        %1112 = vmatprep.subr.bf16.mxu0 0
        %1113 = vmatpush1.bf16.msra.mxu0 %v1074
        %1114 = vmatprep.subr.bf16.mxu0 0
        %1115 = vmatpush1.bf16.msra.mxu0 %v1075
        %1116 = vmatprep.subr.bf16.mxu0 0
        %1117 = vmatpush1.bf16.msra.mxu0 %v1076
        %1118 = vmatprep.subr.bf16.mxu0 0
        %1119 = vmatpush1.bf16.msra.mxu0 %v1077
        %1120 = vmatprep.subr.bf16.mxu0 0
        %1121 = vmatpush1.bf16.msra.mxu0 %v1078
        %1122 = vmatprep.subr.bf16.mxu0 0
        %1123 = vmatpush1.bf16.msra.mxu0 %v1079
        %1124 = vmatprep.subr.bf16.mxu0 0
        %1125 = vmatpush1.bf16.msra.mxu0 %v1080
        %1126 = vmatprep.subr.bf16.mxu0 0
        %1127 = vmatpush1.bf16.msra.mxu0 %v1081
        %1128 = vmatprep.subr.bf16.mxu0 0
        %1129 = vmatpush1.bf16.msra.mxu0 %v1082
        %1130 = vmatprep.subr.bf16.mxu0 0
        %1131 = vmatpush1.bf16.msra.mxu0 %v1083
        %1132 = vmatprep.mubr.bf16.mxu0 %v877
        %1133 = vmatmul.mubr.bf16.gmra.mrb[0].mxu0 %v876
        %v1134 = vpop.f32.mrb[0].mxu0
        %v1135 = vadd.f32 %v682, %v1134
        %v1136 = vpop.f32.mrb[0].mxu0
        %v1137 = vpop.f32.mrb[0].mxu0
        %v1138 = vadd.f32 %v682, %v1137
        %v1139 = vpop.f32.mrb[0].mxu0
        %1140 = vmatprep.mubr.bf16.mxu0 %v879
        %1141 = vmatmul.mubr.bf16.gmra.mrb[0].mxu0 %v878
        %v1142 = vpop.f32.mrb[0].mxu0
        %v1143 = vadd.f32 %v682, %v1142
        %v1144 = vpop.f32.mrb[0].mxu0
        %v1145 = vpop.f32.mrb[0].mxu0
        %v1146 = vadd.f32 %v682, %v1145
        %v1147 = vpop.f32.mrb[0].mxu0
        %1148 = vmatprep.mubr.bf16.mxu0 %v881
        %1149 = vmatmul.mubr.bf16.gmra.mrb[0].mxu0 %v880
        %v1150 = vpop.f32.mrb[0].mxu0
        %v1151 = vadd.f32 %v682, %v1150
        %v1152 = vpop.f32.mrb[0].mxu0
        %v1153 = vpop.f32.mrb[0].mxu0
        %v1154 = vadd.f32 %v682, %v1153
        %v1155 = vpop.f32.mrb[0].mxu0
        %1156 = vmatprep.mubr.bf16.mxu0 %v883
        %1157 = vmatmul.mubr.bf16.gmra.mrb[0].mxu0 %v882
        %v1158 = vpop.f32.mrb[0].mxu0
        %v1159 = vadd.f32 %v682, %v1158
        %v1160 = vpop.f32.mrb[0].mxu0
        %v1161 = vpop.f32.mrb[0].mxu0
        %v1162 = vadd.f32 %v682, %v1161
        %v1163 = vpop.f32.mrb[0].mxu0
        %1164 = vmatprep.mubr.bf16.mxu0 %v885
        %1165 = vmatmul.mubr.bf16.gmra.mrb[0].mxu0 %v884
        %v1166 = vpop.f32.mrb[0].mxu0
        %v1167 = vadd.f32 %v682, %v1166
        %v1168 = vpop.f32.mrb[0].mxu0
        %v1169 = vpop.f32.mrb[0].mxu0
        %v1170 = vadd.f32 %v682, %v1169
        %v1171 = vpop.f32.mrb[0].mxu0
        %1172 = vmatprep.mubr.bf16.mxu0 %v887
        %1173 = vmatmul.mubr.bf16.gmra.mrb[0].mxu0 %v886
        %v1174 = vpop.f32.mrb[0].mxu0
        %v1175 = vadd.f32 %v682, %v1174
        %v1176 = vpop.f32.mrb[0].mxu0
        %v1177 = vpop.f32.mrb[0].mxu0
        %v1178 = vadd.f32 %v682, %v1177
        %v1179 = vpop.f32.mrb[0].mxu0
        %1180 = vmatprep.mubr.bf16.mxu0 %v889
        %1181 = vmatmul.mubr.bf16.gmra.mrb[0].mxu0 %v888
        %v1182 = vpop.f32.mrb[0].mxu0
        %v1183 = vadd.f32 %v682, %v1182
        %v1184 = vpop.f32.mrb[0].mxu0
        %v1185 = vpop.f32.mrb[0].mxu0
        %v1186 = vadd.f32 %v682, %v1185
        %v1187 = vpop.f32.mrb[0].mxu0
        %1188 = vmatprep.mubr.bf16.mxu0 %v891
        %1189 = vmatmul.mubr.bf16.gmra.mrb[0].mxu0 %v890
        %v1190 = vpop.f32.mrb[0].mxu0
        %v1191 = vadd.f32 %v682, %v1190
        %v1192 = vpop.f32.mrb[0].mxu0
        %v1193 = vpop.f32.mrb[0].mxu0
        %v1194 = vadd.f32 %v682, %v1193
        %v1195 = vpop.f32.mrb[0].mxu0
        %1196 = vmatprep.mubr.bf16.mxu0 %v893
        %1197 = vmatmul.mubr.bf16.gmra.mrb[0].mxu0 %v892
        %v1198 = vpop.f32.mrb[0].mxu0
        %v1199 = vadd.f32 %v682, %v1198
        %v1200 = vpop.f32.mrb[0].mxu0
        %v1201 = vpop.f32.mrb[0].mxu0
        %v1202 = vadd.f32 %v682, %v1201
        %v1203 = vpop.f32.mrb[0].mxu0
        %1204 = vmatprep.mubr.bf16.mxu0 %v895
        %1205 = vmatmul.mubr.bf16.gmra.mrb[0].mxu0 %v894
        %v1206 = vpop.f32.mrb[0].mxu0
        %v1207 = vadd.f32 %v682, %v1206
        %v1208 = vpop.f32.mrb[0].mxu0
        %v1209 = vpop.f32.mrb[0].mxu0
        %v1210 = vadd.f32 %v682, %v1209
        %v1211 = vpop.f32.mrb[0].mxu0
        %1212 = vmatprep.mubr.bf16.mxu0 %v897
        %1213 = vmatmul.mubr.bf16.gmra.mrb[0].mxu0 %v896
        %v1214 = vpop.f32.mrb[0].mxu0
        %v1215 = vadd.f32 %v682, %v1214
        %v1216 = vpop.f32.mrb[0].mxu0
        %v1217 = vpop.f32.mrb[0].mxu0
        %v1218 = vadd.f32 %v682, %v1217
        %v1219 = vpop.f32.mrb[0].mxu0
        %1220 = vmatprep.mubr.bf16.mxu0 %v899
        %1221 = vmatmul.mubr.bf16.gmra.mrb[0].mxu0 %v898
        %v1222 = vpop.f32.mrb[0].mxu0
        %v1223 = vadd.f32 %v682, %v1222
        %v1224 = vpop.f32.mrb[0].mxu0
        %v1225 = vpop.f32.mrb[0].mxu0
        %v1226 = vadd.f32 %v682, %v1225
        %v1227 = vpop.f32.mrb[0].mxu0
        %1228 = vmatprep.mubr.bf16.mxu0 %v901
        %1229 = vmatmul.mubr.bf16.gmra.mrb[0].mxu0 %v900
        %v1230 = vpop.f32.mrb[0].mxu0
        %v1231 = vadd.f32 %v682, %v1230
        %v1232 = vpop.f32.mrb[0].mxu0
        %v1233 = vpop.f32.mrb[0].mxu0
        %v1234 = vadd.f32 %v682, %v1233
        %v1235 = vpop.f32.mrb[0].mxu0
        %1236 = vmatprep.mubr.bf16.mxu0 %v903
        %1237 = vmatmul.mubr.bf16.gmra.mrb[0].mxu0 %v902
        %v1238 = vpop.f32.mrb[0].mxu0
        %v1239 = vadd.f32 %v682, %v1238
        %v1240 = vpop.f32.mrb[0].mxu0
        %v1241 = vpop.f32.mrb[0].mxu0
        %v1242 = vadd.f32 %v682, %v1241
        %v1243 = vpop.f32.mrb[0].mxu0
        %1244 = vmatprep.mubr.bf16.mxu0 %v905
        %1245 = vmatmul.mubr.bf16.gmra.mrb[0].mxu0 %v904
        %v1246 = vpop.f32.mrb[0].mxu0
        %v1247 = vadd.f32 %v682, %v1246
        %v1248 = vpop.f32.mrb[0].mxu0
        %v1249 = vpop.f32.mrb[0].mxu0
        %v1250 = vadd.f32 %v682, %v1249
        %v1251 = vpop.f32.mrb[0].mxu0
        %1252 = vmatprep.mubr.bf16.mxu0 %v907
        %1253 = vmatmul.mubr.bf16.gmra.mrb[0].mxu0 %v906
        %v1254 = vpop.f32.mrb[0].mxu0
        %v1255 = vadd.f32 %v682, %v1254
        %v1256 = vpop.f32.mrb[0].mxu0
        %v1257 = vpop.f32.mrb[0].mxu0
        %v1258 = vadd.f32 %v682, %v1257
        %v1259 = vpop.f32.mrb[0].mxu0
        %1260 = vmatprep.mubr.bf16.mxu0 %v909
        %1261 = vmatmul.mubr.bf16.gmra.mrb[0].mxu0 %v908
        %v1262 = vpop.f32.mrb[0].mxu0
        %v1263 = vadd.f32 %v682, %v1262
        %v1264 = vpop.f32.mrb[0].mxu0
        %v1265 = vpop.f32.mrb[0].mxu0
        %v1266 = vadd.f32 %v682, %v1265
        %v1267 = vpop.f32.mrb[0].mxu0
        %1268 = vmatprep.mubr.bf16.mxu0 %v911
        %1269 = vmatmul.mubr.bf16.gmra.mrb[0].mxu0 %v910
        %v1270 = vpop.f32.mrb[0].mxu0
        %v1271 = vadd.f32 %v682, %v1270
        %v1272 = vpop.f32.mrb[0].mxu0
        %v1273 = vpop.f32.mrb[0].mxu0
        %v1274 = vadd.f32 %v682, %v1273
        %v1275 = vpop.f32.mrb[0].mxu0
        %1276 = vmatprep.mubr.bf16.mxu0 %v913
        %1277 = vmatmul.mubr.bf16.gmra.mrb[0].mxu0 %v912
        %v1278 = vpop.f32.mrb[0].mxu0
        %v1279 = vadd.f32 %v682, %v1278
        %v1280 = vpop.f32.mrb[0].mxu0
        %v1281 = vpop.f32.mrb[0].mxu0
        %v1282 = vadd.f32 %v682, %v1281
        %v1283 = vpop.f32.mrb[0].mxu0
        %1284 = vmatprep.mubr.bf16.mxu0 %v915
        %1285 = vmatmul.mubr.bf16.gmra.mrb[0].mxu0 %v914
        %v1286 = vpop.f32.mrb[0].mxu0
        %v1287 = vadd.f32 %v682, %v1286
        %v1288 = vpop.f32.mrb[0].mxu0
        %v1289 = vpop.f32.mrb[0].mxu0
        %v1290 = vadd.f32 %v682, %v1289
        %v1291 = vpop.f32.mrb[0].mxu0
        %1292 = vmatprep.mubr.bf16.mxu0 %v917
        %1293 = vmatmul.mubr.bf16.gmra.mrb[0].mxu0 %v916
        %v1294 = vpop.f32.mrb[0].mxu0
        %v1295 = vadd.f32 %v682, %v1294
        %v1296 = vpop.f32.mrb[0].mxu0
        %v1297 = vpop.f32.mrb[0].mxu0
        %v1298 = vadd.f32 %v682, %v1297
        %v1299 = vpop.f32.mrb[0].mxu0
        %1300 = vmatprep.mubr.bf16.mxu0 %v919
        %1301 = vmatmul.mubr.bf16.gmra.mrb[0].mxu0 %v918
        %v1302 = vpop.f32.mrb[0].mxu0
        %v1303 = vadd.f32 %v682, %v1302
        %v1304 = vpop.f32.mrb[0].mxu0
        %v1305 = vpop.f32.mrb[0].mxu0
        %v1306 = vadd.f32 %v682, %v1305
        %v1307 = vpop.f32.mrb[0].mxu0
        %1308 = vmatprep.mubr.bf16.mxu0 %v921
        %1309 = vmatmul.mubr.bf16.gmra.mrb[0].mxu0 %v920
        %v1310 = vpop.f32.mrb[0].mxu0
        %v1311 = vadd.f32 %v682, %v1310
        %v1312 = vpop.f32.mrb[0].mxu0
        %v1313 = vpop.f32.mrb[0].mxu0
        %v1314 = vadd.f32 %v682, %v1313
        %v1315 = vpop.f32.mrb[0].mxu0
        %1316 = vmatprep.mubr.bf16.mxu0 %v923
        %1317 = vmatmul.mubr.bf16.gmra.mrb[0].mxu0 %v922
        %v1318 = vpop.f32.mrb[0].mxu0
        %v1319 = vadd.f32 %v682, %v1318
        %v1320 = vpop.f32.mrb[0].mxu0
        %v1321 = vpop.f32.mrb[0].mxu0
        %v1322 = vadd.f32 %v682, %v1321
        %v1323 = vpop.f32.mrb[0].mxu0
        %1324 = vmatprep.mubr.bf16.mxu0 %v925
        %1325 = vmatmul.mubr.bf16.gmra.mrb[0].mxu0 %v924
        %v1326 = vpop.f32.mrb[0].mxu0
        %v1327 = vadd.f32 %v682, %v1326
        %v1328 = vpop.f32.mrb[0].mxu0
        %v1329 = vpop.f32.mrb[0].mxu0
        %v1330 = vadd.f32 %v682, %v1329
        %v1331 = vpop.f32.mrb[0].mxu0
        %1332 = vmatprep.mubr.bf16.mxu0 %v927
        %1333 = vmatmul.mubr.bf16.gmra.mrb[0].mxu0 %v926
        %v1334 = vpop.f32.mrb[0].mxu0
        %v1335 = vadd.f32 %v682, %v1334
        %v1336 = vpop.f32.mrb[0].mxu0
        %v1337 = vpop.f32.mrb[0].mxu0
        %v1338 = vadd.f32 %v682, %v1337
        %v1339 = vpop.f32.mrb[0].mxu0
        %1340 = vmatprep.mubr.bf16.mxu0 %v929
        %1341 = vmatmul.mubr.bf16.gmra.mrb[0].mxu0 %v928
        %v1342 = vpop.f32.mrb[0].mxu0
        %v1343 = vadd.f32 %v682, %v1342
        %v1344 = vpop.f32.mrb[0].mxu0
        %v1345 = vpop.f32.mrb[0].mxu0
        %v1346 = vadd.f32 %v682, %v1345
        %v1347 = vpop.f32.mrb[0].mxu0
        %1348 = vmatprep.mubr.bf16.mxu0 %v931
        %1349 = vmatmul.mubr.bf16.gmra.mrb[0].mxu0 %v930
        %v1350 = vpop.f32.mrb[0].mxu0
        %v1351 = vadd.f32 %v682, %v1350
        %v1352 = vpop.f32.mrb[0].mxu0
        %v1353 = vpop.f32.mrb[0].mxu0
        %v1354 = vadd.f32 %v682, %v1353
        %v1355 = vpop.f32.mrb[0].mxu0
        %1356 = vmatprep.mubr.bf16.mxu0 %v933
        %1357 = vmatmul.mubr.bf16.gmra.mrb[0].mxu0 %v932
        %v1358 = vpop.f32.mrb[0].mxu0
        %v1359 = vadd.f32 %v682, %v1358
        %v1360 = vpop.f32.mrb[0].mxu0
        %v1361 = vpop.f32.mrb[0].mxu0
        %v1362 = vadd.f32 %v682, %v1361
        %v1363 = vpop.f32.mrb[0].mxu0
        %1364 = vmatprep.mubr.bf16.mxu0 %v935
        %1365 = vmatmul.mubr.bf16.gmra.mrb[0].mxu0 %v934
        %v1366 = vpop.f32.mrb[0].mxu0
        %v1367 = vadd.f32 %v682, %v1366
        %v1368 = vpop.f32.mrb[0].mxu0
        %v1369 = vpop.f32.mrb[0].mxu0
        %v1370 = vadd.f32 %v682, %v1369
        %v1371 = vpop.f32.mrb[0].mxu0
        %1372 = vmatprep.mubr.bf16.mxu0 %v937
        %1373 = vmatmul.mubr.bf16.gmra.mrb[0].mxu0 %v936
        %v1374 = vpop.f32.mrb[0].mxu0
        %v1375 = vadd.f32 %v682, %v1374
        %v1376 = vpop.f32.mrb[0].mxu0
        %v1377 = vpop.f32.mrb[0].mxu0
        %v1378 = vadd.f32 %v682, %v1377
        %v1379 = vpop.f32.mrb[0].mxu0
        %1380 = vmatprep.mubr.bf16.mxu0 %v939
        %1381 = vmatmul.mubr.bf16.gmra.mrb[0].mxu0 %v938
        %v1382 = vpop.f32.mrb[0].mxu0
        %v1383 = vadd.f32 %v682, %v1382
        %v1384 = vpop.f32.mrb[0].mxu0
        %v1385 = vpop.f32.mrb[0].mxu0
        %v1386 = vadd.f32 %v682, %v1385
        %v1387 = vpop.f32.mrb[0].mxu0
        %1388 = vdwg.mxu0
        %v1389 = vmax.f32 %v1135, 0.0
        %v1390 = vmax.f32 %v1138, 0.0
        %v1391 = vmax.f32 %v1143, 0.0
        %v1392 = vmax.f32 %v1146, 0.0
        %v1393 = vmax.f32 %v1151, 0.0
        %v1394 = vmax.f32 %v1154, 0.0
        %v1395 = vmax.f32 %v1159, 0.0
        %v1396 = vmax.f32 %v1162, 0.0
        %v1397 = vmax.f32 %v1167, 0.0
        %v1398 = vmax.f32 %v1170, 0.0
        %v1399 = vmax.f32 %v1175, 0.0
        %v1400 = vmax.f32 %v1178, 0.0
        %v1401 = vmax.f32 %v1183, 0.0
        %v1402 = vmax.f32 %v1186, 0.0
        %v1403 = vmax.f32 %v1191, 0.0
        %v1404 = vmax.f32 %v1194, 0.0
        %v1405 = vmax.f32 %v1199, 0.0
        %v1406 = vmax.f32 %v1202, 0.0
        %v1407 = vmax.f32 %v1207, 0.0
        %v1408 = vmax.f32 %v1210, 0.0
        %v1409 = vmax.f32 %v1215, 0.0
        %v1410 = vmax.f32 %v1218, 0.0
        %v1411 = vmax.f32 %v1223, 0.0
        %v1412 = vmax.f32 %v1226, 0.0
        %v1413 = vmax.f32 %v1231, 0.0
        %v1414 = vmax.f32 %v1234, 0.0
        %v1415 = vmax.f32 %v1239, 0.0
        %v1416 = vmax.f32 %v1242, 0.0
        %v1417 = vmax.f32 %v1247, 0.0
        %v1418 = vmax.f32 %v1250, 0.0
        %v1419 = vmax.f32 %v1255, 0.0
        %v1420 = vmax.f32 %v1258, 0.0
        %v1421 = vmax.f32 %v1263, 0.0
        %v1422 = vmax.f32 %v1266, 0.0
        %v1423 = vmax.f32 %v1271, 0.0
        %v1424 = vmax.f32 %v1274, 0.0
        %v1425 = vmax.f32 %v1279, 0.0
        %v1426 = vmax.f32 %v1282, 0.0
        %v1427 = vmax.f32 %v1287, 0.0
        %v1428 = vmax.f32 %v1290, 0.0
        %v1429 = vmax.f32 %v1295, 0.0
        %v1430 = vmax.f32 %v1298, 0.0
        %v1431 = vmax.f32 %v1303, 0.0
        %v1432 = vmax.f32 %v1306, 0.0
        %v1433 = vmax.f32 %v1311, 0.0
        %v1434 = vmax.f32 %v1314, 0.0
        %v1435 = vmax.f32 %v1319, 0.0
        %v1436 = vmax.f32 %v1322, 0.0
        %v1437 = vmax.f32 %v1327, 0.0
        %v1438 = vmax.f32 %v1330, 0.0
        %v1439 = vmax.f32 %v1335, 0.0
        %v1440 = vmax.f32 %v1338, 0.0
        %v1441 = vmax.f32 %v1343, 0.0
        %v1442 = vmax.f32 %v1346, 0.0
        %v1443 = vmax.f32 %v1351, 0.0
        %v1444 = vmax.f32 %v1354, 0.0
        %v1445 = vmax.f32 %v1359, 0.0
        %v1446 = vmax.f32 %v1362, 0.0
        %v1447 = vmax.f32 %v1367, 0.0
        %v1448 = vmax.f32 %v1370, 0.0
        %v1449 = vmax.f32 %v1375, 0.0
        %v1450 = vmax.f32 %v1378, 0.0
        %v1451 = vmax.f32 %v1383, 0.0
        %v1452 = vmax.f32 %v1386, 0.0
        %v1453 = vpack.c.bf16 %v1390, %v1389
        %v1454 = vpack.c.bf16 %v1392, %v1391
        %v1455 = vpack.c.bf16 %v1394, %v1393
        %v1456 = vpack.c.bf16 %v1396, %v1395
        %v1457 = vpack.c.bf16 %v1398, %v1397
        %v1458 = vpack.c.bf16 %v1400, %v1399
        %v1459 = vpack.c.bf16 %v1402, %v1401
        %v1460 = vpack.c.bf16 %v1404, %v1403
        %v1461 = vpack.c.bf16 %v1406, %v1405
        %v1462 = vpack.c.bf16 %v1408, %v1407
        %v1463 = vpack.c.bf16 %v1410, %v1409
        %v1464 = vpack.c.bf16 %v1412, %v1411
        %v1465 = vpack.c.bf16 %v1414, %v1413
        %v1466 = vpack.c.bf16 %v1416, %v1415
        %v1467 = vpack.c.bf16 %v1418, %v1417
        %v1468 = vpack.c.bf16 %v1420, %v1419
        %v1469 = vpack.c.bf16 %v1422, %v1421
        %v1470 = vpack.c.bf16 %v1424, %v1423
        %v1471 = vpack.c.bf16 %v1426, %v1425
        %v1472 = vpack.c.bf16 %v1428, %v1427
        %v1473 = vpack.c.bf16 %v1430, %v1429
        %v1474 = vpack.c.bf16 %v1432, %v1431
        %v1475 = vpack.c.bf16 %v1434, %v1433
        %v1476 = vpack.c.bf16 %v1436, %v1435
        %v1477 = vpack.c.bf16 %v1438, %v1437
        %v1478 = vpack.c.bf16 %v1440, %v1439
        %v1479 = vpack.c.bf16 %v1442, %v1441
        %v1480 = vpack.c.bf16 %v1444, %v1443
        %v1481 = vpack.c.bf16 %v1446, %v1445
        %v1482 = vpack.c.bf16 %v1448, %v1447
        %v1483 = vpack.c.bf16 %v1450, %v1449
        %v1484 = vpack.c.bf16 %v1452, %v1451
        %v1517 = vunpack.c.l.b16 %v1453
        %v1518 = vunpack.c.h.b16 %v1453
        %v1519 = vunpack.c.l.b16 %v1454
        %v1520 = vunpack.c.h.b16 %v1454
        %v1521 = vunpack.c.l.b16 %v1455
        %v1522 = vunpack.c.h.b16 %v1455
        %v1523 = vunpack.c.l.b16 %v1456
        %v1524 = vunpack.c.h.b16 %v1456
        %v1525 = vunpack.c.l.b16 %v1457
        %v1526 = vunpack.c.h.b16 %v1457
        %v1527 = vunpack.c.l.b16 %v1458
        %v1528 = vunpack.c.h.b16 %v1458
        %v1529 = vunpack.c.l.b16 %v1459
        %v1530 = vunpack.c.h.b16 %v1459
        %v1531 = vunpack.c.l.b16 %v1460
        %v1532 = vunpack.c.h.b16 %v1460
        %v1533 = vunpack.c.l.b16 %v1461
        %v1534 = vunpack.c.h.b16 %v1461
        %v1535 = vunpack.c.l.b16 %v1462
        %v1536 = vunpack.c.h.b16 %v1462
        %v1537 = vunpack.c.l.b16 %v1463
        %v1538 = vunpack.c.h.b16 %v1463
        %v1539 = vunpack.c.l.b16 %v1464
        %v1540 = vunpack.c.h.b16 %v1464
        %v1541 = vunpack.c.l.b16 %v1465
        %v1542 = vunpack.c.h.b16 %v1465
        %v1543 = vunpack.c.l.b16 %v1466
        %v1544 = vunpack.c.h.b16 %v1466
        %v1545 = vunpack.c.l.b16 %v1467
        %v1546 = vunpack.c.h.b16 %v1467
        %v1547 = vunpack.c.l.b16 %v1468
        %v1548 = vunpack.c.h.b16 %v1468
        %v1549 = vunpack.c.l.b16 %v1469
        %v1550 = vunpack.c.h.b16 %v1469
        %v1551 = vunpack.c.l.b16 %v1470
        %v1552 = vunpack.c.h.b16 %v1470
        %v1553 = vunpack.c.l.b16 %v1471
        %v1554 = vunpack.c.h.b16 %v1471
        %v1555 = vunpack.c.l.b16 %v1472
        %v1556 = vunpack.c.h.b16 %v1472
        %v1557 = vunpack.c.l.b16 %v1473
        %v1558 = vunpack.c.h.b16 %v1473
        %v1559 = vunpack.c.l.b16 %v1474
        %v1560 = vunpack.c.h.b16 %v1474
        %v1561 = vunpack.c.l.b16 %v1475
        %v1562 = vunpack.c.h.b16 %v1475
        %v1563 = vunpack.c.l.b16 %v1476
        %v1564 = vunpack.c.h.b16 %v1476
        %v1565 = vunpack.c.l.b16 %v1477
        %v1566 = vunpack.c.h.b16 %v1477
        %v1567 = vunpack.c.l.b16 %v1478
        %v1568 = vunpack.c.h.b16 %v1478
        %v1569 = vunpack.c.l.b16 %v1479
        %v1570 = vunpack.c.h.b16 %v1479
        %v1571 = vunpack.c.l.b16 %v1480
        %v1572 = vunpack.c.h.b16 %v1480
        %v1573 = vunpack.c.l.b16 %v1481
        %v1574 = vunpack.c.h.b16 %v1481
        %v1575 = vunpack.c.l.b16 %v1482
        %v1576 = vunpack.c.h.b16 %v1482
        %v1577 = vunpack.c.l.b16 %v1483
        %v1578 = vunpack.c.h.b16 %v1483
        %v1579 = vunpack.c.l.b16 %v1484
        %v1580 = vunpack.c.h.b16 %v1484
        %v1581 = vpack.c.b16 %v1517, %v1517
        %v1582 = vpack.c.b16 %v1518, %v1518
        %v1583 = vpack.c.b16 %v1519, %v1519
        %v1584 = vpack.c.b16 %v1520, %v1520
        %v1585 = vpack.c.b16 %v1521, %v1521
        %v1586 = vpack.c.b16 %v1522, %v1522
        %v1587 = vpack.c.b16 %v1523, %v1523
        %v1588 = vpack.c.b16 %v1524, %v1524
        %v1589 = vpack.c.b16 %v1525, %v1525
        %v1590 = vpack.c.b16 %v1526, %v1526
        %v1591 = vpack.c.b16 %v1527, %v1527
        %v1592 = vpack.c.b16 %v1528, %v1528
        %v1593 = vpack.c.b16 %v1529, %v1529
        %v1594 = vpack.c.b16 %v1530, %v1530
        %v1595 = vpack.c.b16 %v1531, %v1531
        %v1596 = vpack.c.b16 %v1532, %v1532
        %v1597 = vpack.c.b16 %v1533, %v1533
        %v1598 = vpack.c.b16 %v1534, %v1534
        %v1599 = vpack.c.b16 %v1535, %v1535
        %v1600 = vpack.c.b16 %v1536, %v1536
        %v1601 = vpack.c.b16 %v1537, %v1537
        %v1602 = vpack.c.b16 %v1538, %v1538
        %v1603 = vpack.c.b16 %v1539, %v1539
        %v1604 = vpack.c.b16 %v1540, %v1540
        %v1605 = vpack.c.b16 %v1541, %v1541
        %v1606 = vpack.c.b16 %v1542, %v1542
        %v1607 = vpack.c.b16 %v1543, %v1543
        %v1608 = vpack.c.b16 %v1544, %v1544
        %v1609 = vpack.c.b16 %v1545, %v1545
        %v1610 = vpack.c.b16 %v1546, %v1546
        %v1611 = vpack.c.b16 %v1547, %v1547
        %v1612 = vpack.c.b16 %v1548, %v1548
        %v1613 = vpack.c.b16 %v1549, %v1549
        %v1614 = vpack.c.b16 %v1550, %v1550
        %v1615 = vpack.c.b16 %v1551, %v1551
        %v1616 = vpack.c.b16 %v1552, %v1552
        %v1617 = vpack.c.b16 %v1553, %v1553
        %v1618 = vpack.c.b16 %v1554, %v1554
        %v1619 = vpack.c.b16 %v1555, %v1555
        %v1620 = vpack.c.b16 %v1556, %v1556
        %v1621 = vpack.c.b16 %v1557, %v1557
        %v1622 = vpack.c.b16 %v1558, %v1558
        %v1623 = vpack.c.b16 %v1559, %v1559
        %v1624 = vpack.c.b16 %v1560, %v1560
        %v1625 = vpack.c.b16 %v1561, %v1561
        %v1626 = vpack.c.b16 %v1562, %v1562
        %v1627 = vpack.c.b16 %v1563, %v1563
        %v1628 = vpack.c.b16 %v1564, %v1564
        %v1629 = vpack.c.b16 %v1565, %v1565
        %v1630 = vpack.c.b16 %v1566, %v1566
        %v1631 = vpack.c.b16 %v1567, %v1567
        %v1632 = vpack.c.b16 %v1568, %v1568
        %v1633 = vpack.c.b16 %v1569, %v1569
        %v1634 = vpack.c.b16 %v1570, %v1570
        %v1635 = vpack.c.b16 %v1571, %v1571
        %v1636 = vpack.c.b16 %v1572, %v1572
        %v1637 = vpack.c.b16 %v1573, %v1573
        %v1638 = vpack.c.b16 %v1574, %v1574
        %v1639 = vpack.c.b16 %v1575, %v1575
        %v1640 = vpack.c.b16 %v1576, %v1576
        %v1641 = vpack.c.b16 %v1577, %v1577
        %v1642 = vpack.c.b16 %v1578, %v1578
        %v1643 = vpack.c.b16 %v1579, %v1579
        %v1644 = vpack.c.b16 %v1580, %v1580
        %vm1645 = vsmask.f32 256
        %vm1646 = vsmask.f32 4368
        %vm1647 = vmor %vm1645, %vm1646
        %v1649 = vshrl.u32 %v1581, 16
        %v1651 = vrot.slane %v1649, 7
        %v1652 = vshll.u32 %v1581, 16
        %v1654 = vor.u32 %v1651, %v1652
        %v1655 = vrot.slane %v1651, 4
        %v1657 = vshrl.u32 %v1582, 16
        %v1659 = vrot.slane %v1657, 7
        %v1660 = vshll.u32 %v1582, 16
        %v1662 = vor.u32 %v1659, %v1660
        %v1663 = vsel %vm1647, %v1655, %v1662
        %v1664 = vrot.slane %v1659, 4
        %v1666 = vshrl.u32 %v1583, 16
        %v1668 = vrot.slane %v1666, 7
        %v1669 = vshll.u32 %v1583, 16
        %v1671 = vor.u32 %v1668, %v1669
        %v1672 = vrot.slane %v1668, 4
        %v1674 = vshrl.u32 %v1584, 16
        %v1676 = vrot.slane %v1674, 7
        %v1677 = vshll.u32 %v1584, 16
        %v1679 = vor.u32 %v1676, %v1677
        %v1680 = vsel %vm1647, %v1672, %v1679
        %v1681 = vrot.slane %v1676, 4
        %v1683 = vshrl.u32 %v1585, 16
        %v1685 = vrot.slane %v1683, 7
        %v1686 = vshll.u32 %v1585, 16
        %v1688 = vor.u32 %v1685, %v1686
        %v1689 = vrot.slane %v1685, 4
        %v1691 = vshrl.u32 %v1586, 16
        %v1693 = vrot.slane %v1691, 7
        %v1694 = vshll.u32 %v1586, 16
        %v1696 = vor.u32 %v1693, %v1694
        %v1697 = vsel %vm1647, %v1689, %v1696
        %v1698 = vrot.slane %v1693, 4
        %v1700 = vshrl.u32 %v1587, 16
        %v1702 = vrot.slane %v1700, 7
        %v1703 = vshll.u32 %v1587, 16
        %v1705 = vor.u32 %v1702, %v1703
        %v1706 = vrot.slane %v1702, 4
        %v1708 = vshrl.u32 %v1588, 16
        %v1710 = vrot.slane %v1708, 7
        %v1711 = vshll.u32 %v1588, 16
        %v1713 = vor.u32 %v1710, %v1711
        %v1714 = vsel %vm1647, %v1706, %v1713
        %v1715 = vrot.slane %v1710, 4
        %v1717 = vshrl.u32 %v1589, 16
        %v1719 = vrot.slane %v1717, 7
        %v1720 = vshll.u32 %v1589, 16
        %v1722 = vor.u32 %v1719, %v1720
        %v1723 = vrot.slane %v1719, 4
        %v1725 = vshrl.u32 %v1590, 16
        %v1727 = vrot.slane %v1725, 7
        %v1728 = vshll.u32 %v1590, 16
        %v1730 = vor.u32 %v1727, %v1728
        %v1731 = vsel %vm1647, %v1723, %v1730
        %v1732 = vrot.slane %v1727, 4
        %v1734 = vshrl.u32 %v1591, 16
        %v1736 = vrot.slane %v1734, 7
        %v1737 = vshll.u32 %v1591, 16
        %v1739 = vor.u32 %v1736, %v1737
        %v1740 = vrot.slane %v1736, 4
        %v1742 = vshrl.u32 %v1592, 16
        %v1744 = vrot.slane %v1742, 7
        %v1745 = vshll.u32 %v1592, 16
        %v1747 = vor.u32 %v1744, %v1745
        %v1748 = vsel %vm1647, %v1740, %v1747
        %v1749 = vrot.slane %v1744, 4
        %v1751 = vshrl.u32 %v1593, 16
        %v1753 = vrot.slane %v1751, 7
        %v1754 = vshll.u32 %v1593, 16
        %v1756 = vor.u32 %v1753, %v1754
        %v1757 = vrot.slane %v1753, 4
        %v1759 = vshrl.u32 %v1594, 16
        %v1761 = vrot.slane %v1759, 7
        %v1762 = vshll.u32 %v1594, 16
        %v1764 = vor.u32 %v1761, %v1762
        %v1765 = vsel %vm1647, %v1757, %v1764
        %v1766 = vrot.slane %v1761, 4
        %v1768 = vshrl.u32 %v1595, 16
        %v1770 = vrot.slane %v1768, 7
        %v1771 = vshll.u32 %v1595, 16
        %v1773 = vor.u32 %v1770, %v1771
        %v1774 = vrot.slane %v1770, 4
        %v1776 = vshrl.u32 %v1596, 16
        %v1778 = vrot.slane %v1776, 7
        %v1779 = vshll.u32 %v1596, 16
        %v1781 = vor.u32 %v1778, %v1779
        %v1782 = vsel %vm1647, %v1774, %v1781
        %v1783 = vrot.slane %v1778, 4
        %v1785 = vshrl.u32 %v1597, 16
        %v1787 = vrot.slane %v1785, 7
        %v1788 = vshll.u32 %v1597, 16
        %v1790 = vor.u32 %v1787, %v1788
        %v1791 = vrot.slane %v1787, 4
        %v1793 = vshrl.u32 %v1598, 16
        %v1795 = vrot.slane %v1793, 7
        %v1796 = vshll.u32 %v1598, 16
        %v1798 = vor.u32 %v1795, %v1796
        %v1799 = vsel %vm1647, %v1791, %v1798
        %v1800 = vrot.slane %v1795, 4
        %v1802 = vshrl.u32 %v1599, 16
        %v1804 = vrot.slane %v1802, 7
        %v1805 = vshll.u32 %v1599, 16
        %v1807 = vor.u32 %v1804, %v1805
        %v1808 = vrot.slane %v1804, 4
        %v1810 = vshrl.u32 %v1600, 16
        %v1812 = vrot.slane %v1810, 7
        %v1813 = vshll.u32 %v1600, 16
        %v1815 = vor.u32 %v1812, %v1813
        %v1816 = vsel %vm1647, %v1808, %v1815
        %v1817 = vrot.slane %v1812, 4
        %v1819 = vshrl.u32 %v1601, 16
        %v1821 = vrot.slane %v1819, 7
        %v1822 = vshll.u32 %v1601, 16
        %v1824 = vor.u32 %v1821, %v1822
        %v1825 = vrot.slane %v1821, 4
        %v1827 = vshrl.u32 %v1602, 16
        %v1829 = vrot.slane %v1827, 7
        %v1830 = vshll.u32 %v1602, 16
        %v1832 = vor.u32 %v1829, %v1830
        %v1833 = vsel %vm1647, %v1825, %v1832
        %v1834 = vrot.slane %v1829, 4
        %v1836 = vshrl.u32 %v1603, 16
        %v1838 = vrot.slane %v1836, 7
        %v1839 = vshll.u32 %v1603, 16
        %v1841 = vor.u32 %v1838, %v1839
        %v1842 = vrot.slane %v1838, 4
        %v1844 = vshrl.u32 %v1604, 16
        %v1846 = vrot.slane %v1844, 7
        %v1847 = vshll.u32 %v1604, 16
        %v1849 = vor.u32 %v1846, %v1847
        %v1850 = vsel %vm1647, %v1842, %v1849
        %v1851 = vrot.slane %v1846, 4
        %v1853 = vshrl.u32 %v1605, 16
        %v1855 = vrot.slane %v1853, 7
        %v1856 = vshll.u32 %v1605, 16
        %v1858 = vor.u32 %v1855, %v1856
        %v1859 = vrot.slane %v1855, 4
        %v1861 = vshrl.u32 %v1606, 16
        %v1863 = vrot.slane %v1861, 7
        %v1864 = vshll.u32 %v1606, 16
        %v1866 = vor.u32 %v1863, %v1864
        %v1867 = vsel %vm1647, %v1859, %v1866
        %v1868 = vrot.slane %v1863, 4
        %v1870 = vshrl.u32 %v1607, 16
        %v1872 = vrot.slane %v1870, 7
        %v1873 = vshll.u32 %v1607, 16
        %v1875 = vor.u32 %v1872, %v1873
        %v1876 = vrot.slane %v1872, 4
        %v1878 = vshrl.u32 %v1608, 16
        %v1880 = vrot.slane %v1878, 7
        %v1881 = vshll.u32 %v1608, 16
        %v1883 = vor.u32 %v1880, %v1881
        %v1884 = vsel %vm1647, %v1876, %v1883
        %v1885 = vrot.slane %v1880, 4
        %v1887 = vshrl.u32 %v1609, 16
        %v1889 = vrot.slane %v1887, 7
        %v1890 = vshll.u32 %v1609, 16
        %v1892 = vor.u32 %v1889, %v1890
        %v1893 = vrot.slane %v1889, 4
        %v1895 = vshrl.u32 %v1610, 16
        %v1897 = vrot.slane %v1895, 7
        %v1898 = vshll.u32 %v1610, 16
        %v1900 = vor.u32 %v1897, %v1898
        %v1901 = vsel %vm1647, %v1893, %v1900
        %v1902 = vrot.slane %v1897, 4
        %v1904 = vshrl.u32 %v1611, 16
        %v1906 = vrot.slane %v1904, 7
        %v1907 = vshll.u32 %v1611, 16
        %v1909 = vor.u32 %v1906, %v1907
        %v1910 = vrot.slane %v1906, 4
        %v1912 = vshrl.u32 %v1612, 16
        %v1914 = vrot.slane %v1912, 7
        %v1915 = vshll.u32 %v1612, 16
        %v1917 = vor.u32 %v1914, %v1915
        %v1918 = vsel %vm1647, %v1910, %v1917
        %v1919 = vrot.slane %v1914, 4
        %v1921 = vshrl.u32 %v1613, 16
        %v1923 = vrot.slane %v1921, 7
        %v1924 = vshll.u32 %v1613, 16
        %v1926 = vor.u32 %v1923, %v1924
        %v1927 = vrot.slane %v1923, 4
        %v1929 = vshrl.u32 %v1614, 16
        %v1931 = vrot.slane %v1929, 7
        %v1932 = vshll.u32 %v1614, 16
        %v1934 = vor.u32 %v1931, %v1932
        %v1935 = vsel %vm1647, %v1927, %v1934
        %v1936 = vrot.slane %v1931, 4
        %v1938 = vshrl.u32 %v1615, 16
        %v1940 = vrot.slane %v1938, 7
        %v1941 = vshll.u32 %v1615, 16
        %v1943 = vor.u32 %v1940, %v1941
        %v1944 = vrot.slane %v1940, 4
        %v1946 = vshrl.u32 %v1616, 16
        %v1948 = vrot.slane %v1946, 7
        %v1949 = vshll.u32 %v1616, 16
        %v1951 = vor.u32 %v1948, %v1949
        %v1952 = vsel %vm1647, %v1944, %v1951
        %v1953 = vrot.slane %v1948, 4
        %v1955 = vshrl.u32 %v1617, 16
        %v1957 = vrot.slane %v1955, 7
        %v1958 = vshll.u32 %v1617, 16
        %v1960 = vor.u32 %v1957, %v1958
        %v1961 = vrot.slane %v1957, 4
        %v1963 = vshrl.u32 %v1618, 16
        %v1965 = vrot.slane %v1963, 7
        %v1966 = vshll.u32 %v1618, 16
        %v1968 = vor.u32 %v1965, %v1966
        %v1969 = vsel %vm1647, %v1961, %v1968
        %v1970 = vrot.slane %v1965, 4
        %v1972 = vshrl.u32 %v1619, 16
        %v1974 = vrot.slane %v1972, 7
        %v1975 = vshll.u32 %v1619, 16
        %v1977 = vor.u32 %v1974, %v1975
        %v1978 = vrot.slane %v1974, 4
        %v1980 = vshrl.u32 %v1620, 16
        %v1982 = vrot.slane %v1980, 7
        %v1983 = vshll.u32 %v1620, 16
        %v1985 = vor.u32 %v1982, %v1983
        %v1986 = vsel %vm1647, %v1978, %v1985
        %v1987 = vrot.slane %v1982, 4
        %v1989 = vshrl.u32 %v1621, 16
        %v1991 = vrot.slane %v1989, 7
        %v1992 = vshll.u32 %v1621, 16
        %v1994 = vor.u32 %v1991, %v1992
        %v1995 = vrot.slane %v1991, 4
        %v1997 = vshrl.u32 %v1622, 16
        %v1999 = vrot.slane %v1997, 7
        %v2000 = vshll.u32 %v1622, 16
        %v2002 = vor.u32 %v1999, %v2000
        %v2003 = vsel %vm1647, %v1995, %v2002
        %v2004 = vrot.slane %v1999, 4
        %v2006 = vshrl.u32 %v1623, 16
        %v2008 = vrot.slane %v2006, 7
        %v2009 = vshll.u32 %v1623, 16
        %v2011 = vor.u32 %v2008, %v2009
        %v2012 = vrot.slane %v2008, 4
        %v2014 = vshrl.u32 %v1624, 16
        %v2016 = vrot.slane %v2014, 7
        %v2017 = vshll.u32 %v1624, 16
        %v2019 = vor.u32 %v2016, %v2017
        %v2020 = vsel %vm1647, %v2012, %v2019
        %v2021 = vrot.slane %v2016, 4
        %v2023 = vshrl.u32 %v1625, 16
        %v2025 = vrot.slane %v2023, 7
        %v2026 = vshll.u32 %v1625, 16
        %v2028 = vor.u32 %v2025, %v2026
        %v2029 = vrot.slane %v2025, 4
        %v2031 = vshrl.u32 %v1626, 16
        %v2033 = vrot.slane %v2031, 7
        %v2034 = vshll.u32 %v1626, 16
        %v2036 = vor.u32 %v2033, %v2034
        %v2037 = vsel %vm1647, %v2029, %v2036
        %v2038 = vrot.slane %v2033, 4
        %v2040 = vshrl.u32 %v1627, 16
        %v2042 = vrot.slane %v2040, 7
        %v2043 = vshll.u32 %v1627, 16
        %v2045 = vor.u32 %v2042, %v2043
        %v2046 = vrot.slane %v2042, 4
        %v2048 = vshrl.u32 %v1628, 16
        %v2050 = vrot.slane %v2048, 7
        %v2051 = vshll.u32 %v1628, 16
        %v2053 = vor.u32 %v2050, %v2051
        %v2054 = vsel %vm1647, %v2046, %v2053
        %v2055 = vrot.slane %v2050, 4
        %v2057 = vshrl.u32 %v1629, 16
        %v2059 = vrot.slane %v2057, 7
        %v2060 = vshll.u32 %v1629, 16
        %v2062 = vor.u32 %v2059, %v2060
        %v2063 = vrot.slane %v2059, 4
        %v2065 = vshrl.u32 %v1630, 16
        %v2067 = vrot.slane %v2065, 7
        %v2068 = vshll.u32 %v1630, 16
        %v2070 = vor.u32 %v2067, %v2068
        %v2071 = vsel %vm1647, %v2063, %v2070
        %v2072 = vrot.slane %v2067, 4
        %v2074 = vshrl.u32 %v1631, 16
        %v2076 = vrot.slane %v2074, 7
        %v2077 = vshll.u32 %v1631, 16
        %v2079 = vor.u32 %v2076, %v2077
        %v2080 = vrot.slane %v2076, 4
        %v2082 = vshrl.u32 %v1632, 16
        %v2084 = vrot.slane %v2082, 7
        %v2085 = vshll.u32 %v1632, 16
        %v2087 = vor.u32 %v2084, %v2085
        %v2088 = vsel %vm1647, %v2080, %v2087
        %v2089 = vrot.slane %v2084, 4
        %v2091 = vshrl.u32 %v1633, 16
        %v2093 = vrot.slane %v2091, 7
        %v2094 = vshll.u32 %v1633, 16
        %v2096 = vor.u32 %v2093, %v2094
        %v2097 = vrot.slane %v2093, 4
        %v2099 = vshrl.u32 %v1634, 16
        %v2101 = vrot.slane %v2099, 7
        %v2102 = vshll.u32 %v1634, 16
        %v2104 = vor.u32 %v2101, %v2102
        %v2105 = vsel %vm1647, %v2097, %v2104
        %v2106 = vrot.slane %v2101, 4
        %v2108 = vshrl.u32 %v1635, 16
        %v2110 = vrot.slane %v2108, 7
        %v2111 = vshll.u32 %v1635, 16
        %v2113 = vor.u32 %v2110, %v2111
        %v2114 = vrot.slane %v2110, 4
        %v2116 = vshrl.u32 %v1636, 16
        %v2118 = vrot.slane %v2116, 7
        %v2119 = vshll.u32 %v1636, 16
        %v2121 = vor.u32 %v2118, %v2119
        %v2122 = vsel %vm1647, %v2114, %v2121
        %v2123 = vrot.slane %v2118, 4
        %v2125 = vshrl.u32 %v1637, 16
        %v2127 = vrot.slane %v2125, 7
        %v2128 = vshll.u32 %v1637, 16
        %v2130 = vor.u32 %v2127, %v2128
        %v2131 = vrot.slane %v2127, 4
        %v2133 = vshrl.u32 %v1638, 16
        %v2135 = vrot.slane %v2133, 7
        %v2136 = vshll.u32 %v1638, 16
        %v2138 = vor.u32 %v2135, %v2136
        %v2139 = vsel %vm1647, %v2131, %v2138
        %v2140 = vrot.slane %v2135, 4
        %v2142 = vshrl.u32 %v1639, 16
        %v2144 = vrot.slane %v2142, 7
        %v2145 = vshll.u32 %v1639, 16
        %v2147 = vor.u32 %v2144, %v2145
        %v2148 = vrot.slane %v2144, 4
        %v2150 = vshrl.u32 %v1640, 16
        %v2152 = vrot.slane %v2150, 7
        %v2153 = vshll.u32 %v1640, 16
        %v2155 = vor.u32 %v2152, %v2153
        %v2156 = vsel %vm1647, %v2148, %v2155
        %v2157 = vrot.slane %v2152, 4
        %v2159 = vshrl.u32 %v1641, 16
        %v2161 = vrot.slane %v2159, 7
        %v2162 = vshll.u32 %v1641, 16
        %v2164 = vor.u32 %v2161, %v2162
        %v2165 = vrot.slane %v2161, 4
        %v2167 = vshrl.u32 %v1642, 16
        %v2169 = vrot.slane %v2167, 7
        %v2170 = vshll.u32 %v1642, 16
        %v2172 = vor.u32 %v2169, %v2170
        %v2173 = vsel %vm1647, %v2165, %v2172
        %v2174 = vrot.slane %v2169, 4
        %v2176 = vshrl.u32 %v1643, 16
        %v2178 = vrot.slane %v2176, 7
        %v2179 = vshll.u32 %v1643, 16
        %v2181 = vor.u32 %v2178, %v2179
        %v2182 = vrot.slane %v2178, 4
        %v2184 = vshrl.u32 %v1644, 16
        %v2186 = vrot.slane %v2184, 7
        %v2187 = vshll.u32 %v1644, 16
        %v2189 = vor.u32 %v2186, %v2187
        %v2190 = vsel %vm1647, %v2182, %v2189
        %v2191 = vrot.slane %v2186, 4
        %s2288 = scalar_lea.vmem [#allocation2], 12
        %vm2289 = vcmask 1043456
        %vm2290 = vsmask.f32 7938
        %vm2291 = vmand %vm2289, %vm2290
        %v2292 = vld [vmem:[%s2288] sm:$0xf]
        %v2293 = vsel %vm2291, %v1654, %v2292
        %2294 = vst [vmem:[%s2288] sm:$0xf] %v2293
        %2295 = vst [vmem:[%s2288 + $0x4] sm:$0xf] %v1663
        %vm2296 = vcmask 1040384
        %vm2297 = vmand %vm2296, %vm1645
        %v2298 = vld [vmem:[%s2288 + $0x8] sm:$0x1]
        %v2299 = vsel %vm2297, %v1664, %v2298
        %2300 = vst [vmem:[%s2288 + $0x8] sm:$0x1] %v2299
        %v2301 = vld [vmem:[%s2288 + $0xc] sm:$0xf]
        %v2302 = vsel %vm2291, %v1671, %v2301
        %2303 = vst [vmem:[%s2288 + $0xc] sm:$0xf] %v2302
        %2304 = vst [vmem:[%s2288 + $0x10] sm:$0xf] %v1680
        %v2305 = vld [vmem:[%s2288 + $0x14] sm:$0x1]
        %v2306 = vsel %vm2297, %v1681, %v2305
        %2307 = vst [vmem:[%s2288 + $0x14] sm:$0x1] %v2306
        %v2308 = vld [vmem:[%s2288 + $0x18] sm:$0xf]
        %v2309 = vsel %vm2291, %v1688, %v2308
        %2310 = vst [vmem:[%s2288 + $0x18] sm:$0xf] %v2309
        %2311 = vst [vmem:[%s2288 + $0x1c] sm:$0xf] %v1697
        %v2312 = vld [vmem:[%s2288 + $0x20] sm:$0x1]
        %v2313 = vsel %vm2297, %v1698, %v2312
        %2314 = vst [vmem:[%s2288 + $0x20] sm:$0x1] %v2313
        %v2315 = vld [vmem:[%s2288 + $0x24] sm:$0xf]
        %v2316 = vsel %vm2291, %v1705, %v2315
        %2317 = vst [vmem:[%s2288 + $0x24] sm:$0xf] %v2316
        %2318 = vst [vmem:[%s2288 + $0x28] sm:$0xf] %v1714
        %v2319 = vld [vmem:[%s2288 + $0x2c] sm:$0x1]
        %v2320 = vsel %vm2297, %v1715, %v2319
        %2321 = vst [vmem:[%s2288 + $0x2c] sm:$0x1] %v2320
        %v2322 = vld [vmem:[%s2288 + $0x30] sm:$0xf]
        %v2323 = vsel %vm2291, %v1722, %v2322
        %2324 = vst [vmem:[%s2288 + $0x30] sm:$0xf] %v2323
        %2325 = vst [vmem:[%s2288 + $0x34] sm:$0xf] %v1731
        %v2326 = vld [vmem:[%s2288 + $0x38] sm:$0x1]
        %v2327 = vsel %vm2297, %v1732, %v2326
        %2328 = vst [vmem:[%s2288 + $0x38] sm:$0x1] %v2327
        %v2329 = vld [vmem:[%s2288 + $0x3c] sm:$0xf]
        %v2330 = vsel %vm2291, %v1739, %v2329
        %2331 = vst [vmem:[%s2288 + $0x3c] sm:$0xf] %v2330
        %2332 = vst [vmem:[%s2288 + $0x40] sm:$0xf] %v1748
        %v2333 = vld [vmem:[%s2288 + $0x44] sm:$0x1]
        %v2334 = vsel %vm2297, %v1749, %v2333
        %2335 = vst [vmem:[%s2288 + $0x44] sm:$0x1] %v2334
        %v2336 = vld [vmem:[%s2288 + $0x48] sm:$0xf]
        %v2337 = vsel %vm2291, %v1756, %v2336
        %2338 = vst [vmem:[%s2288 + $0x48] sm:$0xf] %v2337
        %2339 = vst [vmem:[%s2288 + $0x4c] sm:$0xf] %v1765
        %v2340 = vld [vmem:[%s2288 + $0x50] sm:$0x1]
        %v2341 = vsel %vm2297, %v1766, %v2340
        %2342 = vst [vmem:[%s2288 + $0x50] sm:$0x1] %v2341
        %v2343 = vld [vmem:[%s2288 + $0x54] sm:$0xf]
        %v2344 = vsel %vm2291, %v1773, %v2343
        %2345 = vst [vmem:[%s2288 + $0x54] sm:$0xf] %v2344
        %2346 = vst [vmem:[%s2288 + $0x58] sm:$0xf] %v1782
        %v2347 = vld [vmem:[%s2288 + $0x5c] sm:$0x1]
        %v2348 = vsel %vm2297, %v1783, %v2347
        %2349 = vst [vmem:[%s2288 + $0x5c] sm:$0x1] %v2348
        %v2350 = vld [vmem:[%s2288 + $0x60] sm:$0xf]
        %v2351 = vsel %vm2291, %v1790, %v2350
        %2352 = vst [vmem:[%s2288 + $0x60] sm:$0xf] %v2351
        %2353 = vst [vmem:[%s2288 + $0x64] sm:$0xf] %v1799
        %v2354 = vld [vmem:[%s2288 + $0x68] sm:$0x1]
        %v2355 = vsel %vm2297, %v1800, %v2354
        %2356 = vst [vmem:[%s2288 + $0x68] sm:$0x1] %v2355
        %v2357 = vld [vmem:[%s2288 + $0x6c] sm:$0xf]
        %v2358 = vsel %vm2291, %v1807, %v2357
        %2359 = vst [vmem:[%s2288 + $0x6c] sm:$0xf] %v2358
        %2360 = vst [vmem:[%s2288 + $0x70] sm:$0xf] %v1816
        %v2361 = vld [vmem:[%s2288 + $0x74] sm:$0x1]
        %v2362 = vsel %vm2297, %v1817, %v2361
        %2363 = vst [vmem:[%s2288 + $0x74] sm:$0x1] %v2362
        %v2364 = vld [vmem:[%s2288 + $0x78] sm:$0xf]
        %v2365 = vsel %vm2291, %v1824, %v2364
        %2366 = vst [vmem:[%s2288 + $0x78] sm:$0xf] %v2365
        %2367 = vst [vmem:[%s2288 + $0x7c] sm:$0xf] %v1833
        %v2368 = vld [vmem:[%s2288 + $0x80] sm:$0x1]
        %v2369 = vsel %vm2297, %v1834, %v2368
        %2370 = vst [vmem:[%s2288 + $0x80] sm:$0x1] %v2369
        %v2371 = vld [vmem:[%s2288 + $0x84] sm:$0xf]
        %v2372 = vsel %vm2291, %v1841, %v2371
        %2373 = vst [vmem:[%s2288 + $0x84] sm:$0xf] %v2372
        %2374 = vst [vmem:[%s2288 + $0x88] sm:$0xf] %v1850
        %v2375 = vld [vmem:[%s2288 + $0x8c] sm:$0x1]
        %v2376 = vsel %vm2297, %v1851, %v2375
        %2377 = vst [vmem:[%s2288 + $0x8c] sm:$0x1] %v2376
        %v2378 = vld [vmem:[%s2288 + $0x90] sm:$0xf]
        %v2379 = vsel %vm2291, %v1858, %v2378
        %2380 = vst [vmem:[%s2288 + $0x90] sm:$0xf] %v2379
        %2381 = vst [vmem:[%s2288 + $0x94] sm:$0xf] %v1867
        %v2382 = vld [vmem:[%s2288 + $0x98] sm:$0x1]
        %v2383 = vsel %vm2297, %v1868, %v2382
        %2384 = vst [vmem:[%s2288 + $0x98] sm:$0x1] %v2383
        %v2385 = vld [vmem:[%s2288 + $0x9c] sm:$0xf]
        %v2386 = vsel %vm2291, %v1875, %v2385
        %2387 = vst [vmem:[%s2288 + $0x9c] sm:$0xf] %v2386
        %2388 = vst [vmem:[%s2288 + $0xa0] sm:$0xf] %v1884
        %v2389 = vld [vmem:[%s2288 + $0xa4] sm:$0x1]
        %v2390 = vsel %vm2297, %v1885, %v2389
        %2391 = vst [vmem:[%s2288 + $0xa4] sm:$0x1] %v2390
        %v2392 = vld [vmem:[%s2288 + $0xa8] sm:$0xf]
        %v2393 = vsel %vm2291, %v1892, %v2392
        %2394 = vst [vmem:[%s2288 + $0xa8] sm:$0xf] %v2393
        %2395 = vst [vmem:[%s2288 + $0xac] sm:$0xf] %v1901
        %v2396 = vld [vmem:[%s2288 + $0xb0] sm:$0x1]
        %v2397 = vsel %vm2297, %v1902, %v2396
        %2398 = vst [vmem:[%s2288 + $0xb0] sm:$0x1] %v2397
        %v2399 = vld [vmem:[%s2288 + $0xb4] sm:$0xf]
        %v2400 = vsel %vm2291, %v1909, %v2399
        %2401 = vst [vmem:[%s2288 + $0xb4] sm:$0xf] %v2400
        %2402 = vst [vmem:[%s2288 + $0xb8] sm:$0xf] %v1918
        %v2403 = vld [vmem:[%s2288 + $0xbc] sm:$0x1]
        %v2404 = vsel %vm2297, %v1919, %v2403
        %2405 = vst [vmem:[%s2288 + $0xbc] sm:$0x1] %v2404
        %v2406 = vld [vmem:[%s2288 + $0xd8] sm:$0xf]
        %v2407 = vsel %vm2291, %v1926, %v2406
        %2408 = vst [vmem:[%s2288 + $0xd8] sm:$0xf] %v2407
        %2409 = vst [vmem:[%s2288 + $0xdc] sm:$0xf] %v1935
        %v2410 = vld [vmem:[%s2288 + $0xe0] sm:$0x1]
        %v2411 = vsel %vm2297, %v1936, %v2410
        %2412 = vst [vmem:[%s2288 + $0xe0] sm:$0x1] %v2411
        %v2413 = vld [vmem:[%s2288 + $0xe4] sm:$0xf]
        %v2414 = vsel %vm2291, %v1943, %v2413
        %2415 = vst [vmem:[%s2288 + $0xe4] sm:$0xf] %v2414
        %2416 = vst [vmem:[%s2288 + $0xe8] sm:$0xf] %v1952
        %v2417 = vld [vmem:[%s2288 + $0xec] sm:$0x1]
        %v2418 = vsel %vm2297, %v1953, %v2417
        %2419 = vst [vmem:[%s2288 + $0xec] sm:$0x1] %v2418
        %v2420 = vld [vmem:[%s2288 + $0xf0] sm:$0xf]
        %v2421 = vsel %vm2291, %v1960, %v2420
        %2422 = vst [vmem:[%s2288 + $0xf0] sm:$0xf] %v2421
        %2423 = vst [vmem:[%s2288 + $0xf4] sm:$0xf] %v1969
        %v2424 = vld [vmem:[%s2288 + $0xf8] sm:$0x1]
        %v2425 = vsel %vm2297, %v1970, %v2424
        %2426 = vst [vmem:[%s2288 + $0xf8] sm:$0x1] %v2425
        %v2427 = vld [vmem:[%s2288 + $0xfc] sm:$0xf]
        %v2428 = vsel %vm2291, %v1977, %v2427
        %2429 = vst [vmem:[%s2288 + $0xfc] sm:$0xf] %v2428
        %2430 = vst [vmem:[%s2288 + $0x100] sm:$0xf] %v1986
        %v2431 = vld [vmem:[%s2288 + $0x104] sm:$0x1]
        %v2432 = vsel %vm2297, %v1987, %v2431
        %2433 = vst [vmem:[%s2288 + $0x104] sm:$0x1] %v2432
        %v2434 = vld [vmem:[%s2288 + $0x108] sm:$0xf]
        %v2435 = vsel %vm2291, %v1994, %v2434
        %2436 = vst [vmem:[%s2288 + $0x108] sm:$0xf] %v2435
        %2437 = vst [vmem:[%s2288 + $0x10c] sm:$0xf] %v2003
        %v2438 = vld [vmem:[%s2288 + $0x110] sm:$0x1]
        %v2439 = vsel %vm2297, %v2004, %v2438
        %2440 = vst [vmem:[%s2288 + $0x110] sm:$0x1] %v2439
        %v2441 = vld [vmem:[%s2288 + $0x114] sm:$0xf]
        %v2442 = vsel %vm2291, %v2011, %v2441
        %2443 = vst [vmem:[%s2288 + $0x114] sm:$0xf] %v2442
        %2444 = vst [vmem:[%s2288 + $0x118] sm:$0xf] %v2020
        %v2445 = vld [vmem:[%s2288 + $0x11c] sm:$0x1]
        %v2446 = vsel %vm2297, %v2021, %v2445
        %2447 = vst [vmem:[%s2288 + $0x11c] sm:$0x1] %v2446
        %v2448 = vld [vmem:[%s2288 + $0x120] sm:$0xf]
        %v2449 = vsel %vm2291, %v2028, %v2448
        %2450 = vst [vmem:[%s2288 + $0x120] sm:$0xf] %v2449
        %2451 = vst [vmem:[%s2288 + $0x124] sm:$0xf] %v2037
        %v2452 = vld [vmem:[%s2288 + $0x128] sm:$0x1]
        %v2453 = vsel %vm2297, %v2038, %v2452
        %2454 = vst [vmem:[%s2288 + $0x128] sm:$0x1] %v2453
        %v2455 = vld [vmem:[%s2288 + $0x12c] sm:$0xf]
        %v2456 = vsel %vm2291, %v2045, %v2455
        %2457 = vst [vmem:[%s2288 + $0x12c] sm:$0xf] %v2456
        %2458 = vst [vmem:[%s2288 + $0x130] sm:$0xf] %v2054
        %v2459 = vld [vmem:[%s2288 + $0x134] sm:$0x1]
        %v2460 = vsel %vm2297, %v2055, %v2459
        %2461 = vst [vmem:[%s2288 + $0x134] sm:$0x1] %v2460
        %v2462 = vld [vmem:[%s2288 + $0x138] sm:$0xf]
        %v2463 = vsel %vm2291, %v2062, %v2462
        %2464 = vst [vmem:[%s2288 + $0x138] sm:$0xf] %v2463
        %2465 = vst [vmem:[%s2288 + $0x13c] sm:$0xf] %v2071
        %v2466 = vld [vmem:[%s2288 + $0x140] sm:$0x1]
        %v2467 = vsel %vm2297, %v2072, %v2466
        %2468 = vst [vmem:[%s2288 + $0x140] sm:$0x1] %v2467
        %v2469 = vld [vmem:[%s2288 + $0x144] sm:$0xf]
        %v2470 = vsel %vm2291, %v2079, %v2469
        %2471 = vst [vmem:[%s2288 + $0x144] sm:$0xf] %v2470
        %2472 = vst [vmem:[%s2288 + $0x148] sm:$0xf] %v2088
        %v2473 = vld [vmem:[%s2288 + $0x14c] sm:$0x1]
        %v2474 = vsel %vm2297, %v2089, %v2473
        %2475 = vst [vmem:[%s2288 + $0x14c] sm:$0x1] %v2474
        %v2476 = vld [vmem:[%s2288 + $0x150] sm:$0xf]
        %v2477 = vsel %vm2291, %v2096, %v2476
        %2478 = vst [vmem:[%s2288 + $0x150] sm:$0xf] %v2477
        %2479 = vst [vmem:[%s2288 + $0x154] sm:$0xf] %v2105
        %v2480 = vld [vmem:[%s2288 + $0x158] sm:$0x1]
        %v2481 = vsel %vm2297, %v2106, %v2480
        %2482 = vst [vmem:[%s2288 + $0x158] sm:$0x1] %v2481
        %v2483 = vld [vmem:[%s2288 + $0x15c] sm:$0xf]
        %v2484 = vsel %vm2291, %v2113, %v2483
        %2485 = vst [vmem:[%s2288 + $0x15c] sm:$0xf] %v2484
        %2486 = vst [vmem:[%s2288 + $0x160] sm:$0xf] %v2122
        %v2487 = vld [vmem:[%s2288 + $0x164] sm:$0x1]
        %v2488 = vsel %vm2297, %v2123, %v2487
        %2489 = vst [vmem:[%s2288 + $0x164] sm:$0x1] %v2488
        %v2490 = vld [vmem:[%s2288 + $0x168] sm:$0xf]
        %v2491 = vsel %vm2291, %v2130, %v2490
        %2492 = vst [vmem:[%s2288 + $0x168] sm:$0xf] %v2491
        %2493 = vst [vmem:[%s2288 + $0x16c] sm:$0xf] %v2139
        %v2494 = vld [vmem:[%s2288 + $0x170] sm:$0x1]
        %v2495 = vsel %vm2297, %v2140, %v2494
        %2496 = vst [vmem:[%s2288 + $0x170] sm:$0x1] %v2495
        %v2497 = vld [vmem:[%s2288 + $0x174] sm:$0xf]
        %v2498 = vsel %vm2291, %v2147, %v2497
        %2499 = vst [vmem:[%s2288 + $0x174] sm:$0xf] %v2498
        %2500 = vst [vmem:[%s2288 + $0x178] sm:$0xf] %v2156
        %v2501 = vld [vmem:[%s2288 + $0x17c] sm:$0x1]
        %v2502 = vsel %vm2297, %v2157, %v2501
        %2503 = vst [vmem:[%s2288 + $0x17c] sm:$0x1] %v2502
        %v2504 = vld [vmem:[%s2288 + $0x180] sm:$0xf]
        %v2505 = vsel %vm2291, %v2164, %v2504
        %2506 = vst [vmem:[%s2288 + $0x180] sm:$0xf] %v2505
        %2507 = vst [vmem:[%s2288 + $0x184] sm:$0xf] %v2173
        %v2508 = vld [vmem:[%s2288 + $0x188] sm:$0x1]
        %v2509 = vsel %vm2297, %v2174, %v2508
        %2510 = vst [vmem:[%s2288 + $0x188] sm:$0x1] %v2509
        %v2511 = vld [vmem:[%s2288 + $0x18c] sm:$0xf]
        %v2512 = vsel %vm2291, %v2181, %v2511
        %2513 = vst [vmem:[%s2288 + $0x18c] sm:$0xf] %v2512
        %2514 = vst [vmem:[%s2288 + $0x190] sm:$0xf] %v2190
        %v2515 = vld [vmem:[%s2288 + $0x194] sm:$0x1]
        %v2516 = vsel %vm2297, %v2191, %v2515
        %2517 = vst [vmem:[%s2288 + $0x194] sm:$0x1] %v2516
        %v2518 = vld [vmem:[#allocation2] sm:$0xf]
        %v2519 = vld [vmem:[#allocation2 + $0x4] sm:$0xf]
        %v2520 = vld [vmem:[#allocation2 + $0xc] sm:$0xf]
        %v2521 = vld [vmem:[#allocation2 + $0x10] sm:$0xf]
        %v2522 = vld [vmem:[#allocation2 + $0x18] sm:$0xf]
        %v2523 = vld [vmem:[#allocation2 + $0x1c] sm:$0xf]
        %v2524 = vld [vmem:[#allocation2 + $0x24] sm:$0xf]
        %v2525 = vld [vmem:[#allocation2 + $0x28] sm:$0xf]
        %v2526 = vld [vmem:[#allocation2 + $0x30] sm:$0xf]
        %v2527 = vld [vmem:[#allocation2 + $0x34] sm:$0xf]
        %v2528 = vld [vmem:[#allocation2 + $0x3c] sm:$0xf]
        %v2529 = vld [vmem:[#allocation2 + $0x40] sm:$0xf]
        %v2530 = vld [vmem:[#allocation2 + $0x48] sm:$0xf]
        %v2531 = vld [vmem:[#allocation2 + $0x4c] sm:$0xf]
        %v2532 = vld [vmem:[#allocation2 + $0x54] sm:$0xf]
        %v2533 = vld [vmem:[#allocation2 + $0x58] sm:$0xf]
        %v2534 = vld [vmem:[#allocation2 + $0x60] sm:$0xf]
        %v2535 = vld [vmem:[#allocation2 + $0x64] sm:$0xf]
        %v2536 = vld [vmem:[#allocation2 + $0x6c] sm:$0xf]
        %v2537 = vld [vmem:[#allocation2 + $0x70] sm:$0xf]
        %v2538 = vld [vmem:[#allocation2 + $0x78] sm:$0xf]
        %v2539 = vld [vmem:[#allocation2 + $0x7c] sm:$0xf]
        %v2540 = vld [vmem:[#allocation2 + $0x84] sm:$0xf]
        %v2541 = vld [vmem:[#allocation2 + $0x88] sm:$0xf]
        %v2542 = vld [vmem:[#allocation2 + $0x90] sm:$0xf]
        %v2543 = vld [vmem:[#allocation2 + $0x94] sm:$0xf]
        %v2544 = vld [vmem:[#allocation2 + $0x9c] sm:$0xf]
        %v2545 = vld [vmem:[#allocation2 + $0xa0] sm:$0xf]
        %v2546 = vld [vmem:[#allocation2 + $0xa8] sm:$0xf]
        %v2547 = vld [vmem:[#allocation2 + $0xac] sm:$0xf]
        %v2548 = vld [vmem:[#allocation2 + $0xb4] sm:$0xf]
        %v2549 = vld [vmem:[#allocation2 + $0xb8] sm:$0xf]
        %v2550 = vld [vmem:[#allocation2 + $0xd8] sm:$0xf]
        %v2551 = vld [vmem:[#allocation2 + $0xdc] sm:$0xf]
        %v2552 = vld [vmem:[#allocation2 + $0xe4] sm:$0xf]
        %v2553 = vld [vmem:[#allocation2 + $0xe8] sm:$0xf]
        %v2554 = vld [vmem:[#allocation2 + $0xf0] sm:$0xf]
        %v2555 = vld [vmem:[#allocation2 + $0xf4] sm:$0xf]
        %v2556 = vld [vmem:[#allocation2 + $0xfc] sm:$0xf]
        %v2557 = vld [vmem:[#allocation2 + $0x100] sm:$0xf]
        %v2558 = vld [vmem:[#allocation2 + $0x108] sm:$0xf]
        %v2559 = vld [vmem:[#allocation2 + $0x10c] sm:$0xf]
        %v2560 = vld [vmem:[#allocation2 + $0x114] sm:$0xf]
        %v2561 = vld [vmem:[#allocation2 + $0x118] sm:$0xf]
        %v2562 = vld [vmem:[#allocation2 + $0x120] sm:$0xf]
        %v2563 = vld [vmem:[#allocation2 + $0x124] sm:$0xf]
        %v2564 = vld [vmem:[#allocation2 + $0x12c] sm:$0xf]
        %v2565 = vld [vmem:[#allocation2 + $0x130] sm:$0xf]
        %v2566 = vld [vmem:[#allocation2 + $0x138] sm:$0xf]
        %v2567 = vld [vmem:[#allocation2 + $0x13c] sm:$0xf]
        %v2568 = vld [vmem:[#allocation2 + $0x144] sm:$0xf]
        %v2569 = vld [vmem:[#allocation2 + $0x148] sm:$0xf]
        %v2570 = vld [vmem:[#allocation2 + $0x150] sm:$0xf]
        %v2571 = vld [vmem:[#allocation2 + $0x154] sm:$0xf]
        %v2572 = vld [vmem:[#allocation2 + $0x15c] sm:$0xf]
        %v2573 = vld [vmem:[#allocation2 + $0x160] sm:$0xf]
        %v2574 = vld [vmem:[#allocation2 + $0x168] sm:$0xf]
        %v2575 = vld [vmem:[#allocation2 + $0x16c] sm:$0xf]
        %v2576 = vld [vmem:[#allocation2 + $0x174] sm:$0xf]
        %v2577 = vld [vmem:[#allocation2 + $0x178] sm:$0xf]
        %v2578 = vld [vmem:[#allocation2 + $0x180] sm:$0xf]
        %v2579 = vld [vmem:[#allocation2 + $0x184] sm:$0xf]
        %v2580 = vld [vmem:[#allocation2 + $0x18c] sm:$0xf]
        %v2581 = vld [vmem:[#allocation2 + $0x190] sm:$0xf]
        %v2646 = vunpack.c.l.b16 %v2518
        %v2647 = vunpack.c.l.b16 %v2519
        %v2648 = vunpack.c.l.b16 %v2520
        %v2649 = vunpack.c.l.b16 %v2521
        %v2650 = vunpack.c.l.b16 %v2522
        %v2651 = vunpack.c.l.b16 %v2523
        %v2652 = vunpack.c.l.b16 %v2524
        %v2653 = vunpack.c.l.b16 %v2525
        %v2654 = vunpack.c.l.b16 %v2526
        %v2655 = vunpack.c.l.b16 %v2527
        %v2656 = vunpack.c.l.b16 %v2528
        %v2657 = vunpack.c.l.b16 %v2529
        %v2658 = vunpack.c.l.b16 %v2530
        %v2659 = vunpack.c.l.b16 %v2531
        %v2660 = vunpack.c.l.b16 %v2532
        %v2661 = vunpack.c.l.b16 %v2533
        %v2662 = vunpack.c.l.b16 %v2534
        %v2663 = vunpack.c.l.b16 %v2535
        %v2664 = vunpack.c.l.b16 %v2536
        %v2665 = vunpack.c.l.b16 %v2537
        %v2666 = vunpack.c.l.b16 %v2538
        %v2667 = vunpack.c.l.b16 %v2539
        %v2668 = vunpack.c.l.b16 %v2540
        %v2669 = vunpack.c.l.b16 %v2541
        %v2670 = vunpack.c.l.b16 %v2542
        %v2671 = vunpack.c.l.b16 %v2543
        %v2672 = vunpack.c.l.b16 %v2544
        %v2673 = vunpack.c.l.b16 %v2545
        %v2674 = vunpack.c.l.b16 %v2546
        %v2675 = vunpack.c.l.b16 %v2547
        %v2676 = vunpack.c.l.b16 %v2548
        %v2677 = vunpack.c.l.b16 %v2549
        %v2678 = vunpack.c.l.b16 %v2550
        %v2679 = vunpack.c.l.b16 %v2551
        %v2680 = vunpack.c.l.b16 %v2552
        %v2681 = vunpack.c.l.b16 %v2553
        %v2682 = vunpack.c.l.b16 %v2554
        %v2683 = vunpack.c.l.b16 %v2555
        %v2684 = vunpack.c.l.b16 %v2556
        %v2685 = vunpack.c.l.b16 %v2557
        %v2686 = vunpack.c.l.b16 %v2558
        %v2687 = vunpack.c.l.b16 %v2559
        %v2688 = vunpack.c.l.b16 %v2560
        %v2689 = vunpack.c.l.b16 %v2561
        %v2690 = vunpack.c.l.b16 %v2562
        %v2691 = vunpack.c.l.b16 %v2563
        %v2692 = vunpack.c.l.b16 %v2564
        %v2693 = vunpack.c.l.b16 %v2565
        %v2694 = vunpack.c.l.b16 %v2566
        %v2695 = vunpack.c.l.b16 %v2567
        %v2696 = vunpack.c.l.b16 %v2568
        %v2697 = vunpack.c.l.b16 %v2569
        %v2698 = vunpack.c.l.b16 %v2570
        %v2699 = vunpack.c.l.b16 %v2571
        %v2700 = vunpack.c.l.b16 %v2572
        %v2701 = vunpack.c.l.b16 %v2573
        %v2702 = vunpack.c.l.b16 %v2574
        %v2703 = vunpack.c.l.b16 %v2575
        %v2704 = vunpack.c.l.b16 %v2576
        %v2705 = vunpack.c.l.b16 %v2577
        %v2706 = vunpack.c.l.b16 %v2578
        %v2707 = vunpack.c.l.b16 %v2579
        %v2708 = vunpack.c.l.b16 %v2580
        %v2709 = vunpack.c.l.b16 %v2581
        %v2710 = vpack.c.b16 %v2647, %v2646
        %v2711 = vpack.c.b16 %v2649, %v2648
        %v2712 = vpack.c.b16 %v2651, %v2650
        %v2713 = vpack.c.b16 %v2653, %v2652
        %v2714 = vpack.c.b16 %v2655, %v2654
        %v2715 = vpack.c.b16 %v2657, %v2656
        %v2716 = vpack.c.b16 %v2659, %v2658
        %v2717 = vpack.c.b16 %v2661, %v2660
        %v2718 = vpack.c.b16 %v2663, %v2662
        %v2719 = vpack.c.b16 %v2665, %v2664
        %v2720 = vpack.c.b16 %v2667, %v2666
        %v2721 = vpack.c.b16 %v2669, %v2668
        %v2722 = vpack.c.b16 %v2671, %v2670
        %v2723 = vpack.c.b16 %v2673, %v2672
        %v2724 = vpack.c.b16 %v2675, %v2674
        %v2725 = vpack.c.b16 %v2677, %v2676
        %v2726 = vpack.c.b16 %v2679, %v2678
        %v2727 = vpack.c.b16 %v2681, %v2680
        %v2728 = vpack.c.b16 %v2683, %v2682
        %v2729 = vpack.c.b16 %v2685, %v2684
        %v2730 = vpack.c.b16 %v2687, %v2686
        %v2731 = vpack.c.b16 %v2689, %v2688
        %v2732 = vpack.c.b16 %v2691, %v2690
        %v2733 = vpack.c.b16 %v2693, %v2692
        %v2734 = vpack.c.b16 %v2695, %v2694
        %v2735 = vpack.c.b16 %v2697, %v2696
        %v2736 = vpack.c.b16 %v2699, %v2698
        %v2737 = vpack.c.b16 %v2701, %v2700
        %v2738 = vpack.c.b16 %v2703, %v2702
        %v2739 = vpack.c.b16 %v2705, %v2704
        %v2740 = vpack.c.b16 %v2707, %v2706
        %v2741 = vpack.c.b16 %v2709, %v2708
        %2774 = vst [vmem:[#allocation3] sm:$0xff] %v2710
        %2775 = vst [vmem:[#allocation3 + $0x48] sm:$0xff] %v2711
        %2776 = vst [vmem:[#allocation3 + $0x90] sm:$0xff] %v2712
        %2777 = vst [vmem:[#allocation3 + $0xd8] sm:$0xff] %v2713
        %2778 = vst [vmem:[#allocation3 + $0x120] sm:$0xff] %v2714
        %2779 = vst [vmem:[#allocation3 + $0x168] sm:$0xff] %v2715
        %2780 = vst [vmem:[#allocation3 + $0x1b0] sm:$0xff] %v2716
        %2781 = vst [vmem:[#allocation3 + $0x1f8] sm:$0xff] %v2717
        %2782 = vst [vmem:[#allocation3 + $0x240] sm:$0xff] %v2718
        %2783 = vst [vmem:[#allocation3 + $0x288] sm:$0xff] %v2719
        %2784 = vst [vmem:[#allocation3 + $0x2d0] sm:$0xff] %v2720
        %2785 = vst [vmem:[#allocation3 + $0x318] sm:$0xff] %v2721
        %2786 = vst [vmem:[#allocation3 + $0x360] sm:$0xff] %v2722
        %2787 = vst [vmem:[#allocation3 + $0x3a8] sm:$0xff] %v2723
        %2788 = vst [vmem:[#allocation3 + $0x3f0] sm:$0xff] %v2724
        %2789 = vst [vmem:[#allocation3 + $0x438] sm:$0xff] %v2725
        %2790 = vst [vmem:[#allocation3 + $0x480] sm:$0xff] %v2726
        %2791 = vst [vmem:[#allocation3 + $0x4c8] sm:$0xff] %v2727
        %2792 = vst [vmem:[#allocation3 + $0x510] sm:$0xff] %v2728
        %2793 = vst [vmem:[#allocation3 + $0x558] sm:$0xff] %v2729
        %2794 = vst [vmem:[#allocation3 + $0x5a0] sm:$0xff] %v2730
        %2795 = vst [vmem:[#allocation3 + $0x5e8] sm:$0xff] %v2731
        %2796 = vst [vmem:[#allocation3 + $0x630] sm:$0xff] %v2732
        %2797 = vst [vmem:[#allocation3 + $0x678] sm:$0xff] %v2733
        %2798 = vst [vmem:[#allocation3 + $0x6c0] sm:$0xff] %v2734
        %2799 = vst [vmem:[#allocation3 + $0x708] sm:$0xff] %v2735
        %2800 = vst [vmem:[#allocation3 + $0x750] sm:$0xff] %v2736
        %2801 = vst [vmem:[#allocation3 + $0x798] sm:$0xff] %v2737
        %2802 = vst [vmem:[#allocation3 + $0x7e0] sm:$0xff] %v2738
        %2803 = vst [vmem:[#allocation3 + $0x828] sm:$0xff] %v2739
        %2804 = vst [vmem:[#allocation3 + $0x870] sm:$0xff] %v2740
        %2805 = vst [vmem:[#allocation3 + $0x8b8] sm:$0xff] %v2741
        %v2806 = vld [vmem:[#allocation2] sm:$0xf]
        %v2807 = vld [vmem:[#allocation2 + $0x4] sm:$0xf]
        %v2808 = vld [vmem:[#allocation2 + $0x8] sm:$0x1]
        %v2809 = vld [vmem:[#allocation2 + $0xc] sm:$0xf]
        %v2810 = vld [vmem:[#allocation2 + $0x10] sm:$0xf]
        %v2811 = vld [vmem:[#allocation2 + $0x14] sm:$0x1]
        %v2812 = vld [vmem:[#allocation2 + $0x18] sm:$0xf]
        %v2813 = vld [vmem:[#allocation2 + $0x1c] sm:$0xf]
        %v2814 = vld [vmem:[#allocation2 + $0x20] sm:$0x1]
        %v2815 = vld [vmem:[#allocation2 + $0x24] sm:$0xf]
        %v2816 = vld [vmem:[#allocation2 + $0x28] sm:$0xf]
        %v2817 = vld [vmem:[#allocation2 + $0x2c] sm:$0x1]
        %v2818 = vld [vmem:[#allocation2 + $0x30] sm:$0xf]
        %v2819 = vld [vmem:[#allocation2 + $0x34] sm:$0xf]
        %v2820 = vld [vmem:[#allocation2 + $0x38] sm:$0x1]
        %v2821 = vld [vmem:[#allocation2 + $0x3c] sm:$0xf]
        %v2822 = vld [vmem:[#allocation2 + $0x40] sm:$0xf]
        %v2823 = vld [vmem:[#allocation2 + $0x44] sm:$0x1]
        %v2824 = vld [vmem:[#allocation2 + $0x48] sm:$0xf]
        %v2825 = vld [vmem:[#allocation2 + $0x4c] sm:$0xf]
        %v2826 = vld [vmem:[#allocation2 + $0x50] sm:$0x1]
        %v2827 = vld [vmem:[#allocation2 + $0x54] sm:$0xf]
        %v2828 = vld [vmem:[#allocation2 + $0x58] sm:$0xf]
        %v2829 = vld [vmem:[#allocation2 + $0x5c] sm:$0x1]
        %v2830 = vld [vmem:[#allocation2 + $0x60] sm:$0xf]
        %v2831 = vld [vmem:[#allocation2 + $0x64] sm:$0xf]
        %v2832 = vld [vmem:[#allocation2 + $0x68] sm:$0x1]
        %v2833 = vld [vmem:[#allocation2 + $0x6c] sm:$0xf]
        %v2834 = vld [vmem:[#allocation2 + $0x70] sm:$0xf]
        %v2835 = vld [vmem:[#allocation2 + $0x74] sm:$0x1]
        %v2836 = vld [vmem:[#allocation2 + $0x78] sm:$0xf]
        %v2837 = vld [vmem:[#allocation2 + $0x7c] sm:$0xf]
        %v2838 = vld [vmem:[#allocation2 + $0x80] sm:$0x1]
        %v2839 = vld [vmem:[#allocation2 + $0x84] sm:$0xf]
        %v2840 = vld [vmem:[#allocation2 + $0x88] sm:$0xf]
        %v2841 = vld [vmem:[#allocation2 + $0x8c] sm:$0x1]
        %v2842 = vld [vmem:[#allocation2 + $0x90] sm:$0xf]
        %v2843 = vld [vmem:[#allocation2 + $0x94] sm:$0xf]
        %v2844 = vld [vmem:[#allocation2 + $0x98] sm:$0x1]
        %v2845 = vld [vmem:[#allocation2 + $0x9c] sm:$0xf]
        %v2846 = vld [vmem:[#allocation2 + $0xa0] sm:$0xf]
        %v2847 = vld [vmem:[#allocation2 + $0xa4] sm:$0x1]
        %v2848 = vld [vmem:[#allocation2 + $0xa8] sm:$0xf]
        %v2849 = vld [vmem:[#allocation2 + $0xac] sm:$0xf]
        %v2850 = vld [vmem:[#allocation2 + $0xb0] sm:$0x1]
        %v2851 = vld [vmem:[#allocation2 + $0xb4] sm:$0xf]
        %v2852 = vld [vmem:[#allocation2 + $0xb8] sm:$0xf]
        %v2853 = vld [vmem:[#allocation2 + $0xbc] sm:$0x1]
        %v2854 = vld [vmem:[#allocation2 + $0xd8] sm:$0xf]
        %v2855 = vld [vmem:[#allocation2 + $0xdc] sm:$0xf]
        %v2856 = vld [vmem:[#allocation2 + $0xe0] sm:$0x1]
        %v2857 = vld [vmem:[#allocation2 + $0xe4] sm:$0xf]
        %v2858 = vld [vmem:[#allocation2 + $0xe8] sm:$0xf]
        %v2859 = vld [vmem:[#allocation2 + $0xec] sm:$0x1]
        %v2860 = vld [vmem:[#allocation2 + $0xf0] sm:$0xf]
        %v2861 = vld [vmem:[#allocation2 + $0xf4] sm:$0xf]
        %v2862 = vld [vmem:[#allocation2 + $0xf8] sm:$0x1]
        %v2863 = vld [vmem:[#allocation2 + $0xfc] sm:$0xf]
        %v2864 = vld [vmem:[#allocation2 + $0x100] sm:$0xf]
        %v2865 = vld [vmem:[#allocation2 + $0x104] sm:$0x1]
        %v2866 = vld [vmem:[#allocation2 + $0x108] sm:$0xf]
        %v2867 = vld [vmem:[#allocation2 + $0x10c] sm:$0xf]
        %v2868 = vld [vmem:[#allocation2 + $0x110] sm:$0x1]
        %v2869 = vld [vmem:[#allocation2 + $0x114] sm:$0xf]
        %v2870 = vld [vmem:[#allocation2 + $0x118] sm:$0xf]
        %v2871 = vld [vmem:[#allocation2 + $0x11c] sm:$0x1]
        %v2872 = vld [vmem:[#allocation2 + $0x120] sm:$0xf]
        %v2873 = vld [vmem:[#allocation2 + $0x124] sm:$0xf]
        %v2874 = vld [vmem:[#allocation2 + $0x128] sm:$0x1]
        %v2875 = vld [vmem:[#allocation2 + $0x12c] sm:$0xf]
        %v2876 = vld [vmem:[#allocation2 + $0x130] sm:$0xf]
        %v2877 = vld [vmem:[#allocation2 + $0x134] sm:$0x1]
        %v2878 = vld [vmem:[#allocation2 + $0x138] sm:$0xf]
        %v2879 = vld [vmem:[#allocation2 + $0x13c] sm:$0xf]
        %v2880 = vld [vmem:[#allocation2 + $0x140] sm:$0x1]
        %v2881 = vld [vmem:[#allocation2 + $0x144] sm:$0xf]
        %v2882 = vld [vmem:[#allocation2 + $0x148] sm:$0xf]
        %v2883 = vld [vmem:[#allocation2 + $0x14c] sm:$0x1]
        %v2884 = vld [vmem:[#allocation2 + $0x150] sm:$0xf]
        %v2885 = vld [vmem:[#allocation2 + $0x154] sm:$0xf]
        %v2886 = vld [vmem:[#allocation2 + $0x158] sm:$0x1]
        %v2887 = vld [vmem:[#allocation2 + $0x15c] sm:$0xf]
        %v2888 = vld [vmem:[#allocation2 + $0x160] sm:$0xf]
        %v2889 = vld [vmem:[#allocation2 + $0x164] sm:$0x1]
        %v2890 = vld [vmem:[#allocation2 + $0x168] sm:$0xf]
        %v2891 = vld [vmem:[#allocation2 + $0x16c] sm:$0xf]
        %v2892 = vld [vmem:[#allocation2 + $0x170] sm:$0x1]
        %v2893 = vld [vmem:[#allocation2 + $0x174] sm:$0xf]
        %v2894 = vld [vmem:[#allocation2 + $0x178] sm:$0xf]
        %v2895 = vld [vmem:[#allocation2 + $0x17c] sm:$0x1]
        %v2896 = vld [vmem:[#allocation2 + $0x180] sm:$0xf]
        %v2897 = vld [vmem:[#allocation2 + $0x184] sm:$0xf]
        %v2898 = vld [vmem:[#allocation2 + $0x188] sm:$0x1]
        %v2899 = vld [vmem:[#allocation2 + $0x18c] sm:$0xf]
        %v2900 = vld [vmem:[#allocation2 + $0x190] sm:$0xf]
        %v2901 = vld [vmem:[#allocation2 + $0x194] sm:$0x1]
        %vm2902 = vsmask.f32 3328
        %vm2903 = vsmask.f32 7440
        %vm2904 = vmor %vm2902, %vm2903
        %v2906 = vshrl.u32 %v2806, 16
        %v2908 = vrot.slane %v2906, 4
        %v2909 = vshll.u32 %v2806, 16
        %v2911 = vrot.slane %v2909, 5
        %v2912 = vor.u32 %v2908, %v2911
        %v2913 = vrot.slane %v2912, 4
        %v2915 = vshll.u32 %v2807, 16
        %v2917 = vrot.slane %v2915, 5
        %v2918 = vsel %vm2904, %v2913, %v2917
        %v2919 = vshrl.u32 %v2807, 16
        %v2921 = vrot.slane %v2919, 4
        %v2922 = vor.u32 %v2921, %v2917
        %v2923 = vrot.slane %v2922, 4
        %v2925 = vshll.u32 %v2808, 16
        %v2927 = vrot.slane %v2925, 5
        %v2928 = vsel %vm2904, %v2923, %v2927
        %v2930 = vshrl.u32 %v2809, 16
        %v2932 = vrot.slane %v2930, 4
        %v2933 = vshll.u32 %v2809, 16
        %v2935 = vrot.slane %v2933, 5
        %v2936 = vor.u32 %v2932, %v2935
        %v2937 = vrot.slane %v2936, 4
        %v2939 = vshll.u32 %v2810, 16
        %v2941 = vrot.slane %v2939, 5
        %v2942 = vsel %vm2904, %v2937, %v2941
        %v2943 = vshrl.u32 %v2810, 16
        %v2945 = vrot.slane %v2943, 4
        %v2946 = vor.u32 %v2945, %v2941
        %v2947 = vrot.slane %v2946, 4
        %v2949 = vshll.u32 %v2811, 16
        %v2951 = vrot.slane %v2949, 5
        %v2952 = vsel %vm2904, %v2947, %v2951
        %v2954 = vshrl.u32 %v2812, 16
        %v2956 = vrot.slane %v2954, 4
        %v2957 = vshll.u32 %v2812, 16
        %v2959 = vrot.slane %v2957, 5
        %v2960 = vor.u32 %v2956, %v2959
        %v2961 = vrot.slane %v2960, 4
        %v2963 = vshll.u32 %v2813, 16
        %v2965 = vrot.slane %v2963, 5
        %v2966 = vsel %vm2904, %v2961, %v2965
        %v2967 = vshrl.u32 %v2813, 16
        %v2969 = vrot.slane %v2967, 4
        %v2970 = vor.u32 %v2969, %v2965
        %v2971 = vrot.slane %v2970, 4
        %v2973 = vshll.u32 %v2814, 16
        %v2975 = vrot.slane %v2973, 5
        %v2976 = vsel %vm2904, %v2971, %v2975
        %v2978 = vshrl.u32 %v2815, 16
        %v2980 = vrot.slane %v2978, 4
        %v2981 = vshll.u32 %v2815, 16
        %v2983 = vrot.slane %v2981, 5
        %v2984 = vor.u32 %v2980, %v2983
        %v2985 = vrot.slane %v2984, 4
        %v2987 = vshll.u32 %v2816, 16
        %v2989 = vrot.slane %v2987, 5
        %v2990 = vsel %vm2904, %v2985, %v2989
        %v2991 = vshrl.u32 %v2816, 16
        %v2993 = vrot.slane %v2991, 4
        %v2994 = vor.u32 %v2993, %v2989
        %v2995 = vrot.slane %v2994, 4
        %v2997 = vshll.u32 %v2817, 16
        %v2999 = vrot.slane %v2997, 5
        %v3000 = vsel %vm2904, %v2995, %v2999
        %v3002 = vshrl.u32 %v2818, 16
        %v3004 = vrot.slane %v3002, 4
        %v3005 = vshll.u32 %v2818, 16
        %v3007 = vrot.slane %v3005, 5
        %v3008 = vor.u32 %v3004, %v3007
        %v3009 = vrot.slane %v3008, 4
        %v3011 = vshll.u32 %v2819, 16
        %v3013 = vrot.slane %v3011, 5
        %v3014 = vsel %vm2904, %v3009, %v3013
        %v3015 = vshrl.u32 %v2819, 16
        %v3017 = vrot.slane %v3015, 4
        %v3018 = vor.u32 %v3017, %v3013
        %v3019 = vrot.slane %v3018, 4
        %v3021 = vshll.u32 %v2820, 16
        %v3023 = vrot.slane %v3021, 5
        %v3024 = vsel %vm2904, %v3019, %v3023
        %v3026 = vshrl.u32 %v2821, 16
        %v3028 = vrot.slane %v3026, 4
        %v3029 = vshll.u32 %v2821, 16
        %v3031 = vrot.slane %v3029, 5
        %v3032 = vor.u32 %v3028, %v3031
        %v3033 = vrot.slane %v3032, 4
        %v3035 = vshll.u32 %v2822, 16
        %v3037 = vrot.slane %v3035, 5
        %v3038 = vsel %vm2904, %v3033, %v3037
        %v3039 = vshrl.u32 %v2822, 16
        %v3041 = vrot.slane %v3039, 4
        %v3042 = vor.u32 %v3041, %v3037
        %v3043 = vrot.slane %v3042, 4
        %v3045 = vshll.u32 %v2823, 16
        %v3047 = vrot.slane %v3045, 5
        %v3048 = vsel %vm2904, %v3043, %v3047
        %v3050 = vshrl.u32 %v2824, 16
        %v3052 = vrot.slane %v3050, 4
        %v3053 = vshll.u32 %v2824, 16
        %v3055 = vrot.slane %v3053, 5
        %v3056 = vor.u32 %v3052, %v3055
        %v3057 = vrot.slane %v3056, 4
        %v3059 = vshll.u32 %v2825, 16
        %v3061 = vrot.slane %v3059, 5
        %v3062 = vsel %vm2904, %v3057, %v3061
        %v3063 = vshrl.u32 %v2825, 16
        %v3065 = vrot.slane %v3063, 4
        %v3066 = vor.u32 %v3065, %v3061
        %v3067 = vrot.slane %v3066, 4
        %v3069 = vshll.u32 %v2826, 16
        %v3071 = vrot.slane %v3069, 5
        %v3072 = vsel %vm2904, %v3067, %v3071
        %v3074 = vshrl.u32 %v2827, 16
        %v3076 = vrot.slane %v3074, 4
        %v3077 = vshll.u32 %v2827, 16
        %v3079 = vrot.slane %v3077, 5
        %v3080 = vor.u32 %v3076, %v3079
        %v3081 = vrot.slane %v3080, 4
        %v3083 = vshll.u32 %v2828, 16
        %v3085 = vrot.slane %v3083, 5
        %v3086 = vsel %vm2904, %v3081, %v3085
        %v3087 = vshrl.u32 %v2828, 16
        %v3089 = vrot.slane %v3087, 4
        %v3090 = vor.u32 %v3089, %v3085
        %v3091 = vrot.slane %v3090, 4
        %v3093 = vshll.u32 %v2829, 16
        %v3095 = vrot.slane %v3093, 5
        %v3096 = vsel %vm2904, %v3091, %v3095
        %v3098 = vshrl.u32 %v2830, 16
        %v3100 = vrot.slane %v3098, 4
        %v3101 = vshll.u32 %v2830, 16
        %v3103 = vrot.slane %v3101, 5
        %v3104 = vor.u32 %v3100, %v3103
        %v3105 = vrot.slane %v3104, 4
        %v3107 = vshll.u32 %v2831, 16
        %v3109 = vrot.slane %v3107, 5
        %v3110 = vsel %vm2904, %v3105, %v3109
        %v3111 = vshrl.u32 %v2831, 16
        %v3113 = vrot.slane %v3111, 4
        %v3114 = vor.u32 %v3113, %v3109
        %v3115 = vrot.slane %v3114, 4
        %v3117 = vshll.u32 %v2832, 16
        %v3119 = vrot.slane %v3117, 5
        %v3120 = vsel %vm2904, %v3115, %v3119
        %v3122 = vshrl.u32 %v2833, 16
        %v3124 = vrot.slane %v3122, 4
        %v3125 = vshll.u32 %v2833, 16
        %v3127 = vrot.slane %v3125, 5
        %v3128 = vor.u32 %v3124, %v3127
        %v3129 = vrot.slane %v3128, 4
        %v3131 = vshll.u32 %v2834, 16
        %v3133 = vrot.slane %v3131, 5
        %v3134 = vsel %vm2904, %v3129, %v3133
        %v3135 = vshrl.u32 %v2834, 16
        %v3137 = vrot.slane %v3135, 4
        %v3138 = vor.u32 %v3137, %v3133
        %v3139 = vrot.slane %v3138, 4
        %v3141 = vshll.u32 %v2835, 16
        %v3143 = vrot.slane %v3141, 5
        %v3144 = vsel %vm2904, %v3139, %v3143
        %v3146 = vshrl.u32 %v2836, 16
        %v3148 = vrot.slane %v3146, 4
        %v3149 = vshll.u32 %v2836, 16
        %v3151 = vrot.slane %v3149, 5
        %v3152 = vor.u32 %v3148, %v3151
        %v3153 = vrot.slane %v3152, 4
        %v3155 = vshll.u32 %v2837, 16
        %v3157 = vrot.slane %v3155, 5
        %v3158 = vsel %vm2904, %v3153, %v3157
        %v3159 = vshrl.u32 %v2837, 16
        %v3161 = vrot.slane %v3159, 4
        %v3162 = vor.u32 %v3161, %v3157
        %v3163 = vrot.slane %v3162, 4
        %v3165 = vshll.u32 %v2838, 16
        %v3167 = vrot.slane %v3165, 5
        %v3168 = vsel %vm2904, %v3163, %v3167
        %v3170 = vshrl.u32 %v2839, 16
        %v3172 = vrot.slane %v3170, 4
        %v3173 = vshll.u32 %v2839, 16
        %v3175 = vrot.slane %v3173, 5
        %v3176 = vor.u32 %v3172, %v3175
        %v3177 = vrot.slane %v3176, 4
        %v3179 = vshll.u32 %v2840, 16
        %v3181 = vrot.slane %v3179, 5
        %v3182 = vsel %vm2904, %v3177, %v3181
        %v3183 = vshrl.u32 %v2840, 16
        %v3185 = vrot.slane %v3183, 4
        %v3186 = vor.u32 %v3185, %v3181
        %v3187 = vrot.slane %v3186, 4
        %v3189 = vshll.u32 %v2841, 16
        %v3191 = vrot.slane %v3189, 5
        %v3192 = vsel %vm2904, %v3187, %v3191
        %v3194 = vshrl.u32 %v2842, 16
        %v3196 = vrot.slane %v3194, 4
        %v3197 = vshll.u32 %v2842, 16
        %v3199 = vrot.slane %v3197, 5
        %v3200 = vor.u32 %v3196, %v3199
        %v3201 = vrot.slane %v3200, 4
        %v3203 = vshll.u32 %v2843, 16
        %v3205 = vrot.slane %v3203, 5
        %v3206 = vsel %vm2904, %v3201, %v3205
        %v3207 = vshrl.u32 %v2843, 16
        %v3209 = vrot.slane %v3207, 4
        %v3210 = vor.u32 %v3209, %v3205
        %v3211 = vrot.slane %v3210, 4
        %v3213 = vshll.u32 %v2844, 16
        %v3215 = vrot.slane %v3213, 5
        %v3216 = vsel %vm2904, %v3211, %v3215
        %v3218 = vshrl.u32 %v2845, 16
        %v3220 = vrot.slane %v3218, 4
        %v3221 = vshll.u32 %v2845, 16
        %v3223 = vrot.slane %v3221, 5
        %v3224 = vor.u32 %v3220, %v3223
        %v3225 = vrot.slane %v3224, 4
        %v3227 = vshll.u32 %v2846, 16
        %v3229 = vrot.slane %v3227, 5
        %v3230 = vsel %vm2904, %v3225, %v3229
        %v3231 = vshrl.u32 %v2846, 16
        %v3233 = vrot.slane %v3231, 4
        %v3234 = vor.u32 %v3233, %v3229
        %v3235 = vrot.slane %v3234, 4
        %v3237 = vshll.u32 %v2847, 16
        %v3239 = vrot.slane %v3237, 5
        %v3240 = vsel %vm2904, %v3235, %v3239
        %v3242 = vshrl.u32 %v2848, 16
        %v3244 = vrot.slane %v3242, 4
        %v3245 = vshll.u32 %v2848, 16
        %v3247 = vrot.slane %v3245, 5
        %v3248 = vor.u32 %v3244, %v3247
        %v3249 = vrot.slane %v3248, 4
        %v3251 = vshll.u32 %v2849, 16
        %v3253 = vrot.slane %v3251, 5
        %v3254 = vsel %vm2904, %v3249, %v3253
        %v3255 = vshrl.u32 %v2849, 16
        %v3257 = vrot.slane %v3255, 4
        %v3258 = vor.u32 %v3257, %v3253
        %v3259 = vrot.slane %v3258, 4
        %v3261 = vshll.u32 %v2850, 16
        %v3263 = vrot.slane %v3261, 5
        %v3264 = vsel %vm2904, %v3259, %v3263
        %v3266 = vshrl.u32 %v2851, 16
        %v3268 = vrot.slane %v3266, 4
        %v3269 = vshll.u32 %v2851, 16
        %v3271 = vrot.slane %v3269, 5
        %v3272 = vor.u32 %v3268, %v3271
        %v3273 = vrot.slane %v3272, 4
        %v3275 = vshll.u32 %v2852, 16
        %v3277 = vrot.slane %v3275, 5
        %v3278 = vsel %vm2904, %v3273, %v3277
        %v3279 = vshrl.u32 %v2852, 16
        %v3281 = vrot.slane %v3279, 4
        %v3282 = vor.u32 %v3281, %v3277
        %v3283 = vrot.slane %v3282, 4
        %v3285 = vshll.u32 %v2853, 16
        %v3287 = vrot.slane %v3285, 5
        %v3288 = vsel %vm2904, %v3283, %v3287
        %v3290 = vshrl.u32 %v2854, 16
        %v3292 = vrot.slane %v3290, 4
        %v3293 = vshll.u32 %v2854, 16
        %v3295 = vrot.slane %v3293, 5
        %v3296 = vor.u32 %v3292, %v3295
        %v3297 = vrot.slane %v3296, 4
        %v3299 = vshll.u32 %v2855, 16
        %v3301 = vrot.slane %v3299, 5
        %v3302 = vsel %vm2904, %v3297, %v3301
        %v3303 = vshrl.u32 %v2855, 16
        %v3305 = vrot.slane %v3303, 4
        %v3306 = vor.u32 %v3305, %v3301
        %v3307 = vrot.slane %v3306, 4
        %v3309 = vshll.u32 %v2856, 16
        %v3311 = vrot.slane %v3309, 5
        %v3312 = vsel %vm2904, %v3307, %v3311
        %v3314 = vshrl.u32 %v2857, 16
        %v3316 = vrot.slane %v3314, 4
        %v3317 = vshll.u32 %v2857, 16
        %v3319 = vrot.slane %v3317, 5
        %v3320 = vor.u32 %v3316, %v3319
        %v3321 = vrot.slane %v3320, 4
        %v3323 = vshll.u32 %v2858, 16
        %v3325 = vrot.slane %v3323, 5
        %v3326 = vsel %vm2904, %v3321, %v3325
        %v3327 = vshrl.u32 %v2858, 16
        %v3329 = vrot.slane %v3327, 4
        %v3330 = vor.u32 %v3329, %v3325
        %v3331 = vrot.slane %v3330, 4
        %v3333 = vshll.u32 %v2859, 16
        %v3335 = vrot.slane %v3333, 5
        %v3336 = vsel %vm2904, %v3331, %v3335
        %v3338 = vshrl.u32 %v2860, 16
        %v3340 = vrot.slane %v3338, 4
        %v3341 = vshll.u32 %v2860, 16
        %v3343 = vrot.slane %v3341, 5
        %v3344 = vor.u32 %v3340, %v3343
        %v3345 = vrot.slane %v3344, 4
        %v3347 = vshll.u32 %v2861, 16
        %v3349 = vrot.slane %v3347, 5
        %v3350 = vsel %vm2904, %v3345, %v3349
        %v3351 = vshrl.u32 %v2861, 16
        %v3353 = vrot.slane %v3351, 4
        %v3354 = vor.u32 %v3353, %v3349
        %v3355 = vrot.slane %v3354, 4
        %v3357 = vshll.u32 %v2862, 16
        %v3359 = vrot.slane %v3357, 5
        %v3360 = vsel %vm2904, %v3355, %v3359
        %v3362 = vshrl.u32 %v2863, 16
        %v3364 = vrot.slane %v3362, 4
        %v3365 = vshll.u32 %v2863, 16
        %v3367 = vrot.slane %v3365, 5
        %v3368 = vor.u32 %v3364, %v3367
        %v3369 = vrot.slane %v3368, 4
        %v3371 = vshll.u32 %v2864, 16
        %v3373 = vrot.slane %v3371, 5
        %v3374 = vsel %vm2904, %v3369, %v3373
        %v3375 = vshrl.u32 %v2864, 16
        %v3377 = vrot.slane %v3375, 4
        %v3378 = vor.u32 %v3377, %v3373
        %v3379 = vrot.slane %v3378, 4
        %v3381 = vshll.u32 %v2865, 16
        %v3383 = vrot.slane %v3381, 5
        %v3384 = vsel %vm2904, %v3379, %v3383
        %v3386 = vshrl.u32 %v2866, 16
        %v3388 = vrot.slane %v3386, 4
        %v3389 = vshll.u32 %v2866, 16
        %v3391 = vrot.slane %v3389, 5
        %v3392 = vor.u32 %v3388, %v3391
        %v3393 = vrot.slane %v3392, 4
        %v3395 = vshll.u32 %v2867, 16
        %v3397 = vrot.slane %v3395, 5
        %v3398 = vsel %vm2904, %v3393, %v3397
        %v3399 = vshrl.u32 %v2867, 16
        %v3401 = vrot.slane %v3399, 4
        %v3402 = vor.u32 %v3401, %v3397
        %v3403 = vrot.slane %v3402, 4
        %v3405 = vshll.u32 %v2868, 16
        %v3407 = vrot.slane %v3405, 5
        %v3408 = vsel %vm2904, %v3403, %v3407
        %v3410 = vshrl.u32 %v2869, 16
        %v3412 = vrot.slane %v3410, 4
        %v3413 = vshll.u32 %v2869, 16
        %v3415 = vrot.slane %v3413, 5
        %v3416 = vor.u32 %v3412, %v3415
        %v3417 = vrot.slane %v3416, 4
        %v3419 = vshll.u32 %v2870, 16
        %v3421 = vrot.slane %v3419, 5
        %v3422 = vsel %vm2904, %v3417, %v3421
        %v3423 = vshrl.u32 %v2870, 16
        %v3425 = vrot.slane %v3423, 4
        %v3426 = vor.u32 %v3425, %v3421
        %v3427 = vrot.slane %v3426, 4
        %v3429 = vshll.u32 %v2871, 16
        %v3431 = vrot.slane %v3429, 5
        %v3432 = vsel %vm2904, %v3427, %v3431
        %v3434 = vshrl.u32 %v2872, 16
        %v3436 = vrot.slane %v3434, 4
        %v3437 = vshll.u32 %v2872, 16
        %v3439 = vrot.slane %v3437, 5
        %v3440 = vor.u32 %v3436, %v3439
        %v3441 = vrot.slane %v3440, 4
        %v3443 = vshll.u32 %v2873, 16
        %v3445 = vrot.slane %v3443, 5
        %v3446 = vsel %vm2904, %v3441, %v3445
        %v3447 = vshrl.u32 %v2873, 16
        %v3449 = vrot.slane %v3447, 4
        %v3450 = vor.u32 %v3449, %v3445
        %v3451 = vrot.slane %v3450, 4
        %v3453 = vshll.u32 %v2874, 16
        %v3455 = vrot.slane %v3453, 5
        %v3456 = vsel %vm2904, %v3451, %v3455
        %v3458 = vshrl.u32 %v2875, 16
        %v3460 = vrot.slane %v3458, 4
        %v3461 = vshll.u32 %v2875, 16
        %v3463 = vrot.slane %v3461, 5
        %v3464 = vor.u32 %v3460, %v3463
        %v3465 = vrot.slane %v3464, 4
        %v3467 = vshll.u32 %v2876, 16
        %v3469 = vrot.slane %v3467, 5
        %v3470 = vsel %vm2904, %v3465, %v3469
        %v3471 = vshrl.u32 %v2876, 16
        %v3473 = vrot.slane %v3471, 4
        %v3474 = vor.u32 %v3473, %v3469
        %v3475 = vrot.slane %v3474, 4
        %v3477 = vshll.u32 %v2877, 16
        %v3479 = vrot.slane %v3477, 5
        %v3480 = vsel %vm2904, %v3475, %v3479
        %v3482 = vshrl.u32 %v2878, 16
        %v3484 = vrot.slane %v3482, 4
        %v3485 = vshll.u32 %v2878, 16
        %v3487 = vrot.slane %v3485, 5
        %v3488 = vor.u32 %v3484, %v3487
        %v3489 = vrot.slane %v3488, 4
        %v3491 = vshll.u32 %v2879, 16
        %v3493 = vrot.slane %v3491, 5
        %v3494 = vsel %vm2904, %v3489, %v3493
        %v3495 = vshrl.u32 %v2879, 16
        %v3497 = vrot.slane %v3495, 4
        %v3498 = vor.u32 %v3497, %v3493
        %v3499 = vrot.slane %v3498, 4
        %v3501 = vshll.u32 %v2880, 16
        %v3503 = vrot.slane %v3501, 5
        %v3504 = vsel %vm2904, %v3499, %v3503
        %v3506 = vshrl.u32 %v2881, 16
        %v3508 = vrot.slane %v3506, 4
        %v3509 = vshll.u32 %v2881, 16
        %v3511 = vrot.slane %v3509, 5
        %v3512 = vor.u32 %v3508, %v3511
        %v3513 = vrot.slane %v3512, 4
        %v3515 = vshll.u32 %v2882, 16
        %v3517 = vrot.slane %v3515, 5
        %v3518 = vsel %vm2904, %v3513, %v3517
        %v3519 = vshrl.u32 %v2882, 16
        %v3521 = vrot.slane %v3519, 4
        %v3522 = vor.u32 %v3521, %v3517
        %v3523 = vrot.slane %v3522, 4
        %v3525 = vshll.u32 %v2883, 16
        %v3527 = vrot.slane %v3525, 5
        %v3528 = vsel %vm2904, %v3523, %v3527
        %v3530 = vshrl.u32 %v2884, 16
        %v3532 = vrot.slane %v3530, 4
        %v3533 = vshll.u32 %v2884, 16
        %v3535 = vrot.slane %v3533, 5
        %v3536 = vor.u32 %v3532, %v3535
        %v3537 = vrot.slane %v3536, 4
        %v3539 = vshll.u32 %v2885, 16
        %v3541 = vrot.slane %v3539, 5
        %v3542 = vsel %vm2904, %v3537, %v3541
        %v3543 = vshrl.u32 %v2885, 16
        %v3545 = vrot.slane %v3543, 4
        %v3546 = vor.u32 %v3545, %v3541
        %v3547 = vrot.slane %v3546, 4
        %v3549 = vshll.u32 %v2886, 16
        %v3551 = vrot.slane %v3549, 5
        %v3552 = vsel %vm2904, %v3547, %v3551
        %v3554 = vshrl.u32 %v2887, 16
        %v3556 = vrot.slane %v3554, 4
        %v3557 = vshll.u32 %v2887, 16
        %v3559 = vrot.slane %v3557, 5
        %v3560 = vor.u32 %v3556, %v3559
        %v3561 = vrot.slane %v3560, 4
        %v3563 = vshll.u32 %v2888, 16
        %v3565 = vrot.slane %v3563, 5
        %v3566 = vsel %vm2904, %v3561, %v3565
        %v3567 = vshrl.u32 %v2888, 16
        %v3569 = vrot.slane %v3567, 4
        %v3570 = vor.u32 %v3569, %v3565
        %v3571 = vrot.slane %v3570, 4
        %v3573 = vshll.u32 %v2889, 16
        %v3575 = vrot.slane %v3573, 5
        %v3576 = vsel %vm2904, %v3571, %v3575
        %v3578 = vshrl.u32 %v2890, 16
        %v3580 = vrot.slane %v3578, 4
        %v3581 = vshll.u32 %v2890, 16
        %v3583 = vrot.slane %v3581, 5
        %v3584 = vor.u32 %v3580, %v3583
        %v3585 = vrot.slane %v3584, 4
        %v3587 = vshll.u32 %v2891, 16
        %v3589 = vrot.slane %v3587, 5
        %v3590 = vsel %vm2904, %v3585, %v3589
        %v3591 = vshrl.u32 %v2891, 16
        %v3593 = vrot.slane %v3591, 4
        %v3594 = vor.u32 %v3593, %v3589
        %v3595 = vrot.slane %v3594, 4
        %v3597 = vshll.u32 %v2892, 16
        %v3599 = vrot.slane %v3597, 5
        %v3600 = vsel %vm2904, %v3595, %v3599
        %v3602 = vshrl.u32 %v2893, 16
        %v3604 = vrot.slane %v3602, 4
        %v3605 = vshll.u32 %v2893, 16
        %v3607 = vrot.slane %v3605, 5
        %v3608 = vor.u32 %v3604, %v3607
        %v3609 = vrot.slane %v3608, 4
        %v3611 = vshll.u32 %v2894, 16
        %v3613 = vrot.slane %v3611, 5
        %v3614 = vsel %vm2904, %v3609, %v3613
        %v3615 = vshrl.u32 %v2894, 16
        %v3617 = vrot.slane %v3615, 4
        %v3618 = vor.u32 %v3617, %v3613
        %v3619 = vrot.slane %v3618, 4
        %v3621 = vshll.u32 %v2895, 16
        %v3623 = vrot.slane %v3621, 5
        %v3624 = vsel %vm2904, %v3619, %v3623
        %v3626 = vshrl.u32 %v2896, 16
        %v3628 = vrot.slane %v3626, 4
        %v3629 = vshll.u32 %v2896, 16
        %v3631 = vrot.slane %v3629, 5
        %v3632 = vor.u32 %v3628, %v3631
        %v3633 = vrot.slane %v3632, 4
        %v3635 = vshll.u32 %v2897, 16
        %v3637 = vrot.slane %v3635, 5
        %v3638 = vsel %vm2904, %v3633, %v3637
        %v3639 = vshrl.u32 %v2897, 16
        %v3641 = vrot.slane %v3639, 4
        %v3642 = vor.u32 %v3641, %v3637
        %v3643 = vrot.slane %v3642, 4
        %v3645 = vshll.u32 %v2898, 16
        %v3647 = vrot.slane %v3645, 5
        %v3648 = vsel %vm2904, %v3643, %v3647
        %v3650 = vshrl.u32 %v2899, 16
        %v3652 = vrot.slane %v3650, 4
        %v3653 = vshll.u32 %v2899, 16
        %v3655 = vrot.slane %v3653, 5
        %v3656 = vor.u32 %v3652, %v3655
        %v3657 = vrot.slane %v3656, 4
        %v3659 = vshll.u32 %v2900, 16
        %v3661 = vrot.slane %v3659, 5
        %v3662 = vsel %vm2904, %v3657, %v3661
        %v3663 = vshrl.u32 %v2900, 16
        %v3665 = vrot.slane %v3663, 4
        %v3666 = vor.u32 %v3665, %v3661
        %v3667 = vrot.slane %v3666, 4
        %v3669 = vshll.u32 %v2901, 16
        %v3671 = vrot.slane %v3669, 5
        %v3672 = vsel %vm2904, %v3667, %v3671
        %v3673 = vunpack.c.l.b16 %v2918
        %v3674 = vunpack.c.l.b16 %v2928
        %v3675 = vunpack.c.l.b16 %v2942
        %v3676 = vunpack.c.l.b16 %v2952
        %v3677 = vunpack.c.l.b16 %v2966
        %v3678 = vunpack.c.l.b16 %v2976
        %v3679 = vunpack.c.l.b16 %v2990
        %v3680 = vunpack.c.l.b16 %v3000
        %v3681 = vunpack.c.l.b16 %v3014
        %v3682 = vunpack.c.l.b16 %v3024
        %v3683 = vunpack.c.l.b16 %v3038
        %v3684 = vunpack.c.l.b16 %v3048
        %v3685 = vunpack.c.l.b16 %v3062
        %v3686 = vunpack.c.l.b16 %v3072
        %v3687 = vunpack.c.l.b16 %v3086
        %v3688 = vunpack.c.l.b16 %v3096
        %v3689 = vunpack.c.l.b16 %v3110
        %v3690 = vunpack.c.l.b16 %v3120
        %v3691 = vunpack.c.l.b16 %v3134
        %v3692 = vunpack.c.l.b16 %v3144
        %v3693 = vunpack.c.l.b16 %v3158
        %v3694 = vunpack.c.l.b16 %v3168
        %v3695 = vunpack.c.l.b16 %v3182
        %v3696 = vunpack.c.l.b16 %v3192
        %v3697 = vunpack.c.l.b16 %v3206
        %v3698 = vunpack.c.l.b16 %v3216
        %v3699 = vunpack.c.l.b16 %v3230
        %v3700 = vunpack.c.l.b16 %v3240
        %v3701 = vunpack.c.l.b16 %v3254
        %v3702 = vunpack.c.l.b16 %v3264
        %v3703 = vunpack.c.l.b16 %v3278
        %v3704 = vunpack.c.l.b16 %v3288
        %v3705 = vunpack.c.l.b16 %v3302
        %v3706 = vunpack.c.l.b16 %v3312
        %v3707 = vunpack.c.l.b16 %v3326
        %v3708 = vunpack.c.l.b16 %v3336
        %v3709 = vunpack.c.l.b16 %v3350
        %v3710 = vunpack.c.l.b16 %v3360
        %v3711 = vunpack.c.l.b16 %v3374
        %v3712 = vunpack.c.l.b16 %v3384
        %v3713 = vunpack.c.l.b16 %v3398
        %v3714 = vunpack.c.l.b16 %v3408
        %v3715 = vunpack.c.l.b16 %v3422
        %v3716 = vunpack.c.l.b16 %v3432
        %v3717 = vunpack.c.l.b16 %v3446
        %v3718 = vunpack.c.l.b16 %v3456
        %v3719 = vunpack.c.l.b16 %v3470
        %v3720 = vunpack.c.l.b16 %v3480
        %v3721 = vunpack.c.l.b16 %v3494
        %v3722 = vunpack.c.l.b16 %v3504
        %v3723 = vunpack.c.l.b16 %v3518
        %v3724 = vunpack.c.l.b16 %v3528
        %v3725 = vunpack.c.l.b16 %v3542
        %v3726 = vunpack.c.l.b16 %v3552
        %v3727 = vunpack.c.l.b16 %v3566
        %v3728 = vunpack.c.l.b16 %v3576
        %v3729 = vunpack.c.l.b16 %v3590
        %v3730 = vunpack.c.l.b16 %v3600
        %v3731 = vunpack.c.l.b16 %v3614
        %v3732 = vunpack.c.l.b16 %v3624
        %v3733 = vunpack.c.l.b16 %v3638
        %v3734 = vunpack.c.l.b16 %v3648
        %v3735 = vunpack.c.l.b16 %v3662
        %v3736 = vunpack.c.l.b16 %v3672
        %v3737 = vpack.c.b16 %v3674, %v3673
        %v3738 = vpack.c.b16 %v3676, %v3675
        %v3739 = vpack.c.b16 %v3678, %v3677
        %v3740 = vpack.c.b16 %v3680, %v3679
        %v3741 = vpack.c.b16 %v3682, %v3681
        %v3742 = vpack.c.b16 %v3684, %v3683
        %v3743 = vpack.c.b16 %v3686, %v3685
        %v3744 = vpack.c.b16 %v3688, %v3687
        %v3745 = vpack.c.b16 %v3690, %v3689
        %v3746 = vpack.c.b16 %v3692, %v3691
        %v3747 = vpack.c.b16 %v3694, %v3693
        %v3748 = vpack.c.b16 %v3696, %v3695
        %v3749 = vpack.c.b16 %v3698, %v3697
        %v3750 = vpack.c.b16 %v3700, %v3699
        %v3751 = vpack.c.b16 %v3702, %v3701
        %v3752 = vpack.c.b16 %v3704, %v3703
        %v3753 = vpack.c.b16 %v3706, %v3705
        %v3754 = vpack.c.b16 %v3708, %v3707
        %v3755 = vpack.c.b16 %v3710, %v3709
        %v3756 = vpack.c.b16 %v3712, %v3711
        %v3757 = vpack.c.b16 %v3714, %v3713
        %v3758 = vpack.c.b16 %v3716, %v3715
        %v3759 = vpack.c.b16 %v3718, %v3717
        %v3760 = vpack.c.b16 %v3720, %v3719
        %v3761 = vpack.c.b16 %v3722, %v3721
        %v3762 = vpack.c.b16 %v3724, %v3723
        %v3763 = vpack.c.b16 %v3726, %v3725
        %v3764 = vpack.c.b16 %v3728, %v3727
        %v3765 = vpack.c.b16 %v3730, %v3729
        %v3766 = vpack.c.b16 %v3732, %v3731
        %v3767 = vpack.c.b16 %v3734, %v3733
        %v3768 = vpack.c.b16 %v3736, %v3735
        %3801 = vst [vmem:[#allocation3 + $0x8] sm:$0xff] %v3737
        %3802 = vst [vmem:[#allocation3 + $0x50] sm:$0xff] %v3738
        %3803 = vst [vmem:[#allocation3 + $0x98] sm:$0xff] %v3739
        %3804 = vst [vmem:[#allocation3 + $0xe0] sm:$0xff] %v3740
        %3805 = vst [vmem:[#allocation3 + $0x128] sm:$0xff] %v3741
        %3806 = vst [vmem:[#allocation3 + $0x170] sm:$0xff] %v3742
        %3807 = vst [vmem:[#allocation3 + $0x1b8] sm:$0xff] %v3743
        %3808 = vst [vmem:[#allocation3 + $0x200] sm:$0xff] %v3744
        %3809 = vst [vmem:[#allocation3 + $0x248] sm:$0xff] %v3745
        %3810 = vst [vmem:[#allocation3 + $0x290] sm:$0xff] %v3746
        %3811 = vst [vmem:[#allocation3 + $0x2d8] sm:$0xff] %v3747
        %3812 = vst [vmem:[#allocation3 + $0x320] sm:$0xff] %v3748
        %3813 = vst [vmem:[#allocation3 + $0x368] sm:$0xff] %v3749
        %3814 = vst [vmem:[#allocation3 + $0x3b0] sm:$0xff] %v3750
        %3815 = vst [vmem:[#allocation3 + $0x3f8] sm:$0xff] %v3751
        %3816 = vst [vmem:[#allocation3 + $0x440] sm:$0xff] %v3752
        %3817 = vst [vmem:[#allocation3 + $0x488] sm:$0xff] %v3753
        %3818 = vst [vmem:[#allocation3 + $0x4d0] sm:$0xff] %v3754
        %3819 = vst [vmem:[#allocation3 + $0x518] sm:$0xff] %v3755
        %3820 = vst [vmem:[#allocation3 + $0x560] sm:$0xff] %v3756
        %3821 = vst [vmem:[#allocation3 + $0x5a8] sm:$0xff] %v3757
        %3822 = vst [vmem:[#allocation3 + $0x5f0] sm:$0xff] %v3758
        %3823 = vst [vmem:[#allocation3 + $0x638] sm:$0xff] %v3759
        %3824 = vst [vmem:[#allocation3 + $0x680] sm:$0xff] %v3760
        %3825 = vst [vmem:[#allocation3 + $0x6c8] sm:$0xff] %v3761
        %3826 = vst [vmem:[#allocation3 + $0x710] sm:$0xff] %v3762
        %3827 = vst [vmem:[#allocation3 + $0x758] sm:$0xff] %v3763
        %3828 = vst [vmem:[#allocation3 + $0x7a0] sm:$0xff] %v3764
        %3829 = vst [vmem:[#allocation3 + $0x7e8] sm:$0xff] %v3765
        %3830 = vst [vmem:[#allocation3 + $0x830] sm:$0xff] %v3766
        %3831 = vst [vmem:[#allocation3 + $0x878] sm:$0xff] %v3767
        %3832 = vst [vmem:[#allocation3 + $0x8c0] sm:$0xff] %v3768
        %v3833 = vld [vmem:[#allocation2] sm:$0xe]
        %v3834 = vld [vmem:[#allocation2 + $0x4] sm:$0xf]
        %v3835 = vld [vmem:[#allocation2 + $0x8] sm:$0x1]
        %v3836 = vld [vmem:[#allocation2 + $0xc] sm:$0xe]
        %v3837 = vld [vmem:[#allocation2 + $0x10] sm:$0xf]
        %v3838 = vld [vmem:[#allocation2 + $0x14] sm:$0x1]
        %v3839 = vld [vmem:[#allocation2 + $0x18] sm:$0xe]
        %v3840 = vld [vmem:[#allocation2 + $0x1c] sm:$0xf]
        %v3841 = vld [vmem:[#allocation2 + $0x20] sm:$0x1]
        %v3842 = vld [vmem:[#allocation2 + $0x24] sm:$0xe]
        %v3843 = vld [vmem:[#allocation2 + $0x28] sm:$0xf]
        %v3844 = vld [vmem:[#allocation2 + $0x2c] sm:$0x1]
        %v3845 = vld [vmem:[#allocation2 + $0x30] sm:$0xe]
        %v3846 = vld [vmem:[#allocation2 + $0x34] sm:$0xf]
        %v3847 = vld [vmem:[#allocation2 + $0x38] sm:$0x1]
        %v3848 = vld [vmem:[#allocation2 + $0x3c] sm:$0xe]
        %v3849 = vld [vmem:[#allocation2 + $0x40] sm:$0xf]
        %v3850 = vld [vmem:[#allocation2 + $0x44] sm:$0x1]
        %v3851 = vld [vmem:[#allocation2 + $0x48] sm:$0xe]
        %v3852 = vld [vmem:[#allocation2 + $0x4c] sm:$0xf]
        %v3853 = vld [vmem:[#allocation2 + $0x50] sm:$0x1]
        %v3854 = vld [vmem:[#allocation2 + $0x54] sm:$0xe]
        %v3855 = vld [vmem:[#allocation2 + $0x58] sm:$0xf]
        %v3856 = vld [vmem:[#allocation2 + $0x5c] sm:$0x1]
        %v3857 = vld [vmem:[#allocation2 + $0x60] sm:$0xe]
        %v3858 = vld [vmem:[#allocation2 + $0x64] sm:$0xf]
        %v3859 = vld [vmem:[#allocation2 + $0x68] sm:$0x1]
        %v3860 = vld [vmem:[#allocation2 + $0x6c] sm:$0xe]
        %v3861 = vld [vmem:[#allocation2 + $0x70] sm:$0xf]
        %v3862 = vld [vmem:[#allocation2 + $0x74] sm:$0x1]
        %v3863 = vld [vmem:[#allocation2 + $0x78] sm:$0xe]
        %v3864 = vld [vmem:[#allocation2 + $0x7c] sm:$0xf]
        %v3865 = vld [vmem:[#allocation2 + $0x80] sm:$0x1]
        %v3866 = vld [vmem:[#allocation2 + $0x84] sm:$0xe]
        %v3867 = vld [vmem:[#allocation2 + $0x88] sm:$0xf]
        %v3868 = vld [vmem:[#allocation2 + $0x8c] sm:$0x1]
        %v3869 = vld [vmem:[#allocation2 + $0x90] sm:$0xe]
        %v3870 = vld [vmem:[#allocation2 + $0x94] sm:$0xf]
        %v3871 = vld [vmem:[#allocation2 + $0x98] sm:$0x1]
        %v3872 = vld [vmem:[#allocation2 + $0x9c] sm:$0xe]
        %v3873 = vld [vmem:[#allocation2 + $0xa0] sm:$0xf]
        %v3874 = vld [vmem:[#allocation2 + $0xa4] sm:$0x1]
        %v3875 = vld [vmem:[#allocation2 + $0xa8] sm:$0xe]
        %v3876 = vld [vmem:[#allocation2 + $0xac] sm:$0xf]
        %v3877 = vld [vmem:[#allocation2 + $0xb0] sm:$0x1]
        %v3878 = vld [vmem:[#allocation2 + $0xb4] sm:$0xe]
        %v3879 = vld [vmem:[#allocation2 + $0xb8] sm:$0xf]
        %v3880 = vld [vmem:[#allocation2 + $0xbc] sm:$0x1]
        %v3881 = vld [vmem:[#allocation2 + $0xd8] sm:$0xe]
        %v3882 = vld [vmem:[#allocation2 + $0xdc] sm:$0xf]
        %v3883 = vld [vmem:[#allocation2 + $0xe0] sm:$0x1]
        %v3884 = vld [vmem:[#allocation2 + $0xe4] sm:$0xe]
        %v3885 = vld [vmem:[#allocation2 + $0xe8] sm:$0xf]
        %v3886 = vld [vmem:[#allocation2 + $0xec] sm:$0x1]
        %v3887 = vld [vmem:[#allocation2 + $0xf0] sm:$0xe]
        %v3888 = vld [vmem:[#allocation2 + $0xf4] sm:$0xf]
        %v3889 = vld [vmem:[#allocation2 + $0xf8] sm:$0x1]
        %v3890 = vld [vmem:[#allocation2 + $0xfc] sm:$0xe]
        %v3891 = vld [vmem:[#allocation2 + $0x100] sm:$0xf]
        %v3892 = vld [vmem:[#allocation2 + $0x104] sm:$0x1]
        %v3893 = vld [vmem:[#allocation2 + $0x108] sm:$0xe]
        %v3894 = vld [vmem:[#allocation2 + $0x10c] sm:$0xf]
        %v3895 = vld [vmem:[#allocation2 + $0x110] sm:$0x1]
        %v3896 = vld [vmem:[#allocation2 + $0x114] sm:$0xe]
        %v3897 = vld [vmem:[#allocation2 + $0x118] sm:$0xf]
        %v3898 = vld [vmem:[#allocation2 + $0x11c] sm:$0x1]
        %v3899 = vld [vmem:[#allocation2 + $0x120] sm:$0xe]
        %v3900 = vld [vmem:[#allocation2 + $0x124] sm:$0xf]
        %v3901 = vld [vmem:[#allocation2 + $0x128] sm:$0x1]
        %v3902 = vld [vmem:[#allocation2 + $0x12c] sm:$0xe]
        %v3903 = vld [vmem:[#allocation2 + $0x130] sm:$0xf]
        %v3904 = vld [vmem:[#allocation2 + $0x134] sm:$0x1]
        %v3905 = vld [vmem:[#allocation2 + $0x138] sm:$0xe]
        %v3906 = vld [vmem:[#allocation2 + $0x13c] sm:$0xf]
        %v3907 = vld [vmem:[#allocation2 + $0x140] sm:$0x1]
        %v3908 = vld [vmem:[#allocation2 + $0x144] sm:$0xe]
        %v3909 = vld [vmem:[#allocation2 + $0x148] sm:$0xf]
        %v3910 = vld [vmem:[#allocation2 + $0x14c] sm:$0x1]
        %v3911 = vld [vmem:[#allocation2 + $0x150] sm:$0xe]
        %v3912 = vld [vmem:[#allocation2 + $0x154] sm:$0xf]
        %v3913 = vld [vmem:[#allocation2 + $0x158] sm:$0x1]
        %v3914 = vld [vmem:[#allocation2 + $0x15c] sm:$0xe]
        %v3915 = vld [vmem:[#allocation2 + $0x160] sm:$0xf]
        %v3916 = vld [vmem:[#allocation2 + $0x164] sm:$0x1]
        %v3917 = vld [vmem:[#allocation2 + $0x168] sm:$0xe]
        %v3918 = vld [vmem:[#allocation2 + $0x16c] sm:$0xf]
        %v3919 = vld [vmem:[#allocation2 + $0x170] sm:$0x1]
        %v3920 = vld [vmem:[#allocation2 + $0x174] sm:$0xe]
        %v3921 = vld [vmem:[#allocation2 + $0x178] sm:$0xf]
        %v3922 = vld [vmem:[#allocation2 + $0x17c] sm:$0x1]
        %v3923 = vld [vmem:[#allocation2 + $0x180] sm:$0xe]
        %v3924 = vld [vmem:[#allocation2 + $0x184] sm:$0xf]
        %v3925 = vld [vmem:[#allocation2 + $0x188] sm:$0x1]
        %v3926 = vld [vmem:[#allocation2 + $0x18c] sm:$0xe]
        %v3927 = vld [vmem:[#allocation2 + $0x190] sm:$0xf]
        %v3928 = vld [vmem:[#allocation2 + $0x194] sm:$0x1]
        %vm4025 = vcmask 1042432
        %vm4026 = vcmask 1046532
        %vm4027 = vmor %vm4025, %vm4026
        %v4028 = vrot.slane %v3833, 5
        %v4029 = vrot.slane %v4028, 4
        %v4030 = vrot.slane %v3834, 5
        %v4031 = vsel %vm4027, %v4029, %v4030
        %v4032 = vrot.slane %v4030, 4
        %v4033 = vrot.slane %v3835, 5
        %v4034 = vsel %vm4027, %v4032, %v4033
        %v4035 = vrot.slane %v3836, 5
        %v4036 = vrot.slane %v4035, 4
        %v4037 = vrot.slane %v3837, 5
        %v4038 = vsel %vm4027, %v4036, %v4037
        %v4039 = vrot.slane %v4037, 4
        %v4040 = vrot.slane %v3838, 5
        %v4041 = vsel %vm4027, %v4039, %v4040
        %v4042 = vrot.slane %v3839, 5
        %v4043 = vrot.slane %v4042, 4
        %v4044 = vrot.slane %v3840, 5
        %v4045 = vsel %vm4027, %v4043, %v4044
        %v4046 = vrot.slane %v4044, 4
        %v4047 = vrot.slane %v3841, 5
        %v4048 = vsel %vm4027, %v4046, %v4047
        %v4049 = vrot.slane %v3842, 5
        %v4050 = vrot.slane %v4049, 4
        %v4051 = vrot.slane %v3843, 5
        %v4052 = vsel %vm4027, %v4050, %v4051
        %v4053 = vrot.slane %v4051, 4
        %v4054 = vrot.slane %v3844, 5
        %v4055 = vsel %vm4027, %v4053, %v4054
        %v4056 = vrot.slane %v3845, 5
        %v4057 = vrot.slane %v4056, 4
        %v4058 = vrot.slane %v3846, 5
        %v4059 = vsel %vm4027, %v4057, %v4058
        %v4060 = vrot.slane %v4058, 4
        %v4061 = vrot.slane %v3847, 5
        %v4062 = vsel %vm4027, %v4060, %v4061
        %v4063 = vrot.slane %v3848, 5
        %v4064 = vrot.slane %v4063, 4
        %v4065 = vrot.slane %v3849, 5
        %v4066 = vsel %vm4027, %v4064, %v4065
        %v4067 = vrot.slane %v4065, 4
        %v4068 = vrot.slane %v3850, 5
        %v4069 = vsel %vm4027, %v4067, %v4068
        %v4070 = vrot.slane %v3851, 5
        %v4071 = vrot.slane %v4070, 4
        %v4072 = vrot.slane %v3852, 5
        %v4073 = vsel %vm4027, %v4071, %v4072
        %v4074 = vrot.slane %v4072, 4
        %v4075 = vrot.slane %v3853, 5
        %v4076 = vsel %vm4027, %v4074, %v4075
        %v4077 = vrot.slane %v3854, 5
        %v4078 = vrot.slane %v4077, 4
        %v4079 = vrot.slane %v3855, 5
        %v4080 = vsel %vm4027, %v4078, %v4079
        %v4081 = vrot.slane %v4079, 4
        %v4082 = vrot.slane %v3856, 5
        %v4083 = vsel %vm4027, %v4081, %v4082
        %v4084 = vrot.slane %v3857, 5
        %v4085 = vrot.slane %v4084, 4
        %v4086 = vrot.slane %v3858, 5
        %v4087 = vsel %vm4027, %v4085, %v4086
        %v4088 = vrot.slane %v4086, 4
        %v4089 = vrot.slane %v3859, 5
        %v4090 = vsel %vm4027, %v4088, %v4089
        %v4091 = vrot.slane %v3860, 5
        %v4092 = vrot.slane %v4091, 4
        %v4093 = vrot.slane %v3861, 5
        %v4094 = vsel %vm4027, %v4092, %v4093
        %v4095 = vrot.slane %v4093, 4
        %v4096 = vrot.slane %v3862, 5
        %v4097 = vsel %vm4027, %v4095, %v4096
        %v4098 = vrot.slane %v3863, 5
        %v4099 = vrot.slane %v4098, 4
        %v4100 = vrot.slane %v3864, 5
        %v4101 = vsel %vm4027, %v4099, %v4100
        %v4102 = vrot.slane %v4100, 4
        %v4103 = vrot.slane %v3865, 5
        %v4104 = vsel %vm4027, %v4102, %v4103
        %v4105 = vrot.slane %v3866, 5
        %v4106 = vrot.slane %v4105, 4
        %v4107 = vrot.slane %v3867, 5
        %v4108 = vsel %vm4027, %v4106, %v4107
        %v4109 = vrot.slane %v4107, 4
        %v4110 = vrot.slane %v3868, 5
        %v4111 = vsel %vm4027, %v4109, %v4110
        %v4112 = vrot.slane %v3869, 5
        %v4113 = vrot.slane %v4112, 4
        %v4114 = vrot.slane %v3870, 5
        %v4115 = vsel %vm4027, %v4113, %v4114
        %v4116 = vrot.slane %v4114, 4
        %v4117 = vrot.slane %v3871, 5
        %v4118 = vsel %vm4027, %v4116, %v4117
        %v4119 = vrot.slane %v3872, 5
        %v4120 = vrot.slane %v4119, 4
        %v4121 = vrot.slane %v3873, 5
        %v4122 = vsel %vm4027, %v4120, %v4121
        %v4123 = vrot.slane %v4121, 4
        %v4124 = vrot.slane %v3874, 5
        %v4125 = vsel %vm4027, %v4123, %v4124
        %v4126 = vrot.slane %v3875, 5
        %v4127 = vrot.slane %v4126, 4
        %v4128 = vrot.slane %v3876, 5
        %v4129 = vsel %vm4027, %v4127, %v4128
        %v4130 = vrot.slane %v4128, 4
        %v4131 = vrot.slane %v3877, 5
        %v4132 = vsel %vm4027, %v4130, %v4131
        %v4133 = vrot.slane %v3878, 5
        %v4134 = vrot.slane %v4133, 4
        %v4135 = vrot.slane %v3879, 5
        %v4136 = vsel %vm4027, %v4134, %v4135
        %v4137 = vrot.slane %v4135, 4
        %v4138 = vrot.slane %v3880, 5
        %v4139 = vsel %vm4027, %v4137, %v4138
        %v4140 = vrot.slane %v3881, 5
        %v4141 = vrot.slane %v4140, 4
        %v4142 = vrot.slane %v3882, 5
        %v4143 = vsel %vm4027, %v4141, %v4142
        %v4144 = vrot.slane %v4142, 4
        %v4145 = vrot.slane %v3883, 5
        %v4146 = vsel %vm4027, %v4144, %v4145
        %v4147 = vrot.slane %v3884, 5
        %v4148 = vrot.slane %v4147, 4
        %v4149 = vrot.slane %v3885, 5
        %v4150 = vsel %vm4027, %v4148, %v4149
        %v4151 = vrot.slane %v4149, 4
        %v4152 = vrot.slane %v3886, 5
        %v4153 = vsel %vm4027, %v4151, %v4152
        %v4154 = vrot.slane %v3887, 5
        %v4155 = vrot.slane %v4154, 4
        %v4156 = vrot.slane %v3888, 5
        %v4157 = vsel %vm4027, %v4155, %v4156
        %v4158 = vrot.slane %v4156, 4
        %v4159 = vrot.slane %v3889, 5
        %v4160 = vsel %vm4027, %v4158, %v4159
        %v4161 = vrot.slane %v3890, 5
        %v4162 = vrot.slane %v4161, 4
        %v4163 = vrot.slane %v3891, 5
        %v4164 = vsel %vm4027, %v4162, %v4163
        %v4165 = vrot.slane %v4163, 4
        %v4166 = vrot.slane %v3892, 5
        %v4167 = vsel %vm4027, %v4165, %v4166
        %v4168 = vrot.slane %v3893, 5
        %v4169 = vrot.slane %v4168, 4
        %v4170 = vrot.slane %v3894, 5
        %v4171 = vsel %vm4027, %v4169, %v4170
        %v4172 = vrot.slane %v4170, 4
        %v4173 = vrot.slane %v3895, 5
        %v4174 = vsel %vm4027, %v4172, %v4173
        %v4175 = vrot.slane %v3896, 5
        %v4176 = vrot.slane %v4175, 4
        %v4177 = vrot.slane %v3897, 5
        %v4178 = vsel %vm4027, %v4176, %v4177
        %v4179 = vrot.slane %v4177, 4
        %v4180 = vrot.slane %v3898, 5
        %v4181 = vsel %vm4027, %v4179, %v4180
        %v4182 = vrot.slane %v3899, 5
        %v4183 = vrot.slane %v4182, 4
        %v4184 = vrot.slane %v3900, 5
        %v4185 = vsel %vm4027, %v4183, %v4184
        %v4186 = vrot.slane %v4184, 4
        %v4187 = vrot.slane %v3901, 5
        %v4188 = vsel %vm4027, %v4186, %v4187
        %v4189 = vrot.slane %v3902, 5
        %v4190 = vrot.slane %v4189, 4
        %v4191 = vrot.slane %v3903, 5
        %v4192 = vsel %vm4027, %v4190, %v4191
        %v4193 = vrot.slane %v4191, 4
        %v4194 = vrot.slane %v3904, 5
        %v4195 = vsel %vm4027, %v4193, %v4194
        %v4196 = vrot.slane %v3905, 5
        %v4197 = vrot.slane %v4196, 4
        %v4198 = vrot.slane %v3906, 5
        %v4199 = vsel %vm4027, %v4197, %v4198
        %v4200 = vrot.slane %v4198, 4
        %v4201 = vrot.slane %v3907, 5
        %v4202 = vsel %vm4027, %v4200, %v4201
        %v4203 = vrot.slane %v3908, 5
        %v4204 = vrot.slane %v4203, 4
        %v4205 = vrot.slane %v3909, 5
        %v4206 = vsel %vm4027, %v4204, %v4205
        %v4207 = vrot.slane %v4205, 4
        %v4208 = vrot.slane %v3910, 5
        %v4209 = vsel %vm4027, %v4207, %v4208
        %v4210 = vrot.slane %v3911, 5
        %v4211 = vrot.slane %v4210, 4
        %v4212 = vrot.slane %v3912, 5
        %v4213 = vsel %vm4027, %v4211, %v4212
        %v4214 = vrot.slane %v4212, 4
        %v4215 = vrot.slane %v3913, 5
        %v4216 = vsel %vm4027, %v4214, %v4215
        %v4217 = vrot.slane %v3914, 5
        %v4218 = vrot.slane %v4217, 4
        %v4219 = vrot.slane %v3915, 5
        %v4220 = vsel %vm4027, %v4218, %v4219
        %v4221 = vrot.slane %v4219, 4
        %v4222 = vrot.slane %v3916, 5
        %v4223 = vsel %vm4027, %v4221, %v4222
        %v4224 = vrot.slane %v3917, 5
        %v4225 = vrot.slane %v4224, 4
        %v4226 = vrot.slane %v3918, 5
        %v4227 = vsel %vm4027, %v4225, %v4226
        %v4228 = vrot.slane %v4226, 4
        %v4229 = vrot.slane %v3919, 5
        %v4230 = vsel %vm4027, %v4228, %v4229
        %v4231 = vrot.slane %v3920, 5
        %v4232 = vrot.slane %v4231, 4
        %v4233 = vrot.slane %v3921, 5
        %v4234 = vsel %vm4027, %v4232, %v4233
        %v4235 = vrot.slane %v4233, 4
        %v4236 = vrot.slane %v3922, 5
        %v4237 = vsel %vm4027, %v4235, %v4236
        %v4238 = vrot.slane %v3923, 5
        %v4239 = vrot.slane %v4238, 4
        %v4240 = vrot.slane %v3924, 5
        %v4241 = vsel %vm4027, %v4239, %v4240
        %v4242 = vrot.slane %v4240, 4
        %v4243 = vrot.slane %v3925, 5
        %v4244 = vsel %vm4027, %v4242, %v4243
        %v4245 = vrot.slane %v3926, 5
        %v4246 = vrot.slane %v4245, 4
        %v4247 = vrot.slane %v3927, 5
        %v4248 = vsel %vm4027, %v4246, %v4247
        %v4249 = vrot.slane %v4247, 4
        %v4250 = vrot.slane %v3928, 5
        %v4251 = vsel %vm4027, %v4249, %v4250
        %v4252 = vunpack.c.l.b16 %v4031
        %v4253 = vunpack.c.l.b16 %v4034
        %v4254 = vunpack.c.l.b16 %v4038
        %v4255 = vunpack.c.l.b16 %v4041
        %v4256 = vunpack.c.l.b16 %v4045
        %v4257 = vunpack.c.l.b16 %v4048
        %v4258 = vunpack.c.l.b16 %v4052
        %v4259 = vunpack.c.l.b16 %v4055
        %v4260 = vunpack.c.l.b16 %v4059
        %v4261 = vunpack.c.l.b16 %v4062
        %v4262 = vunpack.c.l.b16 %v4066
        %v4263 = vunpack.c.l.b16 %v4069
        %v4264 = vunpack.c.l.b16 %v4073
        %v4265 = vunpack.c.l.b16 %v4076
        %v4266 = vunpack.c.l.b16 %v4080
        %v4267 = vunpack.c.l.b16 %v4083
        %v4268 = vunpack.c.l.b16 %v4087
        %v4269 = vunpack.c.l.b16 %v4090
        %v4270 = vunpack.c.l.b16 %v4094
        %v4271 = vunpack.c.l.b16 %v4097
        %v4272 = vunpack.c.l.b16 %v4101
        %v4273 = vunpack.c.l.b16 %v4104
        %v4274 = vunpack.c.l.b16 %v4108
        %v4275 = vunpack.c.l.b16 %v4111
        %v4276 = vunpack.c.l.b16 %v4115
        %v4277 = vunpack.c.l.b16 %v4118
        %v4278 = vunpack.c.l.b16 %v4122
        %v4279 = vunpack.c.l.b16 %v4125
        %v4280 = vunpack.c.l.b16 %v4129
        %v4281 = vunpack.c.l.b16 %v4132
        %v4282 = vunpack.c.l.b16 %v4136
        %v4283 = vunpack.c.l.b16 %v4139
        %v4284 = vunpack.c.l.b16 %v4143
        %v4285 = vunpack.c.l.b16 %v4146
        %v4286 = vunpack.c.l.b16 %v4150
        %v4287 = vunpack.c.l.b16 %v4153
        %v4288 = vunpack.c.l.b16 %v4157
        %v4289 = vunpack.c.l.b16 %v4160
        %v4290 = vunpack.c.l.b16 %v4164
        %v4291 = vunpack.c.l.b16 %v4167
        %v4292 = vunpack.c.l.b16 %v4171
        %v4293 = vunpack.c.l.b16 %v4174
        %v4294 = vunpack.c.l.b16 %v4178
        %v4295 = vunpack.c.l.b16 %v4181
        %v4296 = vunpack.c.l.b16 %v4185
        %v4297 = vunpack.c.l.b16 %v4188
        %v4298 = vunpack.c.l.b16 %v4192
        %v4299 = vunpack.c.l.b16 %v4195
        %v4300 = vunpack.c.l.b16 %v4199
        %v4301 = vunpack.c.l.b16 %v4202
        %v4302 = vunpack.c.l.b16 %v4206
        %v4303 = vunpack.c.l.b16 %v4209
        %v4304 = vunpack.c.l.b16 %v4213
        %v4305 = vunpack.c.l.b16 %v4216
        %v4306 = vunpack.c.l.b16 %v4220
        %v4307 = vunpack.c.l.b16 %v4223
        %v4308 = vunpack.c.l.b16 %v4227
        %v4309 = vunpack.c.l.b16 %v4230
        %v4310 = vunpack.c.l.b16 %v4234
        %v4311 = vunpack.c.l.b16 %v4237
        %v4312 = vunpack.c.l.b16 %v4241
        %v4313 = vunpack.c.l.b16 %v4244
        %v4314 = vunpack.c.l.b16 %v4248
        %v4315 = vunpack.c.l.b16 %v4251
        %v4316 = vpack.c.b16 %v4253, %v4252
        %v4317 = vpack.c.b16 %v4255, %v4254
        %v4318 = vpack.c.b16 %v4257, %v4256
        %v4319 = vpack.c.b16 %v4259, %v4258
        %v4320 = vpack.c.b16 %v4261, %v4260
        %v4321 = vpack.c.b16 %v4263, %v4262
        %v4322 = vpack.c.b16 %v4265, %v4264
        %v4323 = vpack.c.b16 %v4267, %v4266
        %v4324 = vpack.c.b16 %v4269, %v4268
        %v4325 = vpack.c.b16 %v4271, %v4270
        %v4326 = vpack.c.b16 %v4273, %v4272
        %v4327 = vpack.c.b16 %v4275, %v4274
        %v4328 = vpack.c.b16 %v4277, %v4276
        %v4329 = vpack.c.b16 %v4279, %v4278
        %v4330 = vpack.c.b16 %v4281, %v4280
        %v4331 = vpack.c.b16 %v4283, %v4282
        %v4332 = vpack.c.b16 %v4285, %v4284
        %v4333 = vpack.c.b16 %v4287, %v4286
        %v4334 = vpack.c.b16 %v4289, %v4288
        %v4335 = vpack.c.b16 %v4291, %v4290
        %v4336 = vpack.c.b16 %v4293, %v4292
        %v4337 = vpack.c.b16 %v4295, %v4294
        %v4338 = vpack.c.b16 %v4297, %v4296
        %v4339 = vpack.c.b16 %v4299, %v4298
        %v4340 = vpack.c.b16 %v4301, %v4300
        %v4341 = vpack.c.b16 %v4303, %v4302
        %v4342 = vpack.c.b16 %v4305, %v4304
        %v4343 = vpack.c.b16 %v4307, %v4306
        %v4344 = vpack.c.b16 %v4309, %v4308
        %v4345 = vpack.c.b16 %v4311, %v4310
        %v4346 = vpack.c.b16 %v4313, %v4312
        %v4347 = vpack.c.b16 %v4315, %v4314
        %4380 = vst [vmem:[#allocation3 + $0x10] sm:$0xff] %v4316
        %4381 = vst [vmem:[#allocation3 + $0x58] sm:$0xff] %v4317
        %4382 = vst [vmem:[#allocation3 + $0xa0] sm:$0xff] %v4318
        %4383 = vst [vmem:[#allocation3 + $0xe8] sm:$0xff] %v4319
        %4384 = vst [vmem:[#allocation3 + $0x130] sm:$0xff] %v4320
        %4385 = vst [vmem:[#allocation3 + $0x178] sm:$0xff] %v4321
        %4386 = vst [vmem:[#allocation3 + $0x1c0] sm:$0xff] %v4322
        %4387 = vst [vmem:[#allocation3 + $0x208] sm:$0xff] %v4323
        %4388 = vst [vmem:[#allocation3 + $0x250] sm:$0xff] %v4324
        %4389 = vst [vmem:[#allocation3 + $0x298] sm:$0xff] %v4325
        %4390 = vst [vmem:[#allocation3 + $0x2e0] sm:$0xff] %v4326
        %4391 = vst [vmem:[#allocation3 + $0x328] sm:$0xff] %v4327
        %4392 = vst [vmem:[#allocation3 + $0x370] sm:$0xff] %v4328
        %4393 = vst [vmem:[#allocation3 + $0x3b8] sm:$0xff] %v4329
        %4394 = vst [vmem:[#allocation3 + $0x400] sm:$0xff] %v4330
        %4395 = vst [vmem:[#allocation3 + $0x448] sm:$0xff] %v4331
        %4396 = vst [vmem:[#allocation3 + $0x490] sm:$0xff] %v4332
        %4397 = vst [vmem:[#allocation3 + $0x4d8] sm:$0xff] %v4333
        %4398 = vst [vmem:[#allocation3 + $0x520] sm:$0xff] %v4334
        %4399 = vst [vmem:[#allocation3 + $0x568] sm:$0xff] %v4335
        %4400 = vst [vmem:[#allocation3 + $0x5b0] sm:$0xff] %v4336
        %4401 = vst [vmem:[#allocation3 + $0x5f8] sm:$0xff] %v4337
        %4402 = vst [vmem:[#allocation3 + $0x640] sm:$0xff] %v4338
        %4403 = vst [vmem:[#allocation3 + $0x688] sm:$0xff] %v4339
        %4404 = vst [vmem:[#allocation3 + $0x6d0] sm:$0xff] %v4340
        %4405 = vst [vmem:[#allocation3 + $0x718] sm:$0xff] %v4341
        %4406 = vst [vmem:[#allocation3 + $0x760] sm:$0xff] %v4342
        %4407 = vst [vmem:[#allocation3 + $0x7a8] sm:$0xff] %v4343
        %4408 = vst [vmem:[#allocation3 + $0x7f0] sm:$0xff] %v4344
        %4409 = vst [vmem:[#allocation3 + $0x838] sm:$0xff] %v4345
        %4410 = vst [vmem:[#allocation3 + $0x880] sm:$0xff] %v4346
        %4411 = vst [vmem:[#allocation3 + $0x8c8] sm:$0xff] %v4347
        %v4412 = vld [vmem:[%s2288] sm:$0xf]
        %v4413 = vld [vmem:[%s2288 + $0x4] sm:$0xf]
        %v4414 = vld [vmem:[%s2288 + $0xc] sm:$0xf]
        %v4415 = vld [vmem:[%s2288 + $0x10] sm:$0xf]
        %v4416 = vld [vmem:[%s2288 + $0x18] sm:$0xf]
        %v4417 = vld [vmem:[%s2288 + $0x1c] sm:$0xf]
        %v4418 = vld [vmem:[%s2288 + $0x24] sm:$0xf]
        %v4419 = vld [vmem:[%s2288 + $0x28] sm:$0xf]
        %v4420 = vld [vmem:[%s2288 + $0x30] sm:$0xf]
        %v4421 = vld [vmem:[%s2288 + $0x34] sm:$0xf]
        %v4422 = vld [vmem:[%s2288 + $0x3c] sm:$0xf]
        %v4423 = vld [vmem:[%s2288 + $0x40] sm:$0xf]
        %v4424 = vld [vmem:[%s2288 + $0x48] sm:$0xf]
        %v4425 = vld [vmem:[%s2288 + $0x4c] sm:$0xf]
        %v4426 = vld [vmem:[%s2288 + $0x54] sm:$0xf]
        %v4427 = vld [vmem:[%s2288 + $0x58] sm:$0xf]
        %v4428 = vld [vmem:[%s2288 + $0x60] sm:$0xf]
        %v4429 = vld [vmem:[%s2288 + $0x64] sm:$0xf]
        %v4430 = vld [vmem:[%s2288 + $0x6c] sm:$0xf]
        %v4431 = vld [vmem:[%s2288 + $0x70] sm:$0xf]
        %v4432 = vld [vmem:[%s2288 + $0x78] sm:$0xf]
        %v4433 = vld [vmem:[%s2288 + $0x7c] sm:$0xf]
        %v4434 = vld [vmem:[%s2288 + $0x84] sm:$0xf]
        %v4435 = vld [vmem:[%s2288 + $0x88] sm:$0xf]
        %v4436 = vld [vmem:[%s2288 + $0x90] sm:$0xf]
        %v4437 = vld [vmem:[%s2288 + $0x94] sm:$0xf]
        %v4438 = vld [vmem:[%s2288 + $0x9c] sm:$0xf]
        %v4439 = vld [vmem:[%s2288 + $0xa0] sm:$0xf]
        %v4440 = vld [vmem:[%s2288 + $0xa8] sm:$0xf]
        %v4441 = vld [vmem:[%s2288 + $0xac] sm:$0xf]
        %v4442 = vld [vmem:[%s2288 + $0xb4] sm:$0xf]
        %v4443 = vld [vmem:[%s2288 + $0xb8] sm:$0xf]
        %v4444 = vld [vmem:[%s2288 + $0xd8] sm:$0xf]
        %v4445 = vld [vmem:[%s2288 + $0xdc] sm:$0xf]
        %v4446 = vld [vmem:[%s2288 + $0xe4] sm:$0xf]
        %v4447 = vld [vmem:[%s2288 + $0xe8] sm:$0xf]
        %v4448 = vld [vmem:[%s2288 + $0xf0] sm:$0xf]
        %v4449 = vld [vmem:[%s2288 + $0xf4] sm:$0xf]
        %v4450 = vld [vmem:[%s2288 + $0xfc] sm:$0xf]
        %v4451 = vld [vmem:[%s2288 + $0x100] sm:$0xf]
        %v4452 = vld [vmem:[%s2288 + $0x108] sm:$0xf]
        %v4453 = vld [vmem:[%s2288 + $0x10c] sm:$0xf]
        %v4454 = vld [vmem:[%s2288 + $0x114] sm:$0xf]
        %v4455 = vld [vmem:[%s2288 + $0x118] sm:$0xf]
        %v4456 = vld [vmem:[%s2288 + $0x120] sm:$0xf]
        %v4457 = vld [vmem:[%s2288 + $0x124] sm:$0xf]
        %v4458 = vld [vmem:[%s2288 + $0x12c] sm:$0xf]
        %v4459 = vld [vmem:[%s2288 + $0x130] sm:$0xf]
        %v4460 = vld [vmem:[%s2288 + $0x138] sm:$0xf]
        %v4461 = vld [vmem:[%s2288 + $0x13c] sm:$0xf]
        %v4462 = vld [vmem:[%s2288 + $0x144] sm:$0xf]
        %v4463 = vld [vmem:[%s2288 + $0x148] sm:$0xf]
        %v4464 = vld [vmem:[%s2288 + $0x150] sm:$0xf]
        %v4465 = vld [vmem:[%s2288 + $0x154] sm:$0xf]
        %v4466 = vld [vmem:[%s2288 + $0x15c] sm:$0xf]
        %v4467 = vld [vmem:[%s2288 + $0x160] sm:$0xf]
        %v4468 = vld [vmem:[%s2288 + $0x168] sm:$0xf]
        %v4469 = vld [vmem:[%s2288 + $0x16c] sm:$0xf]
        %v4470 = vld [vmem:[%s2288 + $0x174] sm:$0xf]
        %v4471 = vld [vmem:[%s2288 + $0x178] sm:$0xf]
        %v4472 = vld [vmem:[%s2288 + $0x180] sm:$0xf]
        %v4473 = vld [vmem:[%s2288 + $0x184] sm:$0xf]
        %v4474 = vld [vmem:[%s2288 + $0x18c] sm:$0xf]
        %v4475 = vld [vmem:[%s2288 + $0x190] sm:$0xf]
        %v4540 = vunpack.c.l.b16 %v4412
        %v4541 = vunpack.c.l.b16 %v4413
        %v4542 = vunpack.c.l.b16 %v4414
        %v4543 = vunpack.c.l.b16 %v4415
        %v4544 = vunpack.c.l.b16 %v4416
        %v4545 = vunpack.c.l.b16 %v4417
        %v4546 = vunpack.c.l.b16 %v4418
        %v4547 = vunpack.c.l.b16 %v4419
        %v4548 = vunpack.c.l.b16 %v4420
        %v4549 = vunpack.c.l.b16 %v4421
        %v4550 = vunpack.c.l.b16 %v4422
        %v4551 = vunpack.c.l.b16 %v4423
        %v4552 = vunpack.c.l.b16 %v4424
        %v4553 = vunpack.c.l.b16 %v4425
        %v4554 = vunpack.c.l.b16 %v4426
        %v4555 = vunpack.c.l.b16 %v4427
        %v4556 = vunpack.c.l.b16 %v4428
        %v4557 = vunpack.c.l.b16 %v4429
        %v4558 = vunpack.c.l.b16 %v4430
        %v4559 = vunpack.c.l.b16 %v4431
        %v4560 = vunpack.c.l.b16 %v4432
        %v4561 = vunpack.c.l.b16 %v4433
        %v4562 = vunpack.c.l.b16 %v4434
        %v4563 = vunpack.c.l.b16 %v4435
        %v4564 = vunpack.c.l.b16 %v4436
        %v4565 = vunpack.c.l.b16 %v4437
        %v4566 = vunpack.c.l.b16 %v4438
        %v4567 = vunpack.c.l.b16 %v4439
        %v4568 = vunpack.c.l.b16 %v4440
        %v4569 = vunpack.c.l.b16 %v4441
        %v4570 = vunpack.c.l.b16 %v4442
        %v4571 = vunpack.c.l.b16 %v4443
        %v4572 = vunpack.c.l.b16 %v4444
        %v4573 = vunpack.c.l.b16 %v4445
        %v4574 = vunpack.c.l.b16 %v4446
        %v4575 = vunpack.c.l.b16 %v4447
        %v4576 = vunpack.c.l.b16 %v4448
        %v4577 = vunpack.c.l.b16 %v4449
        %v4578 = vunpack.c.l.b16 %v4450
        %v4579 = vunpack.c.l.b16 %v4451
        %v4580 = vunpack.c.l.b16 %v4452
        %v4581 = vunpack.c.l.b16 %v4453
        %v4582 = vunpack.c.l.b16 %v4454
        %v4583 = vunpack.c.l.b16 %v4455
        %v4584 = vunpack.c.l.b16 %v4456
        %v4585 = vunpack.c.l.b16 %v4457
        %v4586 = vunpack.c.l.b16 %v4458
        %v4587 = vunpack.c.l.b16 %v4459
        %v4588 = vunpack.c.l.b16 %v4460
        %v4589 = vunpack.c.l.b16 %v4461
        %v4590 = vunpack.c.l.b16 %v4462
        %v4591 = vunpack.c.l.b16 %v4463
        %v4592 = vunpack.c.l.b16 %v4464
        %v4593 = vunpack.c.l.b16 %v4465
        %v4594 = vunpack.c.l.b16 %v4466
        %v4595 = vunpack.c.l.b16 %v4467
        %v4596 = vunpack.c.l.b16 %v4468
        %v4597 = vunpack.c.l.b16 %v4469
        %v4598 = vunpack.c.l.b16 %v4470
        %v4599 = vunpack.c.l.b16 %v4471
        %v4600 = vunpack.c.l.b16 %v4472
        %v4601 = vunpack.c.l.b16 %v4473
        %v4602 = vunpack.c.l.b16 %v4474
        %v4603 = vunpack.c.l.b16 %v4475
        %v4604 = vpack.c.b16 %v4541, %v4540
        %v4605 = vpack.c.b16 %v4543, %v4542
        %v4606 = vpack.c.b16 %v4545, %v4544
        %v4607 = vpack.c.b16 %v4547, %v4546
        %v4608 = vpack.c.b16 %v4549, %v4548
        %v4609 = vpack.c.b16 %v4551, %v4550
        %v4610 = vpack.c.b16 %v4553, %v4552
        %v4611 = vpack.c.b16 %v4555, %v4554
        %v4612 = vpack.c.b16 %v4557, %v4556
        %v4613 = vpack.c.b16 %v4559, %v4558
        %v4614 = vpack.c.b16 %v4561, %v4560
        %v4615 = vpack.c.b16 %v4563, %v4562
        %v4616 = vpack.c.b16 %v4565, %v4564
        %v4617 = vpack.c.b16 %v4567, %v4566
        %v4618 = vpack.c.b16 %v4569, %v4568
        %v4619 = vpack.c.b16 %v4571, %v4570
        %v4620 = vpack.c.b16 %v4573, %v4572
        %v4621 = vpack.c.b16 %v4575, %v4574
        %v4622 = vpack.c.b16 %v4577, %v4576
        %v4623 = vpack.c.b16 %v4579, %v4578
        %v4624 = vpack.c.b16 %v4581, %v4580
        %v4625 = vpack.c.b16 %v4583, %v4582
        %v4626 = vpack.c.b16 %v4585, %v4584
        %v4627 = vpack.c.b16 %v4587, %v4586
        %v4628 = vpack.c.b16 %v4589, %v4588
        %v4629 = vpack.c.b16 %v4591, %v4590
        %v4630 = vpack.c.b16 %v4593, %v4592
        %v4631 = vpack.c.b16 %v4595, %v4594
        %v4632 = vpack.c.b16 %v4597, %v4596
        %v4633 = vpack.c.b16 %v4599, %v4598
        %v4634 = vpack.c.b16 %v4601, %v4600
        %v4635 = vpack.c.b16 %v4603, %v4602
        %4668 = vst [vmem:[#allocation3 + $0x18] sm:$0xff] %v4604
        %4669 = vst [vmem:[#allocation3 + $0x60] sm:$0xff] %v4605
        %4670 = vst [vmem:[#allocation3 + $0xa8] sm:$0xff] %v4606
        %4671 = vst [vmem:[#allocation3 + $0xf0] sm:$0xff] %v4607
        %4672 = vst [vmem:[#allocation3 + $0x138] sm:$0xff] %v4608
        %4673 = vst [vmem:[#allocation3 + $0x180] sm:$0xff] %v4609
        %4674 = vst [vmem:[#allocation3 + $0x1c8] sm:$0xff] %v4610
        %4675 = vst [vmem:[#allocation3 + $0x210] sm:$0xff] %v4611
        %4676 = vst [vmem:[#allocation3 + $0x258] sm:$0xff] %v4612
        %4677 = vst [vmem:[#allocation3 + $0x2a0] sm:$0xff] %v4613
        %4678 = vst [vmem:[#allocation3 + $0x2e8] sm:$0xff] %v4614
        %4679 = vst [vmem:[#allocation3 + $0x330] sm:$0xff] %v4615
        %4680 = vst [vmem:[#allocation3 + $0x378] sm:$0xff] %v4616
        %4681 = vst [vmem:[#allocation3 + $0x3c0] sm:$0xff] %v4617
        %4682 = vst [vmem:[#allocation3 + $0x408] sm:$0xff] %v4618
        %4683 = vst [vmem:[#allocation3 + $0x450] sm:$0xff] %v4619
        %4684 = vst [vmem:[#allocation3 + $0x498] sm:$0xff] %v4620
        %4685 = vst [vmem:[#allocation3 + $0x4e0] sm:$0xff] %v4621
        %4686 = vst [vmem:[#allocation3 + $0x528] sm:$0xff] %v4622
        %4687 = vst [vmem:[#allocation3 + $0x570] sm:$0xff] %v4623
        %4688 = vst [vmem:[#allocation3 + $0x5b8] sm:$0xff] %v4624
        %4689 = vst [vmem:[#allocation3 + $0x600] sm:$0xff] %v4625
        %4690 = vst [vmem:[#allocation3 + $0x648] sm:$0xff] %v4626
        %4691 = vst [vmem:[#allocation3 + $0x690] sm:$0xff] %v4627
        %4692 = vst [vmem:[#allocation3 + $0x6d8] sm:$0xff] %v4628
        %4693 = vst [vmem:[#allocation3 + $0x720] sm:$0xff] %v4629
        %4694 = vst [vmem:[#allocation3 + $0x768] sm:$0xff] %v4630
        %4695 = vst [vmem:[#allocation3 + $0x7b0] sm:$0xff] %v4631
        %4696 = vst [vmem:[#allocation3 + $0x7f8] sm:$0xff] %v4632
        %4697 = vst [vmem:[#allocation3 + $0x840] sm:$0xff] %v4633
        %4698 = vst [vmem:[#allocation3 + $0x888] sm:$0xff] %v4634
        %4699 = vst [vmem:[#allocation3 + $0x8d0] sm:$0xff] %v4635
        %v4700 = vld [vmem:[%s2288] sm:$0xf]
        %v4701 = vld [vmem:[%s2288 + $0x4] sm:$0xf]
        %v4702 = vld [vmem:[%s2288 + $0x8] sm:$0x1]
        %v4703 = vld [vmem:[%s2288 + $0xc] sm:$0xf]
        %v4704 = vld [vmem:[%s2288 + $0x10] sm:$0xf]
        %v4705 = vld [vmem:[%s2288 + $0x14] sm:$0x1]
        %v4706 = vld [vmem:[%s2288 + $0x18] sm:$0xf]
        %v4707 = vld [vmem:[%s2288 + $0x1c] sm:$0xf]
        %v4708 = vld [vmem:[%s2288 + $0x20] sm:$0x1]
        %v4709 = vld [vmem:[%s2288 + $0x24] sm:$0xf]
        %v4710 = vld [vmem:[%s2288 + $0x28] sm:$0xf]
        %v4711 = vld [vmem:[%s2288 + $0x2c] sm:$0x1]
        %v4712 = vld [vmem:[%s2288 + $0x30] sm:$0xf]
        %v4713 = vld [vmem:[%s2288 + $0x34] sm:$0xf]
        %v4714 = vld [vmem:[%s2288 + $0x38] sm:$0x1]
        %v4715 = vld [vmem:[%s2288 + $0x3c] sm:$0xf]
        %v4716 = vld [vmem:[%s2288 + $0x40] sm:$0xf]
        %v4717 = vld [vmem:[%s2288 + $0x44] sm:$0x1]
        %v4718 = vld [vmem:[%s2288 + $0x48] sm:$0xf]
        %v4719 = vld [vmem:[%s2288 + $0x4c] sm:$0xf]
        %v4720 = vld [vmem:[%s2288 + $0x50] sm:$0x1]
        %v4721 = vld [vmem:[%s2288 + $0x54] sm:$0xf]
        %v4722 = vld [vmem:[%s2288 + $0x58] sm:$0xf]
        %v4723 = vld [vmem:[%s2288 + $0x5c] sm:$0x1]
        %v4724 = vld [vmem:[%s2288 + $0x60] sm:$0xf]
        %v4725 = vld [vmem:[%s2288 + $0x64] sm:$0xf]
        %v4726 = vld [vmem:[%s2288 + $0x68] sm:$0x1]
        %v4727 = vld [vmem:[%s2288 + $0x6c] sm:$0xf]
        %v4728 = vld [vmem:[%s2288 + $0x70] sm:$0xf]
        %v4729 = vld [vmem:[%s2288 + $0x74] sm:$0x1]
        %v4730 = vld [vmem:[%s2288 + $0x78] sm:$0xf]
        %v4731 = vld [vmem:[%s2288 + $0x7c] sm:$0xf]
        %v4732 = vld [vmem:[%s2288 + $0x80] sm:$0x1]
        %v4733 = vld [vmem:[%s2288 + $0x84] sm:$0xf]
        %v4734 = vld [vmem:[%s2288 + $0x88] sm:$0xf]
        %v4735 = vld [vmem:[%s2288 + $0x8c] sm:$0x1]
        %v4736 = vld [vmem:[%s2288 + $0x90] sm:$0xf]
        %v4737 = vld [vmem:[%s2288 + $0x94] sm:$0xf]
        %v4738 = vld [vmem:[%s2288 + $0x98] sm:$0x1]
        %v4739 = vld [vmem:[%s2288 + $0x9c] sm:$0xf]
        %v4740 = vld [vmem:[%s2288 + $0xa0] sm:$0xf]
        %v4741 = vld [vmem:[%s2288 + $0xa4] sm:$0x1]
        %v4742 = vld [vmem:[%s2288 + $0xa8] sm:$0xf]
        %v4743 = vld [vmem:[%s2288 + $0xac] sm:$0xf]
        %v4744 = vld [vmem:[%s2288 + $0xb0] sm:$0x1]
        %v4745 = vld [vmem:[%s2288 + $0xb4] sm:$0xf]
        %v4746 = vld [vmem:[%s2288 + $0xb8] sm:$0xf]
        %v4747 = vld [vmem:[%s2288 + $0xbc] sm:$0x1]
        %v4748 = vld [vmem:[%s2288 + $0xd8] sm:$0xf]
        %v4749 = vld [vmem:[%s2288 + $0xdc] sm:$0xf]
        %v4750 = vld [vmem:[%s2288 + $0xe0] sm:$0x1]
        %v4751 = vld [vmem:[%s2288 + $0xe4] sm:$0xf]
        %v4752 = vld [vmem:[%s2288 + $0xe8] sm:$0xf]
        %v4753 = vld [vmem:[%s2288 + $0xec] sm:$0x1]
        %v4754 = vld [vmem:[%s2288 + $0xf0] sm:$0xf]
        %v4755 = vld [vmem:[%s2288 + $0xf4] sm:$0xf]
        %v4756 = vld [vmem:[%s2288 + $0xf8] sm:$0x1]
        %v4757 = vld [vmem:[%s2288 + $0xfc] sm:$0xf]
        %v4758 = vld [vmem:[%s2288 + $0x100] sm:$0xf]
        %v4759 = vld [vmem:[%s2288 + $0x104] sm:$0x1]
        %v4760 = vld [vmem:[%s2288 + $0x108] sm:$0xf]
        %v4761 = vld [vmem:[%s2288 + $0x10c] sm:$0xf]
        %v4762 = vld [vmem:[%s2288 + $0x110] sm:$0x1]
        %v4763 = vld [vmem:[%s2288 + $0x114] sm:$0xf]
        %v4764 = vld [vmem:[%s2288 + $0x118] sm:$0xf]
        %v4765 = vld [vmem:[%s2288 + $0x11c] sm:$0x1]
        %v4766 = vld [vmem:[%s2288 + $0x120] sm:$0xf]
        %v4767 = vld [vmem:[%s2288 + $0x124] sm:$0xf]
        %v4768 = vld [vmem:[%s2288 + $0x128] sm:$0x1]
        %v4769 = vld [vmem:[%s2288 + $0x12c] sm:$0xf]
        %v4770 = vld [vmem:[%s2288 + $0x130] sm:$0xf]
        %v4771 = vld [vmem:[%s2288 + $0x134] sm:$0x1]
        %v4772 = vld [vmem:[%s2288 + $0x138] sm:$0xf]
        %v4773 = vld [vmem:[%s2288 + $0x13c] sm:$0xf]
        %v4774 = vld [vmem:[%s2288 + $0x140] sm:$0x1]
        %v4775 = vld [vmem:[%s2288 + $0x144] sm:$0xf]
        %v4776 = vld [vmem:[%s2288 + $0x148] sm:$0xf]
        %v4777 = vld [vmem:[%s2288 + $0x14c] sm:$0x1]
        %v4778 = vld [vmem:[%s2288 + $0x150] sm:$0xf]
        %v4779 = vld [vmem:[%s2288 + $0x154] sm:$0xf]
        %v4780 = vld [vmem:[%s2288 + $0x158] sm:$0x1]
        %v4781 = vld [vmem:[%s2288 + $0x15c] sm:$0xf]
        %v4782 = vld [vmem:[%s2288 + $0x160] sm:$0xf]
        %v4783 = vld [vmem:[%s2288 + $0x164] sm:$0x1]
        %v4784 = vld [vmem:[%s2288 + $0x168] sm:$0xf]
        %v4785 = vld [vmem:[%s2288 + $0x16c] sm:$0xf]
        %v4786 = vld [vmem:[%s2288 + $0x170] sm:$0x1]
        %v4787 = vld [vmem:[%s2288 + $0x174] sm:$0xf]
        %v4788 = vld [vmem:[%s2288 + $0x178] sm:$0xf]
        %v4789 = vld [vmem:[%s2288 + $0x17c] sm:$0x1]
        %v4790 = vld [vmem:[%s2288 + $0x180] sm:$0xf]
        %v4791 = vld [vmem:[%s2288 + $0x184] sm:$0xf]
        %v4792 = vld [vmem:[%s2288 + $0x188] sm:$0x1]
        %v4793 = vld [vmem:[%s2288 + $0x18c] sm:$0xf]
        %v4794 = vld [vmem:[%s2288 + $0x190] sm:$0xf]
        %v4795 = vld [vmem:[%s2288 + $0x194] sm:$0x1]
        %v4797 = vshrl.u32 %v4700, 16
        %v4799 = vrot.slane %v4797, 4
        %v4800 = vshll.u32 %v4700, 16
        %v4802 = vrot.slane %v4800, 5
        %v4803 = vor.u32 %v4799, %v4802
        %v4804 = vrot.slane %v4803, 4
        %v4806 = vshll.u32 %v4701, 16
        %v4808 = vrot.slane %v4806, 5
        %v4809 = vsel %vm2904, %v4804, %v4808
        %v4810 = vshrl.u32 %v4701, 16
        %v4812 = vrot.slane %v4810, 4
        %v4813 = vor.u32 %v4812, %v4808
        %v4814 = vrot.slane %v4813, 4
        %v4816 = vshll.u32 %v4702, 16
        %v4818 = vrot.slane %v4816, 5
        %v4819 = vsel %vm2904, %v4814, %v4818
        %v4821 = vshrl.u32 %v4703, 16
        %v4823 = vrot.slane %v4821, 4
        %v4824 = vshll.u32 %v4703, 16
        %v4826 = vrot.slane %v4824, 5
        %v4827 = vor.u32 %v4823, %v4826
        %v4828 = vrot.slane %v4827, 4
        %v4830 = vshll.u32 %v4704, 16
        %v4832 = vrot.slane %v4830, 5
        %v4833 = vsel %vm2904, %v4828, %v4832
        %v4834 = vshrl.u32 %v4704, 16
        %v4836 = vrot.slane %v4834, 4
        %v4837 = vor.u32 %v4836, %v4832
        %v4838 = vrot.slane %v4837, 4
        %v4840 = vshll.u32 %v4705, 16
        %v4842 = vrot.slane %v4840, 5
        %v4843 = vsel %vm2904, %v4838, %v4842
        %v4845 = vshrl.u32 %v4706, 16
        %v4847 = vrot.slane %v4845, 4
        %v4848 = vshll.u32 %v4706, 16
        %v4850 = vrot.slane %v4848, 5
        %v4851 = vor.u32 %v4847, %v4850
        %v4852 = vrot.slane %v4851, 4
        %v4854 = vshll.u32 %v4707, 16
        %v4856 = vrot.slane %v4854, 5
        %v4857 = vsel %vm2904, %v4852, %v4856
        %v4858 = vshrl.u32 %v4707, 16
        %v4860 = vrot.slane %v4858, 4
        %v4861 = vor.u32 %v4860, %v4856
        %v4862 = vrot.slane %v4861, 4
        %v4864 = vshll.u32 %v4708, 16
        %v4866 = vrot.slane %v4864, 5
        %v4867 = vsel %vm2904, %v4862, %v4866
        %v4869 = vshrl.u32 %v4709, 16
        %v4871 = vrot.slane %v4869, 4
        %v4872 = vshll.u32 %v4709, 16
        %v4874 = vrot.slane %v4872, 5
        %v4875 = vor.u32 %v4871, %v4874
        %v4876 = vrot.slane %v4875, 4
        %v4878 = vshll.u32 %v4710, 16
        %v4880 = vrot.slane %v4878, 5
        %v4881 = vsel %vm2904, %v4876, %v4880
        %v4882 = vshrl.u32 %v4710, 16
        %v4884 = vrot.slane %v4882, 4
        %v4885 = vor.u32 %v4884, %v4880
        %v4886 = vrot.slane %v4885, 4
        %v4888 = vshll.u32 %v4711, 16
        %v4890 = vrot.slane %v4888, 5
        %v4891 = vsel %vm2904, %v4886, %v4890
        %v4893 = vshrl.u32 %v4712, 16
        %v4895 = vrot.slane %v4893, 4
        %v4896 = vshll.u32 %v4712, 16
        %v4898 = vrot.slane %v4896, 5
        %v4899 = vor.u32 %v4895, %v4898
        %v4900 = vrot.slane %v4899, 4
        %v4902 = vshll.u32 %v4713, 16
        %v4904 = vrot.slane %v4902, 5
        %v4905 = vsel %vm2904, %v4900, %v4904
        %v4906 = vshrl.u32 %v4713, 16
        %v4908 = vrot.slane %v4906, 4
        %v4909 = vor.u32 %v4908, %v4904
        %v4910 = vrot.slane %v4909, 4
        %v4912 = vshll.u32 %v4714, 16
        %v4914 = vrot.slane %v4912, 5
        %v4915 = vsel %vm2904, %v4910, %v4914
        %v4917 = vshrl.u32 %v4715, 16
        %v4919 = vrot.slane %v4917, 4
        %v4920 = vshll.u32 %v4715, 16
        %v4922 = vrot.slane %v4920, 5
        %v4923 = vor.u32 %v4919, %v4922
        %v4924 = vrot.slane %v4923, 4
        %v4926 = vshll.u32 %v4716, 16
        %v4928 = vrot.slane %v4926, 5
        %v4929 = vsel %vm2904, %v4924, %v4928
        %v4930 = vshrl.u32 %v4716, 16
        %v4932 = vrot.slane %v4930, 4
        %v4933 = vor.u32 %v4932, %v4928
        %v4934 = vrot.slane %v4933, 4
        %v4936 = vshll.u32 %v4717, 16
        %v4938 = vrot.slane %v4936, 5
        %v4939 = vsel %vm2904, %v4934, %v4938
        %v4941 = vshrl.u32 %v4718, 16
        %v4943 = vrot.slane %v4941, 4
        %v4944 = vshll.u32 %v4718, 16
        %v4946 = vrot.slane %v4944, 5
        %v4947 = vor.u32 %v4943, %v4946
        %v4948 = vrot.slane %v4947, 4
        %v4950 = vshll.u32 %v4719, 16
        %v4952 = vrot.slane %v4950, 5
        %v4953 = vsel %vm2904, %v4948, %v4952
        %v4954 = vshrl.u32 %v4719, 16
        %v4956 = vrot.slane %v4954, 4
        %v4957 = vor.u32 %v4956, %v4952
        %v4958 = vrot.slane %v4957, 4
        %v4960 = vshll.u32 %v4720, 16
        %v4962 = vrot.slane %v4960, 5
        %v4963 = vsel %vm2904, %v4958, %v4962
        %v4965 = vshrl.u32 %v4721, 16
        %v4967 = vrot.slane %v4965, 4
        %v4968 = vshll.u32 %v4721, 16
        %v4970 = vrot.slane %v4968, 5
        %v4971 = vor.u32 %v4967, %v4970
        %v4972 = vrot.slane %v4971, 4
        %v4974 = vshll.u32 %v4722, 16
        %v4976 = vrot.slane %v4974, 5
        %v4977 = vsel %vm2904, %v4972, %v4976
        %v4978 = vshrl.u32 %v4722, 16
        %v4980 = vrot.slane %v4978, 4
        %v4981 = vor.u32 %v4980, %v4976
        %v4982 = vrot.slane %v4981, 4
        %v4984 = vshll.u32 %v4723, 16
        %v4986 = vrot.slane %v4984, 5
        %v4987 = vsel %vm2904, %v4982, %v4986
        %v4989 = vshrl.u32 %v4724, 16
        %v4991 = vrot.slane %v4989, 4
        %v4992 = vshll.u32 %v4724, 16
        %v4994 = vrot.slane %v4992, 5
        %v4995 = vor.u32 %v4991, %v4994
        %v4996 = vrot.slane %v4995, 4
        %v4998 = vshll.u32 %v4725, 16
        %v5000 = vrot.slane %v4998, 5
        %v5001 = vsel %vm2904, %v4996, %v5000
        %v5002 = vshrl.u32 %v4725, 16
        %v5004 = vrot.slane %v5002, 4
        %v5005 = vor.u32 %v5004, %v5000
        %v5006 = vrot.slane %v5005, 4
        %v5008 = vshll.u32 %v4726, 16
        %v5010 = vrot.slane %v5008, 5
        %v5011 = vsel %vm2904, %v5006, %v5010
        %v5013 = vshrl.u32 %v4727, 16
        %v5015 = vrot.slane %v5013, 4
        %v5016 = vshll.u32 %v4727, 16
        %v5018 = vrot.slane %v5016, 5
        %v5019 = vor.u32 %v5015, %v5018
        %v5020 = vrot.slane %v5019, 4
        %v5022 = vshll.u32 %v4728, 16
        %v5024 = vrot.slane %v5022, 5
        %v5025 = vsel %vm2904, %v5020, %v5024
        %v5026 = vshrl.u32 %v4728, 16
        %v5028 = vrot.slane %v5026, 4
        %v5029 = vor.u32 %v5028, %v5024
        %v5030 = vrot.slane %v5029, 4
        %v5032 = vshll.u32 %v4729, 16
        %v5034 = vrot.slane %v5032, 5
        %v5035 = vsel %vm2904, %v5030, %v5034
        %v5037 = vshrl.u32 %v4730, 16
        %v5039 = vrot.slane %v5037, 4
        %v5040 = vshll.u32 %v4730, 16
        %v5042 = vrot.slane %v5040, 5
        %v5043 = vor.u32 %v5039, %v5042
        %v5044 = vrot.slane %v5043, 4
        %v5046 = vshll.u32 %v4731, 16
        %v5048 = vrot.slane %v5046, 5
        %v5049 = vsel %vm2904, %v5044, %v5048
        %v5050 = vshrl.u32 %v4731, 16
        %v5052 = vrot.slane %v5050, 4
        %v5053 = vor.u32 %v5052, %v5048
        %v5054 = vrot.slane %v5053, 4
        %v5056 = vshll.u32 %v4732, 16
        %v5058 = vrot.slane %v5056, 5
        %v5059 = vsel %vm2904, %v5054, %v5058
        %v5061 = vshrl.u32 %v4733, 16
        %v5063 = vrot.slane %v5061, 4
        %v5064 = vshll.u32 %v4733, 16
        %v5066 = vrot.slane %v5064, 5
        %v5067 = vor.u32 %v5063, %v5066
        %v5068 = vrot.slane %v5067, 4
        %v5070 = vshll.u32 %v4734, 16
        %v5072 = vrot.slane %v5070, 5
        %v5073 = vsel %vm2904, %v5068, %v5072
        %v5074 = vshrl.u32 %v4734, 16
        %v5076 = vrot.slane %v5074, 4
        %v5077 = vor.u32 %v5076, %v5072
        %v5078 = vrot.slane %v5077, 4
        %v5080 = vshll.u32 %v4735, 16
        %v5082 = vrot.slane %v5080, 5
        %v5083 = vsel %vm2904, %v5078, %v5082
        %v5085 = vshrl.u32 %v4736, 16
        %v5087 = vrot.slane %v5085, 4
        %v5088 = vshll.u32 %v4736, 16
        %v5090 = vrot.slane %v5088, 5
        %v5091 = vor.u32 %v5087, %v5090
        %v5092 = vrot.slane %v5091, 4
        %v5094 = vshll.u32 %v4737, 16
        %v5096 = vrot.slane %v5094, 5
        %v5097 = vsel %vm2904, %v5092, %v5096
        %v5098 = vshrl.u32 %v4737, 16
        %v5100 = vrot.slane %v5098, 4
        %v5101 = vor.u32 %v5100, %v5096
        %v5102 = vrot.slane %v5101, 4
        %v5104 = vshll.u32 %v4738, 16
        %v5106 = vrot.slane %v5104, 5
        %v5107 = vsel %vm2904, %v5102, %v5106
        %v5109 = vshrl.u32 %v4739, 16
        %v5111 = vrot.slane %v5109, 4
        %v5112 = vshll.u32 %v4739, 16
        %v5114 = vrot.slane %v5112, 5
        %v5115 = vor.u32 %v5111, %v5114
        %v5116 = vrot.slane %v5115, 4
        %v5118 = vshll.u32 %v4740, 16
        %v5120 = vrot.slane %v5118, 5
        %v5121 = vsel %vm2904, %v5116, %v5120
        %v5122 = vshrl.u32 %v4740, 16
        %v5124 = vrot.slane %v5122, 4
        %v5125 = vor.u32 %v5124, %v5120
        %v5126 = vrot.slane %v5125, 4
        %v5128 = vshll.u32 %v4741, 16
        %v5130 = vrot.slane %v5128, 5
        %v5131 = vsel %vm2904, %v5126, %v5130
        %v5133 = vshrl.u32 %v4742, 16
        %v5135 = vrot.slane %v5133, 4
        %v5136 = vshll.u32 %v4742, 16
        %v5138 = vrot.slane %v5136, 5
        %v5139 = vor.u32 %v5135, %v5138
        %v5140 = vrot.slane %v5139, 4
        %v5142 = vshll.u32 %v4743, 16
        %v5144 = vrot.slane %v5142, 5
        %v5145 = vsel %vm2904, %v5140, %v5144
        %v5146 = vshrl.u32 %v4743, 16
        %v5148 = vrot.slane %v5146, 4
        %v5149 = vor.u32 %v5148, %v5144
        %v5150 = vrot.slane %v5149, 4
        %v5152 = vshll.u32 %v4744, 16
        %v5154 = vrot.slane %v5152, 5
        %v5155 = vsel %vm2904, %v5150, %v5154
        %v5157 = vshrl.u32 %v4745, 16
        %v5159 = vrot.slane %v5157, 4
        %v5160 = vshll.u32 %v4745, 16
        %v5162 = vrot.slane %v5160, 5
        %v5163 = vor.u32 %v5159, %v5162
        %v5164 = vrot.slane %v5163, 4
        %v5166 = vshll.u32 %v4746, 16
        %v5168 = vrot.slane %v5166, 5
        %v5169 = vsel %vm2904, %v5164, %v5168
        %v5170 = vshrl.u32 %v4746, 16
        %v5172 = vrot.slane %v5170, 4
        %v5173 = vor.u32 %v5172, %v5168
        %v5174 = vrot.slane %v5173, 4
        %v5176 = vshll.u32 %v4747, 16
        %v5178 = vrot.slane %v5176, 5
        %v5179 = vsel %vm2904, %v5174, %v5178
        %v5181 = vshrl.u32 %v4748, 16
        %v5183 = vrot.slane %v5181, 4
        %v5184 = vshll.u32 %v4748, 16
        %v5186 = vrot.slane %v5184, 5
        %v5187 = vor.u32 %v5183, %v5186
        %v5188 = vrot.slane %v5187, 4
        %v5190 = vshll.u32 %v4749, 16
        %v5192 = vrot.slane %v5190, 5
        %v5193 = vsel %vm2904, %v5188, %v5192
        %v5194 = vshrl.u32 %v4749, 16
        %v5196 = vrot.slane %v5194, 4
        %v5197 = vor.u32 %v5196, %v5192
        %v5198 = vrot.slane %v5197, 4
        %v5200 = vshll.u32 %v4750, 16
        %v5202 = vrot.slane %v5200, 5
        %v5203 = vsel %vm2904, %v5198, %v5202
        %v5205 = vshrl.u32 %v4751, 16
        %v5207 = vrot.slane %v5205, 4
        %v5208 = vshll.u32 %v4751, 16
        %v5210 = vrot.slane %v5208, 5
        %v5211 = vor.u32 %v5207, %v5210
        %v5212 = vrot.slane %v5211, 4
        %v5214 = vshll.u32 %v4752, 16
        %v5216 = vrot.slane %v5214, 5
        %v5217 = vsel %vm2904, %v5212, %v5216
        %v5218 = vshrl.u32 %v4752, 16
        %v5220 = vrot.slane %v5218, 4
        %v5221 = vor.u32 %v5220, %v5216
        %v5222 = vrot.slane %v5221, 4
        %v5224 = vshll.u32 %v4753, 16
        %v5226 = vrot.slane %v5224, 5
        %v5227 = vsel %vm2904, %v5222, %v5226
        %v5229 = vshrl.u32 %v4754, 16
        %v5231 = vrot.slane %v5229, 4
        %v5232 = vshll.u32 %v4754, 16
        %v5234 = vrot.slane %v5232, 5
        %v5235 = vor.u32 %v5231, %v5234
        %v5236 = vrot.slane %v5235, 4
        %v5238 = vshll.u32 %v4755, 16
        %v5240 = vrot.slane %v5238, 5
        %v5241 = vsel %vm2904, %v5236, %v5240
        %v5242 = vshrl.u32 %v4755, 16
        %v5244 = vrot.slane %v5242, 4
        %v5245 = vor.u32 %v5244, %v5240
        %v5246 = vrot.slane %v5245, 4
        %v5248 = vshll.u32 %v4756, 16
        %v5250 = vrot.slane %v5248, 5
        %v5251 = vsel %vm2904, %v5246, %v5250
        %v5253 = vshrl.u32 %v4757, 16
        %v5255 = vrot.slane %v5253, 4
        %v5256 = vshll.u32 %v4757, 16
        %v5258 = vrot.slane %v5256, 5
        %v5259 = vor.u32 %v5255, %v5258
        %v5260 = vrot.slane %v5259, 4
        %v5262 = vshll.u32 %v4758, 16
        %v5264 = vrot.slane %v5262, 5
        %v5265 = vsel %vm2904, %v5260, %v5264
        %v5266 = vshrl.u32 %v4758, 16
        %v5268 = vrot.slane %v5266, 4
        %v5269 = vor.u32 %v5268, %v5264
        %v5270 = vrot.slane %v5269, 4
        %v5272 = vshll.u32 %v4759, 16
        %v5274 = vrot.slane %v5272, 5
        %v5275 = vsel %vm2904, %v5270, %v5274
        %v5277 = vshrl.u32 %v4760, 16
        %v5279 = vrot.slane %v5277, 4
        %v5280 = vshll.u32 %v4760, 16
        %v5282 = vrot.slane %v5280, 5
        %v5283 = vor.u32 %v5279, %v5282
        %v5284 = vrot.slane %v5283, 4
        %v5286 = vshll.u32 %v4761, 16
        %v5288 = vrot.slane %v5286, 5
        %v5289 = vsel %vm2904, %v5284, %v5288
        %v5290 = vshrl.u32 %v4761, 16
        %v5292 = vrot.slane %v5290, 4
        %v5293 = vor.u32 %v5292, %v5288
        %v5294 = vrot.slane %v5293, 4
        %v5296 = vshll.u32 %v4762, 16
        %v5298 = vrot.slane %v5296, 5
        %v5299 = vsel %vm2904, %v5294, %v5298
        %v5301 = vshrl.u32 %v4763, 16
        %v5303 = vrot.slane %v5301, 4
        %v5304 = vshll.u32 %v4763, 16
        %v5306 = vrot.slane %v5304, 5
        %v5307 = vor.u32 %v5303, %v5306
        %v5308 = vrot.slane %v5307, 4
        %v5310 = vshll.u32 %v4764, 16
        %v5312 = vrot.slane %v5310, 5
        %v5313 = vsel %vm2904, %v5308, %v5312
        %v5314 = vshrl.u32 %v4764, 16
        %v5316 = vrot.slane %v5314, 4
        %v5317 = vor.u32 %v5316, %v5312
        %v5318 = vrot.slane %v5317, 4
        %v5320 = vshll.u32 %v4765, 16
        %v5322 = vrot.slane %v5320, 5
        %v5323 = vsel %vm2904, %v5318, %v5322
        %v5325 = vshrl.u32 %v4766, 16
        %v5327 = vrot.slane %v5325, 4
        %v5328 = vshll.u32 %v4766, 16
        %v5330 = vrot.slane %v5328, 5
        %v5331 = vor.u32 %v5327, %v5330
        %v5332 = vrot.slane %v5331, 4
        %v5334 = vshll.u32 %v4767, 16
        %v5336 = vrot.slane %v5334, 5
        %v5337 = vsel %vm2904, %v5332, %v5336
        %v5338 = vshrl.u32 %v4767, 16
        %v5340 = vrot.slane %v5338, 4
        %v5341 = vor.u32 %v5340, %v5336
        %v5342 = vrot.slane %v5341, 4
        %v5344 = vshll.u32 %v4768, 16
        %v5346 = vrot.slane %v5344, 5
        %v5347 = vsel %vm2904, %v5342, %v5346
        %v5349 = vshrl.u32 %v4769, 16
        %v5351 = vrot.slane %v5349, 4
        %v5352 = vshll.u32 %v4769, 16
        %v5354 = vrot.slane %v5352, 5
        %v5355 = vor.u32 %v5351, %v5354
        %v5356 = vrot.slane %v5355, 4
        %v5358 = vshll.u32 %v4770, 16
        %v5360 = vrot.slane %v5358, 5
        %v5361 = vsel %vm2904, %v5356, %v5360
        %v5362 = vshrl.u32 %v4770, 16
        %v5364 = vrot.slane %v5362, 4
        %v5365 = vor.u32 %v5364, %v5360
        %v5366 = vrot.slane %v5365, 4
        %v5368 = vshll.u32 %v4771, 16
        %v5370 = vrot.slane %v5368, 5
        %v5371 = vsel %vm2904, %v5366, %v5370
        %v5373 = vshrl.u32 %v4772, 16
        %v5375 = vrot.slane %v5373, 4
        %v5376 = vshll.u32 %v4772, 16
        %v5378 = vrot.slane %v5376, 5
        %v5379 = vor.u32 %v5375, %v5378
        %v5380 = vrot.slane %v5379, 4
        %v5382 = vshll.u32 %v4773, 16
        %v5384 = vrot.slane %v5382, 5
        %v5385 = vsel %vm2904, %v5380, %v5384
        %v5386 = vshrl.u32 %v4773, 16
        %v5388 = vrot.slane %v5386, 4
        %v5389 = vor.u32 %v5388, %v5384
        %v5390 = vrot.slane %v5389, 4
        %v5392 = vshll.u32 %v4774, 16
        %v5394 = vrot.slane %v5392, 5
        %v5395 = vsel %vm2904, %v5390, %v5394
        %v5397 = vshrl.u32 %v4775, 16
        %v5399 = vrot.slane %v5397, 4
        %v5400 = vshll.u32 %v4775, 16
        %v5402 = vrot.slane %v5400, 5
        %v5403 = vor.u32 %v5399, %v5402
        %v5404 = vrot.slane %v5403, 4
        %v5406 = vshll.u32 %v4776, 16
        %v5408 = vrot.slane %v5406, 5
        %v5409 = vsel %vm2904, %v5404, %v5408
        %v5410 = vshrl.u32 %v4776, 16
        %v5412 = vrot.slane %v5410, 4
        %v5413 = vor.u32 %v5412, %v5408
        %v5414 = vrot.slane %v5413, 4
        %v5416 = vshll.u32 %v4777, 16
        %v5418 = vrot.slane %v5416, 5
        %v5419 = vsel %vm2904, %v5414, %v5418
        %v5421 = vshrl.u32 %v4778, 16
        %v5423 = vrot.slane %v5421, 4
        %v5424 = vshll.u32 %v4778, 16
        %v5426 = vrot.slane %v5424, 5
        %v5427 = vor.u32 %v5423, %v5426
        %v5428 = vrot.slane %v5427, 4
        %v5430 = vshll.u32 %v4779, 16
        %v5432 = vrot.slane %v5430, 5
        %v5433 = vsel %vm2904, %v5428, %v5432
        %v5434 = vshrl.u32 %v4779, 16
        %v5436 = vrot.slane %v5434, 4
        %v5437 = vor.u32 %v5436, %v5432
        %v5438 = vrot.slane %v5437, 4
        %v5440 = vshll.u32 %v4780, 16
        %v5442 = vrot.slane %v5440, 5
        %v5443 = vsel %vm2904, %v5438, %v5442
        %v5445 = vshrl.u32 %v4781, 16
        %v5447 = vrot.slane %v5445, 4
        %v5448 = vshll.u32 %v4781, 16
        %v5450 = vrot.slane %v5448, 5
        %v5451 = vor.u32 %v5447, %v5450
        %v5452 = vrot.slane %v5451, 4
        %v5454 = vshll.u32 %v4782, 16
        %v5456 = vrot.slane %v5454, 5
        %v5457 = vsel %vm2904, %v5452, %v5456
        %v5458 = vshrl.u32 %v4782, 16
        %v5460 = vrot.slane %v5458, 4
        %v5461 = vor.u32 %v5460, %v5456
        %v5462 = vrot.slane %v5461, 4
        %v5464 = vshll.u32 %v4783, 16
        %v5466 = vrot.slane %v5464, 5
        %v5467 = vsel %vm2904, %v5462, %v5466
        %v5469 = vshrl.u32 %v4784, 16
        %v5471 = vrot.slane %v5469, 4
        %v5472 = vshll.u32 %v4784, 16
        %v5474 = vrot.slane %v5472, 5
        %v5475 = vor.u32 %v5471, %v5474
        %v5476 = vrot.slane %v5475, 4
        %v5478 = vshll.u32 %v4785, 16
        %v5480 = vrot.slane %v5478, 5
        %v5481 = vsel %vm2904, %v5476, %v5480
        %v5482 = vshrl.u32 %v4785, 16
        %v5484 = vrot.slane %v5482, 4
        %v5485 = vor.u32 %v5484, %v5480
        %v5486 = vrot.slane %v5485, 4
        %v5488 = vshll.u32 %v4786, 16
        %v5490 = vrot.slane %v5488, 5
        %v5491 = vsel %vm2904, %v5486, %v5490
        %v5493 = vshrl.u32 %v4787, 16
        %v5495 = vrot.slane %v5493, 4
        %v5496 = vshll.u32 %v4787, 16
        %v5498 = vrot.slane %v5496, 5
        %v5499 = vor.u32 %v5495, %v5498
        %v5500 = vrot.slane %v5499, 4
        %v5502 = vshll.u32 %v4788, 16
        %v5504 = vrot.slane %v5502, 5
        %v5505 = vsel %vm2904, %v5500, %v5504
        %v5506 = vshrl.u32 %v4788, 16
        %v5508 = vrot.slane %v5506, 4
        %v5509 = vor.u32 %v5508, %v5504
        %v5510 = vrot.slane %v5509, 4
        %v5512 = vshll.u32 %v4789, 16
        %v5514 = vrot.slane %v5512, 5
        %v5515 = vsel %vm2904, %v5510, %v5514
        %v5517 = vshrl.u32 %v4790, 16
        %v5519 = vrot.slane %v5517, 4
        %v5520 = vshll.u32 %v4790, 16
        %v5522 = vrot.slane %v5520, 5
        %v5523 = vor.u32 %v5519, %v5522
        %v5524 = vrot.slane %v5523, 4
        %v5526 = vshll.u32 %v4791, 16
        %v5528 = vrot.slane %v5526, 5
        %v5529 = vsel %vm2904, %v5524, %v5528
        %v5530 = vshrl.u32 %v4791, 16
        %v5532 = vrot.slane %v5530, 4
        %v5533 = vor.u32 %v5532, %v5528
        %v5534 = vrot.slane %v5533, 4
        %v5536 = vshll.u32 %v4792, 16
        %v5538 = vrot.slane %v5536, 5
        %v5539 = vsel %vm2904, %v5534, %v5538
        %v5541 = vshrl.u32 %v4793, 16
        %v5543 = vrot.slane %v5541, 4
        %v5544 = vshll.u32 %v4793, 16
        %v5546 = vrot.slane %v5544, 5
        %v5547 = vor.u32 %v5543, %v5546
        %v5548 = vrot.slane %v5547, 4
        %v5550 = vshll.u32 %v4794, 16
        %v5552 = vrot.slane %v5550, 5
        %v5553 = vsel %vm2904, %v5548, %v5552
        %v5554 = vshrl.u32 %v4794, 16
        %v5556 = vrot.slane %v5554, 4
        %v5557 = vor.u32 %v5556, %v5552
        %v5558 = vrot.slane %v5557, 4
        %v5560 = vshll.u32 %v4795, 16
        %v5562 = vrot.slane %v5560, 5
        %v5563 = vsel %vm2904, %v5558, %v5562
        %v5564 = vunpack.c.l.b16 %v4809
        %v5565 = vunpack.c.l.b16 %v4819
        %v5566 = vunpack.c.l.b16 %v4833
        %v5567 = vunpack.c.l.b16 %v4843
        %v5568 = vunpack.c.l.b16 %v4857
        %v5569 = vunpack.c.l.b16 %v4867
        %v5570 = vunpack.c.l.b16 %v4881
        %v5571 = vunpack.c.l.b16 %v4891
        %v5572 = vunpack.c.l.b16 %v4905
        %v5573 = vunpack.c.l.b16 %v4915
        %v5574 = vunpack.c.l.b16 %v4929
        %v5575 = vunpack.c.l.b16 %v4939
        %v5576 = vunpack.c.l.b16 %v4953
        %v5577 = vunpack.c.l.b16 %v4963
        %v5578 = vunpack.c.l.b16 %v4977
        %v5579 = vunpack.c.l.b16 %v4987
        %v5580 = vunpack.c.l.b16 %v5001
        %v5581 = vunpack.c.l.b16 %v5011
        %v5582 = vunpack.c.l.b16 %v5025
        %v5583 = vunpack.c.l.b16 %v5035
        %v5584 = vunpack.c.l.b16 %v5049
        %v5585 = vunpack.c.l.b16 %v5059
        %v5586 = vunpack.c.l.b16 %v5073
        %v5587 = vunpack.c.l.b16 %v5083
        %v5588 = vunpack.c.l.b16 %v5097
        %v5589 = vunpack.c.l.b16 %v5107
        %v5590 = vunpack.c.l.b16 %v5121
        %v5591 = vunpack.c.l.b16 %v5131
        %v5592 = vunpack.c.l.b16 %v5145
        %v5593 = vunpack.c.l.b16 %v5155
        %v5594 = vunpack.c.l.b16 %v5169
        %v5595 = vunpack.c.l.b16 %v5179
        %v5596 = vunpack.c.l.b16 %v5193
        %v5597 = vunpack.c.l.b16 %v5203
        %v5598 = vunpack.c.l.b16 %v5217
        %v5599 = vunpack.c.l.b16 %v5227
        %v5600 = vunpack.c.l.b16 %v5241
        %v5601 = vunpack.c.l.b16 %v5251
        %v5602 = vunpack.c.l.b16 %v5265
        %v5603 = vunpack.c.l.b16 %v5275
        %v5604 = vunpack.c.l.b16 %v5289
        %v5605 = vunpack.c.l.b16 %v5299
        %v5606 = vunpack.c.l.b16 %v5313
        %v5607 = vunpack.c.l.b16 %v5323
        %v5608 = vunpack.c.l.b16 %v5337
        %v5609 = vunpack.c.l.b16 %v5347
        %v5610 = vunpack.c.l.b16 %v5361
        %v5611 = vunpack.c.l.b16 %v5371
        %v5612 = vunpack.c.l.b16 %v5385
        %v5613 = vunpack.c.l.b16 %v5395
        %v5614 = vunpack.c.l.b16 %v5409
        %v5615 = vunpack.c.l.b16 %v5419
        %v5616 = vunpack.c.l.b16 %v5433
        %v5617 = vunpack.c.l.b16 %v5443
        %v5618 = vunpack.c.l.b16 %v5457
        %v5619 = vunpack.c.l.b16 %v5467
        %v5620 = vunpack.c.l.b16 %v5481
        %v5621 = vunpack.c.l.b16 %v5491
        %v5622 = vunpack.c.l.b16 %v5505
        %v5623 = vunpack.c.l.b16 %v5515
        %v5624 = vunpack.c.l.b16 %v5529
        %v5625 = vunpack.c.l.b16 %v5539
        %v5626 = vunpack.c.l.b16 %v5553
        %v5627 = vunpack.c.l.b16 %v5563
        %v5628 = vpack.c.b16 %v5565, %v5564
        %v5629 = vpack.c.b16 %v5567, %v5566
        %v5630 = vpack.c.b16 %v5569, %v5568
        %v5631 = vpack.c.b16 %v5571, %v5570
        %v5632 = vpack.c.b16 %v5573, %v5572
        %v5633 = vpack.c.b16 %v5575, %v5574
        %v5634 = vpack.c.b16 %v5577, %v5576
        %v5635 = vpack.c.b16 %v5579, %v5578
        %v5636 = vpack.c.b16 %v5581, %v5580
        %v5637 = vpack.c.b16 %v5583, %v5582
        %v5638 = vpack.c.b16 %v5585, %v5584
        %v5639 = vpack.c.b16 %v5587, %v5586
        %v5640 = vpack.c.b16 %v5589, %v5588
        %v5641 = vpack.c.b16 %v5591, %v5590
        %v5642 = vpack.c.b16 %v5593, %v5592
        %v5643 = vpack.c.b16 %v5595, %v5594
        %v5644 = vpack.c.b16 %v5597, %v5596
        %v5645 = vpack.c.b16 %v5599, %v5598
        %v5646 = vpack.c.b16 %v5601, %v5600
        %v5647 = vpack.c.b16 %v5603, %v5602
        %v5648 = vpack.c.b16 %v5605, %v5604
        %v5649 = vpack.c.b16 %v5607, %v5606
        %v5650 = vpack.c.b16 %v5609, %v5608
        %v5651 = vpack.c.b16 %v5611, %v5610
        %v5652 = vpack.c.b16 %v5613, %v5612
        %v5653 = vpack.c.b16 %v5615, %v5614
        %v5654 = vpack.c.b16 %v5617, %v5616
        %v5655 = vpack.c.b16 %v5619, %v5618
        %v5656 = vpack.c.b16 %v5621, %v5620
        %v5657 = vpack.c.b16 %v5623, %v5622
        %v5658 = vpack.c.b16 %v5625, %v5624
        %v5659 = vpack.c.b16 %v5627, %v5626
        %5692 = vst [vmem:[#allocation3 + $0x20] sm:$0xff] %v5628
        %5693 = vst [vmem:[#allocation3 + $0x68] sm:$0xff] %v5629
        %5694 = vst [vmem:[#allocation3 + $0xb0] sm:$0xff] %v5630
        %5695 = vst [vmem:[#allocation3 + $0xf8] sm:$0xff] %v5631
        %5696 = vst [vmem:[#allocation3 + $0x140] sm:$0xff] %v5632
        %5697 = vst [vmem:[#allocation3 + $0x188] sm:$0xff] %v5633
        %5698 = vst [vmem:[#allocation3 + $0x1d0] sm:$0xff] %v5634
        %5699 = vst [vmem:[#allocation3 + $0x218] sm:$0xff] %v5635
        %5700 = vst [vmem:[#allocation3 + $0x260] sm:$0xff] %v5636
        %5701 = vst [vmem:[#allocation3 + $0x2a8] sm:$0xff] %v5637
        %5702 = vst [vmem:[#allocation3 + $0x2f0] sm:$0xff] %v5638
        %5703 = vst [vmem:[#allocation3 + $0x338] sm:$0xff] %v5639
        %5704 = vst [vmem:[#allocation3 + $0x380] sm:$0xff] %v5640
        %5705 = vst [vmem:[#allocation3 + $0x3c8] sm:$0xff] %v5641
        %5706 = vst [vmem:[#allocation3 + $0x410] sm:$0xff] %v5642
        %5707 = vst [vmem:[#allocation3 + $0x458] sm:$0xff] %v5643
        %5708 = vst [vmem:[#allocation3 + $0x4a0] sm:$0xff] %v5644
        %5709 = vst [vmem:[#allocation3 + $0x4e8] sm:$0xff] %v5645
        %5710 = vst [vmem:[#allocation3 + $0x530] sm:$0xff] %v5646
        %5711 = vst [vmem:[#allocation3 + $0x578] sm:$0xff] %v5647
        %5712 = vst [vmem:[#allocation3 + $0x5c0] sm:$0xff] %v5648
        %5713 = vst [vmem:[#allocation3 + $0x608] sm:$0xff] %v5649
        %5714 = vst [vmem:[#allocation3 + $0x650] sm:$0xff] %v5650
        %5715 = vst [vmem:[#allocation3 + $0x698] sm:$0xff] %v5651
        %5716 = vst [vmem:[#allocation3 + $0x6e0] sm:$0xff] %v5652
        %5717 = vst [vmem:[#allocation3 + $0x728] sm:$0xff] %v5653
        %5718 = vst [vmem:[#allocation3 + $0x770] sm:$0xff] %v5654
        %5719 = vst [vmem:[#allocation3 + $0x7b8] sm:$0xff] %v5655
        %5720 = vst [vmem:[#allocation3 + $0x800] sm:$0xff] %v5656
        %5721 = vst [vmem:[#allocation3 + $0x848] sm:$0xff] %v5657
        %5722 = vst [vmem:[#allocation3 + $0x890] sm:$0xff] %v5658
        %5723 = vst [vmem:[#allocation3 + $0x8d8] sm:$0xff] %v5659
        %v5724 = vld [vmem:[%s2288] sm:$0xe]
        %v5725 = vld [vmem:[%s2288 + $0x4] sm:$0xf]
        %v5726 = vld [vmem:[%s2288 + $0x8] sm:$0x1]
        %v5727 = vld [vmem:[%s2288 + $0xc] sm:$0xe]
        %v5728 = vld [vmem:[%s2288 + $0x10] sm:$0xf]
        %v5729 = vld [vmem:[%s2288 + $0x14] sm:$0x1]
        %v5730 = vld [vmem:[%s2288 + $0x18] sm:$0xe]
        %v5731 = vld [vmem:[%s2288 + $0x1c] sm:$0xf]
        %v5732 = vld [vmem:[%s2288 + $0x20] sm:$0x1]
        %v5733 = vld [vmem:[%s2288 + $0x24] sm:$0xe]
        %v5734 = vld [vmem:[%s2288 + $0x28] sm:$0xf]
        %v5735 = vld [vmem:[%s2288 + $0x2c] sm:$0x1]
        %v5736 = vld [vmem:[%s2288 + $0x30] sm:$0xe]
        %v5737 = vld [vmem:[%s2288 + $0x34] sm:$0xf]
        %v5738 = vld [vmem:[%s2288 + $0x38] sm:$0x1]
        %v5739 = vld [vmem:[%s2288 + $0x3c] sm:$0xe]
        %v5740 = vld [vmem:[%s2288 + $0x40] sm:$0xf]
        %v5741 = vld [vmem:[%s2288 + $0x44] sm:$0x1]
        %v5742 = vld [vmem:[%s2288 + $0x48] sm:$0xe]
        %v5743 = vld [vmem:[%s2288 + $0x4c] sm:$0xf]
        %v5744 = vld [vmem:[%s2288 + $0x50] sm:$0x1]
        %v5745 = vld [vmem:[%s2288 + $0x54] sm:$0xe]
        %v5746 = vld [vmem:[%s2288 + $0x58] sm:$0xf]
        %v5747 = vld [vmem:[%s2288 + $0x5c] sm:$0x1]
        %v5748 = vld [vmem:[%s2288 + $0x60] sm:$0xe]
        %v5749 = vld [vmem:[%s2288 + $0x64] sm:$0xf]
        %v5750 = vld [vmem:[%s2288 + $0x68] sm:$0x1]
        %v5751 = vld [vmem:[%s2288 + $0x6c] sm:$0xe]
        %v5752 = vld [vmem:[%s2288 + $0x70] sm:$0xf]
        %v5753 = vld [vmem:[%s2288 + $0x74] sm:$0x1]
        %v5754 = vld [vmem:[%s2288 + $0x78] sm:$0xe]
        %v5755 = vld [vmem:[%s2288 + $0x7c] sm:$0xf]
        %v5756 = vld [vmem:[%s2288 + $0x80] sm:$0x1]
        %v5757 = vld [vmem:[%s2288 + $0x84] sm:$0xe]
        %v5758 = vld [vmem:[%s2288 + $0x88] sm:$0xf]
        %v5759 = vld [vmem:[%s2288 + $0x8c] sm:$0x1]
        %v5760 = vld [vmem:[%s2288 + $0x90] sm:$0xe]
        %v5761 = vld [vmem:[%s2288 + $0x94] sm:$0xf]
        %v5762 = vld [vmem:[%s2288 + $0x98] sm:$0x1]
        %v5763 = vld [vmem:[%s2288 + $0x9c] sm:$0xe]
        %v5764 = vld [vmem:[%s2288 + $0xa0] sm:$0xf]
        %v5765 = vld [vmem:[%s2288 + $0xa4] sm:$0x1]
        %v5766 = vld [vmem:[%s2288 + $0xa8] sm:$0xe]
        %v5767 = vld [vmem:[%s2288 + $0xac] sm:$0xf]
        %v5768 = vld [vmem:[%s2288 + $0xb0] sm:$0x1]
        %v5769 = vld [vmem:[%s2288 + $0xb4] sm:$0xe]
        %v5770 = vld [vmem:[%s2288 + $0xb8] sm:$0xf]
        %v5771 = vld [vmem:[%s2288 + $0xbc] sm:$0x1]
        %v5772 = vld [vmem:[%s2288 + $0xd8] sm:$0xe]
        %v5773 = vld [vmem:[%s2288 + $0xdc] sm:$0xf]
        %v5774 = vld [vmem:[%s2288 + $0xe0] sm:$0x1]
        %v5775 = vld [vmem:[%s2288 + $0xe4] sm:$0xe]
        %v5776 = vld [vmem:[%s2288 + $0xe8] sm:$0xf]
        %v5777 = vld [vmem:[%s2288 + $0xec] sm:$0x1]
        %v5778 = vld [vmem:[%s2288 + $0xf0] sm:$0xe]
        %v5779 = vld [vmem:[%s2288 + $0xf4] sm:$0xf]
        %v5780 = vld [vmem:[%s2288 + $0xf8] sm:$0x1]
        %v5781 = vld [vmem:[%s2288 + $0xfc] sm:$0xe]
        %v5782 = vld [vmem:[%s2288 + $0x100] sm:$0xf]
        %v5783 = vld [vmem:[%s2288 + $0x104] sm:$0x1]
        %v5784 = vld [vmem:[%s2288 + $0x108] sm:$0xe]
        %v5785 = vld [vmem:[%s2288 + $0x10c] sm:$0xf]
        %v5786 = vld [vmem:[%s2288 + $0x110] sm:$0x1]
        %v5787 = vld [vmem:[%s2288 + $0x114] sm:$0xe]
        %v5788 = vld [vmem:[%s2288 + $0x118] sm:$0xf]
        %v5789 = vld [vmem:[%s2288 + $0x11c] sm:$0x1]
        %v5790 = vld [vmem:[%s2288 + $0x120] sm:$0xe]
        %v5791 = vld [vmem:[%s2288 + $0x124] sm:$0xf]
        %v5792 = vld [vmem:[%s2288 + $0x128] sm:$0x1]
        %v5793 = vld [vmem:[%s2288 + $0x12c] sm:$0xe]
        %v5794 = vld [vmem:[%s2288 + $0x130] sm:$0xf]
        %v5795 = vld [vmem:[%s2288 + $0x134] sm:$0x1]
        %v5796 = vld [vmem:[%s2288 + $0x138] sm:$0xe]
        %v5797 = vld [vmem:[%s2288 + $0x13c] sm:$0xf]
        %v5798 = vld [vmem:[%s2288 + $0x140] sm:$0x1]
        %v5799 = vld [vmem:[%s2288 + $0x144] sm:$0xe]
        %v5800 = vld [vmem:[%s2288 + $0x148] sm:$0xf]
        %v5801 = vld [vmem:[%s2288 + $0x14c] sm:$0x1]
        %v5802 = vld [vmem:[%s2288 + $0x150] sm:$0xe]
        %v5803 = vld [vmem:[%s2288 + $0x154] sm:$0xf]
        %v5804 = vld [vmem:[%s2288 + $0x158] sm:$0x1]
        %v5805 = vld [vmem:[%s2288 + $0x15c] sm:$0xe]
        %v5806 = vld [vmem:[%s2288 + $0x160] sm:$0xf]
        %v5807 = vld [vmem:[%s2288 + $0x164] sm:$0x1]
        %v5808 = vld [vmem:[%s2288 + $0x168] sm:$0xe]
        %v5809 = vld [vmem:[%s2288 + $0x16c] sm:$0xf]
        %v5810 = vld [vmem:[%s2288 + $0x170] sm:$0x1]
        %v5811 = vld [vmem:[%s2288 + $0x174] sm:$0xe]
        %v5812 = vld [vmem:[%s2288 + $0x178] sm:$0xf]
        %v5813 = vld [vmem:[%s2288 + $0x17c] sm:$0x1]
        %v5814 = vld [vmem:[%s2288 + $0x180] sm:$0xe]
        %v5815 = vld [vmem:[%s2288 + $0x184] sm:$0xf]
        %v5816 = vld [vmem:[%s2288 + $0x188] sm:$0x1]
        %v5817 = vld [vmem:[%s2288 + $0x18c] sm:$0xe]
        %v5818 = vld [vmem:[%s2288 + $0x190] sm:$0xf]
        %v5819 = vld [vmem:[%s2288 + $0x194] sm:$0x1]
        %v5916 = vrot.slane %v5724, 5
        %v5917 = vrot.slane %v5916, 4
        %v5918 = vrot.slane %v5725, 5
        %v5919 = vsel %vm4027, %v5917, %v5918
        %v5920 = vrot.slane %v5918, 4
        %v5921 = vrot.slane %v5726, 5
        %v5922 = vsel %vm4027, %v5920, %v5921
        %v5923 = vrot.slane %v5727, 5
        %v5924 = vrot.slane %v5923, 4
        %v5925 = vrot.slane %v5728, 5
        %v5926 = vsel %vm4027, %v5924, %v5925
        %v5927 = vrot.slane %v5925, 4
        %v5928 = vrot.slane %v5729, 5
        %v5929 = vsel %vm4027, %v5927, %v5928
        %v5930 = vrot.slane %v5730, 5
        %v5931 = vrot.slane %v5930, 4
        %v5932 = vrot.slane %v5731, 5
        %v5933 = vsel %vm4027, %v5931, %v5932
        %v5934 = vrot.slane %v5932, 4
        %v5935 = vrot.slane %v5732, 5
        %v5936 = vsel %vm4027, %v5934, %v5935
        %v5937 = vrot.slane %v5733, 5
        %v5938 = vrot.slane %v5937, 4
        %v5939 = vrot.slane %v5734, 5
        %v5940 = vsel %vm4027, %v5938, %v5939
        %v5941 = vrot.slane %v5939, 4
        %v5942 = vrot.slane %v5735, 5
        %v5943 = vsel %vm4027, %v5941, %v5942
        %v5944 = vrot.slane %v5736, 5
        %v5945 = vrot.slane %v5944, 4
        %v5946 = vrot.slane %v5737, 5
        %v5947 = vsel %vm4027, %v5945, %v5946
        %v5948 = vrot.slane %v5946, 4
        %v5949 = vrot.slane %v5738, 5
        %v5950 = vsel %vm4027, %v5948, %v5949
        %v5951 = vrot.slane %v5739, 5
        %v5952 = vrot.slane %v5951, 4
        %v5953 = vrot.slane %v5740, 5
        %v5954 = vsel %vm4027, %v5952, %v5953
        %v5955 = vrot.slane %v5953, 4
        %v5956 = vrot.slane %v5741, 5
        %v5957 = vsel %vm4027, %v5955, %v5956
        %v5958 = vrot.slane %v5742, 5
        %v5959 = vrot.slane %v5958, 4
        %v5960 = vrot.slane %v5743, 5
        %v5961 = vsel %vm4027, %v5959, %v5960
        %v5962 = vrot.slane %v5960, 4
        %v5963 = vrot.slane %v5744, 5
        %v5964 = vsel %vm4027, %v5962, %v5963
        %v5965 = vrot.slane %v5745, 5
        %v5966 = vrot.slane %v5965, 4
        %v5967 = vrot.slane %v5746, 5
        %v5968 = vsel %vm4027, %v5966, %v5967
        %v5969 = vrot.slane %v5967, 4
        %v5970 = vrot.slane %v5747, 5
        %v5971 = vsel %vm4027, %v5969, %v5970
        %v5972 = vrot.slane %v5748, 5
        %v5973 = vrot.slane %v5972, 4
        %v5974 = vrot.slane %v5749, 5
        %v5975 = vsel %vm4027, %v5973, %v5974
        %v5976 = vrot.slane %v5974, 4
        %v5977 = vrot.slane %v5750, 5
        %v5978 = vsel %vm4027, %v5976, %v5977
        %v5979 = vrot.slane %v5751, 5
        %v5980 = vrot.slane %v5979, 4
        %v5981 = vrot.slane %v5752, 5
        %v5982 = vsel %vm4027, %v5980, %v5981
        %v5983 = vrot.slane %v5981, 4
        %v5984 = vrot.slane %v5753, 5
        %v5985 = vsel %vm4027, %v5983, %v5984
        %v5986 = vrot.slane %v5754, 5
        %v5987 = vrot.slane %v5986, 4
        %v5988 = vrot.slane %v5755, 5
        %v5989 = vsel %vm4027, %v5987, %v5988
        %v5990 = vrot.slane %v5988, 4
        %v5991 = vrot.slane %v5756, 5
        %v5992 = vsel %vm4027, %v5990, %v5991
        %v5993 = vrot.slane %v5757, 5
        %v5994 = vrot.slane %v5993, 4
        %v5995 = vrot.slane %v5758, 5
        %v5996 = vsel %vm4027, %v5994, %v5995
        %v5997 = vrot.slane %v5995, 4
        %v5998 = vrot.slane %v5759, 5
        %v5999 = vsel %vm4027, %v5997, %v5998
        %v6000 = vrot.slane %v5760, 5
        %v6001 = vrot.slane %v6000, 4
        %v6002 = vrot.slane %v5761, 5
        %v6003 = vsel %vm4027, %v6001, %v6002
        %v6004 = vrot.slane %v6002, 4
        %v6005 = vrot.slane %v5762, 5
        %v6006 = vsel %vm4027, %v6004, %v6005
        %v6007 = vrot.slane %v5763, 5
        %v6008 = vrot.slane %v6007, 4
        %v6009 = vrot.slane %v5764, 5
        %v6010 = vsel %vm4027, %v6008, %v6009
        %v6011 = vrot.slane %v6009, 4
        %v6012 = vrot.slane %v5765, 5
        %v6013 = vsel %vm4027, %v6011, %v6012
        %v6014 = vrot.slane %v5766, 5
        %v6015 = vrot.slane %v6014, 4
        %v6016 = vrot.slane %v5767, 5
        %v6017 = vsel %vm4027, %v6015, %v6016
        %v6018 = vrot.slane %v6016, 4
        %v6019 = vrot.slane %v5768, 5
        %v6020 = vsel %vm4027, %v6018, %v6019
        %v6021 = vrot.slane %v5769, 5
        %v6022 = vrot.slane %v6021, 4
        %v6023 = vrot.slane %v5770, 5
        %v6024 = vsel %vm4027, %v6022, %v6023
        %v6025 = vrot.slane %v6023, 4
        %v6026 = vrot.slane %v5771, 5
        %v6027 = vsel %vm4027, %v6025, %v6026
        %v6028 = vrot.slane %v5772, 5
        %v6029 = vrot.slane %v6028, 4
        %v6030 = vrot.slane %v5773, 5
        %v6031 = vsel %vm4027, %v6029, %v6030
        %v6032 = vrot.slane %v6030, 4
        %v6033 = vrot.slane %v5774, 5
        %v6034 = vsel %vm4027, %v6032, %v6033
        %v6035 = vrot.slane %v5775, 5
        %v6036 = vrot.slane %v6035, 4
        %v6037 = vrot.slane %v5776, 5
        %v6038 = vsel %vm4027, %v6036, %v6037
        %v6039 = vrot.slane %v6037, 4
        %v6040 = vrot.slane %v5777, 5
        %v6041 = vsel %vm4027, %v6039, %v6040
        %v6042 = vrot.slane %v5778, 5
        %v6043 = vrot.slane %v6042, 4
        %v6044 = vrot.slane %v5779, 5
        %v6045 = vsel %vm4027, %v6043, %v6044
        %v6046 = vrot.slane %v6044, 4
        %v6047 = vrot.slane %v5780, 5
        %v6048 = vsel %vm4027, %v6046, %v6047
        %v6049 = vrot.slane %v5781, 5
        %v6050 = vrot.slane %v6049, 4
        %v6051 = vrot.slane %v5782, 5
        %v6052 = vsel %vm4027, %v6050, %v6051
        %v6053 = vrot.slane %v6051, 4
        %v6054 = vrot.slane %v5783, 5
        %v6055 = vsel %vm4027, %v6053, %v6054
        %v6056 = vrot.slane %v5784, 5
        %v6057 = vrot.slane %v6056, 4
        %v6058 = vrot.slane %v5785, 5
        %v6059 = vsel %vm4027, %v6057, %v6058
        %v6060 = vrot.slane %v6058, 4
        %v6061 = vrot.slane %v5786, 5
        %v6062 = vsel %vm4027, %v6060, %v6061
        %v6063 = vrot.slane %v5787, 5
        %v6064 = vrot.slane %v6063, 4
        %v6065 = vrot.slane %v5788, 5
        %v6066 = vsel %vm4027, %v6064, %v6065
        %v6067 = vrot.slane %v6065, 4
        %v6068 = vrot.slane %v5789, 5
        %v6069 = vsel %vm4027, %v6067, %v6068
        %v6070 = vrot.slane %v5790, 5
        %v6071 = vrot.slane %v6070, 4
        %v6072 = vrot.slane %v5791, 5
        %v6073 = vsel %vm4027, %v6071, %v6072
        %v6074 = vrot.slane %v6072, 4
        %v6075 = vrot.slane %v5792, 5
        %v6076 = vsel %vm4027, %v6074, %v6075
        %v6077 = vrot.slane %v5793, 5
        %v6078 = vrot.slane %v6077, 4
        %v6079 = vrot.slane %v5794, 5
        %v6080 = vsel %vm4027, %v6078, %v6079
        %v6081 = vrot.slane %v6079, 4
        %v6082 = vrot.slane %v5795, 5
        %v6083 = vsel %vm4027, %v6081, %v6082
        %v6084 = vrot.slane %v5796, 5
        %v6085 = vrot.slane %v6084, 4
        %v6086 = vrot.slane %v5797, 5
        %v6087 = vsel %vm4027, %v6085, %v6086
        %v6088 = vrot.slane %v6086, 4
        %v6089 = vrot.slane %v5798, 5
        %v6090 = vsel %vm4027, %v6088, %v6089
        %v6091 = vrot.slane %v5799, 5
        %v6092 = vrot.slane %v6091, 4
        %v6093 = vrot.slane %v5800, 5
        %v6094 = vsel %vm4027, %v6092, %v6093
        %v6095 = vrot.slane %v6093, 4
        %v6096 = vrot.slane %v5801, 5
        %v6097 = vsel %vm4027, %v6095, %v6096
        %v6098 = vrot.slane %v5802, 5
        %v6099 = vrot.slane %v6098, 4
        %v6100 = vrot.slane %v5803, 5
        %v6101 = vsel %vm4027, %v6099, %v6100
        %v6102 = vrot.slane %v6100, 4
        %v6103 = vrot.slane %v5804, 5
        %v6104 = vsel %vm4027, %v6102, %v6103
        %v6105 = vrot.slane %v5805, 5
        %v6106 = vrot.slane %v6105, 4
        %v6107 = vrot.slane %v5806, 5
        %v6108 = vsel %vm4027, %v6106, %v6107
        %v6109 = vrot.slane %v6107, 4
        %v6110 = vrot.slane %v5807, 5
        %v6111 = vsel %vm4027, %v6109, %v6110
        %v6112 = vrot.slane %v5808, 5
        %v6113 = vrot.slane %v6112, 4
        %v6114 = vrot.slane %v5809, 5
        %v6115 = vsel %vm4027, %v6113, %v6114
        %v6116 = vrot.slane %v6114, 4
        %v6117 = vrot.slane %v5810, 5
        %v6118 = vsel %vm4027, %v6116, %v6117
        %v6119 = vrot.slane %v5811, 5
        %v6120 = vrot.slane %v6119, 4
        %v6121 = vrot.slane %v5812, 5
        %v6122 = vsel %vm4027, %v6120, %v6121
        %v6123 = vrot.slane %v6121, 4
        %v6124 = vrot.slane %v5813, 5
        %v6125 = vsel %vm4027, %v6123, %v6124
        %v6126 = vrot.slane %v5814, 5
        %v6127 = vrot.slane %v6126, 4
        %v6128 = vrot.slane %v5815, 5
        %v6129 = vsel %vm4027, %v6127, %v6128
        %v6130 = vrot.slane %v6128, 4
        %v6131 = vrot.slane %v5816, 5
        %v6132 = vsel %vm4027, %v6130, %v6131
        %v6133 = vrot.slane %v5817, 5
        %v6134 = vrot.slane %v6133, 4
        %v6135 = vrot.slane %v5818, 5
        %v6136 = vsel %vm4027, %v6134, %v6135
        %v6137 = vrot.slane %v6135, 4
        %v6138 = vrot.slane %v5819, 5
        %v6139 = vsel %vm4027, %v6137, %v6138
        %v6140 = vunpack.c.l.b16 %v5919
        %v6141 = vunpack.c.l.b16 %v5922
        %v6142 = vunpack.c.l.b16 %v5926
        %v6143 = vunpack.c.l.b16 %v5929
        %v6144 = vunpack.c.l.b16 %v5933
        %v6145 = vunpack.c.l.b16 %v5936
        %v6146 = vunpack.c.l.b16 %v5940
        %v6147 = vunpack.c.l.b16 %v5943
        %v6148 = vunpack.c.l.b16 %v5947
        %v6149 = vunpack.c.l.b16 %v5950
        %v6150 = vunpack.c.l.b16 %v5954
        %v6151 = vunpack.c.l.b16 %v5957
        %v6152 = vunpack.c.l.b16 %v5961
        %v6153 = vunpack.c.l.b16 %v5964
        %v6154 = vunpack.c.l.b16 %v5968
        %v6155 = vunpack.c.l.b16 %v5971
        %v6156 = vunpack.c.l.b16 %v5975
        %v6157 = vunpack.c.l.b16 %v5978
        %v6158 = vunpack.c.l.b16 %v5982
        %v6159 = vunpack.c.l.b16 %v5985
        %v6160 = vunpack.c.l.b16 %v5989
        %v6161 = vunpack.c.l.b16 %v5992
        %v6162 = vunpack.c.l.b16 %v5996
        %v6163 = vunpack.c.l.b16 %v5999
        %v6164 = vunpack.c.l.b16 %v6003
        %v6165 = vunpack.c.l.b16 %v6006
        %v6166 = vunpack.c.l.b16 %v6010
        %v6167 = vunpack.c.l.b16 %v6013
        %v6168 = vunpack.c.l.b16 %v6017
        %v6169 = vunpack.c.l.b16 %v6020
        %v6170 = vunpack.c.l.b16 %v6024
        %v6171 = vunpack.c.l.b16 %v6027
        %v6172 = vunpack.c.l.b16 %v6031
        %v6173 = vunpack.c.l.b16 %v6034
        %v6174 = vunpack.c.l.b16 %v6038
        %v6175 = vunpack.c.l.b16 %v6041
        %v6176 = vunpack.c.l.b16 %v6045
        %v6177 = vunpack.c.l.b16 %v6048
        %v6178 = vunpack.c.l.b16 %v6052
        %v6179 = vunpack.c.l.b16 %v6055
        %v6180 = vunpack.c.l.b16 %v6059
        %v6181 = vunpack.c.l.b16 %v6062
        %v6182 = vunpack.c.l.b16 %v6066
        %v6183 = vunpack.c.l.b16 %v6069
        %v6184 = vunpack.c.l.b16 %v6073
        %v6185 = vunpack.c.l.b16 %v6076
        %v6186 = vunpack.c.l.b16 %v6080
        %v6187 = vunpack.c.l.b16 %v6083
        %v6188 = vunpack.c.l.b16 %v6087
        %v6189 = vunpack.c.l.b16 %v6090
        %v6190 = vunpack.c.l.b16 %v6094
        %v6191 = vunpack.c.l.b16 %v6097
        %v6192 = vunpack.c.l.b16 %v6101
        %v6193 = vunpack.c.l.b16 %v6104
        %v6194 = vunpack.c.l.b16 %v6108
        %v6195 = vunpack.c.l.b16 %v6111
        %v6196 = vunpack.c.l.b16 %v6115
        %v6197 = vunpack.c.l.b16 %v6118
        %v6198 = vunpack.c.l.b16 %v6122
        %v6199 = vunpack.c.l.b16 %v6125
        %v6200 = vunpack.c.l.b16 %v6129
        %v6201 = vunpack.c.l.b16 %v6132
        %v6202 = vunpack.c.l.b16 %v6136
        %v6203 = vunpack.c.l.b16 %v6139
        %v6204 = vpack.c.b16 %v6141, %v6140
        %v6205 = vpack.c.b16 %v6143, %v6142
        %v6206 = vpack.c.b16 %v6145, %v6144
        %v6207 = vpack.c.b16 %v6147, %v6146
        %v6208 = vpack.c.b16 %v6149, %v6148
        %v6209 = vpack.c.b16 %v6151, %v6150
        %v6210 = vpack.c.b16 %v6153, %v6152
        %v6211 = vpack.c.b16 %v6155, %v6154
        %v6212 = vpack.c.b16 %v6157, %v6156
        %v6213 = vpack.c.b16 %v6159, %v6158
        %v6214 = vpack.c.b16 %v6161, %v6160
        %v6215 = vpack.c.b16 %v6163, %v6162
        %v6216 = vpack.c.b16 %v6165, %v6164
        %v6217 = vpack.c.b16 %v6167, %v6166
        %v6218 = vpack.c.b16 %v6169, %v6168
        %v6219 = vpack.c.b16 %v6171, %v6170
        %v6220 = vpack.c.b16 %v6173, %v6172
        %v6221 = vpack.c.b16 %v6175, %v6174
        %v6222 = vpack.c.b16 %v6177, %v6176
        %v6223 = vpack.c.b16 %v6179, %v6178
        %v6224 = vpack.c.b16 %v6181, %v6180
        %v6225 = vpack.c.b16 %v6183, %v6182
        %v6226 = vpack.c.b16 %v6185, %v6184
        %v6227 = vpack.c.b16 %v6187, %v6186
        %v6228 = vpack.c.b16 %v6189, %v6188
        %v6229 = vpack.c.b16 %v6191, %v6190
        %v6230 = vpack.c.b16 %v6193, %v6192
        %v6231 = vpack.c.b16 %v6195, %v6194
        %v6232 = vpack.c.b16 %v6197, %v6196
        %v6233 = vpack.c.b16 %v6199, %v6198
        %v6234 = vpack.c.b16 %v6201, %v6200
        %v6235 = vpack.c.b16 %v6203, %v6202
        %6268 = vst [vmem:[#allocation3 + $0x28] sm:$0xff] %v6204
        %6269 = vst [vmem:[#allocation3 + $0x70] sm:$0xff] %v6205
        %6270 = vst [vmem:[#allocation3 + $0xb8] sm:$0xff] %v6206
        %6271 = vst [vmem:[#allocation3 + $0x100] sm:$0xff] %v6207
        %6272 = vst [vmem:[#allocation3 + $0x148] sm:$0xff] %v6208
        %6273 = vst [vmem:[#allocation3 + $0x190] sm:$0xff] %v6209
        %6274 = vst [vmem:[#allocation3 + $0x1d8] sm:$0xff] %v6210
        %6275 = vst [vmem:[#allocation3 + $0x220] sm:$0xff] %v6211
        %6276 = vst [vmem:[#allocation3 + $0x268] sm:$0xff] %v6212
        %6277 = vst [vmem:[#allocation3 + $0x2b0] sm:$0xff] %v6213
        %6278 = vst [vmem:[#allocation3 + $0x2f8] sm:$0xff] %v6214
        %6279 = vst [vmem:[#allocation3 + $0x340] sm:$0xff] %v6215
        %6280 = vst [vmem:[#allocation3 + $0x388] sm:$0xff] %v6216
        %6281 = vst [vmem:[#allocation3 + $0x3d0] sm:$0xff] %v6217
        %6282 = vst [vmem:[#allocation3 + $0x418] sm:$0xff] %v6218
        %6283 = vst [vmem:[#allocation3 + $0x460] sm:$0xff] %v6219
        %6284 = vst [vmem:[#allocation3 + $0x4a8] sm:$0xff] %v6220
        %6285 = vst [vmem:[#allocation3 + $0x4f0] sm:$0xff] %v6221
        %6286 = vst [vmem:[#allocation3 + $0x538] sm:$0xff] %v6222
        %6287 = vst [vmem:[#allocation3 + $0x580] sm:$0xff] %v6223
        %6288 = vst [vmem:[#allocation3 + $0x5c8] sm:$0xff] %v6224
        %6289 = vst [vmem:[#allocation3 + $0x610] sm:$0xff] %v6225
        %6290 = vst [vmem:[#allocation3 + $0x658] sm:$0xff] %v6226
        %6291 = vst [vmem:[#allocation3 + $0x6a0] sm:$0xff] %v6227
        %6292 = vst [vmem:[#allocation3 + $0x6e8] sm:$0xff] %v6228
        %6293 = vst [vmem:[#allocation3 + $0x730] sm:$0xff] %v6229
        %6294 = vst [vmem:[#allocation3 + $0x778] sm:$0xff] %v6230
        %6295 = vst [vmem:[#allocation3 + $0x7c0] sm:$0xff] %v6231
        %6296 = vst [vmem:[#allocation3 + $0x808] sm:$0xff] %v6232
        %6297 = vst [vmem:[#allocation3 + $0x850] sm:$0xff] %v6233
        %6298 = vst [vmem:[#allocation3 + $0x898] sm:$0xff] %v6234
        %6299 = vst [vmem:[#allocation3 + $0x8e0] sm:$0xff] %v6235
        %s6300 = scalar_lea.vmem [#allocation2], 24
        %v6301 = vld [vmem:[%s6300] sm:$0xf]
        %v6302 = vld [vmem:[%s6300 + $0x4] sm:$0xf]
        %v6303 = vld [vmem:[%s6300 + $0xc] sm:$0xf]
        %v6304 = vld [vmem:[%s6300 + $0x10] sm:$0xf]
        %v6305 = vld [vmem:[%s6300 + $0x18] sm:$0xf]
        %v6306 = vld [vmem:[%s6300 + $0x1c] sm:$0xf]
        %v6307 = vld [vmem:[%s6300 + $0x24] sm:$0xf]
        %v6308 = vld [vmem:[%s6300 + $0x28] sm:$0xf]
        %v6309 = vld [vmem:[%s6300 + $0x30] sm:$0xf]
        %v6310 = vld [vmem:[%s6300 + $0x34] sm:$0xf]
        %v6311 = vld [vmem:[%s6300 + $0x3c] sm:$0xf]
        %v6312 = vld [vmem:[%s6300 + $0x40] sm:$0xf]
        %v6313 = vld [vmem:[%s6300 + $0x48] sm:$0xf]
        %v6314 = vld [vmem:[%s6300 + $0x4c] sm:$0xf]
        %v6315 = vld [vmem:[%s6300 + $0x54] sm:$0xf]
        %v6316 = vld [vmem:[%s6300 + $0x58] sm:$0xf]
        %v6317 = vld [vmem:[%s6300 + $0x60] sm:$0xf]
        %v6318 = vld [vmem:[%s6300 + $0x64] sm:$0xf]
        %v6319 = vld [vmem:[%s6300 + $0x6c] sm:$0xf]
        %v6320 = vld [vmem:[%s6300 + $0x70] sm:$0xf]
        %v6321 = vld [vmem:[%s6300 + $0x78] sm:$0xf]
        %v6322 = vld [vmem:[%s6300 + $0x7c] sm:$0xf]
        %v6323 = vld [vmem:[%s6300 + $0x84] sm:$0xf]
        %v6324 = vld [vmem:[%s6300 + $0x88] sm:$0xf]
        %v6325 = vld [vmem:[%s6300 + $0x90] sm:$0xf]
        %v6326 = vld [vmem:[%s6300 + $0x94] sm:$0xf]
        %v6327 = vld [vmem:[%s6300 + $0x9c] sm:$0xf]
        %v6328 = vld [vmem:[%s6300 + $0xa0] sm:$0xf]
        %v6329 = vld [vmem:[%s6300 + $0xa8] sm:$0xf]
        %v6330 = vld [vmem:[%s6300 + $0xac] sm:$0xf]
        %v6331 = vld [vmem:[%s6300 + $0xb4] sm:$0xf]
        %v6332 = vld [vmem:[%s6300 + $0xb8] sm:$0xf]
        %v6333 = vld [vmem:[%s6300 + $0xd8] sm:$0xf]
        %v6334 = vld [vmem:[%s6300 + $0xdc] sm:$0xf]
        %v6335 = vld [vmem:[%s6300 + $0xe4] sm:$0xf]
        %v6336 = vld [vmem:[%s6300 + $0xe8] sm:$0xf]
        %v6337 = vld [vmem:[%s6300 + $0xf0] sm:$0xf]
        %v6338 = vld [vmem:[%s6300 + $0xf4] sm:$0xf]
        %v6339 = vld [vmem:[%s6300 + $0xfc] sm:$0xf]
        %v6340 = vld [vmem:[%s6300 + $0x100] sm:$0xf]
        %v6341 = vld [vmem:[%s6300 + $0x108] sm:$0xf]
        %v6342 = vld [vmem:[%s6300 + $0x10c] sm:$0xf]
        %v6343 = vld [vmem:[%s6300 + $0x114] sm:$0xf]
        %v6344 = vld [vmem:[%s6300 + $0x118] sm:$0xf]
        %v6345 = vld [vmem:[%s6300 + $0x120] sm:$0xf]
        %v6346 = vld [vmem:[%s6300 + $0x124] sm:$0xf]
        %v6347 = vld [vmem:[%s6300 + $0x12c] sm:$0xf]
        %v6348 = vld [vmem:[%s6300 + $0x130] sm:$0xf]
        %v6349 = vld [vmem:[%s6300 + $0x138] sm:$0xf]
        %v6350 = vld [vmem:[%s6300 + $0x13c] sm:$0xf]
        %v6351 = vld [vmem:[%s6300 + $0x144] sm:$0xf]
        %v6352 = vld [vmem:[%s6300 + $0x148] sm:$0xf]
        %v6353 = vld [vmem:[%s6300 + $0x150] sm:$0xf]
        %v6354 = vld [vmem:[%s6300 + $0x154] sm:$0xf]
        %v6355 = vld [vmem:[%s6300 + $0x15c] sm:$0xf]
        %v6356 = vld [vmem:[%s6300 + $0x160] sm:$0xf]
        %v6357 = vld [vmem:[%s6300 + $0x168] sm:$0xf]
        %v6358 = vld [vmem:[%s6300 + $0x16c] sm:$0xf]
        %v6359 = vld [vmem:[%s6300 + $0x174] sm:$0xf]
        %v6360 = vld [vmem:[%s6300 + $0x178] sm:$0xf]
        %v6361 = vld [vmem:[%s6300 + $0x180] sm:$0xf]
        %v6362 = vld [vmem:[%s6300 + $0x184] sm:$0xf]
        %v6363 = vld [vmem:[%s6300 + $0x18c] sm:$0xf]
        %v6364 = vld [vmem:[%s6300 + $0x190] sm:$0xf]
        %v6429 = vunpack.c.l.b16 %v6301
        %v6430 = vunpack.c.l.b16 %v6302
        %v6431 = vunpack.c.l.b16 %v6303
        %v6432 = vunpack.c.l.b16 %v6304
        %v6433 = vunpack.c.l.b16 %v6305
        %v6434 = vunpack.c.l.b16 %v6306
        %v6435 = vunpack.c.l.b16 %v6307
        %v6436 = vunpack.c.l.b16 %v6308
        %v6437 = vunpack.c.l.b16 %v6309
        %v6438 = vunpack.c.l.b16 %v6310
        %v6439 = vunpack.c.l.b16 %v6311
        %v6440 = vunpack.c.l.b16 %v6312
        %v6441 = vunpack.c.l.b16 %v6313
        %v6442 = vunpack.c.l.b16 %v6314
        %v6443 = vunpack.c.l.b16 %v6315
        %v6444 = vunpack.c.l.b16 %v6316
        %v6445 = vunpack.c.l.b16 %v6317
        %v6446 = vunpack.c.l.b16 %v6318
        %v6447 = vunpack.c.l.b16 %v6319
        %v6448 = vunpack.c.l.b16 %v6320
        %v6449 = vunpack.c.l.b16 %v6321
        %v6450 = vunpack.c.l.b16 %v6322
        %v6451 = vunpack.c.l.b16 %v6323
        %v6452 = vunpack.c.l.b16 %v6324
        %v6453 = vunpack.c.l.b16 %v6325
        %v6454 = vunpack.c.l.b16 %v6326
        %v6455 = vunpack.c.l.b16 %v6327
        %v6456 = vunpack.c.l.b16 %v6328
        %v6457 = vunpack.c.l.b16 %v6329
        %v6458 = vunpack.c.l.b16 %v6330
        %v6459 = vunpack.c.l.b16 %v6331
        %v6460 = vunpack.c.l.b16 %v6332
        %v6461 = vunpack.c.l.b16 %v6333
        %v6462 = vunpack.c.l.b16 %v6334
        %v6463 = vunpack.c.l.b16 %v6335
        %v6464 = vunpack.c.l.b16 %v6336
        %v6465 = vunpack.c.l.b16 %v6337
        %v6466 = vunpack.c.l.b16 %v6338
        %v6467 = vunpack.c.l.b16 %v6339
        %v6468 = vunpack.c.l.b16 %v6340
        %v6469 = vunpack.c.l.b16 %v6341
        %v6470 = vunpack.c.l.b16 %v6342
        %v6471 = vunpack.c.l.b16 %v6343
        %v6472 = vunpack.c.l.b16 %v6344
        %v6473 = vunpack.c.l.b16 %v6345
        %v6474 = vunpack.c.l.b16 %v6346
        %v6475 = vunpack.c.l.b16 %v6347
        %v6476 = vunpack.c.l.b16 %v6348
        %v6477 = vunpack.c.l.b16 %v6349
        %v6478 = vunpack.c.l.b16 %v6350
        %v6479 = vunpack.c.l.b16 %v6351
        %v6480 = vunpack.c.l.b16 %v6352
        %v6481 = vunpack.c.l.b16 %v6353
        %v6482 = vunpack.c.l.b16 %v6354
        %v6483 = vunpack.c.l.b16 %v6355
        %v6484 = vunpack.c.l.b16 %v6356
        %v6485 = vunpack.c.l.b16 %v6357
        %v6486 = vunpack.c.l.b16 %v6358
        %v6487 = vunpack.c.l.b16 %v6359
        %v6488 = vunpack.c.l.b16 %v6360
        %v6489 = vunpack.c.l.b16 %v6361
        %v6490 = vunpack.c.l.b16 %v6362
        %v6491 = vunpack.c.l.b16 %v6363
        %v6492 = vunpack.c.l.b16 %v6364
        %v6493 = vpack.c.b16 %v6430, %v6429
        %v6494 = vpack.c.b16 %v6432, %v6431
        %v6495 = vpack.c.b16 %v6434, %v6433
        %v6496 = vpack.c.b16 %v6436, %v6435
        %v6497 = vpack.c.b16 %v6438, %v6437
        %v6498 = vpack.c.b16 %v6440, %v6439
        %v6499 = vpack.c.b16 %v6442, %v6441
        %v6500 = vpack.c.b16 %v6444, %v6443
        %v6501 = vpack.c.b16 %v6446, %v6445
        %v6502 = vpack.c.b16 %v6448, %v6447
        %v6503 = vpack.c.b16 %v6450, %v6449
        %v6504 = vpack.c.b16 %v6452, %v6451
        %v6505 = vpack.c.b16 %v6454, %v6453
        %v6506 = vpack.c.b16 %v6456, %v6455
        %v6507 = vpack.c.b16 %v6458, %v6457
        %v6508 = vpack.c.b16 %v6460, %v6459
        %v6509 = vpack.c.b16 %v6462, %v6461
        %v6510 = vpack.c.b16 %v6464, %v6463
        %v6511 = vpack.c.b16 %v6466, %v6465
        %v6512 = vpack.c.b16 %v6468, %v6467
        %v6513 = vpack.c.b16 %v6470, %v6469
        %v6514 = vpack.c.b16 %v6472, %v6471
        %v6515 = vpack.c.b16 %v6474, %v6473
        %v6516 = vpack.c.b16 %v6476, %v6475
        %v6517 = vpack.c.b16 %v6478, %v6477
        %v6518 = vpack.c.b16 %v6480, %v6479
        %v6519 = vpack.c.b16 %v6482, %v6481
        %v6520 = vpack.c.b16 %v6484, %v6483
        %v6521 = vpack.c.b16 %v6486, %v6485
        %v6522 = vpack.c.b16 %v6488, %v6487
        %v6523 = vpack.c.b16 %v6490, %v6489
        %v6524 = vpack.c.b16 %v6492, %v6491
        %6557 = vst [vmem:[#allocation3 + $0x30] sm:$0xff] %v6493
        %6558 = vst [vmem:[#allocation3 + $0x78] sm:$0xff] %v6494
        %6559 = vst [vmem:[#allocation3 + $0xc0] sm:$0xff] %v6495
        %6560 = vst [vmem:[#allocation3 + $0x108] sm:$0xff] %v6496
        %6561 = vst [vmem:[#allocation3 + $0x150] sm:$0xff] %v6497
        %6562 = vst [vmem:[#allocation3 + $0x198] sm:$0xff] %v6498
        %6563 = vst [vmem:[#allocation3 + $0x1e0] sm:$0xff] %v6499
        %6564 = vst [vmem:[#allocation3 + $0x228] sm:$0xff] %v6500
        %6565 = vst [vmem:[#allocation3 + $0x270] sm:$0xff] %v6501
        %6566 = vst [vmem:[#allocation3 + $0x2b8] sm:$0xff] %v6502
        %6567 = vst [vmem:[#allocation3 + $0x300] sm:$0xff] %v6503
        %6568 = vst [vmem:[#allocation3 + $0x348] sm:$0xff] %v6504
        %6569 = vst [vmem:[#allocation3 + $0x390] sm:$0xff] %v6505
        %6570 = vst [vmem:[#allocation3 + $0x3d8] sm:$0xff] %v6506
        %6571 = vst [vmem:[#allocation3 + $0x420] sm:$0xff] %v6507
        %6572 = vst [vmem:[#allocation3 + $0x468] sm:$0xff] %v6508
        %6573 = vst [vmem:[#allocation3 + $0x4b0] sm:$0xff] %v6509
        %6574 = vst [vmem:[#allocation3 + $0x4f8] sm:$0xff] %v6510
        %6575 = vst [vmem:[#allocation3 + $0x540] sm:$0xff] %v6511
        %6576 = vst [vmem:[#allocation3 + $0x588] sm:$0xff] %v6512
        %6577 = vst [vmem:[#allocation3 + $0x5d0] sm:$0xff] %v6513
        %6578 = vst [vmem:[#allocation3 + $0x618] sm:$0xff] %v6514
        %6579 = vst [vmem:[#allocation3 + $0x660] sm:$0xff] %v6515
        %6580 = vst [vmem:[#allocation3 + $0x6a8] sm:$0xff] %v6516
        %6581 = vst [vmem:[#allocation3 + $0x6f0] sm:$0xff] %v6517
        %6582 = vst [vmem:[#allocation3 + $0x738] sm:$0xff] %v6518
        %6583 = vst [vmem:[#allocation3 + $0x780] sm:$0xff] %v6519
        %6584 = vst [vmem:[#allocation3 + $0x7c8] sm:$0xff] %v6520
        %6585 = vst [vmem:[#allocation3 + $0x810] sm:$0xff] %v6521
        %6586 = vst [vmem:[#allocation3 + $0x858] sm:$0xff] %v6522
        %6587 = vst [vmem:[#allocation3 + $0x8a0] sm:$0xff] %v6523
        %6588 = vst [vmem:[#allocation3 + $0x8e8] sm:$0xff] %v6524
        %v6589 = vld [vmem:[%s6300] sm:$0xf]
        %v6590 = vld [vmem:[%s6300 + $0x4] sm:$0xf]
        %v6591 = vld [vmem:[%s6300 + $0x8] sm:$0x1]
        %v6592 = vld [vmem:[%s6300 + $0xc] sm:$0xf]
        %v6593 = vld [vmem:[%s6300 + $0x10] sm:$0xf]
        %v6594 = vld [vmem:[%s6300 + $0x14] sm:$0x1]
        %v6595 = vld [vmem:[%s6300 + $0x18] sm:$0xf]
        %v6596 = vld [vmem:[%s6300 + $0x1c] sm:$0xf]
        %v6597 = vld [vmem:[%s6300 + $0x20] sm:$0x1]
        %v6598 = vld [vmem:[%s6300 + $0x24] sm:$0xf]
        %v6599 = vld [vmem:[%s6300 + $0x28] sm:$0xf]
        %v6600 = vld [vmem:[%s6300 + $0x2c] sm:$0x1]
        %v6601 = vld [vmem:[%s6300 + $0x30] sm:$0xf]
        %v6602 = vld [vmem:[%s6300 + $0x34] sm:$0xf]
        %v6603 = vld [vmem:[%s6300 + $0x38] sm:$0x1]
        %v6604 = vld [vmem:[%s6300 + $0x3c] sm:$0xf]
        %v6605 = vld [vmem:[%s6300 + $0x40] sm:$0xf]
        %v6606 = vld [vmem:[%s6300 + $0x44] sm:$0x1]
        %v6607 = vld [vmem:[%s6300 + $0x48] sm:$0xf]
        %v6608 = vld [vmem:[%s6300 + $0x4c] sm:$0xf]
        %v6609 = vld [vmem:[%s6300 + $0x50] sm:$0x1]
        %v6610 = vld [vmem:[%s6300 + $0x54] sm:$0xf]
        %v6611 = vld [vmem:[%s6300 + $0x58] sm:$0xf]
        %v6612 = vld [vmem:[%s6300 + $0x5c] sm:$0x1]
        %v6613 = vld [vmem:[%s6300 + $0x60] sm:$0xf]
        %v6614 = vld [vmem:[%s6300 + $0x64] sm:$0xf]
        %v6615 = vld [vmem:[%s6300 + $0x68] sm:$0x1]
        %v6616 = vld [vmem:[%s6300 + $0x6c] sm:$0xf]
        %v6617 = vld [vmem:[%s6300 + $0x70] sm:$0xf]
        %v6618 = vld [vmem:[%s6300 + $0x74] sm:$0x1]
        %v6619 = vld [vmem:[%s6300 + $0x78] sm:$0xf]
        %v6620 = vld [vmem:[%s6300 + $0x7c] sm:$0xf]
        %v6621 = vld [vmem:[%s6300 + $0x80] sm:$0x1]
        %v6622 = vld [vmem:[%s6300 + $0x84] sm:$0xf]
        %v6623 = vld [vmem:[%s6300 + $0x88] sm:$0xf]
        %v6624 = vld [vmem:[%s6300 + $0x8c] sm:$0x1]
        %v6625 = vld [vmem:[%s6300 + $0x90] sm:$0xf]
        %v6626 = vld [vmem:[%s6300 + $0x94] sm:$0xf]
        %v6627 = vld [vmem:[%s6300 + $0x98] sm:$0x1]
        %v6628 = vld [vmem:[%s6300 + $0x9c] sm:$0xf]
        %v6629 = vld [vmem:[%s6300 + $0xa0] sm:$0xf]
        %v6630 = vld [vmem:[%s6300 + $0xa4] sm:$0x1]
        %v6631 = vld [vmem:[%s6300 + $0xa8] sm:$0xf]
        %v6632 = vld [vmem:[%s6300 + $0xac] sm:$0xf]
        %v6633 = vld [vmem:[%s6300 + $0xb0] sm:$0x1]
        %v6634 = vld [vmem:[%s6300 + $0xb4] sm:$0xf]
        %v6635 = vld [vmem:[%s6300 + $0xb8] sm:$0xf]
        %v6636 = vld [vmem:[%s6300 + $0xbc] sm:$0x1]
        %v6637 = vld [vmem:[%s6300 + $0xd8] sm:$0xf]
        %v6638 = vld [vmem:[%s6300 + $0xdc] sm:$0xf]
        %v6639 = vld [vmem:[%s6300 + $0xe0] sm:$0x1]
        %v6640 = vld [vmem:[%s6300 + $0xe4] sm:$0xf]
        %v6641 = vld [vmem:[%s6300 + $0xe8] sm:$0xf]
        %v6642 = vld [vmem:[%s6300 + $0xec] sm:$0x1]
        %v6643 = vld [vmem:[%s6300 + $0xf0] sm:$0xf]
        %v6644 = vld [vmem:[%s6300 + $0xf4] sm:$0xf]
        %v6645 = vld [vmem:[%s6300 + $0xf8] sm:$0x1]
        %v6646 = vld [vmem:[%s6300 + $0xfc] sm:$0xf]
        %v6647 = vld [vmem:[%s6300 + $0x100] sm:$0xf]
        %v6648 = vld [vmem:[%s6300 + $0x104] sm:$0x1]
        %v6649 = vld [vmem:[%s6300 + $0x108] sm:$0xf]
        %v6650 = vld [vmem:[%s6300 + $0x10c] sm:$0xf]
        %v6651 = vld [vmem:[%s6300 + $0x110] sm:$0x1]
        %v6652 = vld [vmem:[%s6300 + $0x114] sm:$0xf]
        %v6653 = vld [vmem:[%s6300 + $0x118] sm:$0xf]
        %v6654 = vld [vmem:[%s6300 + $0x11c] sm:$0x1]
        %v6655 = vld [vmem:[%s6300 + $0x120] sm:$0xf]
        %v6656 = vld [vmem:[%s6300 + $0x124] sm:$0xf]
        %v6657 = vld [vmem:[%s6300 + $0x128] sm:$0x1]
        %v6658 = vld [vmem:[%s6300 + $0x12c] sm:$0xf]
        %v6659 = vld [vmem:[%s6300 + $0x130] sm:$0xf]
        %v6660 = vld [vmem:[%s6300 + $0x134] sm:$0x1]
        %v6661 = vld [vmem:[%s6300 + $0x138] sm:$0xf]
        %v6662 = vld [vmem:[%s6300 + $0x13c] sm:$0xf]
        %v6663 = vld [vmem:[%s6300 + $0x140] sm:$0x1]
        %v6664 = vld [vmem:[%s6300 + $0x144] sm:$0xf]
        %v6665 = vld [vmem:[%s6300 + $0x148] sm:$0xf]
        %v6666 = vld [vmem:[%s6300 + $0x14c] sm:$0x1]
        %v6667 = vld [vmem:[%s6300 + $0x150] sm:$0xf]
        %v6668 = vld [vmem:[%s6300 + $0x154] sm:$0xf]
        %v6669 = vld [vmem:[%s6300 + $0x158] sm:$0x1]
        %v6670 = vld [vmem:[%s6300 + $0x15c] sm:$0xf]
        %v6671 = vld [vmem:[%s6300 + $0x160] sm:$0xf]
        %v6672 = vld [vmem:[%s6300 + $0x164] sm:$0x1]
        %v6673 = vld [vmem:[%s6300 + $0x168] sm:$0xf]
        %v6674 = vld [vmem:[%s6300 + $0x16c] sm:$0xf]
        %v6675 = vld [vmem:[%s6300 + $0x170] sm:$0x1]
        %v6676 = vld [vmem:[%s6300 + $0x174] sm:$0xf]
        %v6677 = vld [vmem:[%s6300 + $0x178] sm:$0xf]
        %v6678 = vld [vmem:[%s6300 + $0x17c] sm:$0x1]
        %v6679 = vld [vmem:[%s6300 + $0x180] sm:$0xf]
        %v6680 = vld [vmem:[%s6300 + $0x184] sm:$0xf]
        %v6681 = vld [vmem:[%s6300 + $0x188] sm:$0x1]
        %v6682 = vld [vmem:[%s6300 + $0x18c] sm:$0xf]
        %v6683 = vld [vmem:[%s6300 + $0x190] sm:$0xf]
        %v6684 = vld [vmem:[%s6300 + $0x194] sm:$0x1]
        %v6686 = vshrl.u32 %v6589, 16
        %v6688 = vrot.slane %v6686, 4
        %v6689 = vshll.u32 %v6589, 16
        %v6691 = vrot.slane %v6689, 5
        %v6692 = vor.u32 %v6688, %v6691
        %v6693 = vrot.slane %v6692, 4
        %v6695 = vshll.u32 %v6590, 16
        %v6697 = vrot.slane %v6695, 5
        %v6698 = vsel %vm2904, %v6693, %v6697
        %v6699 = vshrl.u32 %v6590, 16
        %v6701 = vrot.slane %v6699, 4
        %v6702 = vor.u32 %v6701, %v6697
        %v6703 = vrot.slane %v6702, 4
        %v6705 = vshll.u32 %v6591, 16
        %v6707 = vrot.slane %v6705, 5
        %v6708 = vsel %vm2904, %v6703, %v6707
        %v6710 = vshrl.u32 %v6592, 16
        %v6712 = vrot.slane %v6710, 4
        %v6713 = vshll.u32 %v6592, 16
        %v6715 = vrot.slane %v6713, 5
        %v6716 = vor.u32 %v6712, %v6715
        %v6717 = vrot.slane %v6716, 4
        %v6719 = vshll.u32 %v6593, 16
        %v6721 = vrot.slane %v6719, 5
        %v6722 = vsel %vm2904, %v6717, %v6721
        %v6723 = vshrl.u32 %v6593, 16
        %v6725 = vrot.slane %v6723, 4
        %v6726 = vor.u32 %v6725, %v6721
        %v6727 = vrot.slane %v6726, 4
        %v6729 = vshll.u32 %v6594, 16
        %v6731 = vrot.slane %v6729, 5
        %v6732 = vsel %vm2904, %v6727, %v6731
        %v6734 = vshrl.u32 %v6595, 16
        %v6736 = vrot.slane %v6734, 4
        %v6737 = vshll.u32 %v6595, 16
        %v6739 = vrot.slane %v6737, 5
        %v6740 = vor.u32 %v6736, %v6739
        %v6741 = vrot.slane %v6740, 4
        %v6743 = vshll.u32 %v6596, 16
        %v6745 = vrot.slane %v6743, 5
        %v6746 = vsel %vm2904, %v6741, %v6745
        %v6747 = vshrl.u32 %v6596, 16
        %v6749 = vrot.slane %v6747, 4
        %v6750 = vor.u32 %v6749, %v6745
        %v6751 = vrot.slane %v6750, 4
        %v6753 = vshll.u32 %v6597, 16
        %v6755 = vrot.slane %v6753, 5
        %v6756 = vsel %vm2904, %v6751, %v6755
        %v6758 = vshrl.u32 %v6598, 16
        %v6760 = vrot.slane %v6758, 4
        %v6761 = vshll.u32 %v6598, 16
        %v6763 = vrot.slane %v6761, 5
        %v6764 = vor.u32 %v6760, %v6763
        %v6765 = vrot.slane %v6764, 4
        %v6767 = vshll.u32 %v6599, 16
        %v6769 = vrot.slane %v6767, 5
        %v6770 = vsel %vm2904, %v6765, %v6769
        %v6771 = vshrl.u32 %v6599, 16
        %v6773 = vrot.slane %v6771, 4
        %v6774 = vor.u32 %v6773, %v6769
        %v6775 = vrot.slane %v6774, 4
        %v6777 = vshll.u32 %v6600, 16
        %v6779 = vrot.slane %v6777, 5
        %v6780 = vsel %vm2904, %v6775, %v6779
        %v6782 = vshrl.u32 %v6601, 16
        %v6784 = vrot.slane %v6782, 4
        %v6785 = vshll.u32 %v6601, 16
        %v6787 = vrot.slane %v6785, 5
        %v6788 = vor.u32 %v6784, %v6787
        %v6789 = vrot.slane %v6788, 4
        %v6791 = vshll.u32 %v6602, 16
        %v6793 = vrot.slane %v6791, 5
        %v6794 = vsel %vm2904, %v6789, %v6793
        %v6795 = vshrl.u32 %v6602, 16
        %v6797 = vrot.slane %v6795, 4
        %v6798 = vor.u32 %v6797, %v6793
        %v6799 = vrot.slane %v6798, 4
        %v6801 = vshll.u32 %v6603, 16
        %v6803 = vrot.slane %v6801, 5
        %v6804 = vsel %vm2904, %v6799, %v6803
        %v6806 = vshrl.u32 %v6604, 16
        %v6808 = vrot.slane %v6806, 4
        %v6809 = vshll.u32 %v6604, 16
        %v6811 = vrot.slane %v6809, 5
        %v6812 = vor.u32 %v6808, %v6811
        %v6813 = vrot.slane %v6812, 4
        %v6815 = vshll.u32 %v6605, 16
        %v6817 = vrot.slane %v6815, 5
        %v6818 = vsel %vm2904, %v6813, %v6817
        %v6819 = vshrl.u32 %v6605, 16
        %v6821 = vrot.slane %v6819, 4
        %v6822 = vor.u32 %v6821, %v6817
        %v6823 = vrot.slane %v6822, 4
        %v6825 = vshll.u32 %v6606, 16
        %v6827 = vrot.slane %v6825, 5
        %v6828 = vsel %vm2904, %v6823, %v6827
        %v6830 = vshrl.u32 %v6607, 16
        %v6832 = vrot.slane %v6830, 4
        %v6833 = vshll.u32 %v6607, 16
        %v6835 = vrot.slane %v6833, 5
        %v6836 = vor.u32 %v6832, %v6835
        %v6837 = vrot.slane %v6836, 4
        %v6839 = vshll.u32 %v6608, 16
        %v6841 = vrot.slane %v6839, 5
        %v6842 = vsel %vm2904, %v6837, %v6841
        %v6843 = vshrl.u32 %v6608, 16
        %v6845 = vrot.slane %v6843, 4
        %v6846 = vor.u32 %v6845, %v6841
        %v6847 = vrot.slane %v6846, 4
        %v6849 = vshll.u32 %v6609, 16
        %v6851 = vrot.slane %v6849, 5
        %v6852 = vsel %vm2904, %v6847, %v6851
        %v6854 = vshrl.u32 %v6610, 16
        %v6856 = vrot.slane %v6854, 4
        %v6857 = vshll.u32 %v6610, 16
        %v6859 = vrot.slane %v6857, 5
        %v6860 = vor.u32 %v6856, %v6859
        %v6861 = vrot.slane %v6860, 4
        %v6863 = vshll.u32 %v6611, 16
        %v6865 = vrot.slane %v6863, 5
        %v6866 = vsel %vm2904, %v6861, %v6865
        %v6867 = vshrl.u32 %v6611, 16
        %v6869 = vrot.slane %v6867, 4
        %v6870 = vor.u32 %v6869, %v6865
        %v6871 = vrot.slane %v6870, 4
        %v6873 = vshll.u32 %v6612, 16
        %v6875 = vrot.slane %v6873, 5
        %v6876 = vsel %vm2904, %v6871, %v6875
        %v6878 = vshrl.u32 %v6613, 16
        %v6880 = vrot.slane %v6878, 4
        %v6881 = vshll.u32 %v6613, 16
        %v6883 = vrot.slane %v6881, 5
        %v6884 = vor.u32 %v6880, %v6883
        %v6885 = vrot.slane %v6884, 4
        %v6887 = vshll.u32 %v6614, 16
        %v6889 = vrot.slane %v6887, 5
        %v6890 = vsel %vm2904, %v6885, %v6889
        %v6891 = vshrl.u32 %v6614, 16
        %v6893 = vrot.slane %v6891, 4
        %v6894 = vor.u32 %v6893, %v6889
        %v6895 = vrot.slane %v6894, 4
        %v6897 = vshll.u32 %v6615, 16
        %v6899 = vrot.slane %v6897, 5
        %v6900 = vsel %vm2904, %v6895, %v6899
        %v6902 = vshrl.u32 %v6616, 16
        %v6904 = vrot.slane %v6902, 4
        %v6905 = vshll.u32 %v6616, 16
        %v6907 = vrot.slane %v6905, 5
        %v6908 = vor.u32 %v6904, %v6907
        %v6909 = vrot.slane %v6908, 4
        %v6911 = vshll.u32 %v6617, 16
        %v6913 = vrot.slane %v6911, 5
        %v6914 = vsel %vm2904, %v6909, %v6913
        %v6915 = vshrl.u32 %v6617, 16
        %v6917 = vrot.slane %v6915, 4
        %v6918 = vor.u32 %v6917, %v6913
        %v6919 = vrot.slane %v6918, 4
        %v6921 = vshll.u32 %v6618, 16
        %v6923 = vrot.slane %v6921, 5
        %v6924 = vsel %vm2904, %v6919, %v6923
        %v6926 = vshrl.u32 %v6619, 16
        %v6928 = vrot.slane %v6926, 4
        %v6929 = vshll.u32 %v6619, 16
        %v6931 = vrot.slane %v6929, 5
        %v6932 = vor.u32 %v6928, %v6931
        %v6933 = vrot.slane %v6932, 4
        %v6935 = vshll.u32 %v6620, 16
        %v6937 = vrot.slane %v6935, 5
        %v6938 = vsel %vm2904, %v6933, %v6937
        %v6939 = vshrl.u32 %v6620, 16
        %v6941 = vrot.slane %v6939, 4
        %v6942 = vor.u32 %v6941, %v6937
        %v6943 = vrot.slane %v6942, 4
        %v6945 = vshll.u32 %v6621, 16
        %v6947 = vrot.slane %v6945, 5
        %v6948 = vsel %vm2904, %v6943, %v6947
        %v6950 = vshrl.u32 %v6622, 16
        %v6952 = vrot.slane %v6950, 4
        %v6953 = vshll.u32 %v6622, 16
        %v6955 = vrot.slane %v6953, 5
        %v6956 = vor.u32 %v6952, %v6955
        %v6957 = vrot.slane %v6956, 4
        %v6959 = vshll.u32 %v6623, 16
        %v6961 = vrot.slane %v6959, 5
        %v6962 = vsel %vm2904, %v6957, %v6961
        %v6963 = vshrl.u32 %v6623, 16
        %v6965 = vrot.slane %v6963, 4
        %v6966 = vor.u32 %v6965, %v6961
        %v6967 = vrot.slane %v6966, 4
        %v6969 = vshll.u32 %v6624, 16
        %v6971 = vrot.slane %v6969, 5
        %v6972 = vsel %vm2904, %v6967, %v6971
        %v6974 = vshrl.u32 %v6625, 16
        %v6976 = vrot.slane %v6974, 4
        %v6977 = vshll.u32 %v6625, 16
        %v6979 = vrot.slane %v6977, 5
        %v6980 = vor.u32 %v6976, %v6979
        %v6981 = vrot.slane %v6980, 4
        %v6983 = vshll.u32 %v6626, 16
        %v6985 = vrot.slane %v6983, 5
        %v6986 = vsel %vm2904, %v6981, %v6985
        %v6987 = vshrl.u32 %v6626, 16
        %v6989 = vrot.slane %v6987, 4
        %v6990 = vor.u32 %v6989, %v6985
        %v6991 = vrot.slane %v6990, 4
        %v6993 = vshll.u32 %v6627, 16
        %v6995 = vrot.slane %v6993, 5
        %v6996 = vsel %vm2904, %v6991, %v6995
        %v6998 = vshrl.u32 %v6628, 16
        %v7000 = vrot.slane %v6998, 4
        %v7001 = vshll.u32 %v6628, 16
        %v7003 = vrot.slane %v7001, 5
        %v7004 = vor.u32 %v7000, %v7003
        %v7005 = vrot.slane %v7004, 4
        %v7007 = vshll.u32 %v6629, 16
        %v7009 = vrot.slane %v7007, 5
        %v7010 = vsel %vm2904, %v7005, %v7009
        %v7011 = vshrl.u32 %v6629, 16
        %v7013 = vrot.slane %v7011, 4
        %v7014 = vor.u32 %v7013, %v7009
        %v7015 = vrot.slane %v7014, 4
        %v7017 = vshll.u32 %v6630, 16
        %v7019 = vrot.slane %v7017, 5
        %v7020 = vsel %vm2904, %v7015, %v7019
        %v7022 = vshrl.u32 %v6631, 16
        %v7024 = vrot.slane %v7022, 4
        %v7025 = vshll.u32 %v6631, 16
        %v7027 = vrot.slane %v7025, 5
        %v7028 = vor.u32 %v7024, %v7027
        %v7029 = vrot.slane %v7028, 4
        %v7031 = vshll.u32 %v6632, 16
        %v7033 = vrot.slane %v7031, 5
        %v7034 = vsel %vm2904, %v7029, %v7033
        %v7035 = vshrl.u32 %v6632, 16
        %v7037 = vrot.slane %v7035, 4
        %v7038 = vor.u32 %v7037, %v7033
        %v7039 = vrot.slane %v7038, 4
        %v7041 = vshll.u32 %v6633, 16
        %v7043 = vrot.slane %v7041, 5
        %v7044 = vsel %vm2904, %v7039, %v7043
        %v7046 = vshrl.u32 %v6634, 16
        %v7048 = vrot.slane %v7046, 4
        %v7049 = vshll.u32 %v6634, 16
        %v7051 = vrot.slane %v7049, 5
        %v7052 = vor.u32 %v7048, %v7051
        %v7053 = vrot.slane %v7052, 4
        %v7055 = vshll.u32 %v6635, 16
        %v7057 = vrot.slane %v7055, 5
        %v7058 = vsel %vm2904, %v7053, %v7057
        %v7059 = vshrl.u32 %v6635, 16
        %v7061 = vrot.slane %v7059, 4
        %v7062 = vor.u32 %v7061, %v7057
        %v7063 = vrot.slane %v7062, 4
        %v7065 = vshll.u32 %v6636, 16
        %v7067 = vrot.slane %v7065, 5
        %v7068 = vsel %vm2904, %v7063, %v7067
        %v7070 = vshrl.u32 %v6637, 16
        %v7072 = vrot.slane %v7070, 4
        %v7073 = vshll.u32 %v6637, 16
        %v7075 = vrot.slane %v7073, 5
        %v7076 = vor.u32 %v7072, %v7075
        %v7077 = vrot.slane %v7076, 4
        %v7079 = vshll.u32 %v6638, 16
        %v7081 = vrot.slane %v7079, 5
        %v7082 = vsel %vm2904, %v7077, %v7081
        %v7083 = vshrl.u32 %v6638, 16
        %v7085 = vrot.slane %v7083, 4
        %v7086 = vor.u32 %v7085, %v7081
        %v7087 = vrot.slane %v7086, 4
        %v7089 = vshll.u32 %v6639, 16
        %v7091 = vrot.slane %v7089, 5
        %v7092 = vsel %vm2904, %v7087, %v7091
        %v7094 = vshrl.u32 %v6640, 16
        %v7096 = vrot.slane %v7094, 4
        %v7097 = vshll.u32 %v6640, 16
        %v7099 = vrot.slane %v7097, 5
        %v7100 = vor.u32 %v7096, %v7099
        %v7101 = vrot.slane %v7100, 4
        %v7103 = vshll.u32 %v6641, 16
        %v7105 = vrot.slane %v7103, 5
        %v7106 = vsel %vm2904, %v7101, %v7105
        %v7107 = vshrl.u32 %v6641, 16
        %v7109 = vrot.slane %v7107, 4
        %v7110 = vor.u32 %v7109, %v7105
        %v7111 = vrot.slane %v7110, 4
        %v7113 = vshll.u32 %v6642, 16
        %v7115 = vrot.slane %v7113, 5
        %v7116 = vsel %vm2904, %v7111, %v7115
        %v7118 = vshrl.u32 %v6643, 16
        %v7120 = vrot.slane %v7118, 4
        %v7121 = vshll.u32 %v6643, 16
        %v7123 = vrot.slane %v7121, 5
        %v7124 = vor.u32 %v7120, %v7123
        %v7125 = vrot.slane %v7124, 4
        %v7127 = vshll.u32 %v6644, 16
        %v7129 = vrot.slane %v7127, 5
        %v7130 = vsel %vm2904, %v7125, %v7129
        %v7131 = vshrl.u32 %v6644, 16
        %v7133 = vrot.slane %v7131, 4
        %v7134 = vor.u32 %v7133, %v7129
        %v7135 = vrot.slane %v7134, 4
        %v7137 = vshll.u32 %v6645, 16
        %v7139 = vrot.slane %v7137, 5
        %v7140 = vsel %vm2904, %v7135, %v7139
        %v7142 = vshrl.u32 %v6646, 16
        %v7144 = vrot.slane %v7142, 4
        %v7145 = vshll.u32 %v6646, 16
        %v7147 = vrot.slane %v7145, 5
        %v7148 = vor.u32 %v7144, %v7147
        %v7149 = vrot.slane %v7148, 4
        %v7151 = vshll.u32 %v6647, 16
        %v7153 = vrot.slane %v7151, 5
        %v7154 = vsel %vm2904, %v7149, %v7153
        %v7155 = vshrl.u32 %v6647, 16
        %v7157 = vrot.slane %v7155, 4
        %v7158 = vor.u32 %v7157, %v7153
        %v7159 = vrot.slane %v7158, 4
        %v7161 = vshll.u32 %v6648, 16
        %v7163 = vrot.slane %v7161, 5
        %v7164 = vsel %vm2904, %v7159, %v7163
        %v7166 = vshrl.u32 %v6649, 16
        %v7168 = vrot.slane %v7166, 4
        %v7169 = vshll.u32 %v6649, 16
        %v7171 = vrot.slane %v7169, 5
        %v7172 = vor.u32 %v7168, %v7171
        %v7173 = vrot.slane %v7172, 4
        %v7175 = vshll.u32 %v6650, 16
        %v7177 = vrot.slane %v7175, 5
        %v7178 = vsel %vm2904, %v7173, %v7177
        %v7179 = vshrl.u32 %v6650, 16
        %v7181 = vrot.slane %v7179, 4
        %v7182 = vor.u32 %v7181, %v7177
        %v7183 = vrot.slane %v7182, 4
        %v7185 = vshll.u32 %v6651, 16
        %v7187 = vrot.slane %v7185, 5
        %v7188 = vsel %vm2904, %v7183, %v7187
        %v7190 = vshrl.u32 %v6652, 16
        %v7192 = vrot.slane %v7190, 4
        %v7193 = vshll.u32 %v6652, 16
        %v7195 = vrot.slane %v7193, 5
        %v7196 = vor.u32 %v7192, %v7195
        %v7197 = vrot.slane %v7196, 4
        %v7199 = vshll.u32 %v6653, 16
        %v7201 = vrot.slane %v7199, 5
        %v7202 = vsel %vm2904, %v7197, %v7201
        %v7203 = vshrl.u32 %v6653, 16
        %v7205 = vrot.slane %v7203, 4
        %v7206 = vor.u32 %v7205, %v7201
        %v7207 = vrot.slane %v7206, 4
        %v7209 = vshll.u32 %v6654, 16
        %v7211 = vrot.slane %v7209, 5
        %v7212 = vsel %vm2904, %v7207, %v7211
        %v7214 = vshrl.u32 %v6655, 16
        %v7216 = vrot.slane %v7214, 4
        %v7217 = vshll.u32 %v6655, 16
        %v7219 = vrot.slane %v7217, 5
        %v7220 = vor.u32 %v7216, %v7219
        %v7221 = vrot.slane %v7220, 4
        %v7223 = vshll.u32 %v6656, 16
        %v7225 = vrot.slane %v7223, 5
        %v7226 = vsel %vm2904, %v7221, %v7225
        %v7227 = vshrl.u32 %v6656, 16
        %v7229 = vrot.slane %v7227, 4
        %v7230 = vor.u32 %v7229, %v7225
        %v7231 = vrot.slane %v7230, 4
        %v7233 = vshll.u32 %v6657, 16
        %v7235 = vrot.slane %v7233, 5
        %v7236 = vsel %vm2904, %v7231, %v7235
        %v7238 = vshrl.u32 %v6658, 16
        %v7240 = vrot.slane %v7238, 4
        %v7241 = vshll.u32 %v6658, 16
        %v7243 = vrot.slane %v7241, 5
        %v7244 = vor.u32 %v7240, %v7243
        %v7245 = vrot.slane %v7244, 4
        %v7247 = vshll.u32 %v6659, 16
        %v7249 = vrot.slane %v7247, 5
        %v7250 = vsel %vm2904, %v7245, %v7249
        %v7251 = vshrl.u32 %v6659, 16
        %v7253 = vrot.slane %v7251, 4
        %v7254 = vor.u32 %v7253, %v7249
        %v7255 = vrot.slane %v7254, 4
        %v7257 = vshll.u32 %v6660, 16
        %v7259 = vrot.slane %v7257, 5
        %v7260 = vsel %vm2904, %v7255, %v7259
        %v7262 = vshrl.u32 %v6661, 16
        %v7264 = vrot.slane %v7262, 4
        %v7265 = vshll.u32 %v6661, 16
        %v7267 = vrot.slane %v7265, 5
        %v7268 = vor.u32 %v7264, %v7267
        %v7269 = vrot.slane %v7268, 4
        %v7271 = vshll.u32 %v6662, 16
        %v7273 = vrot.slane %v7271, 5
        %v7274 = vsel %vm2904, %v7269, %v7273
        %v7275 = vshrl.u32 %v6662, 16
        %v7277 = vrot.slane %v7275, 4
        %v7278 = vor.u32 %v7277, %v7273
        %v7279 = vrot.slane %v7278, 4
        %v7281 = vshll.u32 %v6663, 16
        %v7283 = vrot.slane %v7281, 5
        %v7284 = vsel %vm2904, %v7279, %v7283
        %v7286 = vshrl.u32 %v6664, 16
        %v7288 = vrot.slane %v7286, 4
        %v7289 = vshll.u32 %v6664, 16
        %v7291 = vrot.slane %v7289, 5
        %v7292 = vor.u32 %v7288, %v7291
        %v7293 = vrot.slane %v7292, 4
        %v7295 = vshll.u32 %v6665, 16
        %v7297 = vrot.slane %v7295, 5
        %v7298 = vsel %vm2904, %v7293, %v7297
        %v7299 = vshrl.u32 %v6665, 16
        %v7301 = vrot.slane %v7299, 4
        %v7302 = vor.u32 %v7301, %v7297
        %v7303 = vrot.slane %v7302, 4
        %v7305 = vshll.u32 %v6666, 16
        %v7307 = vrot.slane %v7305, 5
        %v7308 = vsel %vm2904, %v7303, %v7307
        %v7310 = vshrl.u32 %v6667, 16
        %v7312 = vrot.slane %v7310, 4
        %v7313 = vshll.u32 %v6667, 16
        %v7315 = vrot.slane %v7313, 5
        %v7316 = vor.u32 %v7312, %v7315
        %v7317 = vrot.slane %v7316, 4
        %v7319 = vshll.u32 %v6668, 16
        %v7321 = vrot.slane %v7319, 5
        %v7322 = vsel %vm2904, %v7317, %v7321
        %v7323 = vshrl.u32 %v6668, 16
        %v7325 = vrot.slane %v7323, 4
        %v7326 = vor.u32 %v7325, %v7321
        %v7327 = vrot.slane %v7326, 4
        %v7329 = vshll.u32 %v6669, 16
        %v7331 = vrot.slane %v7329, 5
        %v7332 = vsel %vm2904, %v7327, %v7331
        %v7334 = vshrl.u32 %v6670, 16
        %v7336 = vrot.slane %v7334, 4
        %v7337 = vshll.u32 %v6670, 16
        %v7339 = vrot.slane %v7337, 5
        %v7340 = vor.u32 %v7336, %v7339
        %v7341 = vrot.slane %v7340, 4
        %v7343 = vshll.u32 %v6671, 16
        %v7345 = vrot.slane %v7343, 5
        %v7346 = vsel %vm2904, %v7341, %v7345
        %v7347 = vshrl.u32 %v6671, 16
        %v7349 = vrot.slane %v7347, 4
        %v7350 = vor.u32 %v7349, %v7345
        %v7351 = vrot.slane %v7350, 4
        %v7353 = vshll.u32 %v6672, 16
        %v7355 = vrot.slane %v7353, 5
        %v7356 = vsel %vm2904, %v7351, %v7355
        %v7358 = vshrl.u32 %v6673, 16
        %v7360 = vrot.slane %v7358, 4
        %v7361 = vshll.u32 %v6673, 16
        %v7363 = vrot.slane %v7361, 5
        %v7364 = vor.u32 %v7360, %v7363
        %v7365 = vrot.slane %v7364, 4
        %v7367 = vshll.u32 %v6674, 16
        %v7369 = vrot.slane %v7367, 5
        %v7370 = vsel %vm2904, %v7365, %v7369
        %v7371 = vshrl.u32 %v6674, 16
        %v7373 = vrot.slane %v7371, 4
        %v7374 = vor.u32 %v7373, %v7369
        %v7375 = vrot.slane %v7374, 4
        %v7377 = vshll.u32 %v6675, 16
        %v7379 = vrot.slane %v7377, 5
        %v7380 = vsel %vm2904, %v7375, %v7379
        %v7382 = vshrl.u32 %v6676, 16
        %v7384 = vrot.slane %v7382, 4
        %v7385 = vshll.u32 %v6676, 16
        %v7387 = vrot.slane %v7385, 5
        %v7388 = vor.u32 %v7384, %v7387
        %v7389 = vrot.slane %v7388, 4
        %v7391 = vshll.u32 %v6677, 16
        %v7393 = vrot.slane %v7391, 5
        %v7394 = vsel %vm2904, %v7389, %v7393
        %v7395 = vshrl.u32 %v6677, 16
        %v7397 = vrot.slane %v7395, 4
        %v7398 = vor.u32 %v7397, %v7393
        %v7399 = vrot.slane %v7398, 4
        %v7401 = vshll.u32 %v6678, 16
        %v7403 = vrot.slane %v7401, 5
        %v7404 = vsel %vm2904, %v7399, %v7403
        %v7406 = vshrl.u32 %v6679, 16
        %v7408 = vrot.slane %v7406, 4
        %v7409 = vshll.u32 %v6679, 16
        %v7411 = vrot.slane %v7409, 5
        %v7412 = vor.u32 %v7408, %v7411
        %v7413 = vrot.slane %v7412, 4
        %v7415 = vshll.u32 %v6680, 16
        %v7417 = vrot.slane %v7415, 5
        %v7418 = vsel %vm2904, %v7413, %v7417
        %v7419 = vshrl.u32 %v6680, 16
        %v7421 = vrot.slane %v7419, 4
        %v7422 = vor.u32 %v7421, %v7417
        %v7423 = vrot.slane %v7422, 4
        %v7425 = vshll.u32 %v6681, 16
        %v7427 = vrot.slane %v7425, 5
        %v7428 = vsel %vm2904, %v7423, %v7427
        %v7430 = vshrl.u32 %v6682, 16
        %v7432 = vrot.slane %v7430, 4
        %v7433 = vshll.u32 %v6682, 16
        %v7435 = vrot.slane %v7433, 5
        %v7436 = vor.u32 %v7432, %v7435
        %v7437 = vrot.slane %v7436, 4
        %v7439 = vshll.u32 %v6683, 16
        %v7441 = vrot.slane %v7439, 5
        %v7442 = vsel %vm2904, %v7437, %v7441
        %v7443 = vshrl.u32 %v6683, 16
        %v7445 = vrot.slane %v7443, 4
        %v7446 = vor.u32 %v7445, %v7441
        %v7447 = vrot.slane %v7446, 4
        %v7449 = vshll.u32 %v6684, 16
        %v7451 = vrot.slane %v7449, 5
        %v7452 = vsel %vm2904, %v7447, %v7451
        %v7453 = vunpack.c.l.b16 %v6698
        %v7454 = vunpack.c.l.b16 %v6708
        %v7455 = vunpack.c.l.b16 %v6722
        %v7456 = vunpack.c.l.b16 %v6732
        %v7457 = vunpack.c.l.b16 %v6746
        %v7458 = vunpack.c.l.b16 %v6756
        %v7459 = vunpack.c.l.b16 %v6770
        %v7460 = vunpack.c.l.b16 %v6780
        %v7461 = vunpack.c.l.b16 %v6794
        %v7462 = vunpack.c.l.b16 %v6804
        %v7463 = vunpack.c.l.b16 %v6818
        %v7464 = vunpack.c.l.b16 %v6828
        %v7465 = vunpack.c.l.b16 %v6842
        %v7466 = vunpack.c.l.b16 %v6852
        %v7467 = vunpack.c.l.b16 %v6866
        %v7468 = vunpack.c.l.b16 %v6876
        %v7469 = vunpack.c.l.b16 %v6890
        %v7470 = vunpack.c.l.b16 %v6900
        %v7471 = vunpack.c.l.b16 %v6914
        %v7472 = vunpack.c.l.b16 %v6924
        %v7473 = vunpack.c.l.b16 %v6938
        %v7474 = vunpack.c.l.b16 %v6948
        %v7475 = vunpack.c.l.b16 %v6962
        %v7476 = vunpack.c.l.b16 %v6972
        %v7477 = vunpack.c.l.b16 %v6986
        %v7478 = vunpack.c.l.b16 %v6996
        %v7479 = vunpack.c.l.b16 %v7010
        %v7480 = vunpack.c.l.b16 %v7020
        %v7481 = vunpack.c.l.b16 %v7034
        %v7482 = vunpack.c.l.b16 %v7044
        %v7483 = vunpack.c.l.b16 %v7058
        %v7484 = vunpack.c.l.b16 %v7068
        %v7485 = vunpack.c.l.b16 %v7082
        %v7486 = vunpack.c.l.b16 %v7092
        %v7487 = vunpack.c.l.b16 %v7106
        %v7488 = vunpack.c.l.b16 %v7116
        %v7489 = vunpack.c.l.b16 %v7130
        %v7490 = vunpack.c.l.b16 %v7140
        %v7491 = vunpack.c.l.b16 %v7154
        %v7492 = vunpack.c.l.b16 %v7164
        %v7493 = vunpack.c.l.b16 %v7178
        %v7494 = vunpack.c.l.b16 %v7188
        %v7495 = vunpack.c.l.b16 %v7202
        %v7496 = vunpack.c.l.b16 %v7212
        %v7497 = vunpack.c.l.b16 %v7226
        %v7498 = vunpack.c.l.b16 %v7236
        %v7499 = vunpack.c.l.b16 %v7250
        %v7500 = vunpack.c.l.b16 %v7260
        %v7501 = vunpack.c.l.b16 %v7274
        %v7502 = vunpack.c.l.b16 %v7284
        %v7503 = vunpack.c.l.b16 %v7298
        %v7504 = vunpack.c.l.b16 %v7308
        %v7505 = vunpack.c.l.b16 %v7322
        %v7506 = vunpack.c.l.b16 %v7332
        %v7507 = vunpack.c.l.b16 %v7346
        %v7508 = vunpack.c.l.b16 %v7356
        %v7509 = vunpack.c.l.b16 %v7370
        %v7510 = vunpack.c.l.b16 %v7380
        %v7511 = vunpack.c.l.b16 %v7394
        %v7512 = vunpack.c.l.b16 %v7404
        %v7513 = vunpack.c.l.b16 %v7418
        %v7514 = vunpack.c.l.b16 %v7428
        %v7515 = vunpack.c.l.b16 %v7442
        %v7516 = vunpack.c.l.b16 %v7452
        %v7517 = vpack.c.b16 %v7454, %v7453
        %v7518 = vpack.c.b16 %v7456, %v7455
        %v7519 = vpack.c.b16 %v7458, %v7457
        %v7520 = vpack.c.b16 %v7460, %v7459
        %v7521 = vpack.c.b16 %v7462, %v7461
        %v7522 = vpack.c.b16 %v7464, %v7463
        %v7523 = vpack.c.b16 %v7466, %v7465
        %v7524 = vpack.c.b16 %v7468, %v7467
        %v7525 = vpack.c.b16 %v7470, %v7469
        %v7526 = vpack.c.b16 %v7472, %v7471
        %v7527 = vpack.c.b16 %v7474, %v7473
        %v7528 = vpack.c.b16 %v7476, %v7475
        %v7529 = vpack.c.b16 %v7478, %v7477
        %v7530 = vpack.c.b16 %v7480, %v7479
        %v7531 = vpack.c.b16 %v7482, %v7481
        %v7532 = vpack.c.b16 %v7484, %v7483
        %v7533 = vpack.c.b16 %v7486, %v7485
        %v7534 = vpack.c.b16 %v7488, %v7487
        %v7535 = vpack.c.b16 %v7490, %v7489
        %v7536 = vpack.c.b16 %v7492, %v7491
        %v7537 = vpack.c.b16 %v7494, %v7493
        %v7538 = vpack.c.b16 %v7496, %v7495
        %v7539 = vpack.c.b16 %v7498, %v7497
        %v7540 = vpack.c.b16 %v7500, %v7499
        %v7541 = vpack.c.b16 %v7502, %v7501
        %v7542 = vpack.c.b16 %v7504, %v7503
        %v7543 = vpack.c.b16 %v7506, %v7505
        %v7544 = vpack.c.b16 %v7508, %v7507
        %v7545 = vpack.c.b16 %v7510, %v7509
        %v7546 = vpack.c.b16 %v7512, %v7511
        %v7547 = vpack.c.b16 %v7514, %v7513
        %v7548 = vpack.c.b16 %v7516, %v7515
        %7581 = vst [vmem:[#allocation3 + $0x38] sm:$0xff] %v7517
        %7582 = vst [vmem:[#allocation3 + $0x80] sm:$0xff] %v7518
        %7583 = vst [vmem:[#allocation3 + $0xc8] sm:$0xff] %v7519
        %7584 = vst [vmem:[#allocation3 + $0x110] sm:$0xff] %v7520
        %7585 = vst [vmem:[#allocation3 + $0x158] sm:$0xff] %v7521
        %7586 = vst [vmem:[#allocation3 + $0x1a0] sm:$0xff] %v7522
        %7587 = vst [vmem:[#allocation3 + $0x1e8] sm:$0xff] %v7523
        %7588 = vst [vmem:[#allocation3 + $0x230] sm:$0xff] %v7524
        %7589 = vst [vmem:[#allocation3 + $0x278] sm:$0xff] %v7525
        %7590 = vst [vmem:[#allocation3 + $0x2c0] sm:$0xff] %v7526
        %7591 = vst [vmem:[#allocation3 + $0x308] sm:$0xff] %v7527
        %7592 = vst [vmem:[#allocation3 + $0x350] sm:$0xff] %v7528
        %7593 = vst [vmem:[#allocation3 + $0x398] sm:$0xff] %v7529
        %7594 = vst [vmem:[#allocation3 + $0x3e0] sm:$0xff] %v7530
        %7595 = vst [vmem:[#allocation3 + $0x428] sm:$0xff] %v7531
        %7596 = vst [vmem:[#allocation3 + $0x470] sm:$0xff] %v7532
        %7597 = vst [vmem:[#allocation3 + $0x4b8] sm:$0xff] %v7533
        %7598 = vst [vmem:[#allocation3 + $0x500] sm:$0xff] %v7534
        %7599 = vst [vmem:[#allocation3 + $0x548] sm:$0xff] %v7535
        %7600 = vst [vmem:[#allocation3 + $0x590] sm:$0xff] %v7536
        %7601 = vst [vmem:[#allocation3 + $0x5d8] sm:$0xff] %v7537
        %7602 = vst [vmem:[#allocation3 + $0x620] sm:$0xff] %v7538
        %7603 = vst [vmem:[#allocation3 + $0x668] sm:$0xff] %v7539
        %7604 = vst [vmem:[#allocation3 + $0x6b0] sm:$0xff] %v7540
        %7605 = vst [vmem:[#allocation3 + $0x6f8] sm:$0xff] %v7541
        %7606 = vst [vmem:[#allocation3 + $0x740] sm:$0xff] %v7542
        %7607 = vst [vmem:[#allocation3 + $0x788] sm:$0xff] %v7543
        %7608 = vst [vmem:[#allocation3 + $0x7d0] sm:$0xff] %v7544
        %7609 = vst [vmem:[#allocation3 + $0x818] sm:$0xff] %v7545
        %7610 = vst [vmem:[#allocation3 + $0x860] sm:$0xff] %v7546
        %7611 = vst [vmem:[#allocation3 + $0x8a8] sm:$0xff] %v7547
        %7612 = vst [vmem:[#allocation3 + $0x8f0] sm:$0xff] %v7548
        %v7613 = vld [vmem:[%s6300] sm:$0xe]
        %v7614 = vld [vmem:[%s6300 + $0x4] sm:$0xf]
        %v7615 = vld [vmem:[%s6300 + $0x8] sm:$0x1]
        %v7616 = vld [vmem:[%s6300 + $0xc] sm:$0xe]
        %v7617 = vld [vmem:[%s6300 + $0x10] sm:$0xf]
        %v7618 = vld [vmem:[%s6300 + $0x14] sm:$0x1]
        %v7619 = vld [vmem:[%s6300 + $0x18] sm:$0xe]
        %v7620 = vld [vmem:[%s6300 + $0x1c] sm:$0xf]
        %v7621 = vld [vmem:[%s6300 + $0x20] sm:$0x1]
        %v7622 = vld [vmem:[%s6300 + $0x24] sm:$0xe]
        %v7623 = vld [vmem:[%s6300 + $0x28] sm:$0xf]
        %v7624 = vld [vmem:[%s6300 + $0x2c] sm:$0x1]
        %v7625 = vld [vmem:[%s6300 + $0x30] sm:$0xe]
        %v7626 = vld [vmem:[%s6300 + $0x34] sm:$0xf]
        %v7627 = vld [vmem:[%s6300 + $0x38] sm:$0x1]
        %v7628 = vld [vmem:[%s6300 + $0x3c] sm:$0xe]
        %v7629 = vld [vmem:[%s6300 + $0x40] sm:$0xf]
        %v7630 = vld [vmem:[%s6300 + $0x44] sm:$0x1]
        %v7631 = vld [vmem:[%s6300 + $0x48] sm:$0xe]
        %v7632 = vld [vmem:[%s6300 + $0x4c] sm:$0xf]
        %v7633 = vld [vmem:[%s6300 + $0x50] sm:$0x1]
        %v7634 = vld [vmem:[%s6300 + $0x54] sm:$0xe]
        %v7635 = vld [vmem:[%s6300 + $0x58] sm:$0xf]
        %v7636 = vld [vmem:[%s6300 + $0x5c] sm:$0x1]
        %v7637 = vld [vmem:[%s6300 + $0x60] sm:$0xe]
        %v7638 = vld [vmem:[%s6300 + $0x64] sm:$0xf]
        %v7639 = vld [vmem:[%s6300 + $0x68] sm:$0x1]
        %v7640 = vld [vmem:[%s6300 + $0x6c] sm:$0xe]
        %v7641 = vld [vmem:[%s6300 + $0x70] sm:$0xf]
        %v7642 = vld [vmem:[%s6300 + $0x74] sm:$0x1]
        %v7643 = vld [vmem:[%s6300 + $0x78] sm:$0xe]
        %v7644 = vld [vmem:[%s6300 + $0x7c] sm:$0xf]
        %v7645 = vld [vmem:[%s6300 + $0x80] sm:$0x1]
        %v7646 = vld [vmem:[%s6300 + $0x84] sm:$0xe]
        %v7647 = vld [vmem:[%s6300 + $0x88] sm:$0xf]
        %v7648 = vld [vmem:[%s6300 + $0x8c] sm:$0x1]
        %v7649 = vld [vmem:[%s6300 + $0x90] sm:$0xe]
        %v7650 = vld [vmem:[%s6300 + $0x94] sm:$0xf]
        %v7651 = vld [vmem:[%s6300 + $0x98] sm:$0x1]
        %v7652 = vld [vmem:[%s6300 + $0x9c] sm:$0xe]
        %v7653 = vld [vmem:[%s6300 + $0xa0] sm:$0xf]
        %v7654 = vld [vmem:[%s6300 + $0xa4] sm:$0x1]
        %v7655 = vld [vmem:[%s6300 + $0xa8] sm:$0xe]
        %v7656 = vld [vmem:[%s6300 + $0xac] sm:$0xf]
        %v7657 = vld [vmem:[%s6300 + $0xb0] sm:$0x1]
        %v7658 = vld [vmem:[%s6300 + $0xb4] sm:$0xe]
        %v7659 = vld [vmem:[%s6300 + $0xb8] sm:$0xf]
        %v7660 = vld [vmem:[%s6300 + $0xbc] sm:$0x1]
        %v7661 = vld [vmem:[%s6300 + $0xd8] sm:$0xe]
        %v7662 = vld [vmem:[%s6300 + $0xdc] sm:$0xf]
        %v7663 = vld [vmem:[%s6300 + $0xe0] sm:$0x1]
        %v7664 = vld [vmem:[%s6300 + $0xe4] sm:$0xe]
        %v7665 = vld [vmem:[%s6300 + $0xe8] sm:$0xf]
        %v7666 = vld [vmem:[%s6300 + $0xec] sm:$0x1]
        %v7667 = vld [vmem:[%s6300 + $0xf0] sm:$0xe]
        %v7668 = vld [vmem:[%s6300 + $0xf4] sm:$0xf]
        %v7669 = vld [vmem:[%s6300 + $0xf8] sm:$0x1]
        %v7670 = vld [vmem:[%s6300 + $0xfc] sm:$0xe]
        %v7671 = vld [vmem:[%s6300 + $0x100] sm:$0xf]
        %v7672 = vld [vmem:[%s6300 + $0x104] sm:$0x1]
        %v7673 = vld [vmem:[%s6300 + $0x108] sm:$0xe]
        %v7674 = vld [vmem:[%s6300 + $0x10c] sm:$0xf]
        %v7675 = vld [vmem:[%s6300 + $0x110] sm:$0x1]
        %v7676 = vld [vmem:[%s6300 + $0x114] sm:$0xe]
        %v7677 = vld [vmem:[%s6300 + $0x118] sm:$0xf]
        %v7678 = vld [vmem:[%s6300 + $0x11c] sm:$0x1]
        %v7679 = vld [vmem:[%s6300 + $0x120] sm:$0xe]
        %v7680 = vld [vmem:[%s6300 + $0x124] sm:$0xf]
        %v7681 = vld [vmem:[%s6300 + $0x128] sm:$0x1]
        %v7682 = vld [vmem:[%s6300 + $0x12c] sm:$0xe]
        %v7683 = vld [vmem:[%s6300 + $0x130] sm:$0xf]
        %v7684 = vld [vmem:[%s6300 + $0x134] sm:$0x1]
        %v7685 = vld [vmem:[%s6300 + $0x138] sm:$0xe]
        %v7686 = vld [vmem:[%s6300 + $0x13c] sm:$0xf]
        %v7687 = vld [vmem:[%s6300 + $0x140] sm:$0x1]
        %v7688 = vld [vmem:[%s6300 + $0x144] sm:$0xe]
        %v7689 = vld [vmem:[%s6300 + $0x148] sm:$0xf]
        %v7690 = vld [vmem:[%s6300 + $0x14c] sm:$0x1]
        %v7691 = vld [vmem:[%s6300 + $0x150] sm:$0xe]
        %v7692 = vld [vmem:[%s6300 + $0x154] sm:$0xf]
        %v7693 = vld [vmem:[%s6300 + $0x158] sm:$0x1]
        %v7694 = vld [vmem:[%s6300 + $0x15c] sm:$0xe]
        %v7695 = vld [vmem:[%s6300 + $0x160] sm:$0xf]
        %v7696 = vld [vmem:[%s6300 + $0x164] sm:$0x1]
        %v7697 = vld [vmem:[%s6300 + $0x168] sm:$0xe]
        %v7698 = vld [vmem:[%s6300 + $0x16c] sm:$0xf]
        %v7699 = vld [vmem:[%s6300 + $0x170] sm:$0x1]
        %v7700 = vld [vmem:[%s6300 + $0x174] sm:$0xe]
        %v7701 = vld [vmem:[%s6300 + $0x178] sm:$0xf]
        %v7702 = vld [vmem:[%s6300 + $0x17c] sm:$0x1]
        %v7703 = vld [vmem:[%s6300 + $0x180] sm:$0xe]
        %v7704 = vld [vmem:[%s6300 + $0x184] sm:$0xf]
        %v7705 = vld [vmem:[%s6300 + $0x188] sm:$0x1]
        %v7706 = vld [vmem:[%s6300 + $0x18c] sm:$0xe]
        %v7707 = vld [vmem:[%s6300 + $0x190] sm:$0xf]
        %v7708 = vld [vmem:[%s6300 + $0x194] sm:$0x1]
        %v7805 = vrot.slane %v7613, 5
        %v7806 = vrot.slane %v7805, 4
        %v7807 = vrot.slane %v7614, 5
        %v7808 = vsel %vm4027, %v7806, %v7807
        %v7809 = vrot.slane %v7807, 4
        %v7810 = vrot.slane %v7615, 5
        %v7811 = vsel %vm4027, %v7809, %v7810
        %v7812 = vrot.slane %v7616, 5
        %v7813 = vrot.slane %v7812, 4
        %v7814 = vrot.slane %v7617, 5
        %v7815 = vsel %vm4027, %v7813, %v7814
        %v7816 = vrot.slane %v7814, 4
        %v7817 = vrot.slane %v7618, 5
        %v7818 = vsel %vm4027, %v7816, %v7817
        %v7819 = vrot.slane %v7619, 5
        %v7820 = vrot.slane %v7819, 4
        %v7821 = vrot.slane %v7620, 5
        %v7822 = vsel %vm4027, %v7820, %v7821
        %v7823 = vrot.slane %v7821, 4
        %v7824 = vrot.slane %v7621, 5
        %v7825 = vsel %vm4027, %v7823, %v7824
        %v7826 = vrot.slane %v7622, 5
        %v7827 = vrot.slane %v7826, 4
        %v7828 = vrot.slane %v7623, 5
        %v7829 = vsel %vm4027, %v7827, %v7828
        %v7830 = vrot.slane %v7828, 4
        %v7831 = vrot.slane %v7624, 5
        %v7832 = vsel %vm4027, %v7830, %v7831
        %v7833 = vrot.slane %v7625, 5
        %v7834 = vrot.slane %v7833, 4
        %v7835 = vrot.slane %v7626, 5
        %v7836 = vsel %vm4027, %v7834, %v7835
        %v7837 = vrot.slane %v7835, 4
        %v7838 = vrot.slane %v7627, 5
        %v7839 = vsel %vm4027, %v7837, %v7838
        %v7840 = vrot.slane %v7628, 5
        %v7841 = vrot.slane %v7840, 4
        %v7842 = vrot.slane %v7629, 5
        %v7843 = vsel %vm4027, %v7841, %v7842
        %v7844 = vrot.slane %v7842, 4
        %v7845 = vrot.slane %v7630, 5
        %v7846 = vsel %vm4027, %v7844, %v7845
        %v7847 = vrot.slane %v7631, 5
        %v7848 = vrot.slane %v7847, 4
        %v7849 = vrot.slane %v7632, 5
        %v7850 = vsel %vm4027, %v7848, %v7849
        %v7851 = vrot.slane %v7849, 4
        %v7852 = vrot.slane %v7633, 5
        %v7853 = vsel %vm4027, %v7851, %v7852
        %v7854 = vrot.slane %v7634, 5
        %v7855 = vrot.slane %v7854, 4
        %v7856 = vrot.slane %v7635, 5
        %v7857 = vsel %vm4027, %v7855, %v7856
        %v7858 = vrot.slane %v7856, 4
        %v7859 = vrot.slane %v7636, 5
        %v7860 = vsel %vm4027, %v7858, %v7859
        %v7861 = vrot.slane %v7637, 5
        %v7862 = vrot.slane %v7861, 4
        %v7863 = vrot.slane %v7638, 5
        %v7864 = vsel %vm4027, %v7862, %v7863
        %v7865 = vrot.slane %v7863, 4
        %v7866 = vrot.slane %v7639, 5
        %v7867 = vsel %vm4027, %v7865, %v7866
        %v7868 = vrot.slane %v7640, 5
        %v7869 = vrot.slane %v7868, 4
        %v7870 = vrot.slane %v7641, 5
        %v7871 = vsel %vm4027, %v7869, %v7870
        %v7872 = vrot.slane %v7870, 4
        %v7873 = vrot.slane %v7642, 5
        %v7874 = vsel %vm4027, %v7872, %v7873
        %v7875 = vrot.slane %v7643, 5
        %v7876 = vrot.slane %v7875, 4
        %v7877 = vrot.slane %v7644, 5
        %v7878 = vsel %vm4027, %v7876, %v7877
        %v7879 = vrot.slane %v7877, 4
        %v7880 = vrot.slane %v7645, 5
        %v7881 = vsel %vm4027, %v7879, %v7880
        %v7882 = vrot.slane %v7646, 5
        %v7883 = vrot.slane %v7882, 4
        %v7884 = vrot.slane %v7647, 5
        %v7885 = vsel %vm4027, %v7883, %v7884
        %v7886 = vrot.slane %v7884, 4
        %v7887 = vrot.slane %v7648, 5
        %v7888 = vsel %vm4027, %v7886, %v7887
        %v7889 = vrot.slane %v7649, 5
        %v7890 = vrot.slane %v7889, 4
        %v7891 = vrot.slane %v7650, 5
        %v7892 = vsel %vm4027, %v7890, %v7891
        %v7893 = vrot.slane %v7891, 4
        %v7894 = vrot.slane %v7651, 5
        %v7895 = vsel %vm4027, %v7893, %v7894
        %v7896 = vrot.slane %v7652, 5
        %v7897 = vrot.slane %v7896, 4
        %v7898 = vrot.slane %v7653, 5
        %v7899 = vsel %vm4027, %v7897, %v7898
        %v7900 = vrot.slane %v7898, 4
        %v7901 = vrot.slane %v7654, 5
        %v7902 = vsel %vm4027, %v7900, %v7901
        %v7903 = vrot.slane %v7655, 5
        %v7904 = vrot.slane %v7903, 4
        %v7905 = vrot.slane %v7656, 5
        %v7906 = vsel %vm4027, %v7904, %v7905
        %v7907 = vrot.slane %v7905, 4
        %v7908 = vrot.slane %v7657, 5
        %v7909 = vsel %vm4027, %v7907, %v7908
        %v7910 = vrot.slane %v7658, 5
        %v7911 = vrot.slane %v7910, 4
        %v7912 = vrot.slane %v7659, 5
        %v7913 = vsel %vm4027, %v7911, %v7912
        %v7914 = vrot.slane %v7912, 4
        %v7915 = vrot.slane %v7660, 5
        %v7916 = vsel %vm4027, %v7914, %v7915
        %v7917 = vrot.slane %v7661, 5
        %v7918 = vrot.slane %v7917, 4
        %v7919 = vrot.slane %v7662, 5
        %v7920 = vsel %vm4027, %v7918, %v7919
        %v7921 = vrot.slane %v7919, 4
        %v7922 = vrot.slane %v7663, 5
        %v7923 = vsel %vm4027, %v7921, %v7922
        %v7924 = vrot.slane %v7664, 5
        %v7925 = vrot.slane %v7924, 4
        %v7926 = vrot.slane %v7665, 5
        %v7927 = vsel %vm4027, %v7925, %v7926
        %v7928 = vrot.slane %v7926, 4
        %v7929 = vrot.slane %v7666, 5
        %v7930 = vsel %vm4027, %v7928, %v7929
        %v7931 = vrot.slane %v7667, 5
        %v7932 = vrot.slane %v7931, 4
        %v7933 = vrot.slane %v7668, 5
        %v7934 = vsel %vm4027, %v7932, %v7933
        %v7935 = vrot.slane %v7933, 4
        %v7936 = vrot.slane %v7669, 5
        %v7937 = vsel %vm4027, %v7935, %v7936
        %v7938 = vrot.slane %v7670, 5
        %v7939 = vrot.slane %v7938, 4
        %v7940 = vrot.slane %v7671, 5
        %v7941 = vsel %vm4027, %v7939, %v7940
        %v7942 = vrot.slane %v7940, 4
        %v7943 = vrot.slane %v7672, 5
        %v7944 = vsel %vm4027, %v7942, %v7943
        %v7945 = vrot.slane %v7673, 5
        %v7946 = vrot.slane %v7945, 4
        %v7947 = vrot.slane %v7674, 5
        %v7948 = vsel %vm4027, %v7946, %v7947
        %v7949 = vrot.slane %v7947, 4
        %v7950 = vrot.slane %v7675, 5
        %v7951 = vsel %vm4027, %v7949, %v7950
        %v7952 = vrot.slane %v7676, 5
        %v7953 = vrot.slane %v7952, 4
        %v7954 = vrot.slane %v7677, 5
        %v7955 = vsel %vm4027, %v7953, %v7954
        %v7956 = vrot.slane %v7954, 4
        %v7957 = vrot.slane %v7678, 5
        %v7958 = vsel %vm4027, %v7956, %v7957
        %v7959 = vrot.slane %v7679, 5
        %v7960 = vrot.slane %v7959, 4
        %v7961 = vrot.slane %v7680, 5
        %v7962 = vsel %vm4027, %v7960, %v7961
        %v7963 = vrot.slane %v7961, 4
        %v7964 = vrot.slane %v7681, 5
        %v7965 = vsel %vm4027, %v7963, %v7964
        %v7966 = vrot.slane %v7682, 5
        %v7967 = vrot.slane %v7966, 4
        %v7968 = vrot.slane %v7683, 5
        %v7969 = vsel %vm4027, %v7967, %v7968
        %v7970 = vrot.slane %v7968, 4
        %v7971 = vrot.slane %v7684, 5
        %v7972 = vsel %vm4027, %v7970, %v7971
        %v7973 = vrot.slane %v7685, 5
        %v7974 = vrot.slane %v7973, 4
        %v7975 = vrot.slane %v7686, 5
        %v7976 = vsel %vm4027, %v7974, %v7975
        %v7977 = vrot.slane %v7975, 4
        %v7978 = vrot.slane %v7687, 5
        %v7979 = vsel %vm4027, %v7977, %v7978
        %v7980 = vrot.slane %v7688, 5
        %v7981 = vrot.slane %v7980, 4
        %v7982 = vrot.slane %v7689, 5
        %v7983 = vsel %vm4027, %v7981, %v7982
        %v7984 = vrot.slane %v7982, 4
        %v7985 = vrot.slane %v7690, 5
        %v7986 = vsel %vm4027, %v7984, %v7985
        %v7987 = vrot.slane %v7691, 5
        %v7988 = vrot.slane %v7987, 4
        %v7989 = vrot.slane %v7692, 5
        %v7990 = vsel %vm4027, %v7988, %v7989
        %v7991 = vrot.slane %v7989, 4
        %v7992 = vrot.slane %v7693, 5
        %v7993 = vsel %vm4027, %v7991, %v7992
        %v7994 = vrot.slane %v7694, 5
        %v7995 = vrot.slane %v7994, 4
        %v7996 = vrot.slane %v7695, 5
        %v7997 = vsel %vm4027, %v7995, %v7996
        %v7998 = vrot.slane %v7996, 4
        %v7999 = vrot.slane %v7696, 5
        %v8000 = vsel %vm4027, %v7998, %v7999
        %v8001 = vrot.slane %v7697, 5
        %v8002 = vrot.slane %v8001, 4
        %v8003 = vrot.slane %v7698, 5
        %v8004 = vsel %vm4027, %v8002, %v8003
        %v8005 = vrot.slane %v8003, 4
        %v8006 = vrot.slane %v7699, 5
        %v8007 = vsel %vm4027, %v8005, %v8006
        %v8008 = vrot.slane %v7700, 5
        %v8009 = vrot.slane %v8008, 4
        %v8010 = vrot.slane %v7701, 5
        %v8011 = vsel %vm4027, %v8009, %v8010
        %v8012 = vrot.slane %v8010, 4
        %v8013 = vrot.slane %v7702, 5
        %v8014 = vsel %vm4027, %v8012, %v8013
        %v8015 = vrot.slane %v7703, 5
        %v8016 = vrot.slane %v8015, 4
        %v8017 = vrot.slane %v7704, 5
        %v8018 = vsel %vm4027, %v8016, %v8017
        %v8019 = vrot.slane %v8017, 4
        %v8020 = vrot.slane %v7705, 5
        %v8021 = vsel %vm4027, %v8019, %v8020
        %v8022 = vrot.slane %v7706, 5
        %v8023 = vrot.slane %v8022, 4
        %v8024 = vrot.slane %v7707, 5
        %v8025 = vsel %vm4027, %v8023, %v8024
        %v8026 = vrot.slane %v8024, 4
        %v8027 = vrot.slane %v7708, 5
        %v8028 = vsel %vm4027, %v8026, %v8027
        %v8029 = vunpack.c.l.b16 %v7808
        %v8030 = vunpack.c.l.b16 %v7811
        %v8031 = vunpack.c.l.b16 %v7815
        %v8032 = vunpack.c.l.b16 %v7818
        %v8033 = vunpack.c.l.b16 %v7822
        %v8034 = vunpack.c.l.b16 %v7825
        %v8035 = vunpack.c.l.b16 %v7829
        %v8036 = vunpack.c.l.b16 %v7832
        %v8037 = vunpack.c.l.b16 %v7836
        %v8038 = vunpack.c.l.b16 %v7839
        %v8039 = vunpack.c.l.b16 %v7843
        %v8040 = vunpack.c.l.b16 %v7846
        %v8041 = vunpack.c.l.b16 %v7850
        %v8042 = vunpack.c.l.b16 %v7853
        %v8043 = vunpack.c.l.b16 %v7857
        %v8044 = vunpack.c.l.b16 %v7860
        %v8045 = vunpack.c.l.b16 %v7864
        %v8046 = vunpack.c.l.b16 %v7867
        %v8047 = vunpack.c.l.b16 %v7871
        %v8048 = vunpack.c.l.b16 %v7874
        %v8049 = vunpack.c.l.b16 %v7878
        %v8050 = vunpack.c.l.b16 %v7881
        %v8051 = vunpack.c.l.b16 %v7885
        %v8052 = vunpack.c.l.b16 %v7888
        %v8053 = vunpack.c.l.b16 %v7892
        %v8054 = vunpack.c.l.b16 %v7895
        %v8055 = vunpack.c.l.b16 %v7899
        %v8056 = vunpack.c.l.b16 %v7902
        %v8057 = vunpack.c.l.b16 %v7906
        %v8058 = vunpack.c.l.b16 %v7909
        %v8059 = vunpack.c.l.b16 %v7913
        %v8060 = vunpack.c.l.b16 %v7916
        %v8061 = vunpack.c.l.b16 %v7920
        %v8062 = vunpack.c.l.b16 %v7923
        %v8063 = vunpack.c.l.b16 %v7927
        %v8064 = vunpack.c.l.b16 %v7930
        %v8065 = vunpack.c.l.b16 %v7934
        %v8066 = vunpack.c.l.b16 %v7937
        %v8067 = vunpack.c.l.b16 %v7941
        %v8068 = vunpack.c.l.b16 %v7944
        %v8069 = vunpack.c.l.b16 %v7948
        %v8070 = vunpack.c.l.b16 %v7951
        %v8071 = vunpack.c.l.b16 %v7955
        %v8072 = vunpack.c.l.b16 %v7958
        %v8073 = vunpack.c.l.b16 %v7962
        %v8074 = vunpack.c.l.b16 %v7965
        %v8075 = vunpack.c.l.b16 %v7969
        %v8076 = vunpack.c.l.b16 %v7972
        %v8077 = vunpack.c.l.b16 %v7976
        %v8078 = vunpack.c.l.b16 %v7979
        %v8079 = vunpack.c.l.b16 %v7983
        %v8080 = vunpack.c.l.b16 %v7986
        %v8081 = vunpack.c.l.b16 %v7990
        %v8082 = vunpack.c.l.b16 %v7993
        %v8083 = vunpack.c.l.b16 %v7997
        %v8084 = vunpack.c.l.b16 %v8000
        %v8085 = vunpack.c.l.b16 %v8004
        %v8086 = vunpack.c.l.b16 %v8007
        %v8087 = vunpack.c.l.b16 %v8011
        %v8088 = vunpack.c.l.b16 %v8014
        %v8089 = vunpack.c.l.b16 %v8018
        %v8090 = vunpack.c.l.b16 %v8021
        %v8091 = vunpack.c.l.b16 %v8025
        %v8092 = vunpack.c.l.b16 %v8028
        %v8093 = vpack.c.b16 %v8030, %v8029
        %v8094 = vpack.c.b16 %v8032, %v8031
        %v8095 = vpack.c.b16 %v8034, %v8033
        %v8096 = vpack.c.b16 %v8036, %v8035
        %v8097 = vpack.c.b16 %v8038, %v8037
        %v8098 = vpack.c.b16 %v8040, %v8039
        %v8099 = vpack.c.b16 %v8042, %v8041
        %v8100 = vpack.c.b16 %v8044, %v8043
        %v8101 = vpack.c.b16 %v8046, %v8045
        %v8102 = vpack.c.b16 %v8048, %v8047
        %v8103 = vpack.c.b16 %v8050, %v8049
        %v8104 = vpack.c.b16 %v8052, %v8051
        %v8105 = vpack.c.b16 %v8054, %v8053
        %v8106 = vpack.c.b16 %v8056, %v8055
        %v8107 = vpack.c.b16 %v8058, %v8057
        %v8108 = vpack.c.b16 %v8060, %v8059
        %v8109 = vpack.c.b16 %v8062, %v8061
        %v8110 = vpack.c.b16 %v8064, %v8063
        %v8111 = vpack.c.b16 %v8066, %v8065
        %v8112 = vpack.c.b16 %v8068, %v8067
        %v8113 = vpack.c.b16 %v8070, %v8069
        %v8114 = vpack.c.b16 %v8072, %v8071
        %v8115 = vpack.c.b16 %v8074, %v8073
        %v8116 = vpack.c.b16 %v8076, %v8075
        %v8117 = vpack.c.b16 %v8078, %v8077
        %v8118 = vpack.c.b16 %v8080, %v8079
        %v8119 = vpack.c.b16 %v8082, %v8081
        %v8120 = vpack.c.b16 %v8084, %v8083
        %v8121 = vpack.c.b16 %v8086, %v8085
        %v8122 = vpack.c.b16 %v8088, %v8087
        %v8123 = vpack.c.b16 %v8090, %v8089
        %v8124 = vpack.c.b16 %v8092, %v8091
        %8157 = vst [vmem:[#allocation3 + $0x40] sm:$0xff] %v8093
        %8158 = vst [vmem:[#allocation3 + $0x88] sm:$0xff] %v8094
        %8159 = vst [vmem:[#allocation3 + $0xd0] sm:$0xff] %v8095
        %8160 = vst [vmem:[#allocation3 + $0x118] sm:$0xff] %v8096
        %8161 = vst [vmem:[#allocation3 + $0x160] sm:$0xff] %v8097
        %8162 = vst [vmem:[#allocation3 + $0x1a8] sm:$0xff] %v8098
        %8163 = vst [vmem:[#allocation3 + $0x1f0] sm:$0xff] %v8099
        %8164 = vst [vmem:[#allocation3 + $0x238] sm:$0xff] %v8100
        %8165 = vst [vmem:[#allocation3 + $0x280] sm:$0xff] %v8101
        %8166 = vst [vmem:[#allocation3 + $0x2c8] sm:$0xff] %v8102
        %8167 = vst [vmem:[#allocation3 + $0x310] sm:$0xff] %v8103
        %8168 = vst [vmem:[#allocation3 + $0x358] sm:$0xff] %v8104
        %8169 = vst [vmem:[#allocation3 + $0x3a0] sm:$0xff] %v8105
        %8170 = vst [vmem:[#allocation3 + $0x3e8] sm:$0xff] %v8106
        %8171 = vst [vmem:[#allocation3 + $0x430] sm:$0xff] %v8107
        %8172 = vst [vmem:[#allocation3 + $0x478] sm:$0xff] %v8108
        %8173 = vst [vmem:[#allocation3 + $0x4c0] sm:$0xff] %v8109
        %8174 = vst [vmem:[#allocation3 + $0x508] sm:$0xff] %v8110
        %8175 = vst [vmem:[#allocation3 + $0x550] sm:$0xff] %v8111
        %8176 = vst [vmem:[#allocation3 + $0x598] sm:$0xff] %v8112
        %8177 = vst [vmem:[#allocation3 + $0x5e0] sm:$0xff] %v8113
        %8178 = vst [vmem:[#allocation3 + $0x628] sm:$0xff] %v8114
        %8179 = vst [vmem:[#allocation3 + $0x670] sm:$0xff] %v8115
        %8180 = vst [vmem:[#allocation3 + $0x6b8] sm:$0xff] %v8116
        %8181 = vst [vmem:[#allocation3 + $0x700] sm:$0xff] %v8117
        %8182 = vst [vmem:[#allocation3 + $0x748] sm:$0xff] %v8118
        %8183 = vst [vmem:[#allocation3 + $0x790] sm:$0xff] %v8119
        %8184 = vst [vmem:[#allocation3 + $0x7d8] sm:$0xff] %v8120
        %8185 = vst [vmem:[#allocation3 + $0x820] sm:$0xff] %v8121
        %8186 = vst [vmem:[#allocation3 + $0x868] sm:$0xff] %v8122
        %8187 = vst [vmem:[#allocation3 + $0x8b0] sm:$0xff] %v8123
        %8188 = vst [vmem:[#allocation3 + $0x8f8] sm:$0xff] %v8124
        %v8189 = vld [vmem:[#allocation3] sm:$0xff]
        %v8190 = vld [vmem:[#allocation3 + $0x8] sm:$0xff]
        %v8191 = vld [vmem:[#allocation3 + $0x10] sm:$0xff]
        %v8192 = vld [vmem:[#allocation3 + $0x18] sm:$0xff]
        %v8193 = vld [vmem:[#allocation3 + $0x20] sm:$0xff]
        %v8194 = vld [vmem:[#allocation3 + $0x28] sm:$0xff]
        %v8195 = vld [vmem:[#allocation3 + $0x30] sm:$0xff]
        %v8196 = vld [vmem:[#allocation3 + $0x38] sm:$0xff]
        %v8197 = vld [vmem:[#allocation3 + $0x40] sm:$0xff]
        %v8198 = vld [vmem:[#allocation3 + $0x48] sm:$0xff]
        %v8199 = vld [vmem:[#allocation3 + $0x50] sm:$0xff]
        %v8200 = vld [vmem:[#allocation3 + $0x58] sm:$0xff]
        %v8201 = vld [vmem:[#allocation3 + $0x60] sm:$0xff]
        %v8202 = vld [vmem:[#allocation3 + $0x68] sm:$0xff]
        %v8203 = vld [vmem:[#allocation3 + $0x70] sm:$0xff]
        %v8204 = vld [vmem:[#allocation3 + $0x78] sm:$0xff]
        %v8205 = vld [vmem:[#allocation3 + $0x80] sm:$0xff]
        %v8206 = vld [vmem:[#allocation3 + $0x88] sm:$0xff]
        %v8207 = vld [vmem:[#allocation3 + $0x90] sm:$0xff]
        %v8208 = vld [vmem:[#allocation3 + $0x98] sm:$0xff]
        %v8209 = vld [vmem:[#allocation3 + $0xa0] sm:$0xff]
        %v8210 = vld [vmem:[#allocation3 + $0xa8] sm:$0xff]
        %v8211 = vld [vmem:[#allocation3 + $0xb0] sm:$0xff]
        %v8212 = vld [vmem:[#allocation3 + $0xb8] sm:$0xff]
        %v8213 = vld [vmem:[#allocation3 + $0xc0] sm:$0xff]
        %v8214 = vld [vmem:[#allocation3 + $0xc8] sm:$0xff]
        %v8215 = vld [vmem:[#allocation3 + $0xd0] sm:$0xff]
        %v8216 = vld [vmem:[#allocation3 + $0xd8] sm:$0xff]
        %v8217 = vld [vmem:[#allocation3 + $0xe0] sm:$0xff]
        %v8218 = vld [vmem:[#allocation3 + $0xe8] sm:$0xff]
        %v8219 = vld [vmem:[#allocation3 + $0xf0] sm:$0xff]
        %v8220 = vld [vmem:[#allocation3 + $0xf8] sm:$0xff]
        %v8221 = vld [vmem:[#allocation3 + $0x100] sm:$0xff]
        %v8222 = vld [vmem:[#allocation3 + $0x108] sm:$0xff]
        %v8223 = vld [vmem:[#allocation3 + $0x110] sm:$0xff]
        %v8224 = vld [vmem:[#allocation3 + $0x118] sm:$0xff]
        %v8225 = vld [vmem:[#allocation3 + $0x120] sm:$0xff]
        %v8226 = vld [vmem:[#allocation3 + $0x128] sm:$0xff]
        %v8227 = vld [vmem:[#allocation3 + $0x130] sm:$0xff]
        %v8228 = vld [vmem:[#allocation3 + $0x138] sm:$0xff]
        %v8229 = vld [vmem:[#allocation3 + $0x140] sm:$0xff]
        %v8230 = vld [vmem:[#allocation3 + $0x148] sm:$0xff]
        %v8231 = vld [vmem:[#allocation3 + $0x150] sm:$0xff]
        %v8232 = vld [vmem:[#allocation3 + $0x158] sm:$0xff]
        %v8233 = vld [vmem:[#allocation3 + $0x160] sm:$0xff]
        %v8234 = vld [vmem:[#allocation3 + $0x168] sm:$0xff]
        %v8235 = vld [vmem:[#allocation3 + $0x170] sm:$0xff]
        %v8236 = vld [vmem:[#allocation3 + $0x178] sm:$0xff]
        %v8237 = vld [vmem:[#allocation3 + $0x180] sm:$0xff]
        %v8238 = vld [vmem:[#allocation3 + $0x188] sm:$0xff]
        %v8239 = vld [vmem:[#allocation3 + $0x190] sm:$0xff]
        %v8240 = vld [vmem:[#allocation3 + $0x198] sm:$0xff]
        %v8241 = vld [vmem:[#allocation3 + $0x1a0] sm:$0xff]
        %v8242 = vld [vmem:[#allocation3 + $0x1a8] sm:$0xff]
        %v8243 = vld [vmem:[#allocation3 + $0x1b0] sm:$0xff]
        %v8244 = vld [vmem:[#allocation3 + $0x1b8] sm:$0xff]
        %v8245 = vld [vmem:[#allocation3 + $0x1c0] sm:$0xff]
        %v8246 = vld [vmem:[#allocation3 + $0x1c8] sm:$0xff]
        %v8247 = vld [vmem:[#allocation3 + $0x1d0] sm:$0xff]
        %v8248 = vld [vmem:[#allocation3 + $0x1d8] sm:$0xff]
        %v8249 = vld [vmem:[#allocation3 + $0x1e0] sm:$0xff]
        %v8250 = vld [vmem:[#allocation3 + $0x1e8] sm:$0xff]
        %v8251 = vld [vmem:[#allocation3 + $0x1f0] sm:$0xff]
        %v8252 = vld [vmem:[#allocation3 + $0x1f8] sm:$0xff]
        %v8253 = vld [vmem:[#allocation3 + $0x200] sm:$0xff]
        %v8254 = vld [vmem:[#allocation3 + $0x208] sm:$0xff]
        %v8255 = vld [vmem:[#allocation3 + $0x210] sm:$0xff]
        %v8256 = vld [vmem:[#allocation3 + $0x218] sm:$0xff]
        %v8257 = vld [vmem:[#allocation3 + $0x220] sm:$0xff]
        %v8258 = vld [vmem:[#allocation3 + $0x228] sm:$0xff]
        %v8259 = vld [vmem:[#allocation3 + $0x230] sm:$0xff]
        %v8260 = vld [vmem:[#allocation3 + $0x238] sm:$0xff]
        %v8261 = vld [vmem:[#allocation3 + $0x240] sm:$0xff]
        %v8262 = vld [vmem:[#allocation3 + $0x248] sm:$0xff]
        %v8263 = vld [vmem:[#allocation3 + $0x250] sm:$0xff]
        %v8264 = vld [vmem:[#allocation3 + $0x258] sm:$0xff]
        %v8265 = vld [vmem:[#allocation3 + $0x260] sm:$0xff]
        %v8266 = vld [vmem:[#allocation3 + $0x268] sm:$0xff]
        %v8267 = vld [vmem:[#allocation3 + $0x270] sm:$0xff]
        %v8268 = vld [vmem:[#allocation3 + $0x278] sm:$0xff]
        %v8269 = vld [vmem:[#allocation3 + $0x280] sm:$0xff]
        %v8270 = vld [vmem:[#allocation3 + $0x288] sm:$0xff]
        %v8271 = vld [vmem:[#allocation3 + $0x290] sm:$0xff]
        %v8272 = vld [vmem:[#allocation3 + $0x298] sm:$0xff]
        %v8273 = vld [vmem:[#allocation3 + $0x2a0] sm:$0xff]
        %v8274 = vld [vmem:[#allocation3 + $0x2a8] sm:$0xff]
        %v8275 = vld [vmem:[#allocation3 + $0x2b0] sm:$0xff]
        %v8276 = vld [vmem:[#allocation3 + $0x2b8] sm:$0xff]
        %v8277 = vld [vmem:[#allocation3 + $0x2c0] sm:$0xff]
        %v8278 = vld [vmem:[#allocation3 + $0x2c8] sm:$0xff]
        %v8279 = vld [vmem:[#allocation3 + $0x2d0] sm:$0xff]
        %v8280 = vld [vmem:[#allocation3 + $0x2d8] sm:$0xff]
        %v8281 = vld [vmem:[#allocation3 + $0x2e0] sm:$0xff]
        %v8282 = vld [vmem:[#allocation3 + $0x2e8] sm:$0xff]
        %v8283 = vld [vmem:[#allocation3 + $0x2f0] sm:$0xff]
        %v8284 = vld [vmem:[#allocation3 + $0x2f8] sm:$0xff]
        %v8285 = vld [vmem:[#allocation3 + $0x300] sm:$0xff]
        %v8286 = vld [vmem:[#allocation3 + $0x308] sm:$0xff]
        %v8287 = vld [vmem:[#allocation3 + $0x310] sm:$0xff]
        %v8288 = vld [vmem:[#allocation3 + $0x318] sm:$0xff]
        %v8289 = vld [vmem:[#allocation3 + $0x320] sm:$0xff]
        %v8290 = vld [vmem:[#allocation3 + $0x328] sm:$0xff]
        %v8291 = vld [vmem:[#allocation3 + $0x330] sm:$0xff]
        %v8292 = vld [vmem:[#allocation3 + $0x338] sm:$0xff]
        %v8293 = vld [vmem:[#allocation3 + $0x340] sm:$0xff]
        %v8294 = vld [vmem:[#allocation3 + $0x348] sm:$0xff]
        %v8295 = vld [vmem:[#allocation3 + $0x350] sm:$0xff]
        %v8296 = vld [vmem:[#allocation3 + $0x358] sm:$0xff]
        %v8297 = vld [vmem:[#allocation3 + $0x360] sm:$0xff]
        %v8298 = vld [vmem:[#allocation3 + $0x368] sm:$0xff]
        %v8299 = vld [vmem:[#allocation3 + $0x370] sm:$0xff]
        %v8300 = vld [vmem:[#allocation3 + $0x378] sm:$0xff]
        %v8301 = vld [vmem:[#allocation3 + $0x380] sm:$0xff]
        %v8302 = vld [vmem:[#allocation3 + $0x388] sm:$0xff]
        %v8303 = vld [vmem:[#allocation3 + $0x390] sm:$0xff]
        %v8304 = vld [vmem:[#allocation3 + $0x398] sm:$0xff]
        %v8305 = vld [vmem:[#allocation3 + $0x3a0] sm:$0xff]
        %v8306 = vld [vmem:[#allocation3 + $0x3a8] sm:$0xff]
        %v8307 = vld [vmem:[#allocation3 + $0x3b0] sm:$0xff]
        %v8308 = vld [vmem:[#allocation3 + $0x3b8] sm:$0xff]
        %v8309 = vld [vmem:[#allocation3 + $0x3c0] sm:$0xff]
        %v8310 = vld [vmem:[#allocation3 + $0x3c8] sm:$0xff]
        %v8311 = vld [vmem:[#allocation3 + $0x3d0] sm:$0xff]
        %v8312 = vld [vmem:[#allocation3 + $0x3d8] sm:$0xff]
        %v8313 = vld [vmem:[#allocation3 + $0x3e0] sm:$0xff]
        %v8314 = vld [vmem:[#allocation3 + $0x3e8] sm:$0xff]
        %v8315 = vld [vmem:[#allocation3 + $0x3f0] sm:$0xff]
        %v8316 = vld [vmem:[#allocation3 + $0x3f8] sm:$0xff]
        %v8317 = vld [vmem:[#allocation3 + $0x400] sm:$0xff]
        %v8318 = vld [vmem:[#allocation3 + $0x408] sm:$0xff]
        %v8319 = vld [vmem:[#allocation3 + $0x410] sm:$0xff]
        %v8320 = vld [vmem:[#allocation3 + $0x418] sm:$0xff]
        %v8321 = vld [vmem:[#allocation3 + $0x420] sm:$0xff]
        %v8322 = vld [vmem:[#allocation3 + $0x428] sm:$0xff]
        %v8323 = vld [vmem:[#allocation3 + $0x430] sm:$0xff]
        %v8324 = vld [vmem:[#allocation3 + $0x438] sm:$0xff]
        %v8325 = vld [vmem:[#allocation3 + $0x440] sm:$0xff]
        %v8326 = vld [vmem:[#allocation3 + $0x448] sm:$0xff]
        %v8327 = vld [vmem:[#allocation3 + $0x450] sm:$0xff]
        %v8328 = vld [vmem:[#allocation3 + $0x458] sm:$0xff]
        %v8329 = vld [vmem:[#allocation3 + $0x460] sm:$0xff]
        %v8330 = vld [vmem:[#allocation3 + $0x468] sm:$0xff]
        %v8331 = vld [vmem:[#allocation3 + $0x470] sm:$0xff]
        %v8332 = vld [vmem:[#allocation3 + $0x478] sm:$0xff]
        %v8333 = vld [vmem:[#allocation3 + $0x480] sm:$0xff]
        %v8334 = vld [vmem:[#allocation3 + $0x488] sm:$0xff]
        %v8335 = vld [vmem:[#allocation3 + $0x490] sm:$0xff]
        %v8336 = vld [vmem:[#allocation3 + $0x498] sm:$0xff]
        %v8337 = vld [vmem:[#allocation3 + $0x4a0] sm:$0xff]
        %v8338 = vld [vmem:[#allocation3 + $0x4a8] sm:$0xff]
        %v8339 = vld [vmem:[#allocation3 + $0x4b0] sm:$0xff]
        %v8340 = vld [vmem:[#allocation3 + $0x4b8] sm:$0xff]
        %v8341 = vld [vmem:[#allocation3 + $0x4c0] sm:$0xff]
        %v8342 = vld [vmem:[#allocation3 + $0x4c8] sm:$0xff]
        %v8343 = vld [vmem:[#allocation3 + $0x4d0] sm:$0xff]
        %v8344 = vld [vmem:[#allocation3 + $0x4d8] sm:$0xff]
        %v8345 = vld [vmem:[#allocation3 + $0x4e0] sm:$0xff]
        %v8346 = vld [vmem:[#allocation3 + $0x4e8] sm:$0xff]
        %v8347 = vld [vmem:[#allocation3 + $0x4f0] sm:$0xff]
        %v8348 = vld [vmem:[#allocation3 + $0x4f8] sm:$0xff]
        %v8349 = vld [vmem:[#allocation3 + $0x500] sm:$0xff]
        %v8350 = vld [vmem:[#allocation3 + $0x508] sm:$0xff]
        %v8351 = vld [vmem:[#allocation3 + $0x510] sm:$0xff]
        %v8352 = vld [vmem:[#allocation3 + $0x518] sm:$0xff]
        %v8353 = vld [vmem:[#allocation3 + $0x520] sm:$0xff]
        %v8354 = vld [vmem:[#allocation3 + $0x528] sm:$0xff]
        %v8355 = vld [vmem:[#allocation3 + $0x530] sm:$0xff]
        %v8356 = vld [vmem:[#allocation3 + $0x538] sm:$0xff]
        %v8357 = vld [vmem:[#allocation3 + $0x540] sm:$0xff]
        %v8358 = vld [vmem:[#allocation3 + $0x548] sm:$0xff]
        %v8359 = vld [vmem:[#allocation3 + $0x550] sm:$0xff]
        %v8360 = vld [vmem:[#allocation3 + $0x558] sm:$0xff]
        %v8361 = vld [vmem:[#allocation3 + $0x560] sm:$0xff]
        %v8362 = vld [vmem:[#allocation3 + $0x568] sm:$0xff]
        %v8363 = vld [vmem:[#allocation3 + $0x570] sm:$0xff]
        %v8364 = vld [vmem:[#allocation3 + $0x578] sm:$0xff]
        %v8365 = vld [vmem:[#allocation3 + $0x580] sm:$0xff]
        %v8366 = vld [vmem:[#allocation3 + $0x588] sm:$0xff]
        %v8367 = vld [vmem:[#allocation3 + $0x590] sm:$0xff]
        %v8368 = vld [vmem:[#allocation3 + $0x598] sm:$0xff]
        %v8369 = vld [vmem:[#allocation3 + $0x5a0] sm:$0xff]
        %v8370 = vld [vmem:[#allocation3 + $0x5a8] sm:$0xff]
        %v8371 = vld [vmem:[#allocation3 + $0x5b0] sm:$0xff]
        %v8372 = vld [vmem:[#allocation3 + $0x5b8] sm:$0xff]
        %v8373 = vld [vmem:[#allocation3 + $0x5c0] sm:$0xff]
        %v8374 = vld [vmem:[#allocation3 + $0x5c8] sm:$0xff]
        %v8375 = vld [vmem:[#allocation3 + $0x5d0] sm:$0xff]
        %v8376 = vld [vmem:[#allocation3 + $0x5d8] sm:$0xff]
        %v8377 = vld [vmem:[#allocation3 + $0x5e0] sm:$0xff]
        %v8378 = vld [vmem:[#allocation3 + $0x5e8] sm:$0xff]
        %v8379 = vld [vmem:[#allocation3 + $0x5f0] sm:$0xff]
        %v8380 = vld [vmem:[#allocation3 + $0x5f8] sm:$0xff]
        %v8381 = vld [vmem:[#allocation3 + $0x600] sm:$0xff]
        %v8382 = vld [vmem:[#allocation3 + $0x608] sm:$0xff]
        %v8383 = vld [vmem:[#allocation3 + $0x610] sm:$0xff]
        %v8384 = vld [vmem:[#allocation3 + $0x618] sm:$0xff]
        %v8385 = vld [vmem:[#allocation3 + $0x620] sm:$0xff]
        %v8386 = vld [vmem:[#allocation3 + $0x628] sm:$0xff]
        %v8387 = vld [vmem:[#allocation3 + $0x630] sm:$0xff]
        %v8388 = vld [vmem:[#allocation3 + $0x638] sm:$0xff]
        %v8389 = vld [vmem:[#allocation3 + $0x640] sm:$0xff]
        %v8390 = vld [vmem:[#allocation3 + $0x648] sm:$0xff]
        %v8391 = vld [vmem:[#allocation3 + $0x650] sm:$0xff]
        %v8392 = vld [vmem:[#allocation3 + $0x658] sm:$0xff]
        %v8393 = vld [vmem:[#allocation3 + $0x660] sm:$0xff]
        %v8394 = vld [vmem:[#allocation3 + $0x668] sm:$0xff]
        %v8395 = vld [vmem:[#allocation3 + $0x670] sm:$0xff]
        %v8396 = vld [vmem:[#allocation3 + $0x678] sm:$0xff]
        %v8397 = vld [vmem:[#allocation3 + $0x680] sm:$0xff]
        %v8398 = vld [vmem:[#allocation3 + $0x688] sm:$0xff]
        %v8399 = vld [vmem:[#allocation3 + $0x690] sm:$0xff]
        %v8400 = vld [vmem:[#allocation3 + $0x698] sm:$0xff]
        %v8401 = vld [vmem:[#allocation3 + $0x6a0] sm:$0xff]
        %v8402 = vld [vmem:[#allocation3 + $0x6a8] sm:$0xff]
        %v8403 = vld [vmem:[#allocation3 + $0x6b0] sm:$0xff]
        %v8404 = vld [vmem:[#allocation3 + $0x6b8] sm:$0xff]
        %v8405 = vld [vmem:[#allocation3 + $0x6c0] sm:$0xff]
        %v8406 = vld [vmem:[#allocation3 + $0x6c8] sm:$0xff]
        %v8407 = vld [vmem:[#allocation3 + $0x6d0] sm:$0xff]
        %v8408 = vld [vmem:[#allocation3 + $0x6d8] sm:$0xff]
        %v8409 = vld [vmem:[#allocation3 + $0x6e0] sm:$0xff]
        %v8410 = vld [vmem:[#allocation3 + $0x6e8] sm:$0xff]
        %v8411 = vld [vmem:[#allocation3 + $0x6f0] sm:$0xff]
        %v8412 = vld [vmem:[#allocation3 + $0x6f8] sm:$0xff]
        %v8413 = vld [vmem:[#allocation3 + $0x700] sm:$0xff]
        %v8414 = vld [vmem:[#allocation3 + $0x708] sm:$0xff]
        %v8415 = vld [vmem:[#allocation3 + $0x710] sm:$0xff]
        %v8416 = vld [vmem:[#allocation3 + $0x718] sm:$0xff]
        %v8417 = vld [vmem:[#allocation3 + $0x720] sm:$0xff]
        %v8418 = vld [vmem:[#allocation3 + $0x728] sm:$0xff]
        %v8419 = vld [vmem:[#allocation3 + $0x730] sm:$0xff]
        %v8420 = vld [vmem:[#allocation3 + $0x738] sm:$0xff]
        %v8421 = vld [vmem:[#allocation3 + $0x740] sm:$0xff]
        %v8422 = vld [vmem:[#allocation3 + $0x748] sm:$0xff]
        %v8423 = vld [vmem:[#allocation3 + $0x750] sm:$0xff]
        %v8424 = vld [vmem:[#allocation3 + $0x758] sm:$0xff]
        %v8425 = vld [vmem:[#allocation3 + $0x760] sm:$0xff]
        %v8426 = vld [vmem:[#allocation3 + $0x768] sm:$0xff]
        %v8427 = vld [vmem:[#allocation3 + $0x770] sm:$0xff]
        %v8428 = vld [vmem:[#allocation3 + $0x778] sm:$0xff]
        %v8429 = vld [vmem:[#allocation3 + $0x780] sm:$0xff]
        %v8430 = vld [vmem:[#allocation3 + $0x788] sm:$0xff]
        %v8431 = vld [vmem:[#allocation3 + $0x790] sm:$0xff]
        %v8432 = vld [vmem:[#allocation3 + $0x798] sm:$0xff]
        %v8433 = vld [vmem:[#allocation3 + $0x7a0] sm:$0xff]
        %v8434 = vld [vmem:[#allocation3 + $0x7a8] sm:$0xff]
        %v8435 = vld [vmem:[#allocation3 + $0x7b0] sm:$0xff]
        %v8436 = vld [vmem:[#allocation3 + $0x7b8] sm:$0xff]
        %v8437 = vld [vmem:[#allocation3 + $0x7c0] sm:$0xff]
        %v8438 = vld [vmem:[#allocation3 + $0x7c8] sm:$0xff]
        %v8439 = vld [vmem:[#allocation3 + $0x7d0] sm:$0xff]
        %v8440 = vld [vmem:[#allocation3 + $0x7d8] sm:$0xff]
        %v8441 = vld [vmem:[#allocation3 + $0x7e0] sm:$0xff]
        %v8442 = vld [vmem:[#allocation3 + $0x7e8] sm:$0xff]
        %v8443 = vld [vmem:[#allocation3 + $0x7f0] sm:$0xff]
        %v8444 = vld [vmem:[#allocation3 + $0x7f8] sm:$0xff]
        %v8445 = vld [vmem:[#allocation3 + $0x800] sm:$0xff]
        %v8446 = vld [vmem:[#allocation3 + $0x808] sm:$0xff]
        %v8447 = vld [vmem:[#allocation3 + $0x810] sm:$0xff]
        %v8448 = vld [vmem:[#allocation3 + $0x818] sm:$0xff]
        %v8449 = vld [vmem:[#allocation3 + $0x820] sm:$0xff]
        %v8450 = vld [vmem:[#allocation3 + $0x828] sm:$0xff]
        %v8451 = vld [vmem:[#allocation3 + $0x830] sm:$0xff]
        %v8452 = vld [vmem:[#allocation3 + $0x838] sm:$0xff]
        %v8453 = vld [vmem:[#allocation3 + $0x840] sm:$0xff]
        %v8454 = vld [vmem:[#allocation3 + $0x848] sm:$0xff]
        %v8455 = vld [vmem:[#allocation3 + $0x850] sm:$0xff]
        %v8456 = vld [vmem:[#allocation3 + $0x858] sm:$0xff]
        %v8457 = vld [vmem:[#allocation3 + $0x860] sm:$0xff]
        %v8458 = vld [vmem:[#allocation3 + $0x868] sm:$0xff]
        %v8459 = vld [vmem:[#allocation3 + $0x870] sm:$0xff]
        %v8460 = vld [vmem:[#allocation3 + $0x878] sm:$0xff]
        %v8461 = vld [vmem:[#allocation3 + $0x880] sm:$0xff]
        %v8462 = vld [vmem:[#allocation3 + $0x888] sm:$0xff]
        %v8463 = vld [vmem:[#allocation3 + $0x890] sm:$0xff]
        %v8464 = vld [vmem:[#allocation3 + $0x898] sm:$0xff]
        %v8465 = vld [vmem:[#allocation3 + $0x8a0] sm:$0xff]
        %v8466 = vld [vmem:[#allocation3 + $0x8a8] sm:$0xff]
        %v8467 = vld [vmem:[#allocation3 + $0x8b0] sm:$0xff]
        %v8468 = vld [vmem:[#allocation3 + $0x8b8] sm:$0xff]
        %v8469 = vld [vmem:[#allocation3 + $0x8c0] sm:$0xff]
        %v8470 = vld [vmem:[#allocation3 + $0x8c8] sm:$0xff]
        %v8471 = vld [vmem:[#allocation3 + $0x8d0] sm:$0xff]
        %v8472 = vld [vmem:[#allocation3 + $0x8d8] sm:$0xff]
        %v8473 = vld [vmem:[#allocation3 + $0x8e0] sm:$0xff]
        %v8474 = vld [vmem:[#allocation3 + $0x8e8] sm:$0xff]
        %v8475 = vld [vmem:[#allocation3 + $0x8f0] sm:$0xff]
        %v8476 = vld [vmem:[#allocation3 + $0x8f8] sm:$0xff]
        %v8477 = vld [vmem:[#allocation9] sm:$0xf]
        %v8478 = vld [vmem:[#allocation9 + $0x4] sm:$0xf]
        %v8479 = vld [vmem:[#allocation9 + $0x8] sm:$0xf]
        %v8480 = vld [vmem:[#allocation9 + $0xc] sm:$0xf]
        %v8481 = vld [vmem:[#allocation9 + $0x10] sm:$0xf]
        %v8482 = vld [vmem:[#allocation9 + $0x14] sm:$0xf]
        %v8483 = vld [vmem:[#allocation9 + $0x18] sm:$0xf]
        %v8484 = vld [vmem:[#allocation9 + $0x1c] sm:$0xf]
        %v8485 = vld [vmem:[#allocation9 + $0x20] sm:$0xf]
        %v8486 = vld [vmem:[#allocation9 + $0x24] sm:$0xf]
        %v8487 = vld [vmem:[#allocation9 + $0x28] sm:$0xf]
        %v8488 = vld [vmem:[#allocation9 + $0x2c] sm:$0xf]
        %v8489 = vld [vmem:[#allocation9 + $0x30] sm:$0xf]
        %v8490 = vld [vmem:[#allocation9 + $0x34] sm:$0xf]
        %v8491 = vld [vmem:[#allocation9 + $0x38] sm:$0xf]
        %v8492 = vld [vmem:[#allocation9 + $0x3c] sm:$0xf]
        %v8493 = vld [vmem:[#allocation9 + $0x40] sm:$0xf]
        %v8494 = vld [vmem:[#allocation9 + $0x44] sm:$0xf]
        %v8495 = vld [vmem:[#allocation9 + $0x48] sm:$0xf]
        %v8496 = vld [vmem:[#allocation9 + $0x4c] sm:$0xf]
        %v8497 = vld [vmem:[#allocation9 + $0x50] sm:$0xf]
        %v8498 = vld [vmem:[#allocation9 + $0x54] sm:$0xf]
        %v8499 = vld [vmem:[#allocation9 + $0x58] sm:$0xf]
        %v8500 = vld [vmem:[#allocation9 + $0x5c] sm:$0xf]
        %v8501 = vld [vmem:[#allocation9 + $0x60] sm:$0xf]
        %v8502 = vld [vmem:[#allocation9 + $0x64] sm:$0xf]
        %v8503 = vld [vmem:[#allocation9 + $0x68] sm:$0xf]
        %v8504 = vld [vmem:[#allocation9 + $0x6c] sm:$0xf]
        %v8505 = vld [vmem:[#allocation9 + $0x70] sm:$0xf]
        %v8506 = vld [vmem:[#allocation9 + $0x74] sm:$0xf]
        %v8507 = vld [vmem:[#allocation9 + $0x78] sm:$0xf]
        %v8508 = vld [vmem:[#allocation9 + $0x7c] sm:$0xf]
        %v8509 = vld [vmem:[#allocation9 + $0x80] sm:$0xf]
        %v8510 = vld [vmem:[#allocation9 + $0x84] sm:$0xf]
        %v8511 = vld [vmem:[#allocation9 + $0x88] sm:$0xf]
        %v8512 = vld [vmem:[#allocation9 + $0x8c] sm:$0xf]
        %v8513 = vld [vmem:[#allocation9 + $0x90] sm:$0xf]
        %v8514 = vld [vmem:[#allocation9 + $0x94] sm:$0xf]
        %v8515 = vld [vmem:[#allocation9 + $0x98] sm:$0xf]
        %v8516 = vld [vmem:[#allocation9 + $0x9c] sm:$0xf]
        %v8517 = vld [vmem:[#allocation9 + $0xa0] sm:$0xf]
        %v8518 = vld [vmem:[#allocation9 + $0xa4] sm:$0xf]
        %v8519 = vld [vmem:[#allocation9 + $0xa8] sm:$0xf]
        %v8520 = vld [vmem:[#allocation9 + $0xac] sm:$0xf]
        %v8521 = vld [vmem:[#allocation9 + $0xb0] sm:$0xf]
        %v8522 = vld [vmem:[#allocation9 + $0xb4] sm:$0xf]
        %v8523 = vld [vmem:[#allocation9 + $0xb8] sm:$0xf]
        %v8524 = vld [vmem:[#allocation9 + $0xbc] sm:$0xf]
        %v8525 = vld [vmem:[#allocation9 + $0xc0] sm:$0xf]
        %v8526 = vld [vmem:[#allocation9 + $0xc4] sm:$0xf]
        %v8527 = vld [vmem:[#allocation9 + $0xc8] sm:$0xf]
        %v8528 = vld [vmem:[#allocation9 + $0xcc] sm:$0xf]
        %v8529 = vld [vmem:[#allocation9 + $0xd0] sm:$0xf]
        %v8530 = vld [vmem:[#allocation9 + $0xd4] sm:$0xf]
        %v8531 = vld [vmem:[#allocation9 + $0xd8] sm:$0xf]
        %v8532 = vld [vmem:[#allocation9 + $0xdc] sm:$0xf]
        %v8533 = vld [vmem:[#allocation9 + $0xe0] sm:$0xf]
        %v8534 = vld [vmem:[#allocation9 + $0xe4] sm:$0xf]
        %v8535 = vld [vmem:[#allocation9 + $0xe8] sm:$0xf]
        %v8536 = vld [vmem:[#allocation9 + $0xec] sm:$0xf]
        %v8537 = vld [vmem:[#allocation9 + $0xf0] sm:$0xf]
        %v8538 = vld [vmem:[#allocation9 + $0xf4] sm:$0xf]
        %v8539 = vld [vmem:[#allocation9 + $0xf8] sm:$0xf]
        %v8540 = vld [vmem:[#allocation9 + $0xfc] sm:$0xf]
        %v8541 = vld [vmem:[#allocation9 + $0x100] sm:$0xf]
        %v8542 = vld [vmem:[#allocation9 + $0x104] sm:$0xf]
        %v8543 = vld [vmem:[#allocation9 + $0x108] sm:$0xf]
        %v8544 = vld [vmem:[#allocation9 + $0x10c] sm:$0xf]
        %v8545 = vld [vmem:[#allocation9 + $0x110] sm:$0xf]
        %v8546 = vld [vmem:[#allocation9 + $0x114] sm:$0xf]
        %v8547 = vld [vmem:[#allocation9 + $0x118] sm:$0xf]
        %v8548 = vld [vmem:[#allocation9 + $0x11c] sm:$0xf]
        %v8549 = vld [vmem:[#allocation9 + $0x120] sm:$0xf]
        %v8550 = vld [vmem:[#allocation9 + $0x124] sm:$0xf]
        %v8551 = vld [vmem:[#allocation9 + $0x128] sm:$0xf]
        %v8552 = vld [vmem:[#allocation9 + $0x12c] sm:$0xf]
        %v8553 = vld [vmem:[#allocation9 + $0x130] sm:$0xf]
        %v8554 = vld [vmem:[#allocation9 + $0x134] sm:$0xf]
        %v8555 = vld [vmem:[#allocation9 + $0x138] sm:$0xf]
        %v8556 = vld [vmem:[#allocation9 + $0x13c] sm:$0xf]
        %v8557 = vld [vmem:[#allocation9 + $0x140] sm:$0xf]
        %v8558 = vld [vmem:[#allocation9 + $0x144] sm:$0xf]
        %v8559 = vld [vmem:[#allocation9 + $0x148] sm:$0xf]
        %v8560 = vld [vmem:[#allocation9 + $0x14c] sm:$0xf]
        %v8561 = vld [vmem:[#allocation9 + $0x150] sm:$0xf]
        %v8562 = vld [vmem:[#allocation9 + $0x154] sm:$0xf]
        %v8563 = vld [vmem:[#allocation9 + $0x158] sm:$0xf]
        %v8564 = vld [vmem:[#allocation9 + $0x15c] sm:$0xf]
        %v8565 = vld [vmem:[#allocation9 + $0x160] sm:$0xf]
        %v8566 = vld [vmem:[#allocation9 + $0x164] sm:$0xf]
        %v8567 = vld [vmem:[#allocation9 + $0x168] sm:$0xf]
        %v8568 = vld [vmem:[#allocation9 + $0x16c] sm:$0xf]
        %v8569 = vld [vmem:[#allocation9 + $0x170] sm:$0xf]
        %v8570 = vld [vmem:[#allocation9 + $0x174] sm:$0xf]
        %v8571 = vld [vmem:[#allocation9 + $0x178] sm:$0xf]
        %v8572 = vld [vmem:[#allocation9 + $0x17c] sm:$0xf]
        %v8573 = vld [vmem:[#allocation9 + $0x180] sm:$0xf]
        %v8574 = vld [vmem:[#allocation9 + $0x184] sm:$0xf]
        %v8575 = vld [vmem:[#allocation9 + $0x188] sm:$0xf]
        %v8576 = vld [vmem:[#allocation9 + $0x18c] sm:$0xf]
        %v8577 = vld [vmem:[#allocation9 + $0x190] sm:$0xf]
        %v8578 = vld [vmem:[#allocation9 + $0x194] sm:$0xf]
        %v8579 = vld [vmem:[#allocation9 + $0x198] sm:$0xf]
        %v8580 = vld [vmem:[#allocation9 + $0x19c] sm:$0xf]
        %v8581 = vld [vmem:[#allocation9 + $0x1a0] sm:$0xf]
        %v8582 = vld [vmem:[#allocation9 + $0x1a4] sm:$0xf]
        %v8583 = vld [vmem:[#allocation9 + $0x1a8] sm:$0xf]
        %v8584 = vld [vmem:[#allocation9 + $0x1ac] sm:$0xf]
        %v8585 = vld [vmem:[#allocation9 + $0x1b0] sm:$0xf]
        %v8586 = vld [vmem:[#allocation9 + $0x1b4] sm:$0xf]
        %v8587 = vld [vmem:[#allocation9 + $0x1b8] sm:$0xf]
        %v8588 = vld [vmem:[#allocation9 + $0x1bc] sm:$0xf]
        %v8589 = vld [vmem:[#allocation9 + $0x1c0] sm:$0xf]
        %v8590 = vld [vmem:[#allocation9 + $0x1c4] sm:$0xf]
        %v8591 = vld [vmem:[#allocation9 + $0x1c8] sm:$0xf]
        %v8592 = vld [vmem:[#allocation9 + $0x1cc] sm:$0xf]
        %v8593 = vld [vmem:[#allocation9 + $0x1d0] sm:$0xf]
        %v8594 = vld [vmem:[#allocation9 + $0x1d4] sm:$0xf]
        %v8595 = vld [vmem:[#allocation9 + $0x1d8] sm:$0xf]
        %v8596 = vld [vmem:[#allocation9 + $0x1dc] sm:$0xf]
        %v8597 = vld [vmem:[#allocation9 + $0x1e0] sm:$0xf]
        %v8598 = vld [vmem:[#allocation9 + $0x1e4] sm:$0xf]
        %v8599 = vld [vmem:[#allocation9 + $0x1e8] sm:$0xf]
        %v8600 = vld [vmem:[#allocation9 + $0x1ec] sm:$0xf]
        %v8601 = vld [vmem:[#allocation9 + $0x1f0] sm:$0xf]
        %v8602 = vld [vmem:[#allocation9 + $0x1f4] sm:$0xf]
        %v8603 = vld [vmem:[#allocation9 + $0x1f8] sm:$0xf]
        %v8604 = vld [vmem:[#allocation9 + $0x1fc] sm:$0xf]
        %v8605 = vld [vmem:[#allocation9 + $0x200] sm:$0xf]
        %v8606 = vld [vmem:[#allocation9 + $0x204] sm:$0xf]
        %v8607 = vld [vmem:[#allocation9 + $0x208] sm:$0xf]
        %v8608 = vld [vmem:[#allocation9 + $0x20c] sm:$0xf]
        %v8609 = vld [vmem:[#allocation9 + $0x210] sm:$0xf]
        %v8610 = vld [vmem:[#allocation9 + $0x214] sm:$0xf]
        %v8611 = vld [vmem:[#allocation9 + $0x218] sm:$0xf]
        %v8612 = vld [vmem:[#allocation9 + $0x21c] sm:$0xf]
        %v8613 = vld [vmem:[#allocation9 + $0x220] sm:$0xf]
        %v8614 = vld [vmem:[#allocation9 + $0x224] sm:$0xf]
        %v8615 = vld [vmem:[#allocation9 + $0x228] sm:$0xf]
        %v8616 = vld [vmem:[#allocation9 + $0x22c] sm:$0xf]
        %v8617 = vld [vmem:[#allocation9 + $0x230] sm:$0xf]
        %v8618 = vld [vmem:[#allocation9 + $0x234] sm:$0xf]
        %v8619 = vld [vmem:[#allocation9 + $0x238] sm:$0xf]
        %v8620 = vld [vmem:[#allocation9 + $0x23c] sm:$0xf]
        %v8621 = vld [vmem:[%s4] sm:$0x1]
        %v8623 = vlaneseq
        %v8624 = vshrl.u32 %v8623, 7
        %v8625 = vsub.s32 0, %v8624
        %v8626 = vrot.slane %v8621, %v8625
        %v8772 = vunpack.c.l.b16 %v8477
        %v8773 = vunpack.c.l.b16 %v8478
        %v8774 = vunpack.c.l.b16 %v8479
        %v8775 = vunpack.c.l.b16 %v8480
        %v8776 = vunpack.c.l.b16 %v8481
        %v8777 = vunpack.c.l.b16 %v8482
        %v8778 = vunpack.c.l.b16 %v8483
        %v8779 = vunpack.c.l.b16 %v8484
        %v8780 = vunpack.c.l.b16 %v8485
        %v8781 = vunpack.c.l.b16 %v8486
        %v8782 = vunpack.c.l.b16 %v8487
        %v8783 = vunpack.c.l.b16 %v8488
        %v8784 = vunpack.c.l.b16 %v8489
        %v8785 = vunpack.c.l.b16 %v8490
        %v8786 = vunpack.c.l.b16 %v8491
        %v8787 = vunpack.c.l.b16 %v8492
        %v8788 = vunpack.c.l.b16 %v8493
        %v8789 = vunpack.c.l.b16 %v8494
        %v8790 = vunpack.c.l.b16 %v8495
        %v8791 = vunpack.c.l.b16 %v8496
        %v8792 = vunpack.c.l.b16 %v8497
        %v8793 = vunpack.c.l.b16 %v8498
        %v8794 = vunpack.c.l.b16 %v8499
        %v8795 = vunpack.c.l.b16 %v8500
        %v8796 = vunpack.c.l.b16 %v8501
        %v8797 = vunpack.c.l.b16 %v8502
        %v8798 = vunpack.c.l.b16 %v8503
        %v8799 = vunpack.c.l.b16 %v8504
        %v8800 = vunpack.c.l.b16 %v8505
        %v8801 = vunpack.c.l.b16 %v8506
        %v8802 = vunpack.c.l.b16 %v8507
        %v8803 = vunpack.c.l.b16 %v8508
        %v8804 = vunpack.c.l.b16 %v8509
        %v8805 = vunpack.c.l.b16 %v8510
        %v8806 = vunpack.c.l.b16 %v8511
        %v8807 = vunpack.c.l.b16 %v8512
        %v8808 = vunpack.c.l.b16 %v8513
        %v8809 = vunpack.c.l.b16 %v8514
        %v8810 = vunpack.c.l.b16 %v8515
        %v8811 = vunpack.c.l.b16 %v8516
        %v8812 = vunpack.c.l.b16 %v8517
        %v8813 = vunpack.c.l.b16 %v8518
        %v8814 = vunpack.c.l.b16 %v8519
        %v8815 = vunpack.c.l.b16 %v8520
        %v8816 = vunpack.c.l.b16 %v8521
        %v8817 = vunpack.c.l.b16 %v8522
        %v8818 = vunpack.c.l.b16 %v8523
        %v8819 = vunpack.c.l.b16 %v8524
        %v8820 = vunpack.c.l.b16 %v8525
        %v8821 = vunpack.c.l.b16 %v8526
        %v8822 = vunpack.c.l.b16 %v8527
        %v8823 = vunpack.c.l.b16 %v8528
        %v8824 = vunpack.c.l.b16 %v8529
        %v8825 = vunpack.c.l.b16 %v8530
        %v8826 = vunpack.c.l.b16 %v8531
        %v8827 = vunpack.c.l.b16 %v8532
        %v8828 = vunpack.c.l.b16 %v8533
        %v8829 = vunpack.c.l.b16 %v8534
        %v8830 = vunpack.c.l.b16 %v8535
        %v8831 = vunpack.c.l.b16 %v8536
        %v8832 = vunpack.c.l.b16 %v8537
        %v8833 = vunpack.c.l.b16 %v8538
        %v8834 = vunpack.c.l.b16 %v8539
        %v8835 = vunpack.c.l.b16 %v8540
        %v8836 = vunpack.c.l.b16 %v8541
        %v8837 = vunpack.c.l.b16 %v8542
        %v8838 = vunpack.c.l.b16 %v8543
        %v8839 = vunpack.c.l.b16 %v8544
        %v8840 = vunpack.c.l.b16 %v8545
        %v8841 = vunpack.c.l.b16 %v8546
        %v8842 = vunpack.c.l.b16 %v8547
        %v8843 = vunpack.c.l.b16 %v8548
        %v8844 = vunpack.c.l.b16 %v8549
        %v8845 = vunpack.c.l.b16 %v8550
        %v8846 = vunpack.c.l.b16 %v8551
        %v8847 = vunpack.c.l.b16 %v8552
        %v8848 = vunpack.c.l.b16 %v8553
        %v8849 = vunpack.c.l.b16 %v8554
        %v8850 = vunpack.c.l.b16 %v8555
        %v8851 = vunpack.c.l.b16 %v8556
        %v8852 = vunpack.c.l.b16 %v8557
        %v8853 = vunpack.c.l.b16 %v8558
        %v8854 = vunpack.c.l.b16 %v8559
        %v8855 = vunpack.c.l.b16 %v8560
        %v8856 = vunpack.c.l.b16 %v8561
        %v8857 = vunpack.c.l.b16 %v8562
        %v8858 = vunpack.c.l.b16 %v8563
        %v8859 = vunpack.c.l.b16 %v8564
        %v8860 = vunpack.c.l.b16 %v8565
        %v8861 = vunpack.c.l.b16 %v8566
        %v8862 = vunpack.c.l.b16 %v8567
        %v8863 = vunpack.c.l.b16 %v8568
        %v8864 = vunpack.c.l.b16 %v8569
        %v8865 = vunpack.c.l.b16 %v8570
        %v8866 = vunpack.c.l.b16 %v8571
        %v8867 = vunpack.c.l.b16 %v8572
        %v8868 = vunpack.c.l.b16 %v8573
        %v8869 = vunpack.c.l.b16 %v8574
        %v8870 = vunpack.c.l.b16 %v8575
        %v8871 = vunpack.c.l.b16 %v8576
        %v8872 = vunpack.c.l.b16 %v8577
        %v8873 = vunpack.c.l.b16 %v8578
        %v8874 = vunpack.c.l.b16 %v8579
        %v8875 = vunpack.c.l.b16 %v8580
        %v8876 = vunpack.c.l.b16 %v8581
        %v8877 = vunpack.c.l.b16 %v8582
        %v8878 = vunpack.c.l.b16 %v8583
        %v8879 = vunpack.c.l.b16 %v8584
        %v8880 = vunpack.c.l.b16 %v8585
        %v8881 = vunpack.c.l.b16 %v8586
        %v8882 = vunpack.c.l.b16 %v8587
        %v8883 = vunpack.c.l.b16 %v8588
        %v8884 = vunpack.c.l.b16 %v8589
        %v8885 = vunpack.c.l.b16 %v8590
        %v8886 = vunpack.c.l.b16 %v8591
        %v8887 = vunpack.c.l.b16 %v8592
        %v8888 = vunpack.c.l.b16 %v8593
        %v8889 = vunpack.c.l.b16 %v8594
        %v8890 = vunpack.c.l.b16 %v8595
        %v8891 = vunpack.c.l.b16 %v8596
        %v8892 = vunpack.c.l.b16 %v8597
        %v8893 = vunpack.c.l.b16 %v8598
        %v8894 = vunpack.c.l.b16 %v8599
        %v8895 = vunpack.c.l.b16 %v8600
        %v8896 = vunpack.c.l.b16 %v8601
        %v8897 = vunpack.c.l.b16 %v8602
        %v8898 = vunpack.c.l.b16 %v8603
        %v8899 = vunpack.c.l.b16 %v8604
        %v8900 = vunpack.c.l.b16 %v8605
        %v8901 = vunpack.c.l.b16 %v8606
        %v8902 = vunpack.c.l.b16 %v8607
        %v8903 = vunpack.c.l.b16 %v8608
        %v8904 = vunpack.c.l.b16 %v8609
        %v8905 = vunpack.c.l.b16 %v8610
        %v8906 = vunpack.c.l.b16 %v8611
        %v8907 = vunpack.c.l.b16 %v8612
        %v8908 = vunpack.c.l.b16 %v8613
        %v8909 = vunpack.c.l.b16 %v8614
        %v8910 = vunpack.c.l.b16 %v8615
        %v8911 = vunpack.c.l.b16 %v8616
        %v8912 = vunpack.c.l.b16 %v8617
        %v8913 = vunpack.c.l.b16 %v8618
        %v8914 = vunpack.c.l.b16 %v8619
        %v8915 = vunpack.c.l.b16 %v8620
        %v8916 = vpack.c.b16 %v8773, %v8772
        %v8917 = vpack.c.b16 %v8775, %v8774
        %v8918 = vpack.c.b16 %v8777, %v8776
        %v8919 = vpack.c.b16 %v8779, %v8778
        %v8920 = vpack.c.b16 %v8781, %v8780
        %v8921 = vpack.c.b16 %v8783, %v8782
        %v8922 = vpack.c.b16 %v8785, %v8784
        %v8923 = vpack.c.b16 %v8787, %v8786
        %v8924 = vpack.c.b16 %v8789, %v8788
        %v8925 = vpack.c.b16 %v8791, %v8790
        %v8926 = vpack.c.b16 %v8793, %v8792
        %v8927 = vpack.c.b16 %v8795, %v8794
        %v8928 = vpack.c.b16 %v8797, %v8796
        %v8929 = vpack.c.b16 %v8799, %v8798
        %v8930 = vpack.c.b16 %v8801, %v8800
        %v8931 = vpack.c.b16 %v8803, %v8802
        %v8932 = vpack.c.b16 %v8805, %v8804
        %v8933 = vpack.c.b16 %v8807, %v8806
        %v8934 = vpack.c.b16 %v8809, %v8808
        %v8935 = vpack.c.b16 %v8811, %v8810
        %v8936 = vpack.c.b16 %v8813, %v8812
        %v8937 = vpack.c.b16 %v8815, %v8814
        %v8938 = vpack.c.b16 %v8817, %v8816
        %v8939 = vpack.c.b16 %v8819, %v8818
        %v8940 = vpack.c.b16 %v8821, %v8820
        %v8941 = vpack.c.b16 %v8823, %v8822
        %v8942 = vpack.c.b16 %v8825, %v8824
        %v8943 = vpack.c.b16 %v8827, %v8826
        %v8944 = vpack.c.b16 %v8829, %v8828
        %v8945 = vpack.c.b16 %v8831, %v8830
        %v8946 = vpack.c.b16 %v8833, %v8832
        %v8947 = vpack.c.b16 %v8835, %v8834
        %v8948 = vpack.c.b16 %v8837, %v8836
        %v8949 = vpack.c.b16 %v8839, %v8838
        %v8950 = vpack.c.b16 %v8841, %v8840
        %v8951 = vpack.c.b16 %v8843, %v8842
        %v8952 = vpack.c.b16 %v8845, %v8844
        %v8953 = vpack.c.b16 %v8847, %v8846
        %v8954 = vpack.c.b16 %v8849, %v8848
        %v8955 = vpack.c.b16 %v8851, %v8850
        %v8956 = vpack.c.b16 %v8853, %v8852
        %v8957 = vpack.c.b16 %v8855, %v8854
        %v8958 = vpack.c.b16 %v8857, %v8856
        %v8959 = vpack.c.b16 %v8859, %v8858
        %v8960 = vpack.c.b16 %v8861, %v8860
        %v8961 = vpack.c.b16 %v8863, %v8862
        %v8962 = vpack.c.b16 %v8865, %v8864
        %v8963 = vpack.c.b16 %v8867, %v8866
        %v8964 = vpack.c.b16 %v8869, %v8868
        %v8965 = vpack.c.b16 %v8871, %v8870
        %v8966 = vpack.c.b16 %v8873, %v8872
        %v8967 = vpack.c.b16 %v8875, %v8874
        %v8968 = vpack.c.b16 %v8877, %v8876
        %v8969 = vpack.c.b16 %v8879, %v8878
        %v8970 = vpack.c.b16 %v8881, %v8880
        %v8971 = vpack.c.b16 %v8883, %v8882
        %v8972 = vpack.c.b16 %v8885, %v8884
        %v8973 = vpack.c.b16 %v8887, %v8886
        %v8974 = vpack.c.b16 %v8889, %v8888
        %v8975 = vpack.c.b16 %v8891, %v8890
        %v8976 = vpack.c.b16 %v8893, %v8892
        %v8977 = vpack.c.b16 %v8895, %v8894
        %v8978 = vpack.c.b16 %v8897, %v8896
        %v8979 = vpack.c.b16 %v8899, %v8898
        %v8980 = vpack.c.b16 %v8901, %v8900
        %v8981 = vpack.c.b16 %v8903, %v8902
        %v8982 = vpack.c.b16 %v8905, %v8904
        %v8983 = vpack.c.b16 %v8907, %v8906
        %v8984 = vpack.c.b16 %v8909, %v8908
        %v8985 = vpack.c.b16 %v8911, %v8910
        %v8986 = vpack.c.b16 %v8913, %v8912
        %v8987 = vpack.c.b16 %v8915, %v8914
        %9060 = vmatprep.subr.bf16.mxu0 0
        %9061 = vmatpush1.bf16.msra.mxu0 %v8916
        %9062 = vmatprep.subr.bf16.mxu0 0
        %9063 = vmatpush1.bf16.msra.mxu0 %v8917
        %9064 = vmatprep.subr.bf16.mxu0 0
        %9065 = vmatpush1.bf16.msra.mxu0 %v8918
        %9066 = vmatprep.subr.bf16.mxu0 0
        %9067 = vmatpush1.bf16.msra.mxu0 %v8919
        %9068 = vmatprep.subr.bf16.mxu0 0
        %9069 = vmatpush1.bf16.msra.mxu0 %v8920
        %9070 = vmatprep.subr.bf16.mxu0 0
        %9071 = vmatpush1.bf16.msra.mxu0 %v8921
        %9072 = vmatprep.subr.bf16.mxu0 0
        %9073 = vmatpush1.bf16.msra.mxu0 %v8922
        %9074 = vmatprep.subr.bf16.mxu0 0
        %9075 = vmatpush1.bf16.msra.mxu0 %v8923
        %9076 = vmatprep.subr.bf16.mxu0 0
        %9077 = vmatpush1.bf16.msra.mxu0 %v8924
        %9078 = vmatprep.subr.bf16.mxu0 0
        %9079 = vmatpush1.bf16.msra.mxu0 %v8925
        %9080 = vmatprep.subr.bf16.mxu0 0
        %9081 = vmatpush1.bf16.msra.mxu0 %v8926
        %9082 = vmatprep.subr.bf16.mxu0 0
        %9083 = vmatpush1.bf16.msra.mxu0 %v8927
        %9084 = vmatprep.subr.bf16.mxu0 0
        %9085 = vmatpush1.bf16.msra.mxu0 %v8928
        %9086 = vmatprep.subr.bf16.mxu0 0
        %9087 = vmatpush1.bf16.msra.mxu0 %v8929
        %9088 = vmatprep.subr.bf16.mxu0 0
        %9089 = vmatpush1.bf16.msra.mxu0 %v8930
        %9090 = vmatprep.subr.bf16.mxu0 0
        %9091 = vmatpush1.bf16.msra.mxu0 %v8931
        %9092 = vmatprep.mubr.bf16.mxu0 %v8190
        %9093 = vmatmul.mubr.bf16.gmra.mrb[0].mxu0 %v8189
        %v9094 = vpop.f32.mrb[0].mxu0
        %v9095 = vadd.f32 %v8626, %v9094
        %v9096 = vpop.f32.mrb[0].mxu0
        %v9097 = vpop.f32.mrb[0].mxu0
        %v9098 = vadd.f32 %v8626, %v9097
        %v9099 = vpop.f32.mrb[0].mxu0
        %9100 = vmatprep.mubr.bf16.mxu0 %v8199
        %9101 = vmatmul.mubr.bf16.gmra.mrb[0].mxu0 %v8198
        %v9102 = vpop.f32.mrb[0].mxu0
        %v9103 = vadd.f32 %v8626, %v9102
        %v9104 = vpop.f32.mrb[0].mxu0
        %v9105 = vpop.f32.mrb[0].mxu0
        %v9106 = vadd.f32 %v8626, %v9105
        %v9107 = vpop.f32.mrb[0].mxu0
        %9108 = vmatprep.mubr.bf16.mxu0 %v8208
        %9109 = vmatmul.mubr.bf16.gmra.mrb[0].mxu0 %v8207
        %v9110 = vpop.f32.mrb[0].mxu0
        %v9111 = vadd.f32 %v8626, %v9110
        %v9112 = vpop.f32.mrb[0].mxu0
        %v9113 = vpop.f32.mrb[0].mxu0
        %v9114 = vadd.f32 %v8626, %v9113
        %v9115 = vpop.f32.mrb[0].mxu0
        %9116 = vmatprep.mubr.bf16.mxu0 %v8217
        %9117 = vmatmul.mubr.bf16.gmra.mrb[0].mxu0 %v8216
        %v9118 = vpop.f32.mrb[0].mxu0
        %v9119 = vadd.f32 %v8626, %v9118
        %v9120 = vpop.f32.mrb[0].mxu0
        %v9121 = vpop.f32.mrb[0].mxu0
        %v9122 = vadd.f32 %v8626, %v9121
        %v9123 = vpop.f32.mrb[0].mxu0
        %9124 = vmatprep.mubr.bf16.mxu0 %v8226
        %9125 = vmatmul.mubr.bf16.gmra.mrb[0].mxu0 %v8225
        %v9126 = vpop.f32.mrb[0].mxu0
        %v9127 = vadd.f32 %v8626, %v9126
        %v9128 = vpop.f32.mrb[0].mxu0
        %v9129 = vpop.f32.mrb[0].mxu0
        %v9130 = vadd.f32 %v8626, %v9129
        %v9131 = vpop.f32.mrb[0].mxu0
        %9132 = vmatprep.mubr.bf16.mxu0 %v8235
        %9133 = vmatmul.mubr.bf16.gmra.mrb[0].mxu0 %v8234
        %v9134 = vpop.f32.mrb[0].mxu0
        %v9135 = vadd.f32 %v8626, %v9134
        %v9136 = vpop.f32.mrb[0].mxu0
        %v9137 = vpop.f32.mrb[0].mxu0
        %v9138 = vadd.f32 %v8626, %v9137
        %v9139 = vpop.f32.mrb[0].mxu0
        %9140 = vmatprep.mubr.bf16.mxu0 %v8244
        %9141 = vmatmul.mubr.bf16.gmra.mrb[0].mxu0 %v8243
        %v9142 = vpop.f32.mrb[0].mxu0
        %v9143 = vadd.f32 %v8626, %v9142
        %v9144 = vpop.f32.mrb[0].mxu0
        %v9145 = vpop.f32.mrb[0].mxu0
        %v9146 = vadd.f32 %v8626, %v9145
        %v9147 = vpop.f32.mrb[0].mxu0
        %9148 = vmatprep.mubr.bf16.mxu0 %v8253
        %9149 = vmatmul.mubr.bf16.gmra.mrb[0].mxu0 %v8252
        %v9150 = vpop.f32.mrb[0].mxu0
        %v9151 = vadd.f32 %v8626, %v9150
        %v9152 = vpop.f32.mrb[0].mxu0
        %v9153 = vpop.f32.mrb[0].mxu0
        %v9154 = vadd.f32 %v8626, %v9153
        %v9155 = vpop.f32.mrb[0].mxu0
        %9156 = vmatprep.mubr.bf16.mxu0 %v8262
        %9157 = vmatmul.mubr.bf16.gmra.mrb[0].mxu0 %v8261
        %v9158 = vpop.f32.mrb[0].mxu0
        %v9159 = vadd.f32 %v8626, %v9158
        %v9160 = vpop.f32.mrb[0].mxu0
        %v9161 = vpop.f32.mrb[0].mxu0
        %v9162 = vadd.f32 %v8626, %v9161
        %v9163 = vpop.f32.mrb[0].mxu0
        %9164 = vmatprep.mubr.bf16.mxu0 %v8271
        %9165 = vmatmul.mubr.bf16.gmra.mrb[0].mxu0 %v8270
        %v9166 = vpop.f32.mrb[0].mxu0
        %v9167 = vadd.f32 %v8626, %v9166
        %v9168 = vpop.f32.mrb[0].mxu0
        %v9169 = vpop.f32.mrb[0].mxu0
        %v9170 = vadd.f32 %v8626, %v9169
        %v9171 = vpop.f32.mrb[0].mxu0
        %9172 = vmatprep.mubr.bf16.mxu0 %v8280
        %9173 = vmatmul.mubr.bf16.gmra.mrb[0].mxu0 %v8279
        %v9174 = vpop.f32.mrb[0].mxu0
        %v9175 = vadd.f32 %v8626, %v9174
        %v9176 = vpop.f32.mrb[0].mxu0
        %v9177 = vpop.f32.mrb[0].mxu0
        %v9178 = vadd.f32 %v8626, %v9177
        %v9179 = vpop.f32.mrb[0].mxu0
        %9180 = vmatprep.mubr.bf16.mxu0 %v8289
        %9181 = vmatmul.mubr.bf16.gmra.mrb[0].mxu0 %v8288
        %v9182 = vpop.f32.mrb[0].mxu0
        %v9183 = vadd.f32 %v8626, %v9182
        %v9184 = vpop.f32.mrb[0].mxu0
        %v9185 = vpop.f32.mrb[0].mxu0
        %v9186 = vadd.f32 %v8626, %v9185
        %v9187 = vpop.f32.mrb[0].mxu0
        %9188 = vmatprep.mubr.bf16.mxu0 %v8298
        %9189 = vmatmul.mubr.bf16.gmra.mrb[0].mxu0 %v8297
        %v9190 = vpop.f32.mrb[0].mxu0
        %v9191 = vadd.f32 %v8626, %v9190
        %v9192 = vpop.f32.mrb[0].mxu0
        %v9193 = vpop.f32.mrb[0].mxu0
        %v9194 = vadd.f32 %v8626, %v9193
        %v9195 = vpop.f32.mrb[0].mxu0
        %9196 = vmatprep.mubr.bf16.mxu0 %v8307
        %9197 = vmatmul.mubr.bf16.gmra.mrb[0].mxu0 %v8306
        %v9198 = vpop.f32.mrb[0].mxu0
        %v9199 = vadd.f32 %v8626, %v9198
        %v9200 = vpop.f32.mrb[0].mxu0
        %v9201 = vpop.f32.mrb[0].mxu0
        %v9202 = vadd.f32 %v8626, %v9201
        %v9203 = vpop.f32.mrb[0].mxu0
        %9204 = vmatprep.mubr.bf16.mxu0 %v8316
        %9205 = vmatmul.mubr.bf16.gmra.mrb[0].mxu0 %v8315
        %v9206 = vpop.f32.mrb[0].mxu0
        %v9207 = vadd.f32 %v8626, %v9206
        %v9208 = vpop.f32.mrb[0].mxu0
        %v9209 = vpop.f32.mrb[0].mxu0
        %v9210 = vadd.f32 %v8626, %v9209
        %v9211 = vpop.f32.mrb[0].mxu0
        %9212 = vmatprep.mubr.bf16.mxu0 %v8325
        %9213 = vmatmul.mubr.bf16.gmra.mrb[0].mxu0 %v8324
        %v9214 = vpop.f32.mrb[0].mxu0
        %v9215 = vadd.f32 %v8626, %v9214
        %v9216 = vpop.f32.mrb[0].mxu0
        %v9217 = vpop.f32.mrb[0].mxu0
        %v9218 = vadd.f32 %v8626, %v9217
        %v9219 = vpop.f32.mrb[0].mxu0
        %9220 = vmatprep.mubr.bf16.mxu0 %v8334
        %9221 = vmatmul.mubr.bf16.gmra.mrb[0].mxu0 %v8333
        %v9222 = vpop.f32.mrb[0].mxu0
        %v9223 = vadd.f32 %v8626, %v9222
        %v9224 = vpop.f32.mrb[0].mxu0
        %v9225 = vpop.f32.mrb[0].mxu0
        %v9226 = vadd.f32 %v8626, %v9225
        %v9227 = vpop.f32.mrb[0].mxu0
        %9228 = vmatprep.mubr.bf16.mxu0 %v8343
        %9229 = vmatmul.mubr.bf16.gmra.mrb[0].mxu0 %v8342
        %v9230 = vpop.f32.mrb[0].mxu0
        %v9231 = vadd.f32 %v8626, %v9230
        %v9232 = vpop.f32.mrb[0].mxu0
        %v9233 = vpop.f32.mrb[0].mxu0
        %v9234 = vadd.f32 %v8626, %v9233
        %v9235 = vpop.f32.mrb[0].mxu0
        %9236 = vmatprep.mubr.bf16.mxu0 %v8352
        %9237 = vmatmul.mubr.bf16.gmra.mrb[0].mxu0 %v8351
        %v9238 = vpop.f32.mrb[0].mxu0
        %v9239 = vadd.f32 %v8626, %v9238
        %v9240 = vpop.f32.mrb[0].mxu0
        %v9241 = vpop.f32.mrb[0].mxu0
        %v9242 = vadd.f32 %v8626, %v9241
        %v9243 = vpop.f32.mrb[0].mxu0
        %9244 = vmatprep.mubr.bf16.mxu0 %v8361
        %9245 = vmatmul.mubr.bf16.gmra.mrb[0].mxu0 %v8360
        %v9246 = vpop.f32.mrb[0].mxu0
        %v9247 = vadd.f32 %v8626, %v9246
        %v9248 = vpop.f32.mrb[0].mxu0
        %v9249 = vpop.f32.mrb[0].mxu0
        %v9250 = vadd.f32 %v8626, %v9249
        %v9251 = vpop.f32.mrb[0].mxu0
        %9252 = vmatprep.mubr.bf16.mxu0 %v8370
        %9253 = vmatmul.mubr.bf16.gmra.mrb[0].mxu0 %v8369
        %v9254 = vpop.f32.mrb[0].mxu0
        %v9255 = vadd.f32 %v8626, %v9254
        %v9256 = vpop.f32.mrb[0].mxu0
        %v9257 = vpop.f32.mrb[0].mxu0
        %v9258 = vadd.f32 %v8626, %v9257
        %v9259 = vpop.f32.mrb[0].mxu0
        %9260 = vmatprep.mubr.bf16.mxu0 %v8379
        %9261 = vmatmul.mubr.bf16.gmra.mrb[0].mxu0 %v8378
        %v9262 = vpop.f32.mrb[0].mxu0
        %v9263 = vadd.f32 %v8626, %v9262
        %v9264 = vpop.f32.mrb[0].mxu0
        %v9265 = vpop.f32.mrb[0].mxu0
        %v9266 = vadd.f32 %v8626, %v9265
        %v9267 = vpop.f32.mrb[0].mxu0
        %9268 = vmatprep.mubr.bf16.mxu0 %v8388
        %9269 = vmatmul.mubr.bf16.gmra.mrb[0].mxu0 %v8387
        %v9270 = vpop.f32.mrb[0].mxu0
        %v9271 = vadd.f32 %v8626, %v9270
        %v9272 = vpop.f32.mrb[0].mxu0
        %v9273 = vpop.f32.mrb[0].mxu0
        %v9274 = vadd.f32 %v8626, %v9273
        %v9275 = vpop.f32.mrb[0].mxu0
        %9276 = vmatprep.mubr.bf16.mxu0 %v8397
        %9277 = vmatmul.mubr.bf16.gmra.mrb[0].mxu0 %v8396
        %v9278 = vpop.f32.mrb[0].mxu0
        %v9279 = vadd.f32 %v8626, %v9278
        %v9280 = vpop.f32.mrb[0].mxu0
        %v9281 = vpop.f32.mrb[0].mxu0
        %v9282 = vadd.f32 %v8626, %v9281
        %v9283 = vpop.f32.mrb[0].mxu0
        %9284 = vmatprep.mubr.bf16.mxu0 %v8406
        %9285 = vmatmul.mubr.bf16.gmra.mrb[0].mxu0 %v8405
        %v9286 = vpop.f32.mrb[0].mxu0
        %v9287 = vadd.f32 %v8626, %v9286
        %v9288 = vpop.f32.mrb[0].mxu0
        %v9289 = vpop.f32.mrb[0].mxu0
        %v9290 = vadd.f32 %v8626, %v9289
        %v9291 = vpop.f32.mrb[0].mxu0
        %9292 = vmatprep.mubr.bf16.mxu0 %v8415
        %9293 = vmatmul.mubr.bf16.gmra.mrb[0].mxu0 %v8414
        %v9294 = vpop.f32.mrb[0].mxu0
        %v9295 = vadd.f32 %v8626, %v9294
        %v9296 = vpop.f32.mrb[0].mxu0
        %v9297 = vpop.f32.mrb[0].mxu0
        %v9298 = vadd.f32 %v8626, %v9297
        %v9299 = vpop.f32.mrb[0].mxu0
        %9300 = vmatprep.mubr.bf16.mxu0 %v8424
        %9301 = vmatmul.mubr.bf16.gmra.mrb[0].mxu0 %v8423
        %v9302 = vpop.f32.mrb[0].mxu0
        %v9303 = vadd.f32 %v8626, %v9302
        %v9304 = vpop.f32.mrb[0].mxu0
        %v9305 = vpop.f32.mrb[0].mxu0
        %v9306 = vadd.f32 %v8626, %v9305
        %v9307 = vpop.f32.mrb[0].mxu0
        %9308 = vmatprep.mubr.bf16.mxu0 %v8433
        %9309 = vmatmul.mubr.bf16.gmra.mrb[0].mxu0 %v8432
        %v9310 = vpop.f32.mrb[0].mxu0
        %v9311 = vadd.f32 %v8626, %v9310
        %v9312 = vpop.f32.mrb[0].mxu0
        %v9313 = vpop.f32.mrb[0].mxu0
        %v9314 = vadd.f32 %v8626, %v9313
        %v9315 = vpop.f32.mrb[0].mxu0
        %9316 = vmatprep.mubr.bf16.mxu0 %v8442
        %9317 = vmatmul.mubr.bf16.gmra.mrb[0].mxu0 %v8441
        %v9318 = vpop.f32.mrb[0].mxu0
        %v9319 = vadd.f32 %v8626, %v9318
        %v9320 = vpop.f32.mrb[0].mxu0
        %v9321 = vpop.f32.mrb[0].mxu0
        %v9322 = vadd.f32 %v8626, %v9321
        %v9323 = vpop.f32.mrb[0].mxu0
        %9324 = vmatprep.mubr.bf16.mxu0 %v8451
        %9325 = vmatmul.mubr.bf16.gmra.mrb[0].mxu0 %v8450
        %v9326 = vpop.f32.mrb[0].mxu0
        %v9327 = vadd.f32 %v8626, %v9326
        %v9328 = vpop.f32.mrb[0].mxu0
        %v9329 = vpop.f32.mrb[0].mxu0
        %v9330 = vadd.f32 %v8626, %v9329
        %v9331 = vpop.f32.mrb[0].mxu0
        %9332 = vmatprep.mubr.bf16.mxu0 %v8460
        %9333 = vmatmul.mubr.bf16.gmra.mrb[0].mxu0 %v8459
        %v9334 = vpop.f32.mrb[0].mxu0
        %v9335 = vadd.f32 %v8626, %v9334
        %v9336 = vpop.f32.mrb[0].mxu0
        %v9337 = vpop.f32.mrb[0].mxu0
        %v9338 = vadd.f32 %v8626, %v9337
        %v9339 = vpop.f32.mrb[0].mxu0
        %9340 = vmatprep.mubr.bf16.mxu0 %v8469
        %9341 = vmatmul.mubr.bf16.gmra.mrb[0].mxu0 %v8468
        %v9342 = vpop.f32.mrb[0].mxu0
        %v9343 = vadd.f32 %v8626, %v9342
        %v9344 = vpop.f32.mrb[0].mxu0
        %v9345 = vpop.f32.mrb[0].mxu0
        %v9346 = vadd.f32 %v8626, %v9345
        %v9347 = vpop.f32.mrb[0].mxu0
        %9348 = vdwg.mxu0
        %9349 = vmatprep.subr.bf16.mxu0 0
        %9350 = vmatpush1.bf16.msra.mxu0 %v8932
        %9351 = vmatprep.subr.bf16.mxu0 0
        %9352 = vmatpush1.bf16.msra.mxu0 %v8933
        %9353 = vmatprep.subr.bf16.mxu0 0
        %9354 = vmatpush1.bf16.msra.mxu0 %v8934
        %9355 = vmatprep.subr.bf16.mxu0 0
        %9356 = vmatpush1.bf16.msra.mxu0 %v8935
        %9357 = vmatprep.subr.bf16.mxu0 0
        %9358 = vmatpush1.bf16.msra.mxu0 %v8936
        %9359 = vmatprep.subr.bf16.mxu0 0
        %9360 = vmatpush1.bf16.msra.mxu0 %v8937
        %9361 = vmatprep.subr.bf16.mxu0 0
        %9362 = vmatpush1.bf16.msra.mxu0 %v8938
        %9363 = vmatprep.subr.bf16.mxu0 0
        %9364 = vmatpush1.bf16.msra.mxu0 %v8939
        %9365 = vmatprep.subr.bf16.mxu0 0
        %9366 = vmatpush1.bf16.msra.mxu0 %v8940
        %9367 = vmatprep.subr.bf16.mxu0 0
        %9368 = vmatpush1.bf16.msra.mxu0 %v8941
        %9369 = vmatprep.subr.bf16.mxu0 0
        %9370 = vmatpush1.bf16.msra.mxu0 %v8942
        %9371 = vmatprep.subr.bf16.mxu0 0
        %9372 = vmatpush1.bf16.msra.mxu0 %v8943
        %9373 = vmatprep.subr.bf16.mxu0 0
        %9374 = vmatpush1.bf16.msra.mxu0 %v8944
        %9375 = vmatprep.subr.bf16.mxu0 0
        %9376 = vmatpush1.bf16.msra.mxu0 %v8945
        %9377 = vmatprep.subr.bf16.mxu0 0
        %9378 = vmatpush1.bf16.msra.mxu0 %v8946
        %9379 = vmatprep.subr.bf16.mxu0 0
        %9380 = vmatpush1.bf16.msra.mxu0 %v8947
        %9381 = vmatprep.mubr.bf16.mxu0 %v8192
        %9382 = vmatmul.mubr.bf16.gmra.mrb[0].mxu0 %v8191
        %v9383 = vpop.f32.mrb[0].mxu0
        %v9384 = vadd.f32 %v9095, %v9383
        %v9385 = vpop.f32.mrb[0].mxu0
        %v9386 = vpop.f32.mrb[0].mxu0
        %v9387 = vadd.f32 %v9098, %v9386
        %v9388 = vpop.f32.mrb[0].mxu0
        %9389 = vmatprep.mubr.bf16.mxu0 %v8201
        %9390 = vmatmul.mubr.bf16.gmra.mrb[0].mxu0 %v8200
        %v9391 = vpop.f32.mrb[0].mxu0
        %v9392 = vadd.f32 %v9103, %v9391
        %v9393 = vpop.f32.mrb[0].mxu0
        %v9394 = vpop.f32.mrb[0].mxu0
        %v9395 = vadd.f32 %v9106, %v9394
        %v9396 = vpop.f32.mrb[0].mxu0
        %9397 = vmatprep.mubr.bf16.mxu0 %v8210
        %9398 = vmatmul.mubr.bf16.gmra.mrb[0].mxu0 %v8209
        %v9399 = vpop.f32.mrb[0].mxu0
        %v9400 = vadd.f32 %v9111, %v9399
        %v9401 = vpop.f32.mrb[0].mxu0
        %v9402 = vpop.f32.mrb[0].mxu0
        %v9403 = vadd.f32 %v9114, %v9402
        %v9404 = vpop.f32.mrb[0].mxu0
        %9405 = vmatprep.mubr.bf16.mxu0 %v8219
        %9406 = vmatmul.mubr.bf16.gmra.mrb[0].mxu0 %v8218
        %v9407 = vpop.f32.mrb[0].mxu0
        %v9408 = vadd.f32 %v9119, %v9407
        %v9409 = vpop.f32.mrb[0].mxu0
        %v9410 = vpop.f32.mrb[0].mxu0
        %v9411 = vadd.f32 %v9122, %v9410
        %v9412 = vpop.f32.mrb[0].mxu0
        %9413 = vmatprep.mubr.bf16.mxu0 %v8228
        %9414 = vmatmul.mubr.bf16.gmra.mrb[0].mxu0 %v8227
        %v9415 = vpop.f32.mrb[0].mxu0
        %v9416 = vadd.f32 %v9127, %v9415
        %v9417 = vpop.f32.mrb[0].mxu0
        %v9418 = vpop.f32.mrb[0].mxu0
        %v9419 = vadd.f32 %v9130, %v9418
        %v9420 = vpop.f32.mrb[0].mxu0
        %9421 = vmatprep.mubr.bf16.mxu0 %v8237
        %9422 = vmatmul.mubr.bf16.gmra.mrb[0].mxu0 %v8236
        %v9423 = vpop.f32.mrb[0].mxu0
        %v9424 = vadd.f32 %v9135, %v9423
        %v9425 = vpop.f32.mrb[0].mxu0
        %v9426 = vpop.f32.mrb[0].mxu0
        %v9427 = vadd.f32 %v9138, %v9426
        %v9428 = vpop.f32.mrb[0].mxu0
        %9429 = vmatprep.mubr.bf16.mxu0 %v8246
        %9430 = vmatmul.mubr.bf16.gmra.mrb[0].mxu0 %v8245
        %v9431 = vpop.f32.mrb[0].mxu0
        %v9432 = vadd.f32 %v9143, %v9431
        %v9433 = vpop.f32.mrb[0].mxu0
        %v9434 = vpop.f32.mrb[0].mxu0
        %v9435 = vadd.f32 %v9146, %v9434
        %v9436 = vpop.f32.mrb[0].mxu0
        %9437 = vmatprep.mubr.bf16.mxu0 %v8255
        %9438 = vmatmul.mubr.bf16.gmra.mrb[0].mxu0 %v8254
        %v9439 = vpop.f32.mrb[0].mxu0
        %v9440 = vadd.f32 %v9151, %v9439
        %v9441 = vpop.f32.mrb[0].mxu0
        %v9442 = vpop.f32.mrb[0].mxu0
        %v9443 = vadd.f32 %v9154, %v9442
        %v9444 = vpop.f32.mrb[0].mxu0
        %9445 = vmatprep.mubr.bf16.mxu0 %v8264
        %9446 = vmatmul.mubr.bf16.gmra.mrb[0].mxu0 %v8263
        %v9447 = vpop.f32.mrb[0].mxu0
        %v9448 = vadd.f32 %v9159, %v9447
        %v9449 = vpop.f32.mrb[0].mxu0
        %v9450 = vpop.f32.mrb[0].mxu0
        %v9451 = vadd.f32 %v9162, %v9450
        %v9452 = vpop.f32.mrb[0].mxu0
        %9453 = vmatprep.mubr.bf16.mxu0 %v8273
        %9454 = vmatmul.mubr.bf16.gmra.mrb[0].mxu0 %v8272
        %v9455 = vpop.f32.mrb[0].mxu0
        %v9456 = vadd.f32 %v9167, %v9455
        %v9457 = vpop.f32.mrb[0].mxu0
        %v9458 = vpop.f32.mrb[0].mxu0
        %v9459 = vadd.f32 %v9170, %v9458
        %v9460 = vpop.f32.mrb[0].mxu0
        %9461 = vmatprep.mubr.bf16.mxu0 %v8282
        %9462 = vmatmul.mubr.bf16.gmra.mrb[0].mxu0 %v8281
        %v9463 = vpop.f32.mrb[0].mxu0
        %v9464 = vadd.f32 %v9175, %v9463
        %v9465 = vpop.f32.mrb[0].mxu0
        %v9466 = vpop.f32.mrb[0].mxu0
        %v9467 = vadd.f32 %v9178, %v9466
        %v9468 = vpop.f32.mrb[0].mxu0
        %9469 = vmatprep.mubr.bf16.mxu0 %v8291
        %9470 = vmatmul.mubr.bf16.gmra.mrb[0].mxu0 %v8290
        %v9471 = vpop.f32.mrb[0].mxu0
        %v9472 = vadd.f32 %v9183, %v9471
        %v9473 = vpop.f32.mrb[0].mxu0
        %v9474 = vpop.f32.mrb[0].mxu0
        %v9475 = vadd.f32 %v9186, %v9474
        %v9476 = vpop.f32.mrb[0].mxu0
        %9477 = vmatprep.mubr.bf16.mxu0 %v8300
        %9478 = vmatmul.mubr.bf16.gmra.mrb[0].mxu0 %v8299
        %v9479 = vpop.f32.mrb[0].mxu0
        %v9480 = vadd.f32 %v9191, %v9479
        %v9481 = vpop.f32.mrb[0].mxu0
        %v9482 = vpop.f32.mrb[0].mxu0
        %v9483 = vadd.f32 %v9194, %v9482
        %v9484 = vpop.f32.mrb[0].mxu0
        %9485 = vmatprep.mubr.bf16.mxu0 %v8309
        %9486 = vmatmul.mubr.bf16.gmra.mrb[0].mxu0 %v8308
        %v9487 = vpop.f32.mrb[0].mxu0
        %v9488 = vadd.f32 %v9199, %v9487
        %v9489 = vpop.f32.mrb[0].mxu0
        %v9490 = vpop.f32.mrb[0].mxu0
        %v9491 = vadd.f32 %v9202, %v9490
        %v9492 = vpop.f32.mrb[0].mxu0
        %9493 = vmatprep.mubr.bf16.mxu0 %v8318
        %9494 = vmatmul.mubr.bf16.gmra.mrb[0].mxu0 %v8317
        %v9495 = vpop.f32.mrb[0].mxu0
        %v9496 = vadd.f32 %v9207, %v9495
        %v9497 = vpop.f32.mrb[0].mxu0
        %v9498 = vpop.f32.mrb[0].mxu0
        %v9499 = vadd.f32 %v9210, %v9498
        %v9500 = vpop.f32.mrb[0].mxu0
        %9501 = vmatprep.mubr.bf16.mxu0 %v8327
        %9502 = vmatmul.mubr.bf16.gmra.mrb[0].mxu0 %v8326
        %v9503 = vpop.f32.mrb[0].mxu0
        %v9504 = vadd.f32 %v9215, %v9503
        %v9505 = vpop.f32.mrb[0].mxu0
        %v9506 = vpop.f32.mrb[0].mxu0
        %v9507 = vadd.f32 %v9218, %v9506
        %v9508 = vpop.f32.mrb[0].mxu0
        %9509 = vmatprep.mubr.bf16.mxu0 %v8336
        %9510 = vmatmul.mubr.bf16.gmra.mrb[0].mxu0 %v8335
        %v9511 = vpop.f32.mrb[0].mxu0
        %v9512 = vadd.f32 %v9223, %v9511
        %v9513 = vpop.f32.mrb[0].mxu0
        %v9514 = vpop.f32.mrb[0].mxu0
        %v9515 = vadd.f32 %v9226, %v9514
        %v9516 = vpop.f32.mrb[0].mxu0
        %9517 = vmatprep.mubr.bf16.mxu0 %v8345
        %9518 = vmatmul.mubr.bf16.gmra.mrb[0].mxu0 %v8344
        %v9519 = vpop.f32.mrb[0].mxu0
        %v9520 = vadd.f32 %v9231, %v9519
        %v9521 = vpop.f32.mrb[0].mxu0
        %v9522 = vpop.f32.mrb[0].mxu0
        %v9523 = vadd.f32 %v9234, %v9522
        %v9524 = vpop.f32.mrb[0].mxu0
        %9525 = vmatprep.mubr.bf16.mxu0 %v8354
        %9526 = vmatmul.mubr.bf16.gmra.mrb[0].mxu0 %v8353
        %v9527 = vpop.f32.mrb[0].mxu0
        %v9528 = vadd.f32 %v9239, %v9527
        %v9529 = vpop.f32.mrb[0].mxu0
        %v9530 = vpop.f32.mrb[0].mxu0
        %v9531 = vadd.f32 %v9242, %v9530
        %v9532 = vpop.f32.mrb[0].mxu0
        %9533 = vmatprep.mubr.bf16.mxu0 %v8363
        %9534 = vmatmul.mubr.bf16.gmra.mrb[0].mxu0 %v8362
        %v9535 = vpop.f32.mrb[0].mxu0
        %v9536 = vadd.f32 %v9247, %v9535
        %v9537 = vpop.f32.mrb[0].mxu0
        %v9538 = vpop.f32.mrb[0].mxu0
        %v9539 = vadd.f32 %v9250, %v9538
        %v9540 = vpop.f32.mrb[0].mxu0
        %9541 = vmatprep.mubr.bf16.mxu0 %v8372
        %9542 = vmatmul.mubr.bf16.gmra.mrb[0].mxu0 %v8371
        %v9543 = vpop.f32.mrb[0].mxu0
        %v9544 = vadd.f32 %v9255, %v9543
        %v9545 = vpop.f32.mrb[0].mxu0
        %v9546 = vpop.f32.mrb[0].mxu0
        %v9547 = vadd.f32 %v9258, %v9546
        %v9548 = vpop.f32.mrb[0].mxu0
        %9549 = vmatprep.mubr.bf16.mxu0 %v8381
        %9550 = vmatmul.mubr.bf16.gmra.mrb[0].mxu0 %v8380
        %v9551 = vpop.f32.mrb[0].mxu0
        %v9552 = vadd.f32 %v9263, %v9551
        %v9553 = vpop.f32.mrb[0].mxu0
        %v9554 = vpop.f32.mrb[0].mxu0
        %v9555 = vadd.f32 %v9266, %v9554
        %v9556 = vpop.f32.mrb[0].mxu0
        %9557 = vmatprep.mubr.bf16.mxu0 %v8390
        %9558 = vmatmul.mubr.bf16.gmra.mrb[0].mxu0 %v8389
        %v9559 = vpop.f32.mrb[0].mxu0
        %v9560 = vadd.f32 %v9271, %v9559
        %v9561 = vpop.f32.mrb[0].mxu0
        %v9562 = vpop.f32.mrb[0].mxu0
        %v9563 = vadd.f32 %v9274, %v9562
        %v9564 = vpop.f32.mrb[0].mxu0
        %9565 = vmatprep.mubr.bf16.mxu0 %v8399
        %9566 = vmatmul.mubr.bf16.gmra.mrb[0].mxu0 %v8398
        %v9567 = vpop.f32.mrb[0].mxu0
        %v9568 = vadd.f32 %v9279, %v9567
        %v9569 = vpop.f32.mrb[0].mxu0
        %v9570 = vpop.f32.mrb[0].mxu0
        %v9571 = vadd.f32 %v9282, %v9570
        %v9572 = vpop.f32.mrb[0].mxu0
        %9573 = vmatprep.mubr.bf16.mxu0 %v8408
        %9574 = vmatmul.mubr.bf16.gmra.mrb[0].mxu0 %v8407
        %v9575 = vpop.f32.mrb[0].mxu0
        %v9576 = vadd.f32 %v9287, %v9575
        %v9577 = vpop.f32.mrb[0].mxu0
        %v9578 = vpop.f32.mrb[0].mxu0
        %v9579 = vadd.f32 %v9290, %v9578
        %v9580 = vpop.f32.mrb[0].mxu0
        %9581 = vmatprep.mubr.bf16.mxu0 %v8417
        %9582 = vmatmul.mubr.bf16.gmra.mrb[0].mxu0 %v8416
        %v9583 = vpop.f32.mrb[0].mxu0
        %v9584 = vadd.f32 %v9295, %v9583
        %v9585 = vpop.f32.mrb[0].mxu0
        %v9586 = vpop.f32.mrb[0].mxu0
        %v9587 = vadd.f32 %v9298, %v9586
        %v9588 = vpop.f32.mrb[0].mxu0
        %9589 = vmatprep.mubr.bf16.mxu0 %v8426
        %9590 = vmatmul.mubr.bf16.gmra.mrb[0].mxu0 %v8425
        %v9591 = vpop.f32.mrb[0].mxu0
        %v9592 = vadd.f32 %v9303, %v9591
        %v9593 = vpop.f32.mrb[0].mxu0
        %v9594 = vpop.f32.mrb[0].mxu0
        %v9595 = vadd.f32 %v9306, %v9594
        %v9596 = vpop.f32.mrb[0].mxu0
        %9597 = vmatprep.mubr.bf16.mxu0 %v8435
        %9598 = vmatmul.mubr.bf16.gmra.mrb[0].mxu0 %v8434
        %v9599 = vpop.f32.mrb[0].mxu0
        %v9600 = vadd.f32 %v9311, %v9599
        %v9601 = vpop.f32.mrb[0].mxu0
        %v9602 = vpop.f32.mrb[0].mxu0
        %v9603 = vadd.f32 %v9314, %v9602
        %v9604 = vpop.f32.mrb[0].mxu0
        %9605 = vmatprep.mubr.bf16.mxu0 %v8444
        %9606 = vmatmul.mubr.bf16.gmra.mrb[0].mxu0 %v8443
        %v9607 = vpop.f32.mrb[0].mxu0
        %v9608 = vadd.f32 %v9319, %v9607
        %v9609 = vpop.f32.mrb[0].mxu0
        %v9610 = vpop.f32.mrb[0].mxu0
        %v9611 = vadd.f32 %v9322, %v9610
        %v9612 = vpop.f32.mrb[0].mxu0
        %9613 = vmatprep.mubr.bf16.mxu0 %v8453
        %9614 = vmatmul.mubr.bf16.gmra.mrb[0].mxu0 %v8452
        %v9615 = vpop.f32.mrb[0].mxu0
        %v9616 = vadd.f32 %v9327, %v9615
        %v9617 = vpop.f32.mrb[0].mxu0
        %v9618 = vpop.f32.mrb[0].mxu0
        %v9619 = vadd.f32 %v9330, %v9618
        %v9620 = vpop.f32.mrb[0].mxu0
        %9621 = vmatprep.mubr.bf16.mxu0 %v8462
        %9622 = vmatmul.mubr.bf16.gmra.mrb[0].mxu0 %v8461
        %v9623 = vpop.f32.mrb[0].mxu0
        %v9624 = vadd.f32 %v9335, %v9623
        %v9625 = vpop.f32.mrb[0].mxu0
        %v9626 = vpop.f32.mrb[0].mxu0
        %v9627 = vadd.f32 %v9338, %v9626
        %v9628 = vpop.f32.mrb[0].mxu0
        %9629 = vmatprep.mubr.bf16.mxu0 %v8471
        %9630 = vmatmul.mubr.bf16.gmra.mrb[0].mxu0 %v8470
        %v9631 = vpop.f32.mrb[0].mxu0
        %v9632 = vadd.f32 %v9343, %v9631
        %v9633 = vpop.f32.mrb[0].mxu0
        %v9634 = vpop.f32.mrb[0].mxu0
        %v9635 = vadd.f32 %v9346, %v9634
        %v9636 = vpop.f32.mrb[0].mxu0
        %9637 = vdwg.mxu0
        %9638 = vmatprep.subr.bf16.mxu0 0
        %9639 = vmatpush1.bf16.msra.mxu0 %v8948
        %9640 = vmatprep.subr.bf16.mxu0 0
        %9641 = vmatpush1.bf16.msra.mxu0 %v8949
        %9642 = vmatprep.subr.bf16.mxu0 0
        %9643 = vmatpush1.bf16.msra.mxu0 %v8950
        %9644 = vmatprep.subr.bf16.mxu0 0
        %9645 = vmatpush1.bf16.msra.mxu0 %v8951
        %9646 = vmatprep.subr.bf16.mxu0 0
        %9647 = vmatpush1.bf16.msra.mxu0 %v8952
        %9648 = vmatprep.subr.bf16.mxu0 0
        %9649 = vmatpush1.bf16.msra.mxu0 %v8953
        %9650 = vmatprep.subr.bf16.mxu0 0
        %9651 = vmatpush1.bf16.msra.mxu0 %v8954
        %9652 = vmatprep.subr.bf16.mxu0 0
        %9653 = vmatpush1.bf16.msra.mxu0 %v8955
        %9654 = vmatprep.subr.bf16.mxu0 0
        %9655 = vmatpush1.bf16.msra.mxu0 %v8956
        %9656 = vmatprep.subr.bf16.mxu0 0
        %9657 = vmatpush1.bf16.msra.mxu0 %v8957
        %9658 = vmatprep.subr.bf16.mxu0 0
        %9659 = vmatpush1.bf16.msra.mxu0 %v8958
        %9660 = vmatprep.subr.bf16.mxu0 0
        %9661 = vmatpush1.bf16.msra.mxu0 %v8959
        %9662 = vmatprep.subr.bf16.mxu0 0
        %9663 = vmatpush1.bf16.msra.mxu0 %v8960
        %9664 = vmatprep.subr.bf16.mxu0 0
        %9665 = vmatpush1.bf16.msra.mxu0 %v8961
        %9666 = vmatprep.subr.bf16.mxu0 0
        %9667 = vmatpush1.bf16.msra.mxu0 %v8962
        %9668 = vmatprep.subr.bf16.mxu0 0
        %9669 = vmatpush1.bf16.msra.mxu0 %v8963
        %9670 = vmatprep.mubr.bf16.mxu0 %v8194
        %9671 = vmatmul.mubr.bf16.gmra.mrb[0].mxu0 %v8193
        %v9672 = vpop.f32.mrb[0].mxu0
        %v9673 = vadd.f32 %v9384, %v9672
        %v9674 = vpop.f32.mrb[0].mxu0
        %v9675 = vpop.f32.mrb[0].mxu0
        %v9676 = vadd.f32 %v9387, %v9675
        %v9677 = vpop.f32.mrb[0].mxu0
        %9678 = vmatprep.mubr.bf16.mxu0 %v8203
        %9679 = vmatmul.mubr.bf16.gmra.mrb[0].mxu0 %v8202
        %v9680 = vpop.f32.mrb[0].mxu0
        %v9681 = vadd.f32 %v9392, %v9680
        %v9682 = vpop.f32.mrb[0].mxu0
        %v9683 = vpop.f32.mrb[0].mxu0
        %v9684 = vadd.f32 %v9395, %v9683
        %v9685 = vpop.f32.mrb[0].mxu0
        %9686 = vmatprep.mubr.bf16.mxu0 %v8212
        %9687 = vmatmul.mubr.bf16.gmra.mrb[0].mxu0 %v8211
        %v9688 = vpop.f32.mrb[0].mxu0
        %v9689 = vadd.f32 %v9400, %v9688
        %v9690 = vpop.f32.mrb[0].mxu0
        %v9691 = vpop.f32.mrb[0].mxu0
        %v9692 = vadd.f32 %v9403, %v9691
        %v9693 = vpop.f32.mrb[0].mxu0
        %9694 = vmatprep.mubr.bf16.mxu0 %v8221
        %9695 = vmatmul.mubr.bf16.gmra.mrb[0].mxu0 %v8220
        %v9696 = vpop.f32.mrb[0].mxu0
        %v9697 = vadd.f32 %v9408, %v9696
        %v9698 = vpop.f32.mrb[0].mxu0
        %v9699 = vpop.f32.mrb[0].mxu0
        %v9700 = vadd.f32 %v9411, %v9699
        %v9701 = vpop.f32.mrb[0].mxu0
        %9702 = vmatprep.mubr.bf16.mxu0 %v8230
        %9703 = vmatmul.mubr.bf16.gmra.mrb[0].mxu0 %v8229
        %v9704 = vpop.f32.mrb[0].mxu0
        %v9705 = vadd.f32 %v9416, %v9704
        %v9706 = vpop.f32.mrb[0].mxu0
        %v9707 = vpop.f32.mrb[0].mxu0
        %v9708 = vadd.f32 %v9419, %v9707
        %v9709 = vpop.f32.mrb[0].mxu0
        %9710 = vmatprep.mubr.bf16.mxu0 %v8239
        %9711 = vmatmul.mubr.bf16.gmra.mrb[0].mxu0 %v8238
        %v9712 = vpop.f32.mrb[0].mxu0
        %v9713 = vadd.f32 %v9424, %v9712
        %v9714 = vpop.f32.mrb[0].mxu0
        %v9715 = vpop.f32.mrb[0].mxu0
        %v9716 = vadd.f32 %v9427, %v9715
        %v9717 = vpop.f32.mrb[0].mxu0
        %9718 = vmatprep.mubr.bf16.mxu0 %v8248
        %9719 = vmatmul.mubr.bf16.gmra.mrb[0].mxu0 %v8247
        %v9720 = vpop.f32.mrb[0].mxu0
        %v9721 = vadd.f32 %v9432, %v9720
        %v9722 = vpop.f32.mrb[0].mxu0
        %v9723 = vpop.f32.mrb[0].mxu0
        %v9724 = vadd.f32 %v9435, %v9723
        %v9725 = vpop.f32.mrb[0].mxu0
        %9726 = vmatprep.mubr.bf16.mxu0 %v8257
        %9727 = vmatmul.mubr.bf16.gmra.mrb[0].mxu0 %v8256
        %v9728 = vpop.f32.mrb[0].mxu0
        %v9729 = vadd.f32 %v9440, %v9728
        %v9730 = vpop.f32.mrb[0].mxu0
        %v9731 = vpop.f32.mrb[0].mxu0
        %v9732 = vadd.f32 %v9443, %v9731
        %v9733 = vpop.f32.mrb[0].mxu0
        %9734 = vmatprep.mubr.bf16.mxu0 %v8266
        %9735 = vmatmul.mubr.bf16.gmra.mrb[0].mxu0 %v8265
        %v9736 = vpop.f32.mrb[0].mxu0
        %v9737 = vadd.f32 %v9448, %v9736
        %v9738 = vpop.f32.mrb[0].mxu0
        %v9739 = vpop.f32.mrb[0].mxu0
        %v9740 = vadd.f32 %v9451, %v9739
        %v9741 = vpop.f32.mrb[0].mxu0
        %9742 = vmatprep.mubr.bf16.mxu0 %v8275
        %9743 = vmatmul.mubr.bf16.gmra.mrb[0].mxu0 %v8274
        %v9744 = vpop.f32.mrb[0].mxu0
        %v9745 = vadd.f32 %v9456, %v9744
        %v9746 = vpop.f32.mrb[0].mxu0
        %v9747 = vpop.f32.mrb[0].mxu0
        %v9748 = vadd.f32 %v9459, %v9747
        %v9749 = vpop.f32.mrb[0].mxu0
        %9750 = vmatprep.mubr.bf16.mxu0 %v8284
        %9751 = vmatmul.mubr.bf16.gmra.mrb[0].mxu0 %v8283
        %v9752 = vpop.f32.mrb[0].mxu0
        %v9753 = vadd.f32 %v9464, %v9752
        %v9754 = vpop.f32.mrb[0].mxu0
        %v9755 = vpop.f32.mrb[0].mxu0
        %v9756 = vadd.f32 %v9467, %v9755
        %v9757 = vpop.f32.mrb[0].mxu0
        %9758 = vmatprep.mubr.bf16.mxu0 %v8293
        %9759 = vmatmul.mubr.bf16.gmra.mrb[0].mxu0 %v8292
        %v9760 = vpop.f32.mrb[0].mxu0
        %v9761 = vadd.f32 %v9472, %v9760
        %v9762 = vpop.f32.mrb[0].mxu0
        %v9763 = vpop.f32.mrb[0].mxu0
        %v9764 = vadd.f32 %v9475, %v9763
        %v9765 = vpop.f32.mrb[0].mxu0
        %9766 = vmatprep.mubr.bf16.mxu0 %v8302
        %9767 = vmatmul.mubr.bf16.gmra.mrb[0].mxu0 %v8301
        %v9768 = vpop.f32.mrb[0].mxu0
        %v9769 = vadd.f32 %v9480, %v9768
        %v9770 = vpop.f32.mrb[0].mxu0
        %v9771 = vpop.f32.mrb[0].mxu0
        %v9772 = vadd.f32 %v9483, %v9771
        %v9773 = vpop.f32.mrb[0].mxu0
        %9774 = vmatprep.mubr.bf16.mxu0 %v8311
        %9775 = vmatmul.mubr.bf16.gmra.mrb[0].mxu0 %v8310
        %v9776 = vpop.f32.mrb[0].mxu0
        %v9777 = vadd.f32 %v9488, %v9776
        %v9778 = vpop.f32.mrb[0].mxu0
        %v9779 = vpop.f32.mrb[0].mxu0
        %v9780 = vadd.f32 %v9491, %v9779
        %v9781 = vpop.f32.mrb[0].mxu0
        %9782 = vmatprep.mubr.bf16.mxu0 %v8320
        %9783 = vmatmul.mubr.bf16.gmra.mrb[0].mxu0 %v8319
        %v9784 = vpop.f32.mrb[0].mxu0
        %v9785 = vadd.f32 %v9496, %v9784
        %v9786 = vpop.f32.mrb[0].mxu0
        %v9787 = vpop.f32.mrb[0].mxu0
        %v9788 = vadd.f32 %v9499, %v9787
        %v9789 = vpop.f32.mrb[0].mxu0
        %9790 = vmatprep.mubr.bf16.mxu0 %v8329
        %9791 = vmatmul.mubr.bf16.gmra.mrb[0].mxu0 %v8328
        %v9792 = vpop.f32.mrb[0].mxu0
        %v9793 = vadd.f32 %v9504, %v9792
        %v9794 = vpop.f32.mrb[0].mxu0
        %v9795 = vpop.f32.mrb[0].mxu0
        %v9796 = vadd.f32 %v9507, %v9795
        %v9797 = vpop.f32.mrb[0].mxu0
        %9798 = vmatprep.mubr.bf16.mxu0 %v8338
        %9799 = vmatmul.mubr.bf16.gmra.mrb[0].mxu0 %v8337
        %v9800 = vpop.f32.mrb[0].mxu0
        %v9801 = vadd.f32 %v9512, %v9800
        %v9802 = vpop.f32.mrb[0].mxu0
        %v9803 = vpop.f32.mrb[0].mxu0
        %v9804 = vadd.f32 %v9515, %v9803
        %v9805 = vpop.f32.mrb[0].mxu0
        %9806 = vmatprep.mubr.bf16.mxu0 %v8347
        %9807 = vmatmul.mubr.bf16.gmra.mrb[0].mxu0 %v8346
        %v9808 = vpop.f32.mrb[0].mxu0
        %v9809 = vadd.f32 %v9520, %v9808
        %v9810 = vpop.f32.mrb[0].mxu0
        %v9811 = vpop.f32.mrb[0].mxu0
        %v9812 = vadd.f32 %v9523, %v9811
        %v9813 = vpop.f32.mrb[0].mxu0
        %9814 = vmatprep.mubr.bf16.mxu0 %v8356
        %9815 = vmatmul.mubr.bf16.gmra.mrb[0].mxu0 %v8355
        %v9816 = vpop.f32.mrb[0].mxu0
        %v9817 = vadd.f32 %v9528, %v9816
        %v9818 = vpop.f32.mrb[0].mxu0
        %v9819 = vpop.f32.mrb[0].mxu0
        %v9820 = vadd.f32 %v9531, %v9819
        %v9821 = vpop.f32.mrb[0].mxu0
        %9822 = vmatprep.mubr.bf16.mxu0 %v8365
        %9823 = vmatmul.mubr.bf16.gmra.mrb[0].mxu0 %v8364
        %v9824 = vpop.f32.mrb[0].mxu0
        %v9825 = vadd.f32 %v9536, %v9824
        %v9826 = vpop.f32.mrb[0].mxu0
        %v9827 = vpop.f32.mrb[0].mxu0
        %v9828 = vadd.f32 %v9539, %v9827
        %v9829 = vpop.f32.mrb[0].mxu0
        %9830 = vmatprep.mubr.bf16.mxu0 %v8374
        %9831 = vmatmul.mubr.bf16.gmra.mrb[0].mxu0 %v8373
        %v9832 = vpop.f32.mrb[0].mxu0
        %v9833 = vadd.f32 %v9544, %v9832
        %v9834 = vpop.f32.mrb[0].mxu0
        %v9835 = vpop.f32.mrb[0].mxu0
        %v9836 = vadd.f32 %v9547, %v9835
        %v9837 = vpop.f32.mrb[0].mxu0
        %9838 = vmatprep.mubr.bf16.mxu0 %v8383
        %9839 = vmatmul.mubr.bf16.gmra.mrb[0].mxu0 %v8382
        %v9840 = vpop.f32.mrb[0].mxu0
        %v9841 = vadd.f32 %v9552, %v9840
        %v9842 = vpop.f32.mrb[0].mxu0
        %v9843 = vpop.f32.mrb[0].mxu0
        %v9844 = vadd.f32 %v9555, %v9843
        %v9845 = vpop.f32.mrb[0].mxu0
        %9846 = vmatprep.mubr.bf16.mxu0 %v8392
        %9847 = vmatmul.mubr.bf16.gmra.mrb[0].mxu0 %v8391
        %v9848 = vpop.f32.mrb[0].mxu0
        %v9849 = vadd.f32 %v9560, %v9848
        %v9850 = vpop.f32.mrb[0].mxu0
        %v9851 = vpop.f32.mrb[0].mxu0
        %v9852 = vadd.f32 %v9563, %v9851
        %v9853 = vpop.f32.mrb[0].mxu0
        %9854 = vmatprep.mubr.bf16.mxu0 %v8401
        %9855 = vmatmul.mubr.bf16.gmra.mrb[0].mxu0 %v8400
        %v9856 = vpop.f32.mrb[0].mxu0
        %v9857 = vadd.f32 %v9568, %v9856
        %v9858 = vpop.f32.mrb[0].mxu0
        %v9859 = vpop.f32.mrb[0].mxu0
        %v9860 = vadd.f32 %v9571, %v9859
        %v9861 = vpop.f32.mrb[0].mxu0
        %9862 = vmatprep.mubr.bf16.mxu0 %v8410
        %9863 = vmatmul.mubr.bf16.gmra.mrb[0].mxu0 %v8409
        %v9864 = vpop.f32.mrb[0].mxu0
        %v9865 = vadd.f32 %v9576, %v9864
        %v9866 = vpop.f32.mrb[0].mxu0
        %v9867 = vpop.f32.mrb[0].mxu0
        %v9868 = vadd.f32 %v9579, %v9867
        %v9869 = vpop.f32.mrb[0].mxu0
        %9870 = vmatprep.mubr.bf16.mxu0 %v8419
        %9871 = vmatmul.mubr.bf16.gmra.mrb[0].mxu0 %v8418
        %v9872 = vpop.f32.mrb[0].mxu0
        %v9873 = vadd.f32 %v9584, %v9872
        %v9874 = vpop.f32.mrb[0].mxu0
        %v9875 = vpop.f32.mrb[0].mxu0
        %v9876 = vadd.f32 %v9587, %v9875
        %v9877 = vpop.f32.mrb[0].mxu0
        %9878 = vmatprep.mubr.bf16.mxu0 %v8428
        %9879 = vmatmul.mubr.bf16.gmra.mrb[0].mxu0 %v8427
        %v9880 = vpop.f32.mrb[0].mxu0
        %v9881 = vadd.f32 %v9592, %v9880
        %v9882 = vpop.f32.mrb[0].mxu0
        %v9883 = vpop.f32.mrb[0].mxu0
        %v9884 = vadd.f32 %v9595, %v9883
        %v9885 = vpop.f32.mrb[0].mxu0
        %9886 = vmatprep.mubr.bf16.mxu0 %v8437
        %9887 = vmatmul.mubr.bf16.gmra.mrb[0].mxu0 %v8436
        %v9888 = vpop.f32.mrb[0].mxu0
        %v9889 = vadd.f32 %v9600, %v9888
        %v9890 = vpop.f32.mrb[0].mxu0
        %v9891 = vpop.f32.mrb[0].mxu0
        %v9892 = vadd.f32 %v9603, %v9891
        %v9893 = vpop.f32.mrb[0].mxu0
        %9894 = vmatprep.mubr.bf16.mxu0 %v8446
        %9895 = vmatmul.mubr.bf16.gmra.mrb[0].mxu0 %v8445
        %v9896 = vpop.f32.mrb[0].mxu0
        %v9897 = vadd.f32 %v9608, %v9896
        %v9898 = vpop.f32.mrb[0].mxu0
        %v9899 = vpop.f32.mrb[0].mxu0
        %v9900 = vadd.f32 %v9611, %v9899
        %v9901 = vpop.f32.mrb[0].mxu0
        %9902 = vmatprep.mubr.bf16.mxu0 %v8455
        %9903 = vmatmul.mubr.bf16.gmra.mrb[0].mxu0 %v8454
        %v9904 = vpop.f32.mrb[0].mxu0
        %v9905 = vadd.f32 %v9616, %v9904
        %v9906 = vpop.f32.mrb[0].mxu0
        %v9907 = vpop.f32.mrb[0].mxu0
        %v9908 = vadd.f32 %v9619, %v9907
        %v9909 = vpop.f32.mrb[0].mxu0
        %9910 = vmatprep.mubr.bf16.mxu0 %v8464
        %9911 = vmatmul.mubr.bf16.gmra.mrb[0].mxu0 %v8463
        %v9912 = vpop.f32.mrb[0].mxu0
        %v9913 = vadd.f32 %v9624, %v9912
        %v9914 = vpop.f32.mrb[0].mxu0
        %v9915 = vpop.f32.mrb[0].mxu0
        %v9916 = vadd.f32 %v9627, %v9915
        %v9917 = vpop.f32.mrb[0].mxu0
        %9918 = vmatprep.mubr.bf16.mxu0 %v8473
        %9919 = vmatmul.mubr.bf16.gmra.mrb[0].mxu0 %v8472
        %v9920 = vpop.f32.mrb[0].mxu0
        %v9921 = vadd.f32 %v9632, %v9920
        %v9922 = vpop.f32.mrb[0].mxu0
        %v9923 = vpop.f32.mrb[0].mxu0
        %v9924 = vadd.f32 %v9635, %v9923
        %v9925 = vpop.f32.mrb[0].mxu0
        %9926 = vdwg.mxu0
        %9927 = vmatprep.subr.bf16.mxu0 0
        %9928 = vmatpush1.bf16.msra.mxu0 %v8964
        %9929 = vmatprep.subr.bf16.mxu0 0
        %9930 = vmatpush1.bf16.msra.mxu0 %v8965
        %9931 = vmatprep.subr.bf16.mxu0 0
        %9932 = vmatpush1.bf16.msra.mxu0 %v8966
        %9933 = vmatprep.subr.bf16.mxu0 0
        %9934 = vmatpush1.bf16.msra.mxu0 %v8967
        %9935 = vmatprep.subr.bf16.mxu0 0
        %9936 = vmatpush1.bf16.msra.mxu0 %v8968
        %9937 = vmatprep.subr.bf16.mxu0 0
        %9938 = vmatpush1.bf16.msra.mxu0 %v8969
        %9939 = vmatprep.subr.bf16.mxu0 0
        %9940 = vmatpush1.bf16.msra.mxu0 %v8970
        %9941 = vmatprep.subr.bf16.mxu0 0
        %9942 = vmatpush1.bf16.msra.mxu0 %v8971
        %9943 = vmatprep.subr.bf16.mxu0 0
        %9944 = vmatpush1.bf16.msra.mxu0 %v8972
        %9945 = vmatprep.subr.bf16.mxu0 0
        %9946 = vmatpush1.bf16.msra.mxu0 %v8973
        %9947 = vmatprep.subr.bf16.mxu0 0
        %9948 = vmatpush1.bf16.msra.mxu0 %v8974
        %9949 = vmatprep.subr.bf16.mxu0 0
        %9950 = vmatpush1.bf16.msra.mxu0 %v8975
        %9951 = vmatprep.subr.bf16.mxu0 0
        %9952 = vmatpush1.bf16.msra.mxu0 %v8976
        %9953 = vmatprep.subr.bf16.mxu0 0
        %9954 = vmatpush1.bf16.msra.mxu0 %v8977
        %9955 = vmatprep.subr.bf16.mxu0 0
        %9956 = vmatpush1.bf16.msra.mxu0 %v8978
        %9957 = vmatprep.subr.bf16.mxu0 0
        %9958 = vmatpush1.bf16.msra.mxu0 %v8979
        %9959 = vmatprep.mubr.bf16.mxu0 %v8196
        %9960 = vmatmul.mubr.bf16.gmra.mrb[0].mxu0 %v8195
        %v9961 = vpop.f32.mrb[0].mxu0
        %v9962 = vadd.f32 %v9673, %v9961
        %v9963 = vpop.f32.mrb[0].mxu0
        %v9964 = vpop.f32.mrb[0].mxu0
        %v9965 = vadd.f32 %v9676, %v9964
        %v9966 = vpop.f32.mrb[0].mxu0
        %9967 = vmatprep.mubr.bf16.mxu0 %v8205
        %9968 = vmatmul.mubr.bf16.gmra.mrb[0].mxu0 %v8204
        %v9969 = vpop.f32.mrb[0].mxu0
        %v9970 = vadd.f32 %v9681, %v9969
        %v9971 = vpop.f32.mrb[0].mxu0
        %v9972 = vpop.f32.mrb[0].mxu0
        %v9973 = vadd.f32 %v9684, %v9972
        %v9974 = vpop.f32.mrb[0].mxu0
        %9975 = vmatprep.mubr.bf16.mxu0 %v8214
        %9976 = vmatmul.mubr.bf16.gmra.mrb[0].mxu0 %v8213
        %v9977 = vpop.f32.mrb[0].mxu0
        %v9978 = vadd.f32 %v9689, %v9977
        %v9979 = vpop.f32.mrb[0].mxu0
        %v9980 = vpop.f32.mrb[0].mxu0
        %v9981 = vadd.f32 %v9692, %v9980
        %v9982 = vpop.f32.mrb[0].mxu0
        %9983 = vmatprep.mubr.bf16.mxu0 %v8223
        %9984 = vmatmul.mubr.bf16.gmra.mrb[0].mxu0 %v8222
        %v9985 = vpop.f32.mrb[0].mxu0
        %v9986 = vadd.f32 %v9697, %v9985
        %v9987 = vpop.f32.mrb[0].mxu0
        %v9988 = vpop.f32.mrb[0].mxu0
        %v9989 = vadd.f32 %v9700, %v9988
        %v9990 = vpop.f32.mrb[0].mxu0
        %9991 = vmatprep.mubr.bf16.mxu0 %v8232
        %9992 = vmatmul.mubr.bf16.gmra.mrb[0].mxu0 %v8231
        %v9993 = vpop.f32.mrb[0].mxu0
        %v9994 = vadd.f32 %v9705, %v9993
        %v9995 = vpop.f32.mrb[0].mxu0
        %v9996 = vpop.f32.mrb[0].mxu0
        %v9997 = vadd.f32 %v9708, %v9996
        %v9998 = vpop.f32.mrb[0].mxu0
        %9999 = vmatprep.mubr.bf16.mxu0 %v8241
        %10000 = vmatmul.mubr.bf16.gmra.mrb[0].mxu0 %v8240
        %v10001 = vpop.f32.mrb[0].mxu0
        %v10002 = vadd.f32 %v9713, %v10001
        %v10003 = vpop.f32.mrb[0].mxu0
        %v10004 = vpop.f32.mrb[0].mxu0
        %v10005 = vadd.f32 %v9716, %v10004
        %v10006 = vpop.f32.mrb[0].mxu0
        %10007 = vmatprep.mubr.bf16.mxu0 %v8250
        %10008 = vmatmul.mubr.bf16.gmra.mrb[0].mxu0 %v8249
        %v10009 = vpop.f32.mrb[0].mxu0
        %v10010 = vadd.f32 %v9721, %v10009
        %v10011 = vpop.f32.mrb[0].mxu0
        %v10012 = vpop.f32.mrb[0].mxu0
        %v10013 = vadd.f32 %v9724, %v10012
        %v10014 = vpop.f32.mrb[0].mxu0
        %10015 = vmatprep.mubr.bf16.mxu0 %v8259
        %10016 = vmatmul.mubr.bf16.gmra.mrb[0].mxu0 %v8258
        %v10017 = vpop.f32.mrb[0].mxu0
        %v10018 = vadd.f32 %v9729, %v10017
        %v10019 = vpop.f32.mrb[0].mxu0
        %v10020 = vpop.f32.mrb[0].mxu0
        %v10021 = vadd.f32 %v9732, %v10020
        %v10022 = vpop.f32.mrb[0].mxu0
        %10023 = vmatprep.mubr.bf16.mxu0 %v8268
        %10024 = vmatmul.mubr.bf16.gmra.mrb[0].mxu0 %v8267
        %v10025 = vpop.f32.mrb[0].mxu0
        %v10026 = vadd.f32 %v9737, %v10025
        %v10027 = vpop.f32.mrb[0].mxu0
        %v10028 = vpop.f32.mrb[0].mxu0
        %v10029 = vadd.f32 %v9740, %v10028
        %v10030 = vpop.f32.mrb[0].mxu0
        %10031 = vmatprep.mubr.bf16.mxu0 %v8277
        %10032 = vmatmul.mubr.bf16.gmra.mrb[0].mxu0 %v8276
        %v10033 = vpop.f32.mrb[0].mxu0
        %v10034 = vadd.f32 %v9745, %v10033
        %v10035 = vpop.f32.mrb[0].mxu0
        %v10036 = vpop.f32.mrb[0].mxu0
        %v10037 = vadd.f32 %v9748, %v10036
        %v10038 = vpop.f32.mrb[0].mxu0
        %10039 = vmatprep.mubr.bf16.mxu0 %v8286
        %10040 = vmatmul.mubr.bf16.gmra.mrb[0].mxu0 %v8285
        %v10041 = vpop.f32.mrb[0].mxu0
        %v10042 = vadd.f32 %v9753, %v10041
        %v10043 = vpop.f32.mrb[0].mxu0
        %v10044 = vpop.f32.mrb[0].mxu0
        %v10045 = vadd.f32 %v9756, %v10044
        %v10046 = vpop.f32.mrb[0].mxu0
        %10047 = vmatprep.mubr.bf16.mxu0 %v8295
        %10048 = vmatmul.mubr.bf16.gmra.mrb[0].mxu0 %v8294
        %v10049 = vpop.f32.mrb[0].mxu0
        %v10050 = vadd.f32 %v9761, %v10049
        %v10051 = vpop.f32.mrb[0].mxu0
        %v10052 = vpop.f32.mrb[0].mxu0
        %v10053 = vadd.f32 %v9764, %v10052
        %v10054 = vpop.f32.mrb[0].mxu0
        %10055 = vmatprep.mubr.bf16.mxu0 %v8304
        %10056 = vmatmul.mubr.bf16.gmra.mrb[0].mxu0 %v8303
        %v10057 = vpop.f32.mrb[0].mxu0
        %v10058 = vadd.f32 %v9769, %v10057
        %v10059 = vpop.f32.mrb[0].mxu0
        %v10060 = vpop.f32.mrb[0].mxu0
        %v10061 = vadd.f32 %v9772, %v10060
        %v10062 = vpop.f32.mrb[0].mxu0
        %10063 = vmatprep.mubr.bf16.mxu0 %v8313
        %10064 = vmatmul.mubr.bf16.gmra.mrb[0].mxu0 %v8312
        %v10065 = vpop.f32.mrb[0].mxu0
        %v10066 = vadd.f32 %v9777, %v10065
        %v10067 = vpop.f32.mrb[0].mxu0
        %v10068 = vpop.f32.mrb[0].mxu0
        %v10069 = vadd.f32 %v9780, %v10068
        %v10070 = vpop.f32.mrb[0].mxu0
        %10071 = vmatprep.mubr.bf16.mxu0 %v8322
        %10072 = vmatmul.mubr.bf16.gmra.mrb[0].mxu0 %v8321
        %v10073 = vpop.f32.mrb[0].mxu0
        %v10074 = vadd.f32 %v9785, %v10073
        %v10075 = vpop.f32.mrb[0].mxu0
        %v10076 = vpop.f32.mrb[0].mxu0
        %v10077 = vadd.f32 %v9788, %v10076
        %v10078 = vpop.f32.mrb[0].mxu0
        %10079 = vmatprep.mubr.bf16.mxu0 %v8331
        %10080 = vmatmul.mubr.bf16.gmra.mrb[0].mxu0 %v8330
        %v10081 = vpop.f32.mrb[0].mxu0
        %v10082 = vadd.f32 %v9793, %v10081
        %v10083 = vpop.f32.mrb[0].mxu0
        %v10084 = vpop.f32.mrb[0].mxu0
        %v10085 = vadd.f32 %v9796, %v10084
        %v10086 = vpop.f32.mrb[0].mxu0
        %10087 = vmatprep.mubr.bf16.mxu0 %v8340
        %10088 = vmatmul.mubr.bf16.gmra.mrb[0].mxu0 %v8339
        %v10089 = vpop.f32.mrb[0].mxu0
        %v10090 = vadd.f32 %v9801, %v10089
        %v10091 = vpop.f32.mrb[0].mxu0
        %v10092 = vpop.f32.mrb[0].mxu0
        %v10093 = vadd.f32 %v9804, %v10092
        %v10094 = vpop.f32.mrb[0].mxu0
        %10095 = vmatprep.mubr.bf16.mxu0 %v8349
        %10096 = vmatmul.mubr.bf16.gmra.mrb[0].mxu0 %v8348
        %v10097 = vpop.f32.mrb[0].mxu0
        %v10098 = vadd.f32 %v9809, %v10097
        %v10099 = vpop.f32.mrb[0].mxu0
        %v10100 = vpop.f32.mrb[0].mxu0
        %v10101 = vadd.f32 %v9812, %v10100
        %v10102 = vpop.f32.mrb[0].mxu0
        %10103 = vmatprep.mubr.bf16.mxu0 %v8358
        %10104 = vmatmul.mubr.bf16.gmra.mrb[0].mxu0 %v8357
        %v10105 = vpop.f32.mrb[0].mxu0
        %v10106 = vadd.f32 %v9817, %v10105
        %v10107 = vpop.f32.mrb[0].mxu0
        %v10108 = vpop.f32.mrb[0].mxu0
        %v10109 = vadd.f32 %v9820, %v10108
        %v10110 = vpop.f32.mrb[0].mxu0
        %10111 = vmatprep.mubr.bf16.mxu0 %v8367
        %10112 = vmatmul.mubr.bf16.gmra.mrb[0].mxu0 %v8366
        %v10113 = vpop.f32.mrb[0].mxu0
        %v10114 = vadd.f32 %v9825, %v10113
        %v10115 = vpop.f32.mrb[0].mxu0
        %v10116 = vpop.f32.mrb[0].mxu0
        %v10117 = vadd.f32 %v9828, %v10116
        %v10118 = vpop.f32.mrb[0].mxu0
        %10119 = vmatprep.mubr.bf16.mxu0 %v8376
        %10120 = vmatmul.mubr.bf16.gmra.mrb[0].mxu0 %v8375
        %v10121 = vpop.f32.mrb[0].mxu0
        %v10122 = vadd.f32 %v9833, %v10121
        %v10123 = vpop.f32.mrb[0].mxu0
        %v10124 = vpop.f32.mrb[0].mxu0
        %v10125 = vadd.f32 %v9836, %v10124
        %v10126 = vpop.f32.mrb[0].mxu0
        %10127 = vmatprep.mubr.bf16.mxu0 %v8385
        %10128 = vmatmul.mubr.bf16.gmra.mrb[0].mxu0 %v8384
        %v10129 = vpop.f32.mrb[0].mxu0
        %v10130 = vadd.f32 %v9841, %v10129
        %v10131 = vpop.f32.mrb[0].mxu0
        %v10132 = vpop.f32.mrb[0].mxu0
        %v10133 = vadd.f32 %v9844, %v10132
        %v10134 = vpop.f32.mrb[0].mxu0
        %10135 = vmatprep.mubr.bf16.mxu0 %v8394
        %10136 = vmatmul.mubr.bf16.gmra.mrb[0].mxu0 %v8393
        %v10137 = vpop.f32.mrb[0].mxu0
        %v10138 = vadd.f32 %v9849, %v10137
        %v10139 = vpop.f32.mrb[0].mxu0
        %v10140 = vpop.f32.mrb[0].mxu0
        %v10141 = vadd.f32 %v9852, %v10140
        %v10142 = vpop.f32.mrb[0].mxu0
        %10143 = vmatprep.mubr.bf16.mxu0 %v8403
        %10144 = vmatmul.mubr.bf16.gmra.mrb[0].mxu0 %v8402
        %v10145 = vpop.f32.mrb[0].mxu0
        %v10146 = vadd.f32 %v9857, %v10145
        %v10147 = vpop.f32.mrb[0].mxu0
        %v10148 = vpop.f32.mrb[0].mxu0
        %v10149 = vadd.f32 %v9860, %v10148
        %v10150 = vpop.f32.mrb[0].mxu0
        %10151 = vmatprep.mubr.bf16.mxu0 %v8412
        %10152 = vmatmul.mubr.bf16.gmra.mrb[0].mxu0 %v8411
        %v10153 = vpop.f32.mrb[0].mxu0
        %v10154 = vadd.f32 %v9865, %v10153
        %v10155 = vpop.f32.mrb[0].mxu0
        %v10156 = vpop.f32.mrb[0].mxu0
        %v10157 = vadd.f32 %v9868, %v10156
        %v10158 = vpop.f32.mrb[0].mxu0
        %10159 = vmatprep.mubr.bf16.mxu0 %v8421
        %10160 = vmatmul.mubr.bf16.gmra.mrb[0].mxu0 %v8420
        %v10161 = vpop.f32.mrb[0].mxu0
        %v10162 = vadd.f32 %v9873, %v10161
        %v10163 = vpop.f32.mrb[0].mxu0
        %v10164 = vpop.f32.mrb[0].mxu0
        %v10165 = vadd.f32 %v9876, %v10164
        %v10166 = vpop.f32.mrb[0].mxu0
        %10167 = vmatprep.mubr.bf16.mxu0 %v8430
        %10168 = vmatmul.mubr.bf16.gmra.mrb[0].mxu0 %v8429
        %v10169 = vpop.f32.mrb[0].mxu0
        %v10170 = vadd.f32 %v9881, %v10169
        %v10171 = vpop.f32.mrb[0].mxu0
        %v10172 = vpop.f32.mrb[0].mxu0
        %v10173 = vadd.f32 %v9884, %v10172
        %v10174 = vpop.f32.mrb[0].mxu0
        %10175 = vmatprep.mubr.bf16.mxu0 %v8439
        %10176 = vmatmul.mubr.bf16.gmra.mrb[0].mxu0 %v8438
        %v10177 = vpop.f32.mrb[0].mxu0
        %v10178 = vadd.f32 %v9889, %v10177
        %v10179 = vpop.f32.mrb[0].mxu0
        %v10180 = vpop.f32.mrb[0].mxu0
        %v10181 = vadd.f32 %v9892, %v10180
        %v10182 = vpop.f32.mrb[0].mxu0
        %10183 = vmatprep.mubr.bf16.mxu0 %v8448
        %10184 = vmatmul.mubr.bf16.gmra.mrb[0].mxu0 %v8447
        %v10185 = vpop.f32.mrb[0].mxu0
        %v10186 = vadd.f32 %v9897, %v10185
        %v10187 = vpop.f32.mrb[0].mxu0
        %v10188 = vpop.f32.mrb[0].mxu0
        %v10189 = vadd.f32 %v9900, %v10188
        %v10190 = vpop.f32.mrb[0].mxu0
        %10191 = vmatprep.mubr.bf16.mxu0 %v8457
        %10192 = vmatmul.mubr.bf16.gmra.mrb[0].mxu0 %v8456
        %v10193 = vpop.f32.mrb[0].mxu0
        %v10194 = vadd.f32 %v9905, %v10193
        %v10195 = vpop.f32.mrb[0].mxu0
        %v10196 = vpop.f32.mrb[0].mxu0
        %v10197 = vadd.f32 %v9908, %v10196
        %v10198 = vpop.f32.mrb[0].mxu0
        %10199 = vmatprep.mubr.bf16.mxu0 %v8466
        %10200 = vmatmul.mubr.bf16.gmra.mrb[0].mxu0 %v8465
        %v10201 = vpop.f32.mrb[0].mxu0
        %v10202 = vadd.f32 %v9913, %v10201
        %v10203 = vpop.f32.mrb[0].mxu0
        %v10204 = vpop.f32.mrb[0].mxu0
        %v10205 = vadd.f32 %v9916, %v10204
        %v10206 = vpop.f32.mrb[0].mxu0
        %10207 = vmatprep.mubr.bf16.mxu0 %v8475
        %10208 = vmatmul.mubr.bf16.gmra.mrb[0].mxu0 %v8474
        %v10209 = vpop.f32.mrb[0].mxu0
        %v10210 = vadd.f32 %v9921, %v10209
        %v10211 = vpop.f32.mrb[0].mxu0
        %v10212 = vpop.f32.mrb[0].mxu0
        %v10213 = vadd.f32 %v9924, %v10212
        %v10214 = vpop.f32.mrb[0].mxu0
        %10215 = vdwg.mxu0
        %10216 = vmatprep.subr.bf16.mxu0 0
        %10217 = vmatpush1.bf16.msra.mxu0 %v8980
        %10218 = vmatprep.subr.bf16.mxu0 0
        %10219 = vmatpush1.bf16.msra.mxu0 %v8981
        %10220 = vmatprep.subr.bf16.mxu0 0
        %10221 = vmatpush1.bf16.msra.mxu0 %v8982
        %10222 = vmatprep.subr.bf16.mxu0 0
        %10223 = vmatpush1.bf16.msra.mxu0 %v8983
        %10224 = vmatprep.subr.bf16.mxu0 0
        %10225 = vmatpush1.bf16.msra.mxu0 %v8984
        %10226 = vmatprep.subr.bf16.mxu0 0
        %10227 = vmatpush1.bf16.msra.mxu0 %v8985
        %10228 = vmatprep.subr.bf16.mxu0 0
        %10229 = vmatpush1.bf16.msra.mxu0 %v8986
        %10230 = vmatprep.subr.bf16.mxu0 0
        %10231 = vmatpush1.bf16.msra.mxu0 %v8987
        %10232 = vmatprep.subr.bf16.mxu0 0
        %10233 = vmatpush1.bf16.msra.mxu0 0
        %10234 = vmatprep.subr.bf16.mxu0 0
        %10235 = vmatpush1.bf16.msra.mxu0 0
        %10236 = vmatprep.subr.bf16.mxu0 0
        %10237 = vmatpush1.bf16.msra.mxu0 0
        %10238 = vmatprep.subr.bf16.mxu0 0
        %10239 = vmatpush1.bf16.msra.mxu0 0
        %10240 = vmatprep.subr.bf16.mxu0 0
        %10241 = vmatpush1.bf16.msra.mxu0 0
        %10242 = vmatprep.subr.bf16.mxu0 0
        %10243 = vmatpush1.bf16.msra.mxu0 0
        %10244 = vmatprep.subr.bf16.mxu0 0
        %10245 = vmatpush1.bf16.msra.mxu0 0
        %10246 = vmatprep.subr.bf16.mxu0 0
        %10247 = vmatpush1.bf16.msra.mxu0 0
        %10248 = vmatprep.mubr.bf16.mxu0 0
        %10249 = vmatmul.mubr.bf16.gmra.mrb[0].mxu0 %v8197
        %v10250 = vpop.f32.mrb[0].mxu0
        %v10251 = vadd.f32 %v9962, %v10250
        %v10252 = vpop.f32.mrb[0].mxu0
        %v10253 = vpop.f32.mrb[0].mxu0
        %v10254 = vadd.f32 %v9965, %v10253
        %v10255 = vpop.f32.mrb[0].mxu0
        %10256 = vmatprep.mubr.bf16.mxu0 0
        %10257 = vmatmul.mubr.bf16.gmra.mrb[0].mxu0 %v8206
        %v10258 = vpop.f32.mrb[0].mxu0
        %v10259 = vadd.f32 %v9970, %v10258
        %v10260 = vpop.f32.mrb[0].mxu0
        %v10261 = vpop.f32.mrb[0].mxu0
        %v10262 = vadd.f32 %v9973, %v10261
        %v10263 = vpop.f32.mrb[0].mxu0
        %10264 = vmatprep.mubr.bf16.mxu0 0
        %10265 = vmatmul.mubr.bf16.gmra.mrb[0].mxu0 %v8215
        %v10266 = vpop.f32.mrb[0].mxu0
        %v10267 = vadd.f32 %v9978, %v10266
        %v10268 = vpop.f32.mrb[0].mxu0
        %v10269 = vpop.f32.mrb[0].mxu0
        %v10270 = vadd.f32 %v9981, %v10269
        %v10271 = vpop.f32.mrb[0].mxu0
        %10272 = vmatprep.mubr.bf16.mxu0 0
        %10273 = vmatmul.mubr.bf16.gmra.mrb[0].mxu0 %v8224
        %v10274 = vpop.f32.mrb[0].mxu0
        %v10275 = vadd.f32 %v9986, %v10274
        %v10276 = vpop.f32.mrb[0].mxu0
        %v10277 = vpop.f32.mrb[0].mxu0
        %v10278 = vadd.f32 %v9989, %v10277
        %v10279 = vpop.f32.mrb[0].mxu0
        %10280 = vmatprep.mubr.bf16.mxu0 0
        %10281 = vmatmul.mubr.bf16.gmra.mrb[0].mxu0 %v8233
        %v10282 = vpop.f32.mrb[0].mxu0
        %v10283 = vadd.f32 %v9994, %v10282
        %v10284 = vpop.f32.mrb[0].mxu0
        %v10285 = vpop.f32.mrb[0].mxu0
        %v10286 = vadd.f32 %v9997, %v10285
        %v10287 = vpop.f32.mrb[0].mxu0
        %10288 = vmatprep.mubr.bf16.mxu0 0
        %10289 = vmatmul.mubr.bf16.gmra.mrb[0].mxu0 %v8242
        %v10290 = vpop.f32.mrb[0].mxu0
        %v10291 = vadd.f32 %v10002, %v10290
        %v10292 = vpop.f32.mrb[0].mxu0
        %v10293 = vpop.f32.mrb[0].mxu0
        %v10294 = vadd.f32 %v10005, %v10293
        %v10295 = vpop.f32.mrb[0].mxu0
        %10296 = vmatprep.mubr.bf16.mxu0 0
        %10297 = vmatmul.mubr.bf16.gmra.mrb[0].mxu0 %v8251
        %v10298 = vpop.f32.mrb[0].mxu0
        %v10299 = vadd.f32 %v10010, %v10298
        %v10300 = vpop.f32.mrb[0].mxu0
        %v10301 = vpop.f32.mrb[0].mxu0
        %v10302 = vadd.f32 %v10013, %v10301
        %v10303 = vpop.f32.mrb[0].mxu0
        %10304 = vmatprep.mubr.bf16.mxu0 0
        %10305 = vmatmul.mubr.bf16.gmra.mrb[0].mxu0 %v8260
        %v10306 = vpop.f32.mrb[0].mxu0
        %v10307 = vadd.f32 %v10018, %v10306
        %v10308 = vpop.f32.mrb[0].mxu0
        %v10309 = vpop.f32.mrb[0].mxu0
        %v10310 = vadd.f32 %v10021, %v10309
        %v10311 = vpop.f32.mrb[0].mxu0
        %10312 = vmatprep.mubr.bf16.mxu0 0
        %10313 = vmatmul.mubr.bf16.gmra.mrb[0].mxu0 %v8269
        %v10314 = vpop.f32.mrb[0].mxu0
        %v10315 = vadd.f32 %v10026, %v10314
        %v10316 = vpop.f32.mrb[0].mxu0
        %v10317 = vpop.f32.mrb[0].mxu0
        %v10318 = vadd.f32 %v10029, %v10317
        %v10319 = vpop.f32.mrb[0].mxu0
        %10320 = vmatprep.mubr.bf16.mxu0 0
        %10321 = vmatmul.mubr.bf16.gmra.mrb[0].mxu0 %v8278
        %v10322 = vpop.f32.mrb[0].mxu0
        %v10323 = vadd.f32 %v10034, %v10322
        %v10324 = vpop.f32.mrb[0].mxu0
        %v10325 = vpop.f32.mrb[0].mxu0
        %v10326 = vadd.f32 %v10037, %v10325
        %v10327 = vpop.f32.mrb[0].mxu0
        %10328 = vmatprep.mubr.bf16.mxu0 0
        %10329 = vmatmul.mubr.bf16.gmra.mrb[0].mxu0 %v8287
        %v10330 = vpop.f32.mrb[0].mxu0
        %v10331 = vadd.f32 %v10042, %v10330
        %v10332 = vpop.f32.mrb[0].mxu0
        %v10333 = vpop.f32.mrb[0].mxu0
        %v10334 = vadd.f32 %v10045, %v10333
        %v10335 = vpop.f32.mrb[0].mxu0
        %10336 = vmatprep.mubr.bf16.mxu0 0
        %10337 = vmatmul.mubr.bf16.gmra.mrb[0].mxu0 %v8296
        %v10338 = vpop.f32.mrb[0].mxu0
        %v10339 = vadd.f32 %v10050, %v10338
        %v10340 = vpop.f32.mrb[0].mxu0
        %v10341 = vpop.f32.mrb[0].mxu0
        %v10342 = vadd.f32 %v10053, %v10341
        %v10343 = vpop.f32.mrb[0].mxu0
        %10344 = vmatprep.mubr.bf16.mxu0 0
        %10345 = vmatmul.mubr.bf16.gmra.mrb[0].mxu0 %v8305
        %v10346 = vpop.f32.mrb[0].mxu0
        %v10347 = vadd.f32 %v10058, %v10346
        %v10348 = vpop.f32.mrb[0].mxu0
        %v10349 = vpop.f32.mrb[0].mxu0
        %v10350 = vadd.f32 %v10061, %v10349
        %v10351 = vpop.f32.mrb[0].mxu0
        %10352 = vmatprep.mubr.bf16.mxu0 0
        %10353 = vmatmul.mubr.bf16.gmra.mrb[0].mxu0 %v8314
        %v10354 = vpop.f32.mrb[0].mxu0
        %v10355 = vadd.f32 %v10066, %v10354
        %v10356 = vpop.f32.mrb[0].mxu0
        %v10357 = vpop.f32.mrb[0].mxu0
        %v10358 = vadd.f32 %v10069, %v10357
        %v10359 = vpop.f32.mrb[0].mxu0
        %10360 = vmatprep.mubr.bf16.mxu0 0
        %10361 = vmatmul.mubr.bf16.gmra.mrb[0].mxu0 %v8323
        %v10362 = vpop.f32.mrb[0].mxu0
        %v10363 = vadd.f32 %v10074, %v10362
        %v10364 = vpop.f32.mrb[0].mxu0
        %v10365 = vpop.f32.mrb[0].mxu0
        %v10366 = vadd.f32 %v10077, %v10365
        %v10367 = vpop.f32.mrb[0].mxu0
        %10368 = vmatprep.mubr.bf16.mxu0 0
        %10369 = vmatmul.mubr.bf16.gmra.mrb[0].mxu0 %v8332
        %v10370 = vpop.f32.mrb[0].mxu0
        %v10371 = vadd.f32 %v10082, %v10370
        %v10372 = vpop.f32.mrb[0].mxu0
        %v10373 = vpop.f32.mrb[0].mxu0
        %v10374 = vadd.f32 %v10085, %v10373
        %v10375 = vpop.f32.mrb[0].mxu0
        %10376 = vmatprep.mubr.bf16.mxu0 0
        %10377 = vmatmul.mubr.bf16.gmra.mrb[0].mxu0 %v8341
        %v10378 = vpop.f32.mrb[0].mxu0
        %v10379 = vadd.f32 %v10090, %v10378
        %v10380 = vpop.f32.mrb[0].mxu0
        %v10381 = vpop.f32.mrb[0].mxu0
        %v10382 = vadd.f32 %v10093, %v10381
        %v10383 = vpop.f32.mrb[0].mxu0
        %10384 = vmatprep.mubr.bf16.mxu0 0
        %10385 = vmatmul.mubr.bf16.gmra.mrb[0].mxu0 %v8350
        %v10386 = vpop.f32.mrb[0].mxu0
        %v10387 = vadd.f32 %v10098, %v10386
        %v10388 = vpop.f32.mrb[0].mxu0
        %v10389 = vpop.f32.mrb[0].mxu0
        %v10390 = vadd.f32 %v10101, %v10389
        %v10391 = vpop.f32.mrb[0].mxu0
        %10392 = vmatprep.mubr.bf16.mxu0 0
        %10393 = vmatmul.mubr.bf16.gmra.mrb[0].mxu0 %v8359
        %v10394 = vpop.f32.mrb[0].mxu0
        %v10395 = vadd.f32 %v10106, %v10394
        %v10396 = vpop.f32.mrb[0].mxu0
        %v10397 = vpop.f32.mrb[0].mxu0
        %v10398 = vadd.f32 %v10109, %v10397
        %v10399 = vpop.f32.mrb[0].mxu0
        %10400 = vmatprep.mubr.bf16.mxu0 0
        %10401 = vmatmul.mubr.bf16.gmra.mrb[0].mxu0 %v8368
        %v10402 = vpop.f32.mrb[0].mxu0
        %v10403 = vadd.f32 %v10114, %v10402
        %v10404 = vpop.f32.mrb[0].mxu0
        %v10405 = vpop.f32.mrb[0].mxu0
        %v10406 = vadd.f32 %v10117, %v10405
        %v10407 = vpop.f32.mrb[0].mxu0
        %10408 = vmatprep.mubr.bf16.mxu0 0
        %10409 = vmatmul.mubr.bf16.gmra.mrb[0].mxu0 %v8377
        %v10410 = vpop.f32.mrb[0].mxu0
        %v10411 = vadd.f32 %v10122, %v10410
        %v10412 = vpop.f32.mrb[0].mxu0
        %v10413 = vpop.f32.mrb[0].mxu0
        %v10414 = vadd.f32 %v10125, %v10413
        %v10415 = vpop.f32.mrb[0].mxu0
        %10416 = vmatprep.mubr.bf16.mxu0 0
        %10417 = vmatmul.mubr.bf16.gmra.mrb[0].mxu0 %v8386
        %v10418 = vpop.f32.mrb[0].mxu0
        %v10419 = vadd.f32 %v10130, %v10418
        %v10420 = vpop.f32.mrb[0].mxu0
        %v10421 = vpop.f32.mrb[0].mxu0
        %v10422 = vadd.f32 %v10133, %v10421
        %v10423 = vpop.f32.mrb[0].mxu0
        %10424 = vmatprep.mubr.bf16.mxu0 0
        %10425 = vmatmul.mubr.bf16.gmra.mrb[0].mxu0 %v8395
        %v10426 = vpop.f32.mrb[0].mxu0
        %v10427 = vadd.f32 %v10138, %v10426
        %v10428 = vpop.f32.mrb[0].mxu0
        %v10429 = vpop.f32.mrb[0].mxu0
        %v10430 = vadd.f32 %v10141, %v10429
        %v10431 = vpop.f32.mrb[0].mxu0
        %10432 = vmatprep.mubr.bf16.mxu0 0
        %10433 = vmatmul.mubr.bf16.gmra.mrb[0].mxu0 %v8404
        %v10434 = vpop.f32.mrb[0].mxu0
        %v10435 = vadd.f32 %v10146, %v10434
        %v10436 = vpop.f32.mrb[0].mxu0
        %v10437 = vpop.f32.mrb[0].mxu0
        %v10438 = vadd.f32 %v10149, %v10437
        %v10439 = vpop.f32.mrb[0].mxu0
        %10440 = vmatprep.mubr.bf16.mxu0 0
        %10441 = vmatmul.mubr.bf16.gmra.mrb[0].mxu0 %v8413
        %v10442 = vpop.f32.mrb[0].mxu0
        %v10443 = vadd.f32 %v10154, %v10442
        %v10444 = vpop.f32.mrb[0].mxu0
        %v10445 = vpop.f32.mrb[0].mxu0
        %v10446 = vadd.f32 %v10157, %v10445
        %v10447 = vpop.f32.mrb[0].mxu0
        %10448 = vmatprep.mubr.bf16.mxu0 0
        %10449 = vmatmul.mubr.bf16.gmra.mrb[0].mxu0 %v8422
        %v10450 = vpop.f32.mrb[0].mxu0
        %v10451 = vadd.f32 %v10162, %v10450
        %v10452 = vpop.f32.mrb[0].mxu0
        %v10453 = vpop.f32.mrb[0].mxu0
        %v10454 = vadd.f32 %v10165, %v10453
        %v10455 = vpop.f32.mrb[0].mxu0
        %10456 = vmatprep.mubr.bf16.mxu0 0
        %10457 = vmatmul.mubr.bf16.gmra.mrb[0].mxu0 %v8431
        %v10458 = vpop.f32.mrb[0].mxu0
        %v10459 = vadd.f32 %v10170, %v10458
        %v10460 = vpop.f32.mrb[0].mxu0
        %v10461 = vpop.f32.mrb[0].mxu0
        %v10462 = vadd.f32 %v10173, %v10461
        %v10463 = vpop.f32.mrb[0].mxu0
        %10464 = vmatprep.mubr.bf16.mxu0 0
        %10465 = vmatmul.mubr.bf16.gmra.mrb[0].mxu0 %v8440
        %v10466 = vpop.f32.mrb[0].mxu0
        %v10467 = vadd.f32 %v10178, %v10466
        %v10468 = vpop.f32.mrb[0].mxu0
        %v10469 = vpop.f32.mrb[0].mxu0
        %v10470 = vadd.f32 %v10181, %v10469
        %v10471 = vpop.f32.mrb[0].mxu0
        %10472 = vmatprep.mubr.bf16.mxu0 0
        %10473 = vmatmul.mubr.bf16.gmra.mrb[0].mxu0 %v8449
        %v10474 = vpop.f32.mrb[0].mxu0
        %v10475 = vadd.f32 %v10186, %v10474
        %v10476 = vpop.f32.mrb[0].mxu0
        %v10477 = vpop.f32.mrb[0].mxu0
        %v10478 = vadd.f32 %v10189, %v10477
        %v10479 = vpop.f32.mrb[0].mxu0
        %10480 = vmatprep.mubr.bf16.mxu0 0
        %10481 = vmatmul.mubr.bf16.gmra.mrb[0].mxu0 %v8458
        %v10482 = vpop.f32.mrb[0].mxu0
        %v10483 = vadd.f32 %v10194, %v10482
        %v10484 = vpop.f32.mrb[0].mxu0
        %v10485 = vpop.f32.mrb[0].mxu0
        %v10486 = vadd.f32 %v10197, %v10485
        %v10487 = vpop.f32.mrb[0].mxu0
        %10488 = vmatprep.mubr.bf16.mxu0 0
        %10489 = vmatmul.mubr.bf16.gmra.mrb[0].mxu0 %v8467
        %v10490 = vpop.f32.mrb[0].mxu0
        %v10491 = vadd.f32 %v10202, %v10490
        %v10492 = vpop.f32.mrb[0].mxu0
        %v10493 = vpop.f32.mrb[0].mxu0
        %v10494 = vadd.f32 %v10205, %v10493
        %v10495 = vpop.f32.mrb[0].mxu0
        %10496 = vmatprep.mubr.bf16.mxu0 0
        %10497 = vmatmul.mubr.bf16.gmra.mrb[0].mxu0 %v8476
        %v10498 = vpop.f32.mrb[0].mxu0
        %v10499 = vadd.f32 %v10210, %v10498
        %v10500 = vpop.f32.mrb[0].mxu0
        %v10501 = vpop.f32.mrb[0].mxu0
        %v10502 = vadd.f32 %v10213, %v10501
        %v10503 = vpop.f32.mrb[0].mxu0
        %10504 = vdwg.mxu0
        %v10505 = vmax.f32 %v10251, 0.0
        %v10506 = vmax.f32 %v10254, 0.0
        %v10507 = vmax.f32 %v10259, 0.0
        %v10508 = vmax.f32 %v10262, 0.0
        %v10509 = vmax.f32 %v10267, 0.0
        %v10510 = vmax.f32 %v10270, 0.0
        %v10511 = vmax.f32 %v10275, 0.0
        %v10512 = vmax.f32 %v10278, 0.0
        %v10513 = vmax.f32 %v10283, 0.0
        %v10514 = vmax.f32 %v10286, 0.0
        %v10515 = vmax.f32 %v10291, 0.0
        %v10516 = vmax.f32 %v10294, 0.0
        %v10517 = vmax.f32 %v10299, 0.0
        %v10518 = vmax.f32 %v10302, 0.0
        %v10519 = vmax.f32 %v10307, 0.0
        %v10520 = vmax.f32 %v10310, 0.0
        %v10521 = vmax.f32 %v10315, 0.0
        %v10522 = vmax.f32 %v10318, 0.0
        %v10523 = vmax.f32 %v10323, 0.0
        %v10524 = vmax.f32 %v10326, 0.0
        %v10525 = vmax.f32 %v10331, 0.0
        %v10526 = vmax.f32 %v10334, 0.0
        %v10527 = vmax.f32 %v10339, 0.0
        %v10528 = vmax.f32 %v10342, 0.0
        %v10529 = vmax.f32 %v10347, 0.0
        %v10530 = vmax.f32 %v10350, 0.0
        %v10531 = vmax.f32 %v10355, 0.0
        %v10532 = vmax.f32 %v10358, 0.0
        %v10533 = vmax.f32 %v10363, 0.0
        %v10534 = vmax.f32 %v10366, 0.0
        %v10535 = vmax.f32 %v10371, 0.0
        %v10536 = vmax.f32 %v10374, 0.0
        %v10537 = vmax.f32 %v10379, 0.0
        %v10538 = vmax.f32 %v10382, 0.0
        %v10539 = vmax.f32 %v10387, 0.0
        %v10540 = vmax.f32 %v10390, 0.0
        %v10541 = vmax.f32 %v10395, 0.0
        %v10542 = vmax.f32 %v10398, 0.0
        %v10543 = vmax.f32 %v10403, 0.0
        %v10544 = vmax.f32 %v10406, 0.0
        %v10545 = vmax.f32 %v10411, 0.0
        %v10546 = vmax.f32 %v10414, 0.0
        %v10547 = vmax.f32 %v10419, 0.0
        %v10548 = vmax.f32 %v10422, 0.0
        %v10549 = vmax.f32 %v10427, 0.0
        %v10550 = vmax.f32 %v10430, 0.0
        %v10551 = vmax.f32 %v10435, 0.0
        %v10552 = vmax.f32 %v10438, 0.0
        %v10553 = vmax.f32 %v10443, 0.0
        %v10554 = vmax.f32 %v10446, 0.0
        %v10555 = vmax.f32 %v10451, 0.0
        %v10556 = vmax.f32 %v10454, 0.0
        %v10557 = vmax.f32 %v10459, 0.0
        %v10558 = vmax.f32 %v10462, 0.0
        %v10559 = vmax.f32 %v10467, 0.0
        %v10560 = vmax.f32 %v10470, 0.0
        %v10561 = vmax.f32 %v10475, 0.0
        %v10562 = vmax.f32 %v10478, 0.0
        %v10563 = vmax.f32 %v10483, 0.0
        %v10564 = vmax.f32 %v10486, 0.0
        %v10565 = vmax.f32 %v10491, 0.0
        %v10566 = vmax.f32 %v10494, 0.0
        %v10567 = vmax.f32 %v10499, 0.0
        %v10568 = vmax.f32 %v10502, 0.0
        %v10569 = vpack.c.bf16 %v10506, %v10505
        %v10570 = vpack.c.bf16 %v10508, %v10507
        %v10571 = vpack.c.bf16 %v10510, %v10509
        %v10572 = vpack.c.bf16 %v10512, %v10511
        %v10573 = vpack.c.bf16 %v10514, %v10513
        %v10574 = vpack.c.bf16 %v10516, %v10515
        %v10575 = vpack.c.bf16 %v10518, %v10517
        %v10576 = vpack.c.bf16 %v10520, %v10519
        %v10577 = vpack.c.bf16 %v10522, %v10521
        %v10578 = vpack.c.bf16 %v10524, %v10523
        %v10579 = vpack.c.bf16 %v10526, %v10525
        %v10580 = vpack.c.bf16 %v10528, %v10527
        %v10581 = vpack.c.bf16 %v10530, %v10529
        %v10582 = vpack.c.bf16 %v10532, %v10531
        %v10583 = vpack.c.bf16 %v10534, %v10533
        %v10584 = vpack.c.bf16 %v10536, %v10535
        %v10585 = vpack.c.bf16 %v10538, %v10537
        %v10586 = vpack.c.bf16 %v10540, %v10539
        %v10587 = vpack.c.bf16 %v10542, %v10541
        %v10588 = vpack.c.bf16 %v10544, %v10543
        %v10589 = vpack.c.bf16 %v10546, %v10545
        %v10590 = vpack.c.bf16 %v10548, %v10547
        %v10591 = vpack.c.bf16 %v10550, %v10549
        %v10592 = vpack.c.bf16 %v10552, %v10551
        %v10593 = vpack.c.bf16 %v10554, %v10553
        %v10594 = vpack.c.bf16 %v10556, %v10555
        %v10595 = vpack.c.bf16 %v10558, %v10557
        %v10596 = vpack.c.bf16 %v10560, %v10559
        %v10597 = vpack.c.bf16 %v10562, %v10561
        %v10598 = vpack.c.bf16 %v10564, %v10563
        %v10599 = vpack.c.bf16 %v10566, %v10565
        %v10600 = vpack.c.bf16 %v10568, %v10567
        %v10601 = vld [vmem:[#allocation10] sm:$0xff]
        %v10602 = vld [vmem:[#allocation10 + $0x8] sm:$0xff]
        %v10603 = vld [vmem:[#allocation10 + $0x10] sm:$0xff]
        %v10604 = vld [vmem:[#allocation10 + $0x18] sm:$0xff]
        %v10605 = vld [vmem:[#allocation10 + $0x20] sm:$0xff]
        %v10606 = vld [vmem:[#allocation10 + $0x28] sm:$0xff]
        %v10607 = vld [vmem:[#allocation10 + $0x30] sm:$0xff]
        %v10608 = vld [vmem:[#allocation10 + $0x38] sm:$0xff]
        %v10609 = vld [vmem:[#allocation10 + $0x40] sm:$0xff]
        %v10610 = vld [vmem:[#allocation10 + $0x48] sm:$0xff]
        %v10611 = vld [vmem:[#allocation10 + $0x50] sm:$0xff]
        %v10612 = vld [vmem:[#allocation10 + $0x58] sm:$0xff]
        %v10613 = vld [vmem:[#allocation10 + $0x60] sm:$0xff]
        %v10614 = vld [vmem:[#allocation10 + $0x68] sm:$0xff]
        %v10615 = vld [vmem:[#allocation10 + $0x70] sm:$0xff]
        %v10616 = vld [vmem:[#allocation10 + $0x78] sm:$0xff]
        %v10617 = vld [vmem:[%s6] sm:$0x3]
        %v10619 = vlaneseq
        %v10620 = vshrl.u32 %v10619, 7
        %v10621 = vsub.s32 0, %v10620
        %v10622 = vrot.slane %v10617, %v10621
        %v10623 = vlaneseq
        %v10624 = vshrl.u32 %v10623, 7
        %v10625 = vsub.s32 1, %v10624
        %v10626 = vrot.slane %v10617, %v10625
        %v10645 = vunpack.c.l.b16 %v10601
        %v10646 = vunpack.c.h.b16 %v10601
        %v10647 = vunpack.c.l.b16 %v10602
        %v10648 = vunpack.c.h.b16 %v10602
        %v10649 = vunpack.c.l.b16 %v10603
        %v10650 = vunpack.c.h.b16 %v10603
        %v10651 = vunpack.c.l.b16 %v10604
        %v10652 = vunpack.c.h.b16 %v10604
        %v10653 = vunpack.c.l.b16 %v10605
        %v10654 = vunpack.c.h.b16 %v10605
        %v10655 = vunpack.c.l.b16 %v10606
        %v10656 = vunpack.c.h.b16 %v10606
        %v10657 = vunpack.c.l.b16 %v10607
        %v10658 = vunpack.c.h.b16 %v10607
        %v10659 = vunpack.c.l.b16 %v10608
        %v10660 = vunpack.c.h.b16 %v10608
        %v10661 = vunpack.c.l.b16 %v10609
        %v10662 = vunpack.c.h.b16 %v10609
        %v10663 = vunpack.c.l.b16 %v10610
        %v10664 = vunpack.c.h.b16 %v10610
        %v10665 = vunpack.c.l.b16 %v10611
        %v10666 = vunpack.c.h.b16 %v10611
        %v10667 = vunpack.c.l.b16 %v10612
        %v10668 = vunpack.c.h.b16 %v10612
        %v10669 = vunpack.c.l.b16 %v10613
        %v10670 = vunpack.c.h.b16 %v10613
        %v10671 = vunpack.c.l.b16 %v10614
        %v10672 = vunpack.c.h.b16 %v10614
        %v10673 = vunpack.c.l.b16 %v10615
        %v10674 = vunpack.c.h.b16 %v10615
        %v10675 = vunpack.c.l.b16 %v10616
        %v10676 = vunpack.c.h.b16 %v10616
        %v10677 = vpack.c.b16 %v10647, %v10645
        %v10678 = vpack.c.b16 %v10648, %v10646
        %v10679 = vpack.c.b16 %v10651, %v10649
        %v10680 = vpack.c.b16 %v10652, %v10650
        %v10681 = vpack.c.b16 %v10655, %v10653
        %v10682 = vpack.c.b16 %v10656, %v10654
        %v10683 = vpack.c.b16 %v10659, %v10657
        %v10684 = vpack.c.b16 %v10660, %v10658
        %v10685 = vpack.c.b16 %v10663, %v10661
        %v10686 = vpack.c.b16 %v10664, %v10662
        %v10687 = vpack.c.b16 %v10667, %v10665
        %v10688 = vpack.c.b16 %v10668, %v10666
        %v10689 = vpack.c.b16 %v10671, %v10669
        %v10690 = vpack.c.b16 %v10672, %v10670
        %v10691 = vpack.c.b16 %v10675, %v10673
        %v10692 = vpack.c.b16 %v10676, %v10674
        %10709 = vmatprep.subr.bf16.mxu0 %v10678
        %10710 = vmatpush1.bf16.msra.mxu0 %v10677
        %10711 = vmatprep.subr.bf16.mxu0 %v10680
        %10712 = vmatpush1.bf16.msra.mxu0 %v10679
        %10713 = vmatprep.subr.bf16.mxu0 %v10682
        %10714 = vmatpush1.bf16.msra.mxu0 %v10681
        %10715 = vmatprep.subr.bf16.mxu0 %v10684
        %10716 = vmatpush1.bf16.msra.mxu0 %v10683
        %10717 = vmatprep.subr.bf16.mxu0 %v10686
        %10718 = vmatpush1.bf16.msra.mxu0 %v10685
        %10719 = vmatprep.subr.bf16.mxu0 %v10688
        %10720 = vmatpush1.bf16.msra.mxu0 %v10687
        %10721 = vmatprep.subr.bf16.mxu0 %v10690
        %10722 = vmatpush1.bf16.msra.mxu0 %v10689
        %10723 = vmatprep.subr.bf16.mxu0 %v10692
        %10724 = vmatpush1.bf16.msra.mxu0 %v10691
        %10725 = vmatprep.subr.bf16.mxu0 0
        %10726 = vmatpush1.bf16.msra.mxu0 0
        %10727 = vmatprep.subr.bf16.mxu0 0
        %10728 = vmatpush1.bf16.msra.mxu0 0
        %10729 = vmatprep.subr.bf16.mxu0 0
        %10730 = vmatpush1.bf16.msra.mxu0 0
        %10731 = vmatprep.subr.bf16.mxu0 0
        %10732 = vmatpush1.bf16.msra.mxu0 0
        %10733 = vmatprep.subr.bf16.mxu0 0
        %10734 = vmatpush1.bf16.msra.mxu0 0
        %10735 = vmatprep.subr.bf16.mxu0 0
        %10736 = vmatpush1.bf16.msra.mxu0 0
        %10737 = vmatprep.subr.bf16.mxu0 0
        %10738 = vmatpush1.bf16.msra.mxu0 0
        %10739 = vmatprep.subr.bf16.mxu0 0
        %10740 = vmatpush1.bf16.msra.mxu0 0
        %10741 = vmatprep.mubr.bf16.mxu0 0
        %10742 = vmatmul.mubr.bf16.gmra.mrb[0].mxu0 %v10569
        %v10743 = vpop.f32.mrb[0].mxu0
        %v10744 = vadd.f32 %v10622, %v10743
        %v10745 = vpop.f32.mrb[0].mxu0
        %v10746 = vadd.f32 %v10626, %v10745
        %v10747 = vpop.f32.mrb[0].mxu0
        %v10748 = vadd.f32 %v10622, %v10747
        %v10749 = vpop.f32.mrb[0].mxu0
        %v10750 = vadd.f32 %v10626, %v10749
        %10751 = vmatprep.mubr.bf16.mxu0 0
        %10752 = vmatmul.mubr.bf16.gmra.mrb[0].mxu0 %v10570
        %v10753 = vpop.f32.mrb[0].mxu0
        %v10754 = vadd.f32 %v10622, %v10753
        %v10755 = vpop.f32.mrb[0].mxu0
        %v10756 = vadd.f32 %v10626, %v10755
        %v10757 = vpop.f32.mrb[0].mxu0
        %v10758 = vadd.f32 %v10622, %v10757
        %v10759 = vpop.f32.mrb[0].mxu0
        %v10760 = vadd.f32 %v10626, %v10759
        %10761 = vmatprep.mubr.bf16.mxu0 0
        %10762 = vmatmul.mubr.bf16.gmra.mrb[0].mxu0 %v10571
        %v10763 = vpop.f32.mrb[0].mxu0
        %v10764 = vadd.f32 %v10622, %v10763
        %v10765 = vpop.f32.mrb[0].mxu0
        %v10766 = vadd.f32 %v10626, %v10765
        %v10767 = vpop.f32.mrb[0].mxu0
        %v10768 = vadd.f32 %v10622, %v10767
        %v10769 = vpop.f32.mrb[0].mxu0
        %v10770 = vadd.f32 %v10626, %v10769
        %10771 = vmatprep.mubr.bf16.mxu0 0
        %10772 = vmatmul.mubr.bf16.gmra.mrb[0].mxu0 %v10572
        %v10773 = vpop.f32.mrb[0].mxu0
        %v10774 = vadd.f32 %v10622, %v10773
        %v10775 = vpop.f32.mrb[0].mxu0
        %v10776 = vadd.f32 %v10626, %v10775
        %v10777 = vpop.f32.mrb[0].mxu0
        %v10778 = vadd.f32 %v10622, %v10777
        %v10779 = vpop.f32.mrb[0].mxu0
        %v10780 = vadd.f32 %v10626, %v10779
        %10781 = vmatprep.mubr.bf16.mxu0 0
        %10782 = vmatmul.mubr.bf16.gmra.mrb[0].mxu0 %v10573
        %v10783 = vpop.f32.mrb[0].mxu0
        %v10784 = vadd.f32 %v10622, %v10783
        %v10785 = vpop.f32.mrb[0].mxu0
        %v10786 = vadd.f32 %v10626, %v10785
        %v10787 = vpop.f32.mrb[0].mxu0
        %v10788 = vadd.f32 %v10622, %v10787
        %v10789 = vpop.f32.mrb[0].mxu0
        %v10790 = vadd.f32 %v10626, %v10789
        %10791 = vmatprep.mubr.bf16.mxu0 0
        %10792 = vmatmul.mubr.bf16.gmra.mrb[0].mxu0 %v10574
        %v10793 = vpop.f32.mrb[0].mxu0
        %v10794 = vadd.f32 %v10622, %v10793
        %v10795 = vpop.f32.mrb[0].mxu0
        %v10796 = vadd.f32 %v10626, %v10795
        %v10797 = vpop.f32.mrb[0].mxu0
        %v10798 = vadd.f32 %v10622, %v10797
        %v10799 = vpop.f32.mrb[0].mxu0
        %v10800 = vadd.f32 %v10626, %v10799
        %10801 = vmatprep.mubr.bf16.mxu0 0
        %10802 = vmatmul.mubr.bf16.gmra.mrb[0].mxu0 %v10575
        %v10803 = vpop.f32.mrb[0].mxu0
        %v10804 = vadd.f32 %v10622, %v10803
        %v10805 = vpop.f32.mrb[0].mxu0
        %v10806 = vadd.f32 %v10626, %v10805
        %v10807 = vpop.f32.mrb[0].mxu0
        %v10808 = vadd.f32 %v10622, %v10807
        %v10809 = vpop.f32.mrb[0].mxu0
        %v10810 = vadd.f32 %v10626, %v10809
        %10811 = vmatprep.mubr.bf16.mxu0 0
        %10812 = vmatmul.mubr.bf16.gmra.mrb[0].mxu0 %v10576
        %v10813 = vpop.f32.mrb[0].mxu0
        %v10814 = vadd.f32 %v10622, %v10813
        %v10815 = vpop.f32.mrb[0].mxu0
        %v10816 = vadd.f32 %v10626, %v10815
        %v10817 = vpop.f32.mrb[0].mxu0
        %v10818 = vadd.f32 %v10622, %v10817
        %v10819 = vpop.f32.mrb[0].mxu0
        %v10820 = vadd.f32 %v10626, %v10819
        %10821 = vmatprep.mubr.bf16.mxu0 0
        %10822 = vmatmul.mubr.bf16.gmra.mrb[0].mxu0 %v10577
        %v10823 = vpop.f32.mrb[0].mxu0
        %v10824 = vadd.f32 %v10622, %v10823
        %v10825 = vpop.f32.mrb[0].mxu0
        %v10826 = vadd.f32 %v10626, %v10825
        %v10827 = vpop.f32.mrb[0].mxu0
        %v10828 = vadd.f32 %v10622, %v10827
        %v10829 = vpop.f32.mrb[0].mxu0
        %v10830 = vadd.f32 %v10626, %v10829
        %10831 = vmatprep.mubr.bf16.mxu0 0
        %10832 = vmatmul.mubr.bf16.gmra.mrb[0].mxu0 %v10578
        %v10833 = vpop.f32.mrb[0].mxu0
        %v10834 = vadd.f32 %v10622, %v10833
        %v10835 = vpop.f32.mrb[0].mxu0
        %v10836 = vadd.f32 %v10626, %v10835
        %v10837 = vpop.f32.mrb[0].mxu0
        %v10838 = vadd.f32 %v10622, %v10837
        %v10839 = vpop.f32.mrb[0].mxu0
        %v10840 = vadd.f32 %v10626, %v10839
        %10841 = vmatprep.mubr.bf16.mxu0 0
        %10842 = vmatmul.mubr.bf16.gmra.mrb[0].mxu0 %v10579
        %v10843 = vpop.f32.mrb[0].mxu0
        %v10844 = vadd.f32 %v10622, %v10843
        %v10845 = vpop.f32.mrb[0].mxu0
        %v10846 = vadd.f32 %v10626, %v10845
        %v10847 = vpop.f32.mrb[0].mxu0
        %v10848 = vadd.f32 %v10622, %v10847
        %v10849 = vpop.f32.mrb[0].mxu0
        %v10850 = vadd.f32 %v10626, %v10849
        %10851 = vmatprep.mubr.bf16.mxu0 0
        %10852 = vmatmul.mubr.bf16.gmra.mrb[0].mxu0 %v10580
        %v10853 = vpop.f32.mrb[0].mxu0
        %v10854 = vadd.f32 %v10622, %v10853
        %v10855 = vpop.f32.mrb[0].mxu0
        %v10856 = vadd.f32 %v10626, %v10855
        %v10857 = vpop.f32.mrb[0].mxu0
        %v10858 = vadd.f32 %v10622, %v10857
        %v10859 = vpop.f32.mrb[0].mxu0
        %v10860 = vadd.f32 %v10626, %v10859
        %10861 = vmatprep.mubr.bf16.mxu0 0
        %10862 = vmatmul.mubr.bf16.gmra.mrb[0].mxu0 %v10581
        %v10863 = vpop.f32.mrb[0].mxu0
        %v10864 = vadd.f32 %v10622, %v10863
        %v10865 = vpop.f32.mrb[0].mxu0
        %v10866 = vadd.f32 %v10626, %v10865
        %v10867 = vpop.f32.mrb[0].mxu0
        %v10868 = vadd.f32 %v10622, %v10867
        %v10869 = vpop.f32.mrb[0].mxu0
        %v10870 = vadd.f32 %v10626, %v10869
        %10871 = vmatprep.mubr.bf16.mxu0 0
        %10872 = vmatmul.mubr.bf16.gmra.mrb[0].mxu0 %v10582
        %v10873 = vpop.f32.mrb[0].mxu0
        %v10874 = vadd.f32 %v10622, %v10873
        %v10875 = vpop.f32.mrb[0].mxu0
        %v10876 = vadd.f32 %v10626, %v10875
        %v10877 = vpop.f32.mrb[0].mxu0
        %v10878 = vadd.f32 %v10622, %v10877
        %v10879 = vpop.f32.mrb[0].mxu0
        %v10880 = vadd.f32 %v10626, %v10879
        %10881 = vmatprep.mubr.bf16.mxu0 0
        %10882 = vmatmul.mubr.bf16.gmra.mrb[0].mxu0 %v10583
        %v10883 = vpop.f32.mrb[0].mxu0
        %v10884 = vadd.f32 %v10622, %v10883
        %v10885 = vpop.f32.mrb[0].mxu0
        %v10886 = vadd.f32 %v10626, %v10885
        %v10887 = vpop.f32.mrb[0].mxu0
        %v10888 = vadd.f32 %v10622, %v10887
        %v10889 = vpop.f32.mrb[0].mxu0
        %v10890 = vadd.f32 %v10626, %v10889
        %10891 = vmatprep.mubr.bf16.mxu0 0
        %10892 = vmatmul.mubr.bf16.gmra.mrb[0].mxu0 %v10584
        %v10893 = vpop.f32.mrb[0].mxu0
        %v10894 = vadd.f32 %v10622, %v10893
        %v10895 = vpop.f32.mrb[0].mxu0
        %v10896 = vadd.f32 %v10626, %v10895
        %v10897 = vpop.f32.mrb[0].mxu0
        %v10898 = vadd.f32 %v10622, %v10897
        %v10899 = vpop.f32.mrb[0].mxu0
        %v10900 = vadd.f32 %v10626, %v10899
        %10901 = vmatprep.mubr.bf16.mxu0 0
        %10902 = vmatmul.mubr.bf16.gmra.mrb[0].mxu0 %v10585
        %v10903 = vpop.f32.mrb[0].mxu0
        %v10904 = vadd.f32 %v10622, %v10903
        %v10905 = vpop.f32.mrb[0].mxu0
        %v10906 = vadd.f32 %v10626, %v10905
        %v10907 = vpop.f32.mrb[0].mxu0
        %v10908 = vadd.f32 %v10622, %v10907
        %v10909 = vpop.f32.mrb[0].mxu0
        %v10910 = vadd.f32 %v10626, %v10909
        %10911 = vmatprep.mubr.bf16.mxu0 0
        %10912 = vmatmul.mubr.bf16.gmra.mrb[0].mxu0 %v10586
        %v10913 = vpop.f32.mrb[0].mxu0
        %v10914 = vadd.f32 %v10622, %v10913
        %v10915 = vpop.f32.mrb[0].mxu0
        %v10916 = vadd.f32 %v10626, %v10915
        %v10917 = vpop.f32.mrb[0].mxu0
        %v10918 = vadd.f32 %v10622, %v10917
        %v10919 = vpop.f32.mrb[0].mxu0
        %v10920 = vadd.f32 %v10626, %v10919
        %10921 = vmatprep.mubr.bf16.mxu0 0
        %10922 = vmatmul.mubr.bf16.gmra.mrb[0].mxu0 %v10587
        %v10923 = vpop.f32.mrb[0].mxu0
        %v10924 = vadd.f32 %v10622, %v10923
        %v10925 = vpop.f32.mrb[0].mxu0
        %v10926 = vadd.f32 %v10626, %v10925
        %v10927 = vpop.f32.mrb[0].mxu0
        %v10928 = vadd.f32 %v10622, %v10927
        %v10929 = vpop.f32.mrb[0].mxu0
        %v10930 = vadd.f32 %v10626, %v10929
        %10931 = vmatprep.mubr.bf16.mxu0 0
        %10932 = vmatmul.mubr.bf16.gmra.mrb[0].mxu0 %v10588
        %v10933 = vpop.f32.mrb[0].mxu0
        %v10934 = vadd.f32 %v10622, %v10933
        %v10935 = vpop.f32.mrb[0].mxu0
        %v10936 = vadd.f32 %v10626, %v10935
        %v10937 = vpop.f32.mrb[0].mxu0
        %v10938 = vadd.f32 %v10622, %v10937
        %v10939 = vpop.f32.mrb[0].mxu0
        %v10940 = vadd.f32 %v10626, %v10939
        %10941 = vmatprep.mubr.bf16.mxu0 0
        %10942 = vmatmul.mubr.bf16.gmra.mrb[0].mxu0 %v10589
        %v10943 = vpop.f32.mrb[0].mxu0
        %v10944 = vadd.f32 %v10622, %v10943
        %v10945 = vpop.f32.mrb[0].mxu0
        %v10946 = vadd.f32 %v10626, %v10945
        %v10947 = vpop.f32.mrb[0].mxu0
        %v10948 = vadd.f32 %v10622, %v10947
        %v10949 = vpop.f32.mrb[0].mxu0
        %v10950 = vadd.f32 %v10626, %v10949
        %10951 = vmatprep.mubr.bf16.mxu0 0
        %10952 = vmatmul.mubr.bf16.gmra.mrb[0].mxu0 %v10590
        %v10953 = vpop.f32.mrb[0].mxu0
        %v10954 = vadd.f32 %v10622, %v10953
        %v10955 = vpop.f32.mrb[0].mxu0
        %v10956 = vadd.f32 %v10626, %v10955
        %v10957 = vpop.f32.mrb[0].mxu0
        %v10958 = vadd.f32 %v10622, %v10957
        %v10959 = vpop.f32.mrb[0].mxu0
        %v10960 = vadd.f32 %v10626, %v10959
        %10961 = vmatprep.mubr.bf16.mxu0 0
        %10962 = vmatmul.mubr.bf16.gmra.mrb[0].mxu0 %v10591
        %v10963 = vpop.f32.mrb[0].mxu0
        %v10964 = vadd.f32 %v10622, %v10963
        %v10965 = vpop.f32.mrb[0].mxu0
        %v10966 = vadd.f32 %v10626, %v10965
        %v10967 = vpop.f32.mrb[0].mxu0
        %v10968 = vadd.f32 %v10622, %v10967
        %v10969 = vpop.f32.mrb[0].mxu0
        %v10970 = vadd.f32 %v10626, %v10969
        %10971 = vmatprep.mubr.bf16.mxu0 0
        %10972 = vmatmul.mubr.bf16.gmra.mrb[0].mxu0 %v10592
        %v10973 = vpop.f32.mrb[0].mxu0
        %v10974 = vadd.f32 %v10622, %v10973
        %v10975 = vpop.f32.mrb[0].mxu0
        %v10976 = vadd.f32 %v10626, %v10975
        %v10977 = vpop.f32.mrb[0].mxu0
        %v10978 = vadd.f32 %v10622, %v10977
        %v10979 = vpop.f32.mrb[0].mxu0
        %v10980 = vadd.f32 %v10626, %v10979
        %10981 = vmatprep.mubr.bf16.mxu0 0
        %10982 = vmatmul.mubr.bf16.gmra.mrb[0].mxu0 %v10593
        %v10983 = vpop.f32.mrb[0].mxu0
        %v10984 = vadd.f32 %v10622, %v10983
        %v10985 = vpop.f32.mrb[0].mxu0
        %v10986 = vadd.f32 %v10626, %v10985
        %v10987 = vpop.f32.mrb[0].mxu0
        %v10988 = vadd.f32 %v10622, %v10987
        %v10989 = vpop.f32.mrb[0].mxu0
        %v10990 = vadd.f32 %v10626, %v10989
        %10991 = vmatprep.mubr.bf16.mxu0 0
        %10992 = vmatmul.mubr.bf16.gmra.mrb[0].mxu0 %v10594
        %v10993 = vpop.f32.mrb[0].mxu0
        %v10994 = vadd.f32 %v10622, %v10993
        %v10995 = vpop.f32.mrb[0].mxu0
        %v10996 = vadd.f32 %v10626, %v10995
        %v10997 = vpop.f32.mrb[0].mxu0
        %v10998 = vadd.f32 %v10622, %v10997
        %v10999 = vpop.f32.mrb[0].mxu0
        %v11000 = vadd.f32 %v10626, %v10999
        %11001 = vmatprep.mubr.bf16.mxu0 0
        %11002 = vmatmul.mubr.bf16.gmra.mrb[0].mxu0 %v10595
        %v11003 = vpop.f32.mrb[0].mxu0
        %v11004 = vadd.f32 %v10622, %v11003
        %v11005 = vpop.f32.mrb[0].mxu0
        %v11006 = vadd.f32 %v10626, %v11005
        %v11007 = vpop.f32.mrb[0].mxu0
        %v11008 = vadd.f32 %v10622, %v11007
        %v11009 = vpop.f32.mrb[0].mxu0
        %v11010 = vadd.f32 %v10626, %v11009
        %11011 = vmatprep.mubr.bf16.mxu0 0
        %11012 = vmatmul.mubr.bf16.gmra.mrb[0].mxu0 %v10596
        %v11013 = vpop.f32.mrb[0].mxu0
        %v11014 = vadd.f32 %v10622, %v11013
        %v11015 = vpop.f32.mrb[0].mxu0
        %v11016 = vadd.f32 %v10626, %v11015
        %v11017 = vpop.f32.mrb[0].mxu0
        %v11018 = vadd.f32 %v10622, %v11017
        %v11019 = vpop.f32.mrb[0].mxu0
        %v11020 = vadd.f32 %v10626, %v11019
        %11021 = vmatprep.mubr.bf16.mxu0 0
        %11022 = vmatmul.mubr.bf16.gmra.mrb[0].mxu0 %v10597
        %v11023 = vpop.f32.mrb[0].mxu0
        %v11024 = vadd.f32 %v10622, %v11023
        %v11025 = vpop.f32.mrb[0].mxu0
        %v11026 = vadd.f32 %v10626, %v11025
        %v11027 = vpop.f32.mrb[0].mxu0
        %v11028 = vadd.f32 %v10622, %v11027
        %v11029 = vpop.f32.mrb[0].mxu0
        %v11030 = vadd.f32 %v10626, %v11029
        %11031 = vmatprep.mubr.bf16.mxu0 0
        %11032 = vmatmul.mubr.bf16.gmra.mrb[0].mxu0 %v10598
        %v11033 = vpop.f32.mrb[0].mxu0
        %v11034 = vadd.f32 %v10622, %v11033
        %v11035 = vpop.f32.mrb[0].mxu0
        %v11036 = vadd.f32 %v10626, %v11035
        %v11037 = vpop.f32.mrb[0].mxu0
        %v11038 = vadd.f32 %v10622, %v11037
        %v11039 = vpop.f32.mrb[0].mxu0
        %v11040 = vadd.f32 %v10626, %v11039
        %11041 = vmatprep.mubr.bf16.mxu0 0
        %11042 = vmatmul.mubr.bf16.gmra.mrb[0].mxu0 %v10599
        %v11043 = vpop.f32.mrb[0].mxu0
        %v11044 = vadd.f32 %v10622, %v11043
        %v11045 = vpop.f32.mrb[0].mxu0
        %v11046 = vadd.f32 %v10626, %v11045
        %v11047 = vpop.f32.mrb[0].mxu0
        %v11048 = vadd.f32 %v10622, %v11047
        %v11049 = vpop.f32.mrb[0].mxu0
        %v11050 = vadd.f32 %v10626, %v11049
        %11051 = vmatprep.mubr.bf16.mxu0 0
        %11052 = vmatmul.mubr.bf16.gmra.mrb[0].mxu0 %v10600
        %v11053 = vpop.f32.mrb[0].mxu0
        %v11054 = vadd.f32 %v10622, %v11053
        %v11055 = vpop.f32.mrb[0].mxu0
        %v11056 = vadd.f32 %v10626, %v11055
        %v11057 = vpop.f32.mrb[0].mxu0
        %v11058 = vadd.f32 %v10622, %v11057
        %v11059 = vpop.f32.mrb[0].mxu0
        %v11060 = vadd.f32 %v10626, %v11059
        %11061 = vdwg.mxu0
        %v11062 = vadd.f32 %v10744, %v517
        %v11063 = vadd.f32 %v10746, %v518
        %v11064 = vadd.f32 %v10748, %v519
        %v11065 = vadd.f32 %v10750, %v520
        %v11066 = vadd.f32 %v10754, %v521
        %v11067 = vadd.f32 %v10756, %v522
        %v11068 = vadd.f32 %v10758, %v523
        %v11069 = vadd.f32 %v10760, %v524
        %v11070 = vadd.f32 %v10764, %v525
        %v11071 = vadd.f32 %v10766, %v526
        %v11072 = vadd.f32 %v10768, %v527
        %v11073 = vadd.f32 %v10770, %v528
        %v11074 = vadd.f32 %v10774, %v529
        %v11075 = vadd.f32 %v10776, %v530
        %v11076 = vadd.f32 %v10778, %v531
        %v11077 = vadd.f32 %v10780, %v532
        %v11078 = vadd.f32 %v10784, %v533
        %v11079 = vadd.f32 %v10786, %v534
        %v11080 = vadd.f32 %v10788, %v535
        %v11081 = vadd.f32 %v10790, %v536
        %v11082 = vadd.f32 %v10794, %v537
        %v11083 = vadd.f32 %v10796, %v538
        %v11084 = vadd.f32 %v10798, %v539
        %v11085 = vadd.f32 %v10800, %v540
        %v11086 = vadd.f32 %v10804, %v541
        %v11087 = vadd.f32 %v10806, %v542
        %v11088 = vadd.f32 %v10808, %v543
        %v11089 = vadd.f32 %v10810, %v544
        %v11090 = vadd.f32 %v10814, %v545
        %v11091 = vadd.f32 %v10816, %v546
        %v11092 = vadd.f32 %v10818, %v547
        %v11093 = vadd.f32 %v10820, %v548
        %v11094 = vadd.f32 %v10824, %v549
        %v11095 = vadd.f32 %v10826, %v550
        %v11096 = vadd.f32 %v10828, %v551
        %v11097 = vadd.f32 %v10830, %v552
        %v11098 = vadd.f32 %v10834, %v553
        %v11099 = vadd.f32 %v10836, %v554
        %v11100 = vadd.f32 %v10838, %v555
        %v11101 = vadd.f32 %v10840, %v556
        %v11102 = vadd.f32 %v10844, %v557
        %v11103 = vadd.f32 %v10846, %v558
        %v11104 = vadd.f32 %v10848, %v559
        %v11105 = vadd.f32 %v10850, %v560
        %v11106 = vadd.f32 %v10854, %v561
        %v11107 = vadd.f32 %v10856, %v562
        %v11108 = vadd.f32 %v10858, %v563
        %v11109 = vadd.f32 %v10860, %v564
        %v11110 = vadd.f32 %v10864, %v565
        %v11111 = vadd.f32 %v10866, %v566
        %v11112 = vadd.f32 %v10868, %v567
        %v11113 = vadd.f32 %v10870, %v568
        %v11114 = vadd.f32 %v10874, %v569
        %v11115 = vadd.f32 %v10876, %v570
        %v11116 = vadd.f32 %v10878, %v571
        %v11117 = vadd.f32 %v10880, %v572
        %v11118 = vadd.f32 %v10884, %v573
        %v11119 = vadd.f32 %v10886, %v574
        %v11120 = vadd.f32 %v10888, %v575
        %v11121 = vadd.f32 %v10890, %v576
        %v11122 = vadd.f32 %v10894, %v577
        %v11123 = vadd.f32 %v10896, %v578
        %v11124 = vadd.f32 %v10898, %v579
        %v11125 = vadd.f32 %v10900, %v580
        %v11126 = vadd.f32 %v10904, %v581
        %v11127 = vadd.f32 %v10906, %v582
        %v11128 = vadd.f32 %v10908, %v583
        %v11129 = vadd.f32 %v10910, %v584
        %v11130 = vadd.f32 %v10914, %v585
        %v11131 = vadd.f32 %v10916, %v586
        %v11132 = vadd.f32 %v10918, %v587
        %v11133 = vadd.f32 %v10920, %v588
        %v11134 = vadd.f32 %v10924, %v589
        %v11135 = vadd.f32 %v10926, %v590
        %v11136 = vadd.f32 %v10928, %v591
        %v11137 = vadd.f32 %v10930, %v592
        %v11138 = vadd.f32 %v10934, %v593
        %v11139 = vadd.f32 %v10936, %v594
        %v11140 = vadd.f32 %v10938, %v595
        %v11141 = vadd.f32 %v10940, %v596
        %v11142 = vadd.f32 %v10944, %v597
        %v11143 = vadd.f32 %v10946, %v598
        %v11144 = vadd.f32 %v10948, %v599
        %v11145 = vadd.f32 %v10950, %v600
        %v11146 = vadd.f32 %v10954, %v601
        %v11147 = vadd.f32 %v10956, %v602
        %v11148 = vadd.f32 %v10958, %v603
        %v11149 = vadd.f32 %v10960, %v604
        %v11150 = vadd.f32 %v10964, %v605
        %v11151 = vadd.f32 %v10966, %v606
        %v11152 = vadd.f32 %v10968, %v607
        %v11153 = vadd.f32 %v10970, %v608
        %v11154 = vadd.f32 %v10974, %v609
        %v11155 = vadd.f32 %v10976, %v610
        %v11156 = vadd.f32 %v10978, %v611
        %v11157 = vadd.f32 %v10980, %v612
        %v11158 = vadd.f32 %v10984, %v613
        %v11159 = vadd.f32 %v10986, %v614
        %v11160 = vadd.f32 %v10988, %v615
        %v11161 = vadd.f32 %v10990, %v616
        %v11162 = vadd.f32 %v10994, %v617
        %v11163 = vadd.f32 %v10996, %v618
        %v11164 = vadd.f32 %v10998, %v619
        %v11165 = vadd.f32 %v11000, %v620
        %v11166 = vadd.f32 %v11004, %v621
        %v11167 = vadd.f32 %v11006, %v622
        %v11168 = vadd.f32 %v11008, %v623
        %v11169 = vadd.f32 %v11010, %v624
        %v11170 = vadd.f32 %v11014, %v625
        %v11171 = vadd.f32 %v11016, %v626
        %v11172 = vadd.f32 %v11018, %v627
        %v11173 = vadd.f32 %v11020, %v628
        %v11174 = vadd.f32 %v11024, %v629
        %v11175 = vadd.f32 %v11026, %v630
        %v11176 = vadd.f32 %v11028, %v631
        %v11177 = vadd.f32 %v11030, %v632
        %v11178 = vadd.f32 %v11034, %v633
        %v11179 = vadd.f32 %v11036, %v634
        %v11180 = vadd.f32 %v11038, %v635
        %v11181 = vadd.f32 %v11040, %v636
        %v11182 = vadd.f32 %v11044, %v637
        %v11183 = vadd.f32 %v11046, %v638
        %v11184 = vadd.f32 %v11048, %v639
        %v11185 = vadd.f32 %v11050, %v640
        %v11186 = vadd.f32 %v11054, %v641
        %v11187 = vadd.f32 %v11056, %v642
        %v11188 = vadd.f32 %v11058, %v643
        %v11189 = vadd.f32 %v11060, %v644
        %v11190 = vmax.f32 %v11062, 0.0
        %v11191 = vmax.f32 %v11063, 0.0
        %v11192 = vmax.f32 %v11064, 0.0
        %v11193 = vmax.f32 %v11065, 0.0
        %v11194 = vmax.f32 %v11066, 0.0
        %v11195 = vmax.f32 %v11067, 0.0
        %v11196 = vmax.f32 %v11068, 0.0
        %v11197 = vmax.f32 %v11069, 0.0
        %v11198 = vmax.f32 %v11070, 0.0
        %v11199 = vmax.f32 %v11071, 0.0
        %v11200 = vmax.f32 %v11072, 0.0
        %v11201 = vmax.f32 %v11073, 0.0
        %v11202 = vmax.f32 %v11074, 0.0
        %v11203 = vmax.f32 %v11075, 0.0
        %v11204 = vmax.f32 %v11076, 0.0
        %v11205 = vmax.f32 %v11077, 0.0
        %v11206 = vmax.f32 %v11078, 0.0
        %v11207 = vmax.f32 %v11079, 0.0
        %v11208 = vmax.f32 %v11080, 0.0
        %v11209 = vmax.f32 %v11081, 0.0
        %v11210 = vmax.f32 %v11082, 0.0
        %v11211 = vmax.f32 %v11083, 0.0
        %v11212 = vmax.f32 %v11084, 0.0
        %v11213 = vmax.f32 %v11085, 0.0
        %v11214 = vmax.f32 %v11086, 0.0
        %v11215 = vmax.f32 %v11087, 0.0
        %v11216 = vmax.f32 %v11088, 0.0
        %v11217 = vmax.f32 %v11089, 0.0
        %v11218 = vmax.f32 %v11090, 0.0
        %v11219 = vmax.f32 %v11091, 0.0
        %v11220 = vmax.f32 %v11092, 0.0
        %v11221 = vmax.f32 %v11093, 0.0
        %v11222 = vmax.f32 %v11094, 0.0
        %v11223 = vmax.f32 %v11095, 0.0
        %v11224 = vmax.f32 %v11096, 0.0
        %v11225 = vmax.f32 %v11097, 0.0
        %v11226 = vmax.f32 %v11098, 0.0
        %v11227 = vmax.f32 %v11099, 0.0
        %v11228 = vmax.f32 %v11100, 0.0
        %v11229 = vmax.f32 %v11101, 0.0
        %v11230 = vmax.f32 %v11102, 0.0
        %v11231 = vmax.f32 %v11103, 0.0
        %v11232 = vmax.f32 %v11104, 0.0
        %v11233 = vmax.f32 %v11105, 0.0
        %v11234 = vmax.f32 %v11106, 0.0
        %v11235 = vmax.f32 %v11107, 0.0
        %v11236 = vmax.f32 %v11108, 0.0
        %v11237 = vmax.f32 %v11109, 0.0
        %v11238 = vmax.f32 %v11110, 0.0
        %v11239 = vmax.f32 %v11111, 0.0
        %v11240 = vmax.f32 %v11112, 0.0
        %v11241 = vmax.f32 %v11113, 0.0
        %v11242 = vmax.f32 %v11114, 0.0
        %v11243 = vmax.f32 %v11115, 0.0
        %v11244 = vmax.f32 %v11116, 0.0
        %v11245 = vmax.f32 %v11117, 0.0
        %v11246 = vmax.f32 %v11118, 0.0
        %v11247 = vmax.f32 %v11119, 0.0
        %v11248 = vmax.f32 %v11120, 0.0
        %v11249 = vmax.f32 %v11121, 0.0
        %v11250 = vmax.f32 %v11122, 0.0
        %v11251 = vmax.f32 %v11123, 0.0
        %v11252 = vmax.f32 %v11124, 0.0
        %v11253 = vmax.f32 %v11125, 0.0
        %v11254 = vmax.f32 %v11126, 0.0
        %v11255 = vmax.f32 %v11127, 0.0
        %v11256 = vmax.f32 %v11128, 0.0
        %v11257 = vmax.f32 %v11129, 0.0
        %v11258 = vmax.f32 %v11130, 0.0
        %v11259 = vmax.f32 %v11131, 0.0
        %v11260 = vmax.f32 %v11132, 0.0
        %v11261 = vmax.f32 %v11133, 0.0
        %v11262 = vmax.f32 %v11134, 0.0
        %v11263 = vmax.f32 %v11135, 0.0
        %v11264 = vmax.f32 %v11136, 0.0
        %v11265 = vmax.f32 %v11137, 0.0
        %v11266 = vmax.f32 %v11138, 0.0
        %v11267 = vmax.f32 %v11139, 0.0
        %v11268 = vmax.f32 %v11140, 0.0
        %v11269 = vmax.f32 %v11141, 0.0
        %v11270 = vmax.f32 %v11142, 0.0
        %v11271 = vmax.f32 %v11143, 0.0
        %v11272 = vmax.f32 %v11144, 0.0
        %v11273 = vmax.f32 %v11145, 0.0
        %v11274 = vmax.f32 %v11146, 0.0
        %v11275 = vmax.f32 %v11147, 0.0
        %v11276 = vmax.f32 %v11148, 0.0
        %v11277 = vmax.f32 %v11149, 0.0
        %v11278 = vmax.f32 %v11150, 0.0
        %v11279 = vmax.f32 %v11151, 0.0
        %v11280 = vmax.f32 %v11152, 0.0
        %v11281 = vmax.f32 %v11153, 0.0
        %v11282 = vmax.f32 %v11154, 0.0
        %v11283 = vmax.f32 %v11155, 0.0
        %v11284 = vmax.f32 %v11156, 0.0
        %v11285 = vmax.f32 %v11157, 0.0
        %v11286 = vmax.f32 %v11158, 0.0
        %v11287 = vmax.f32 %v11159, 0.0
        %v11288 = vmax.f32 %v11160, 0.0
        %v11289 = vmax.f32 %v11161, 0.0
        %v11290 = vmax.f32 %v11162, 0.0
        %v11291 = vmax.f32 %v11163, 0.0
        %v11292 = vmax.f32 %v11164, 0.0
        %v11293 = vmax.f32 %v11165, 0.0
        %v11294 = vmax.f32 %v11166, 0.0
        %v11295 = vmax.f32 %v11167, 0.0
        %v11296 = vmax.f32 %v11168, 0.0
        %v11297 = vmax.f32 %v11169, 0.0
        %v11298 = vmax.f32 %v11170, 0.0
        %v11299 = vmax.f32 %v11171, 0.0
        %v11300 = vmax.f32 %v11172, 0.0
        %v11301 = vmax.f32 %v11173, 0.0
        %v11302 = vmax.f32 %v11174, 0.0
        %v11303 = vmax.f32 %v11175, 0.0
        %v11304 = vmax.f32 %v11176, 0.0
        %v11305 = vmax.f32 %v11177, 0.0
        %v11306 = vmax.f32 %v11178, 0.0
        %v11307 = vmax.f32 %v11179, 0.0
        %v11308 = vmax.f32 %v11180, 0.0
        %v11309 = vmax.f32 %v11181, 0.0
        %v11310 = vmax.f32 %v11182, 0.0
        %v11311 = vmax.f32 %v11183, 0.0
        %v11312 = vmax.f32 %v11184, 0.0
        %v11313 = vmax.f32 %v11185, 0.0
        %v11314 = vmax.f32 %v11186, 0.0
        %v11315 = vmax.f32 %v11187, 0.0
        %v11316 = vmax.f32 %v11188, 0.0
        %v11317 = vmax.f32 %v11189, 0.0
        %v11318 = vpack.c.bf16 %v11192, %v11190
        %v11319 = vpack.c.bf16 %v11193, %v11191
        %v11320 = vpack.c.bf16 %v11196, %v11194
        %v11321 = vpack.c.bf16 %v11197, %v11195
        %v11322 = vpack.c.bf16 %v11200, %v11198
        %v11323 = vpack.c.bf16 %v11201, %v11199
        %v11324 = vpack.c.bf16 %v11204, %v11202
        %v11325 = vpack.c.bf16 %v11205, %v11203
        %v11326 = vpack.c.bf16 %v11208, %v11206
        %v11327 = vpack.c.bf16 %v11209, %v11207
        %v11328 = vpack.c.bf16 %v11212, %v11210
        %v11329 = vpack.c.bf16 %v11213, %v11211
        %v11330 = vpack.c.bf16 %v11216, %v11214
        %v11331 = vpack.c.bf16 %v11217, %v11215
        %v11332 = vpack.c.bf16 %v11220, %v11218
        %v11333 = vpack.c.bf16 %v11221, %v11219
        %v11334 = vpack.c.bf16 %v11224, %v11222
        %v11335 = vpack.c.bf16 %v11225, %v11223
        %v11336 = vpack.c.bf16 %v11228, %v11226
        %v11337 = vpack.c.bf16 %v11229, %v11227
        %v11338 = vpack.c.bf16 %v11232, %v11230
        %v11339 = vpack.c.bf16 %v11233, %v11231
        %v11340 = vpack.c.bf16 %v11236, %v11234
        %v11341 = vpack.c.bf16 %v11237, %v11235
        %v11342 = vpack.c.bf16 %v11240, %v11238
        %v11343 = vpack.c.bf16 %v11241, %v11239
        %v11344 = vpack.c.bf16 %v11244, %v11242
        %v11345 = vpack.c.bf16 %v11245, %v11243
        %v11346 = vpack.c.bf16 %v11248, %v11246
        %v11347 = vpack.c.bf16 %v11249, %v11247
        %v11348 = vpack.c.bf16 %v11252, %v11250
        %v11349 = vpack.c.bf16 %v11253, %v11251
        %v11350 = vpack.c.bf16 %v11256, %v11254
        %v11351 = vpack.c.bf16 %v11257, %v11255
        %v11352 = vpack.c.bf16 %v11260, %v11258
        %v11353 = vpack.c.bf16 %v11261, %v11259
        %v11354 = vpack.c.bf16 %v11264, %v11262
        %v11355 = vpack.c.bf16 %v11265, %v11263
        %v11356 = vpack.c.bf16 %v11268, %v11266
        %v11357 = vpack.c.bf16 %v11269, %v11267
        %v11358 = vpack.c.bf16 %v11272, %v11270
        %v11359 = vpack.c.bf16 %v11273, %v11271
        %v11360 = vpack.c.bf16 %v11276, %v11274
        %v11361 = vpack.c.bf16 %v11277, %v11275
        %v11362 = vpack.c.bf16 %v11280, %v11278
        %v11363 = vpack.c.bf16 %v11281, %v11279
        %v11364 = vpack.c.bf16 %v11284, %v11282
        %v11365 = vpack.c.bf16 %v11285, %v11283
        %v11366 = vpack.c.bf16 %v11288, %v11286
        %v11367 = vpack.c.bf16 %v11289, %v11287
        %v11368 = vpack.c.bf16 %v11292, %v11290
        %v11369 = vpack.c.bf16 %v11293, %v11291
        %v11370 = vpack.c.bf16 %v11296, %v11294
        %v11371 = vpack.c.bf16 %v11297, %v11295
        %v11372 = vpack.c.bf16 %v11300, %v11298
        %v11373 = vpack.c.bf16 %v11301, %v11299
        %v11374 = vpack.c.bf16 %v11304, %v11302
        %v11375 = vpack.c.bf16 %v11305, %v11303
        %v11376 = vpack.c.bf16 %v11308, %v11306
        %v11377 = vpack.c.bf16 %v11309, %v11307
        %v11378 = vpack.c.bf16 %v11312, %v11310
        %v11379 = vpack.c.bf16 %v11313, %v11311
        %v11380 = vpack.c.bf16 %v11316, %v11314
        %v11381 = vpack.c.bf16 %v11317, %v11315
        %v11446 = vunpack.c.l.b16 %v11318
        %v11447 = vunpack.c.l.b16 %v11319
        %v11448 = vunpack.c.h.b16 %v11318
        %v11449 = vunpack.c.h.b16 %v11319
        %v11450 = vunpack.c.l.b16 %v11320
        %v11451 = vunpack.c.l.b16 %v11321
        %v11452 = vunpack.c.h.b16 %v11320
        %v11453 = vunpack.c.h.b16 %v11321
        %v11454 = vunpack.c.l.b16 %v11322
        %v11455 = vunpack.c.l.b16 %v11323
        %v11456 = vunpack.c.h.b16 %v11322
        %v11457 = vunpack.c.h.b16 %v11323
        %v11458 = vunpack.c.l.b16 %v11324
        %v11459 = vunpack.c.l.b16 %v11325
        %v11460 = vunpack.c.h.b16 %v11324
        %v11461 = vunpack.c.h.b16 %v11325
        %v11462 = vunpack.c.l.b16 %v11326
        %v11463 = vunpack.c.l.b16 %v11327
        %v11464 = vunpack.c.h.b16 %v11326
        %v11465 = vunpack.c.h.b16 %v11327
        %v11466 = vunpack.c.l.b16 %v11328
        %v11467 = vunpack.c.l.b16 %v11329
        %v11468 = vunpack.c.h.b16 %v11328
        %v11469 = vunpack.c.h.b16 %v11329
        %v11470 = vunpack.c.l.b16 %v11330
        %v11471 = vunpack.c.l.b16 %v11331
        %v11472 = vunpack.c.h.b16 %v11330
        %v11473 = vunpack.c.h.b16 %v11331
        %v11474 = vunpack.c.l.b16 %v11332
        %v11475 = vunpack.c.l.b16 %v11333
        %v11476 = vunpack.c.h.b16 %v11332
        %v11477 = vunpack.c.h.b16 %v11333
        %v11478 = vunpack.c.l.b16 %v11334
        %v11479 = vunpack.c.l.b16 %v11335
        %v11480 = vunpack.c.h.b16 %v11334
        %v11481 = vunpack.c.h.b16 %v11335
        %v11482 = vunpack.c.l.b16 %v11336
        %v11483 = vunpack.c.l.b16 %v11337
        %v11484 = vunpack.c.h.b16 %v11336
        %v11485 = vunpack.c.h.b16 %v11337
        %v11486 = vunpack.c.l.b16 %v11338
        %v11487 = vunpack.c.l.b16 %v11339
        %v11488 = vunpack.c.h.b16 %v11338
        %v11489 = vunpack.c.h.b16 %v11339
        %v11490 = vunpack.c.l.b16 %v11340
        %v11491 = vunpack.c.l.b16 %v11341
        %v11492 = vunpack.c.h.b16 %v11340
        %v11493 = vunpack.c.h.b16 %v11341
        %v11494 = vunpack.c.l.b16 %v11342
        %v11495 = vunpack.c.l.b16 %v11343
        %v11496 = vunpack.c.h.b16 %v11342
        %v11497 = vunpack.c.h.b16 %v11343
        %v11498 = vunpack.c.l.b16 %v11344
        %v11499 = vunpack.c.l.b16 %v11345
        %v11500 = vunpack.c.h.b16 %v11344
        %v11501 = vunpack.c.h.b16 %v11345
        %v11502 = vunpack.c.l.b16 %v11346
        %v11503 = vunpack.c.l.b16 %v11347
        %v11504 = vunpack.c.h.b16 %v11346
        %v11505 = vunpack.c.h.b16 %v11347
        %v11506 = vunpack.c.l.b16 %v11348
        %v11507 = vunpack.c.l.b16 %v11349
        %v11508 = vunpack.c.h.b16 %v11348
        %v11509 = vunpack.c.h.b16 %v11349
        %v11510 = vunpack.c.l.b16 %v11350
        %v11511 = vunpack.c.l.b16 %v11351
        %v11512 = vunpack.c.h.b16 %v11350
        %v11513 = vunpack.c.h.b16 %v11351
        %v11514 = vunpack.c.l.b16 %v11352
        %v11515 = vunpack.c.l.b16 %v11353
        %v11516 = vunpack.c.h.b16 %v11352
        %v11517 = vunpack.c.h.b16 %v11353
        %v11518 = vunpack.c.l.b16 %v11354
        %v11519 = vunpack.c.l.b16 %v11355
        %v11520 = vunpack.c.h.b16 %v11354
        %v11521 = vunpack.c.h.b16 %v11355
        %v11522 = vunpack.c.l.b16 %v11356
        %v11523 = vunpack.c.l.b16 %v11357
        %v11524 = vunpack.c.h.b16 %v11356
        %v11525 = vunpack.c.h.b16 %v11357
        %v11526 = vunpack.c.l.b16 %v11358
        %v11527 = vunpack.c.l.b16 %v11359
        %v11528 = vunpack.c.h.b16 %v11358
        %v11529 = vunpack.c.h.b16 %v11359
        %v11530 = vunpack.c.l.b16 %v11360
        %v11531 = vunpack.c.l.b16 %v11361
        %v11532 = vunpack.c.h.b16 %v11360
        %v11533 = vunpack.c.h.b16 %v11361
        %v11534 = vunpack.c.l.b16 %v11362
        %v11535 = vunpack.c.l.b16 %v11363
        %v11536 = vunpack.c.h.b16 %v11362
        %v11537 = vunpack.c.h.b16 %v11363
        %v11538 = vunpack.c.l.b16 %v11364
        %v11539 = vunpack.c.l.b16 %v11365
        %v11540 = vunpack.c.h.b16 %v11364
        %v11541 = vunpack.c.h.b16 %v11365
        %v11542 = vunpack.c.l.b16 %v11366
        %v11543 = vunpack.c.l.b16 %v11367
        %v11544 = vunpack.c.h.b16 %v11366
        %v11545 = vunpack.c.h.b16 %v11367
        %v11546 = vunpack.c.l.b16 %v11368
        %v11547 = vunpack.c.l.b16 %v11369
        %v11548 = vunpack.c.h.b16 %v11368
        %v11549 = vunpack.c.h.b16 %v11369
        %v11550 = vunpack.c.l.b16 %v11370
        %v11551 = vunpack.c.l.b16 %v11371
        %v11552 = vunpack.c.h.b16 %v11370
        %v11553 = vunpack.c.h.b16 %v11371
        %v11554 = vunpack.c.l.b16 %v11372
        %v11555 = vunpack.c.l.b16 %v11373
        %v11556 = vunpack.c.h.b16 %v11372
        %v11557 = vunpack.c.h.b16 %v11373
        %v11558 = vunpack.c.l.b16 %v11374
        %v11559 = vunpack.c.l.b16 %v11375
        %v11560 = vunpack.c.h.b16 %v11374
        %v11561 = vunpack.c.h.b16 %v11375
        %v11562 = vunpack.c.l.b16 %v11376
        %v11563 = vunpack.c.l.b16 %v11377
        %v11564 = vunpack.c.h.b16 %v11376
        %v11565 = vunpack.c.h.b16 %v11377
        %v11566 = vunpack.c.l.b16 %v11378
        %v11567 = vunpack.c.l.b16 %v11379
        %v11568 = vunpack.c.h.b16 %v11378
        %v11569 = vunpack.c.h.b16 %v11379
        %v11570 = vunpack.c.l.b16 %v11380
        %v11571 = vunpack.c.l.b16 %v11381
        %v11572 = vunpack.c.h.b16 %v11380
        %v11573 = vunpack.c.h.b16 %v11381
        %v11574 = vpack.c.b16 %v11447, %v11446
        %v11575 = vpack.c.b16 %v11449, %v11448
        %v11576 = vpack.c.b16 %v11451, %v11450
        %v11577 = vpack.c.b16 %v11453, %v11452
        %v11578 = vpack.c.b16 %v11455, %v11454
        %v11579 = vpack.c.b16 %v11457, %v11456
        %v11580 = vpack.c.b16 %v11459, %v11458
        %v11581 = vpack.c.b16 %v11461, %v11460
        %v11582 = vpack.c.b16 %v11463, %v11462
        %v11583 = vpack.c.b16 %v11465, %v11464
        %v11584 = vpack.c.b16 %v11467, %v11466
        %v11585 = vpack.c.b16 %v11469, %v11468
        %v11586 = vpack.c.b16 %v11471, %v11470
        %v11587 = vpack.c.b16 %v11473, %v11472
        %v11588 = vpack.c.b16 %v11475, %v11474
        %v11589 = vpack.c.b16 %v11477, %v11476
        %v11590 = vpack.c.b16 %v11479, %v11478
        %v11591 = vpack.c.b16 %v11481, %v11480
        %v11592 = vpack.c.b16 %v11483, %v11482
        %v11593 = vpack.c.b16 %v11485, %v11484
        %v11594 = vpack.c.b16 %v11487, %v11486
        %v11595 = vpack.c.b16 %v11489, %v11488
        %v11596 = vpack.c.b16 %v11491, %v11490
        %v11597 = vpack.c.b16 %v11493, %v11492
        %v11598 = vpack.c.b16 %v11495, %v11494
        %v11599 = vpack.c.b16 %v11497, %v11496
        %v11600 = vpack.c.b16 %v11499, %v11498
        %v11601 = vpack.c.b16 %v11501, %v11500
        %v11602 = vpack.c.b16 %v11503, %v11502
        %v11603 = vpack.c.b16 %v11505, %v11504
        %v11604 = vpack.c.b16 %v11507, %v11506
        %v11605 = vpack.c.b16 %v11509, %v11508
        %v11606 = vpack.c.b16 %v11511, %v11510
        %v11607 = vpack.c.b16 %v11513, %v11512
        %v11608 = vpack.c.b16 %v11515, %v11514
        %v11609 = vpack.c.b16 %v11517, %v11516
        %v11610 = vpack.c.b16 %v11519, %v11518
        %v11611 = vpack.c.b16 %v11521, %v11520
        %v11612 = vpack.c.b16 %v11523, %v11522
        %v11613 = vpack.c.b16 %v11525, %v11524
        %v11614 = vpack.c.b16 %v11527, %v11526
        %v11615 = vpack.c.b16 %v11529, %v11528
        %v11616 = vpack.c.b16 %v11531, %v11530
        %v11617 = vpack.c.b16 %v11533, %v11532
        %v11618 = vpack.c.b16 %v11535, %v11534
        %v11619 = vpack.c.b16 %v11537, %v11536
        %v11620 = vpack.c.b16 %v11539, %v11538
        %v11621 = vpack.c.b16 %v11541, %v11540
        %v11622 = vpack.c.b16 %v11543, %v11542
        %v11623 = vpack.c.b16 %v11545, %v11544
        %v11624 = vpack.c.b16 %v11547, %v11546
        %v11625 = vpack.c.b16 %v11549, %v11548
        %v11626 = vpack.c.b16 %v11551, %v11550
        %v11627 = vpack.c.b16 %v11553, %v11552
        %v11628 = vpack.c.b16 %v11555, %v11554
        %v11629 = vpack.c.b16 %v11557, %v11556
        %v11630 = vpack.c.b16 %v11559, %v11558
        %v11631 = vpack.c.b16 %v11561, %v11560
        %v11632 = vpack.c.b16 %v11563, %v11562
        %v11633 = vpack.c.b16 %v11565, %v11564
        %v11634 = vpack.c.b16 %v11567, %v11566
        %v11635 = vpack.c.b16 %v11569, %v11568
        %v11636 = vpack.c.b16 %v11571, %v11570
        %v11637 = vpack.c.b16 %v11573, %v11572
        %11702 = vst [vmem:[%s341] sm:$0xff] %v11574
        %11703 = vst [vmem:[%s341 + $0x8] sm:$0xff] %v11575
        %11704 = vst [vmem:[%s341 + $0x10] sm:$0xff] %v11576
        %11705 = vst [vmem:[%s341 + $0x18] sm:$0xff] %v11577
        %11706 = vst [vmem:[%s341 + $0x20] sm:$0xff] %v11578
        %11707 = vst [vmem:[%s341 + $0x28] sm:$0xff] %v11579
        %11708 = vst [vmem:[%s341 + $0x30] sm:$0xff] %v11580
        %11709 = vst [vmem:[%s341 + $0x38] sm:$0xff] %v11581
        %11710 = vst [vmem:[%s341 + $0x40] sm:$0xff] %v11582
        %11711 = vst [vmem:[%s341 + $0x48] sm:$0xff] %v11583
        %11712 = vst [vmem:[%s341 + $0x50] sm:$0xff] %v11584
        %11713 = vst [vmem:[%s341 + $0x58] sm:$0xff] %v11585
        %11714 = vst [vmem:[%s341 + $0x60] sm:$0xff] %v11586
        %11715 = vst [vmem:[%s341 + $0x68] sm:$0xff] %v11587
        %11716 = vst [vmem:[%s341 + $0x70] sm:$0xff] %v11588
        %11717 = vst [vmem:[%s341 + $0x78] sm:$0xff] %v11589
        %11718 = vst [vmem:[%s341 + $0x80] sm:$0xff] %v11590
        %11719 = vst [vmem:[%s341 + $0x88] sm:$0xff] %v11591
        %11720 = vst [vmem:[%s341 + $0x90] sm:$0xff] %v11592
        %11721 = vst [vmem:[%s341 + $0x98] sm:$0xff] %v11593
        %11722 = vst [vmem:[%s341 + $0xa0] sm:$0xff] %v11594
        %11723 = vst [vmem:[%s341 + $0xa8] sm:$0xff] %v11595
        %11724 = vst [vmem:[%s341 + $0xb0] sm:$0xff] %v11596
        %11725 = vst [vmem:[%s341 + $0xb8] sm:$0xff] %v11597
        %11726 = vst [vmem:[%s341 + $0xc0] sm:$0xff] %v11598
        %11727 = vst [vmem:[%s341 + $0xc8] sm:$0xff] %v11599
        %11728 = vst [vmem:[%s341 + $0xd0] sm:$0xff] %v11600
        %11729 = vst [vmem:[%s341 + $0xd8] sm:$0xff] %v11601
        %11730 = vst [vmem:[%s341 + $0xe0] sm:$0xff] %v11602
        %11731 = vst [vmem:[%s341 + $0xe8] sm:$0xff] %v11603
        %11732 = vst [vmem:[%s341 + $0xf0] sm:$0xff] %v11604
        %11733 = vst [vmem:[%s341 + $0xf8] sm:$0xff] %v11605
        %11734 = vst [vmem:[%s341 + $0x100] sm:$0xff] %v11606
        %11735 = vst [vmem:[%s341 + $0x108] sm:$0xff] %v11607
        %11736 = vst [vmem:[%s341 + $0x110] sm:$0xff] %v11608
        %11737 = vst [vmem:[%s341 + $0x118] sm:$0xff] %v11609
        %11738 = vst [vmem:[%s341 + $0x120] sm:$0xff] %v11610
        %11739 = vst [vmem:[%s341 + $0x128] sm:$0xff] %v11611
        %11740 = vst [vmem:[%s341 + $0x130] sm:$0xff] %v11612
        %11741 = vst [vmem:[%s341 + $0x138] sm:$0xff] %v11613
        %11742 = vst [vmem:[%s341 + $0x140] sm:$0xff] %v11614
        %11743 = vst [vmem:[%s341 + $0x148] sm:$0xff] %v11615
        %11744 = vst [vmem:[%s341 + $0x150] sm:$0xff] %v11616
        %11745 = vst [vmem:[%s341 + $0x158] sm:$0xff] %v11617
        %11746 = vst [vmem:[%s341 + $0x160] sm:$0xff] %v11618
        %11747 = vst [vmem:[%s341 + $0x168] sm:$0xff] %v11619
        %11748 = vst [vmem:[%s341 + $0x170] sm:$0xff] %v11620
        %11749 = vst [vmem:[%s341 + $0x178] sm:$0xff] %v11621
        %11750 = vst [vmem:[%s341 + $0x180] sm:$0xff] %v11622
        %11751 = vst [vmem:[%s341 + $0x188] sm:$0xff] %v11623
        %11752 = vst [vmem:[%s341 + $0x190] sm:$0xff] %v11624
        %11753 = vst [vmem:[%s341 + $0x198] sm:$0xff] %v11625
        %11754 = vst [vmem:[%s341 + $0x1a0] sm:$0xff] %v11626
        %11755 = vst [vmem:[%s341 + $0x1a8] sm:$0xff] %v11627
        %11756 = vst [vmem:[%s341 + $0x1b0] sm:$0xff] %v11628
        %11757 = vst [vmem:[%s341 + $0x1b8] sm:$0xff] %v11629
        %11758 = vst [vmem:[%s341 + $0x1c0] sm:$0xff] %v11630
        %11759 = vst [vmem:[%s341 + $0x1c8] sm:$0xff] %v11631
        %11760 = vst [vmem:[%s341 + $0x1d0] sm:$0xff] %v11632
        %11761 = vst [vmem:[%s341 + $0x1d8] sm:$0xff] %v11633
        %11762 = vst [vmem:[%s341 + $0x1e0] sm:$0xff] %v11634
        %11763 = vst [vmem:[%s341 + $0x1e8] sm:$0xff] %v11635
        %11764 = vst [vmem:[%s341 + $0x1f0] sm:$0xff] %v11636
        %11765 = vst [vmem:[%s341 + $0x1f8] sm:$0xff] %v11637
        %s11766 = sand.u32 %s186, 1
        %s11767 = scalar_lea.sflag [#allocation6], %s11766
        %s11768 = sand.u32 %s186, 1
        %s11769 = smul.addr %s11768, 512
        %s11770 = scalar_lea.vmem [#allocation12], %s11769
        // Predicated region
        $region65: #{tpu_custom_call.1} parent=47 // pred_check
          %p11771 = pneg %p196
        $region66: #{tpu_custom_call.1} parent=47 // pred_check_branch
          %11773 = sbr.rel (%p11771) target = $region68
        $region67: #{tpu_custom_call.1} parent=47 // pred_region
          %s11774 = smul.u32 2, %s26
          %s11776 = ssub.s32 8192, 8192
          %11777 = vsyncadd %s11767, %s11776
          %s11778 = smul.addr %s11774, 64
          %s11779 = smul.addr %s11778, 64
          %s11780 = scalar_lea.hbm %s7, %s11779
          %s11781 = sshll.u32 %s11770, 4
          %s11782 = int_to_ptr.vmem [resolvable:$true] %s11781
          %11787 = dma.vmem_to_hbm [thread:$0]  %s11782, 8192, %s11780, %s11767, 128, 128, 8
        $region68: #{tpu_custom_call.1} parent=47 // pred_fallthru
          _
      $region48: #{tpu_custom_call.1} parent=5 // pred_fallthru
        _
      %p11788 = scmp.le.s32.totalorder 2, %s21
      // Predicated region
      $region69: #{tpu_custom_call.1} parent=5 // pred_check
        %p11789 = pneg %p11788
      $region70: #{tpu_custom_call.1} parent=5 // pred_check_branch
        %11791 = sbr.rel (%p11789) target = $region72
      $region71: #{tpu_custom_call.1} parent=5 // pred_region
        %s11792 = ssub.s32 %s21, 2
        // Predicated region
        $region73: #{tpu_custom_call.1} parent=71 // pred_check
          %p11793 = pneg %p202
        $region74: #{tpu_custom_call.1} parent=71 // pred_check_branch
          %11795 = sbr.rel (%p11793) target = $region76
        $region75: #{tpu_custom_call.1} parent=71 // pred_region
          %s11796 = sand.u32 %s187, 1
          %s11797 = scalar_lea.sflag [#allocation6], %s11796
          %s11798 = sand.u32 %s187, 1
          %s11799 = smul.addr %s11798, 512
          %s11800 = scalar_lea.vmem [#allocation12], %s11799
          %11801 = dma.done %s11797, 8192
        $region76: #{tpu_custom_call.1} parent=71 // pred_fallthru
          _
      $region72: #{tpu_custom_call.1} parent=5 // pred_fallthru
        _
    $region6: #{tpu_custom_call.1} parent=1 // loop_footer
      %s25 = sadd.s32 1, %s21
    $region7: #{tpu_custom_call.1} parent=1 // loop_footer_branch
      %20 = sbr.rel target = $region3
    $region8: #{tpu_custom_call.1} parent=1 // loop_exit
      _
    %11802 = vsyncpa [#allocation5], 1
    %s11803 = scalar_lea.sflag [#allocation5], 1
    %11804 = vsyncpa %s11803, 1
    %11805 = vsyncpa [#allocation8], 1
    %11806 = vsyncpa [#allocation11], 1
    %11807 = vsyncpa [#allocation6], 1
    %s11808 = scalar_lea.sflag [#allocation6], 1
    %11809 = vsyncpa %s11808, 1

</llo_original>
